<compile_context>
chip_gen: v6e
topology: v6e:2x2x1
jax: 0.10.0
libtpu: 0.0.40
codegen_flags: <defaults>
</compile_context>

<pallas_src>
import functools

import jax
import jax.numpy as jnp
from jax.experimental import pallas as pl
from jax.experimental.pallas import tpu as pltpu

BN_EPS = 1e-5


def _full_spec(shape):
    # Whole array as a single block (full-extent blocks are always legal).
    return pl.BlockSpec(shape, lambda i: (0,) * len(shape))


# ---------------------------------------------------------------------------
# Kernel 1: Conv (im2col matmul) + BatchNorm2d (training batch stats) + ReLU
#           + MaxPool2d(2,2), fully fused.
#   p4_ref  : (4, N*Hp*Wp, K*K*Cin)  patches grouped by 2x2-pool corner
#   rem_ref : (Mr, K*K*Cin)          conv positions cropped by the pool floor
#                                    (BN stats only; absent when Ho, Wo even)
# ---------------------------------------------------------------------------
def conv_bn_relu_pool_kernel(*refs, n_corner_rows, n_rem_rows, has_rem):
    if has_rem:
        p4_ref, rem_ref, w_ref, g_ref, beta_ref, o_ref = refs
    else:
        p4_ref, w_ref, g_ref, beta_ref, o_ref = refs
        rem_ref = None

    w = w_ref[...].astype(jnp.bfloat16)          # bf16 MXU inputs, f32 accum
    ys = [
        jnp.dot(p4_ref[c].astype(jnp.bfloat16), w,
                preferred_element_type=jnp.float32)
        for c in range(4)
    ]

    # Training-mode BatchNorm2d statistics over ALL N*Ho*Wo conv positions
    # (biased variance, like PyTorch).  Conv bias is dropped: a per-channel
    # constant added before BN is exactly cancelled by the mean subtraction.
    sum_y = jnp.sum(ys[0] + ys[1] + ys[2] + ys[3], axis=0, keepdims=True)
    sum_y2 = jnp.sum(ys[0] * ys[0] + ys[1] * ys[1]
                     + ys[2] * ys[2] + ys[3] * ys[3], axis=0, keepdims=True)
    count = 4 * n_corner_rows
    if has_rem:
        y_rem = jnp.dot(rem_ref[...].astype(jnp.bfloat16), w,
                        preferred_element_type=jnp.float32)
        sum_y = sum_y + jnp.sum(y_rem, axis=0, keepdims=True)
        sum_y2 = sum_y2 + jnp.sum(y_rem * y_rem, axis=0, keepdims=True)
        count = count + n_rem_rows

    inv_n = 1.0 / float(count)
    mean = sum_y * inv_n
    var = sum_y2 * inv_n - mean * mean
    scale = g_ref[...] * jax.lax.rsqrt(var + BN_EPS)   # BN folded to one affine
    shift = beta_ref[...] - mean * scale

    z = [ys[c] * scale + shift for c in range(4)]
    pooled = jnp.maximum(jnp.maximum(z[0], z[1]), jnp.maximum(z[2], z[3]))
    o_ref[...] = jnp.maximum(pooled, 0.0)        # ReLU commutes with max


def _pool_grouped_patches(x, k):
    # TODO(synk): im2col / corner grouping kept as XLA glue (pure data
    # movement); in-kernel extraction needs strided in-VMEM gathers.
    N, H, W, C = x.shape
    Ho, Wo = H - k + 1, W - k + 1
    Hp, Wp = Ho // 2, Wo // 2
    KKC = k * k * C
    cols = [x[:, i:i + Ho, j:j + Wo, :] for i in range(k) for j in range(k)]
    p = jnp.concatenate(cols, axis=-1)                   # (N, Ho, Wo, K*K*C)
    corners = [p[:, a:2 * Hp:2, b:2 * Wp:2, :].reshape(N * Hp * Wp, KKC)
               for a in range(2) for b in range(2)]
    p4 = jnp.stack(corners, axis=0)                      # (4, N*Hp*Wp, KKC)
    rems = []
    if Ho > 2 * Hp:
        rems.append(p[:, 2 * Hp:, :, :].reshape(-1, KKC))
    if Wo > 2 * Wp:
        rems.append(p[:, :2 * Hp, 2 * Wp:, :].reshape(-1, KKC))
    rem = jnp.concatenate(rems, axis=0) if rems else None
    return p4, rem, (N, Hp, Wp)


def conv_bn_relu_pool(x_nhwc, w, gamma, beta):
    p4, rem, (N, Hp, Wp) = _pool_grouped_patches(x_nhwc, 3)
    Mp, KKC = p4.shape[1], p4.shape[2]
    Cout = w.shape[1]
    has_rem = rem is not None
    n_rem = rem.shape[0] if has_rem else 0

    kernel = functools.partial(conv_bn_relu_pool_kernel,
                               n_corner_rows=Mp, n_rem_rows=n_rem,
                               has_rem=has_rem)
    in_specs, args = [_full_spec(p4.shape)], [p4]
    if has_rem:
        in_specs.append(_full_spec(rem.shape))
        args.append(rem)
    in_specs += [_full_spec(w.shape), _full_spec(gamma.shape),
                 _full_spec(beta.shape)]
    args += [w, gamma, beta]

    total_rows = 4 * Mp + n_rem
    cost = pl.CostEstimate(
        flops=2 * total_rows * KKC * Cout,
        transcendentals=0,
        bytes_accessed=4 * (total_rows * KKC + KKC * Cout
                            + Mp * Cout + 2 * Cout))

    out = pl.pallas_call(
        kernel,
        grid=(1,),   # training-mode BN couples every row -> single block
        in_specs=in_specs,
        out_specs=_full_spec((Mp, Cout)),
        out_shape=jax.ShapeDtypeStruct((Mp, Cout), jnp.float32),
        compiler_params=pltpu.CompilerParams(
            dimension_semantics=("arbitrary",),
            vmem_limit_bytes=32 * 1024 * 1024),
        cost_estimate=cost,
    )(*args)
    return out.reshape(N, Hp, Wp, Cout)


# ---------------------------------------------------------------------------
# Kernel 2: fused MLP  (1250 -> 1024 -> 128 -> 10), weights resident in VMEM,
#           intermediates never leave the kernel.
# ---------------------------------------------------------------------------
def fc_kernel(x_ref, w1_ref, b1_ref, w2_ref, b2_ref, w3_ref, b3_ref, o_ref):
    h = jnp.dot(x_ref[...].astype(jnp.bfloat16),
                w1_ref[...].astype(jnp.bfloat16),
                preferred_element_type=jnp.float32) + b1_ref[...]
    h = jnp.maximum(h, 0.0)
    h = jnp.dot(h.astype(jnp.bfloat16), w2_ref[...].astype(jnp.bfloat16),
                preferred_element_type=jnp.float32) + b2_ref[...]
    h = jnp.maximum(h, 0.0)
    o_ref[...] = jnp.dot(h.astype(jnp.bfloat16),
                         w3_ref[...].astype(jnp.bfloat16),
                         preferred_element_type=jnp.float32) + b3_ref[...]


def fc_fused(x, w1, b1, w2, b2, w3, b3):
    M, D = x.shape
    Dout = w3.shape[1]
    bm = M if M <= 128 else 128           # batch-row tile; grid shards over M
    grid = (pl.cdiv(M, bm),)

    def _resident(shape):                 # same block every step -> stays in VMEM
        return pl.BlockSpec(shape, lambda i: (0,) * len(shape))

    cost = pl.CostEstimate(
        flops=2 * M * (w1.shape[0] * w1.shape[1]
                       + w2.shape[0] * w2.shape[1]
                       + w3.shape[0] * w3.shape[1]),
        transcendentals=0,
        bytes_accessed=4 * (x.size + w1.size + b1.size + w2.size + b2.size
                            + w3.size + b3.size + M * Dout))

    return pl.pallas_call(
        fc_kernel,
        grid=grid,
        in_specs=[pl.BlockSpec((bm, D), lambda i: (i, 0)),
                  _resident(w1.shape), _resident(b1.shape),
                  _resident(w2.shape), _resident(b2.shape),
                  _resident(w3.shape), _resident(b3.shape)],
        out_specs=pl.BlockSpec((bm, Dout), lambda i: (i, 0)),
        out_shape=jax.ShapeDtypeStruct((M, Dout), jnp.float32),
        compiler_params=pltpu.CompilerParams(
            dimension_semantics=("parallel",),          # rows independent (v7x 2 TCs)
            vmem_limit_bytes=32 * 1024 * 1024),         # > v5e's 16 MiB default
        cost_estimate=cost,
    )(x, w1, b1, w2, b2, w3, b3)


# ---------------------------------------------------------------------------
# Parameter init (PyTorch-style uniform bounds) and forward pass.
# ---------------------------------------------------------------------------
def init_params(key):
    ks = jax.random.split(key, 8)

    def unif(k, shape, fan_in):
        bound = 1.0 / jnp.sqrt(jnp.float32(fan_in))
        return jax.random.uniform(k, shape, jnp.float32, -bound, bound)

    return {
        # Conv2d(1, 25, 3): weight stored as (3*3*1, 25) in (kh, kw, Cin) order.
        # Conv biases omitted: exactly cancelled by training-mode BatchNorm.
        "w1": unif(ks[0], (3 * 3 * 1, 25), 9),
        "g1": jnp.ones((1, 25), jnp.float32),
        "beta1": jnp.zeros((1, 25), jnp.float32),
        # Conv2d(25, 50, 3)
        "w2": unif(ks[1], (3 * 3 * 25, 50), 225),
        "g2": jnp.ones((1, 50), jnp.float32),
        "beta2": jnp.zeros((1, 50), jnp.float32),
        # Linear(1250 -> 1024 -> 128 -> 10); fw1 rows stored in NHWC (h, w, c)
        # flatten order (== PyTorch's NCHW-ordered fc1 weight pre-permuted once
        # at init), so no transpose is needed in the forward pass.
        "fw1": unif(ks[2], (1250, 1024), 1250),
        "fb1": unif(ks[3], (1, 1024), 1250),
        "fw2": unif(ks[4], (1024, 128), 1024),
        "fb2": unif(ks[5], (1, 128), 1024),
        "fw3": unif(ks[6], (128, 10), 128),
        "fb3": unif(ks[7], (1, 10), 128),
    }


def cnn_forward(x_nchw, p):
    # NCHW -> NHWC (channels on the 128-lane axis); pure layout glue.
    x = jnp.transpose(x_nchw, (0, 2, 3, 1)).astype(jnp.float32)
    # layer1+2: Conv(1,25,3)+BN+ReLU+MaxPool(2,2) fused -> (N, 13, 13, 25)
    y = conv_bn_relu_pool(x, p["w1"], p["g1"], p["beta1"])
    # layer3+4: Conv(25,50,3)+BN+ReLU+MaxPool(2,2) fused -> (N, 5, 5, 50)
    y = conv_bn_relu_pool(y, p["w2"], p["g2"], p["beta2"])
    N = y.shape[0]
    # Flatten (NHWC order; fw1 rows are stored in the matching order).
    y = y.reshape(N, -1)                                  # (N, 1250)
    # fused fc: 1250 -> 1024 -> 128 -> 10
    return fc_fused(y, p["fw1"], p["fb1"], p["fw2"], p["fb2"],
                    p["fw3"], p["fb3"])


if __name__ == "__main__":
    key = jax.random.PRNGKey(0)
    pkey, xkey = jax.random.split(key)
    params = init_params(pkey)
    # Spatial size 28x28 is forced by the fc input dim 50*5*5 in the module.
    x = jax.random.normal(xkey, (2, 1, 28, 28), jnp.float32)
    out = jax.jit(cnn_forward)(x, params)
    out = jax.block_until_ready(out)
    assert out.shape == (2, 10) and out.dtype == jnp.float32
    print("KERNEL_OK")
</pallas_src>

<mosaic_0001>
module attributes {stable_mosaic.version = 11 : i64} {
  func.func @conv_bn_relu_pool_kernel(%arg0: i32, %arg1: memref<4x338x9xf32, #tpu.memory_space<vmem>>, %arg2: memref<9x25xf32, #tpu.memory_space<vmem>>, %arg3: memref<1x25xf32, #tpu.memory_space<vmem>>, %arg4: memref<1x25xf32, #tpu.memory_space<vmem>>, %arg5: memref<338x25xf32, #tpu.memory_space<vmem>>) attributes {dimension_semantics = [#tpu.dimension_semantics<arbitrary>], iteration_bounds = array<i64: 1>, scalar_prefetch = 0 : i64, scratch_operands = 0 : i64, tpu.core_type = #tpu.core_type<tc>, window_params = [{pipeline_mode = #tpu.pipeline_mode<synchronous>, transform_indices = @transform_0, window_bounds = array<i64: 4, 338, 9>}, {pipeline_mode = #tpu.pipeline_mode<synchronous>, transform_indices = @transform_1, window_bounds = array<i64: 9, 25>}, {pipeline_mode = #tpu.pipeline_mode<synchronous>, transform_indices = @transform_2, window_bounds = array<i64: 1, 25>}, {pipeline_mode = #tpu.pipeline_mode<synchronous>, transform_indices = @transform_3, window_bounds = array<i64: 1, 25>}, {pipeline_mode = #tpu.pipeline_mode<synchronous>, transform_indices = @transform_4, window_bounds = array<i64: 338, 25>}]} {
    %c0 = arith.constant 0 : index
    %c0_0 = arith.constant 0 : index
    %0 = vector.load %arg2[%c0, %c0_0] : memref<9x25xf32, #tpu.memory_space<vmem>>, vector<9x25xf32>
    %1 = arith.truncf %0 : vector<9x25xf32> to vector<9x25xbf16>
    %c0_1 = arith.constant 0 : index
    %c0_2 = arith.constant 0 : index
    %c0_3 = arith.constant 0 : index
    %2 = vector.load %arg1[%c0_1, %c0_2, %c0_3] : memref<4x338x9xf32, #tpu.memory_space<vmem>>, vector<1x338x9xf32>
    %3 = vector.shape_cast %2 : vector<1x338x9xf32> to vector<338x9xf32>
    %4 = arith.truncf %3 : vector<338x9xf32> to vector<338x9xbf16>
    %cst = arith.constant dense<0.000000e+00> : vector<338x25xf32>
    %5 = tpu.matmul %4, %1, %cst {dimension_numbers = #tpu.dot_dimension_numbers<[1], [0], [0], [1], [0, 0, 1, 1], [], []>} : vector<338x9xbf16>, vector<9x25xbf16>, vector<338x25xf32> -> vector<338x25xf32>
    %c1 = arith.constant 1 : index
    %c0_4 = arith.constant 0 : index
    %c0_5 = arith.constant 0 : index
    %6 = vector.load %arg1[%c1, %c0_4, %c0_5] : memref<4x338x9xf32, #tpu.memory_space<vmem>>, vector<1x338x9xf32>
    %7 = vector.shape_cast %6 : vector<1x338x9xf32> to vector<338x9xf32>
    %8 = arith.truncf %7 : vector<338x9xf32> to vector<338x9xbf16>
    %cst_6 = arith.constant dense<0.000000e+00> : vector<338x25xf32>
    %9 = tpu.matmul %8, %1, %cst_6 {dimension_numbers = #tpu.dot_dimension_numbers<[1], [0], [0], [1], [0, 0, 1, 1], [], []>} : vector<338x9xbf16>, vector<9x25xbf16>, vector<338x25xf32> -> vector<338x25xf32>
    %c2 = arith.constant 2 : index
    %c0_7 = arith.constant 0 : index
    %c0_8 = arith.constant 0 : index
    %10 = vector.load %arg1[%c2, %c0_7, %c0_8] : memref<4x338x9xf32, #tpu.memory_space<vmem>>, vector<1x338x9xf32>
    %11 = vector.shape_cast %10 : vector<1x338x9xf32> to vector<338x9xf32>
    %12 = arith.truncf %11 : vector<338x9xf32> to vector<338x9xbf16>
    %cst_9 = arith.constant dense<0.000000e+00> : vector<338x25xf32>
    %13 = tpu.matmul %12, %1, %cst_9 {dimension_numbers = #tpu.dot_dimension_numbers<[1], [0], [0], [1], [0, 0, 1, 1], [], []>} : vector<338x9xbf16>, vector<9x25xbf16>, vector<338x25xf32> -> vector<338x25xf32>
    %c3 = arith.constant 3 : index
    %c0_10 = arith.constant 0 : index
    %c0_11 = arith.constant 0 : index
    %14 = vector.load %arg1[%c3, %c0_10, %c0_11] : memref<4x338x9xf32, #tpu.memory_space<vmem>>, vector<1x338x9xf32>
    %15 = vector.shape_cast %14 : vector<1x338x9xf32> to vector<338x9xf32>
    %16 = arith.truncf %15 : vector<338x9xf32> to vector<338x9xbf16>
    %cst_12 = arith.constant dense<0.000000e+00> : vector<338x25xf32>
    %17 = tpu.matmul %16, %1, %cst_12 {dimension_numbers = #tpu.dot_dimension_numbers<[1], [0], [0], [1], [0, 0, 1, 1], [], []>} : vector<338x9xbf16>, vector<9x25xbf16>, vector<338x25xf32> -> vector<338x25xf32>
    %18 = arith.addf %5, %9 : vector<338x25xf32>
    %19 = arith.addf %18, %13 : vector<338x25xf32>
    %20 = arith.addf %19, %17 : vector<338x25xf32>
    %cst_13 = arith.constant dense<0.000000e+00> : vector<25xf32>
    %21 = vector.multi_reduction <add>, %20, %cst_13 [0] : vector<338x25xf32> to vector<25xf32>
    %22 = vector.shape_cast %21 : vector<25xf32> to vector<1x25xf32>
    %23 = arith.mulf %5, %5 : vector<338x25xf32>
    %24 = arith.mulf %9, %9 : vector<338x25xf32>
    %25 = arith.addf %23, %24 : vector<338x25xf32>
    %26 = arith.mulf %13, %13 : vector<338x25xf32>
    %27 = arith.addf %25, %26 : vector<338x25xf32>
    %28 = arith.mulf %17, %17 : vector<338x25xf32>
    %29 = arith.addf %27, %28 : vector<338x25xf32>
    %cst_14 = arith.constant dense<0.000000e+00> : vector<25xf32>
    %30 = vector.multi_reduction <add>, %29, %cst_14 [0] : vector<338x25xf32> to vector<25xf32>
    %31 = vector.shape_cast %30 : vector<25xf32> to vector<1x25xf32>
    %cst_15 = arith.constant 7.396450e-04 : f32
    %32 = vector.broadcast %cst_15 : f32 to vector<1x25xf32>
    %33 = arith.mulf %22, %32 : vector<1x25xf32>
    %cst_16 = arith.constant 7.396450e-04 : f32
    %34 = vector.broadcast %cst_16 : f32 to vector<1x25xf32>
    %35 = arith.mulf %31, %34 : vector<1x25xf32>
    %36 = arith.mulf %33, %33 : vector<1x25xf32>
    %37 = arith.subf %35, %36 : vector<1x25xf32>
    %c0_17 = arith.constant 0 : index
    %c0_18 = arith.constant 0 : index
    %38 = vector.load %arg3[%c0_17, %c0_18] : memref<1x25xf32, #tpu.memory_space<vmem>>, vector<1x25xf32>
    %cst_19 = arith.constant 9.99999974E-6 : f32
    %39 = vector.broadcast %cst_19 : f32 to vector<1x25xf32>
    %40 = arith.addf %37, %39 : vector<1x25xf32>
    %41 = math.rsqrt %40 : vector<1x25xf32>
    %42 = arith.mulf %38, %41 : vector<1x25xf32>
    %c0_20 = arith.constant 0 : index
    %c0_21 = arith.constant 0 : index
    %43 = vector.load %arg4[%c0_20, %c0_21] : memref<1x25xf32, #tpu.memory_space<vmem>>, vector<1x25xf32>
    %44 = arith.mulf %33, %42 : vector<1x25xf32>
    %45 = arith.subf %43, %44 : vector<1x25xf32>
    %46 = vector.broadcast %42 : vector<1x25xf32> to vector<338x25xf32>
    %47 = arith.mulf %5, %46 : vector<338x25xf32>
    %48 = vector.broadcast %45 : vector<1x25xf32> to vector<338x25xf32>
    %49 = arith.addf %47, %48 : vector<338x25xf32>
    %50 = vector.broadcast %42 : vector<1x25xf32> to vector<338x25xf32>
    %51 = arith.mulf %9, %50 : vector<338x25xf32>
    %52 = vector.broadcast %45 : vector<1x25xf32> to vector<338x25xf32>
    %53 = arith.addf %51, %52 : vector<338x25xf32>
    %54 = vector.broadcast %42 : vector<1x25xf32> to vector<338x25xf32>
    %55 = arith.mulf %13, %54 : vector<338x25xf32>
    %56 = vector.broadcast %45 : vector<1x25xf32> to vector<338x25xf32>
    %57 = arith.addf %55, %56 : vector<338x25xf32>
    %58 = vector.broadcast %42 : vector<1x25xf32> to vector<338x25xf32>
    %59 = arith.mulf %17, %58 : vector<338x25xf32>
    %60 = vector.broadcast %45 : vector<1x25xf32> to vector<338x25xf32>
    %61 = arith.addf %59, %60 : vector<338x25xf32>
    %62 = arith.maximumf %49, %53 : vector<338x25xf32>
    %63 = arith.maximumf %57, %61 : vector<338x25xf32>
    %64 = arith.maximumf %62, %63 : vector<338x25xf32>
    %cst_22 = arith.constant 0.000000e+00 : f32
    %65 = vector.broadcast %cst_22 : f32 to vector<338x25xf32>
    %66 = arith.maximumf %64, %65 : vector<338x25xf32>
    %c0_23 = arith.constant 0 : index
    %c0_24 = arith.constant 0 : index
    %67 = vector.load %arg5[%c0_23, %c0_24] : memref<338x25xf32, #tpu.memory_space<vmem>>, vector<338x25xf32>
    tpu.vector_store %arg5[%c0_23, %c0_24], %66 {strides = array<i32>} : memref<338x25xf32, #tpu.memory_space<vmem>>, vector<338x25xf32>,
    return
  }
  func.func @transform_0(%arg0: i32) -> (i32, i32, i32) {
    %c0_i32 = arith.constant 0 : i32
    %c0_i32_0 = arith.constant 0 : i32
    %c0_i32_1 = arith.constant 0 : i32
    %c0_i32_2 = arith.constant 0 : i32
    return %c0_i32, %c0_i32_0, %c0_i32_1 : i32, i32, i32
  }
  func.func @transform_1(%arg0: i32) -> (i32, i32) {
    %c0_i32 = arith.constant 0 : i32
    %c0_i32_0 = arith.constant 0 : i32
    %c0_i32_1 = arith.constant 0 : i32
    return %c0_i32, %c0_i32_0 : i32, i32
  }
  func.func @transform_2(%arg0: i32) -> (i32, i32) {
    %c0_i32 = arith.constant 0 : i32
    %c0_i32_0 = arith.constant 0 : i32
    %c0_i32_1 = arith.constant 0 : i32
    return %c0_i32, %c0_i32_0 : i32, i32
  }
  func.func @transform_3(%arg0: i32) -> (i32, i32) {
    %c0_i32 = arith.constant 0 : i32
    %c0_i32_0 = arith.constant 0 : i32
    %c0_i32_1 = arith.constant 0 : i32
    return %c0_i32, %c0_i32_0 : i32, i32
  }
  func.func @transform_4(%arg0: i32) -> (i32, i32) {
    %c0_i32 = arith.constant 0 : i32
    %c0_i32_0 = arith.constant 0 : i32
    %c0_i32_1 = arith.constant 0 : i32
    return %c0_i32, %c0_i32_0 : i32, i32
  }
}

module attributes {stable_mosaic.version = 11 : i64} {
  func.func @conv_bn_relu_pool_kernel(%arg0: i32, %arg1: memref<4x50x225xf32, #tpu.memory_space<vmem>>, %arg2: memref<42x225xf32, #tpu.memory_space<vmem>>, %arg3: memref<225x50xf32, #tpu.memory_space<vmem>>, %arg4: memref<1x50xf32, #tpu.memory_space<vmem>>, %arg5: memref<1x50xf32, #tpu.memory_space<vmem>>, %arg6: memref<50x50xf32, #tpu.memory_space<vmem>>) attributes {dimension_semantics = [#tpu.dimension_semantics<arbitrary>], iteration_bounds = array<i64: 1>, scalar_prefetch = 0 : i64, scratch_operands = 0 : i64, tpu.core_type = #tpu.core_type<tc>, window_params = [{pipeline_mode = #tpu.pipeline_mode<synchronous>, transform_indices = @transform_0, window_bounds = array<i64: 4, 50, 225>}, {pipeline_mode = #tpu.pipeline_mode<synchronous>, transform_indices = @transform_1, window_bounds = array<i64: 42, 225>}, {pipeline_mode = #tpu.pipeline_mode<synchronous>, transform_indices = @transform_2, window_bounds = array<i64: 225, 50>}, {pipeline_mode = #tpu.pipeline_mode<synchronous>, transform_indices = @transform_3, window_bounds = array<i64: 1, 50>}, {pipeline_mode = #tpu.pipeline_mode<synchronous>, transform_indices = @transform_4, window_bounds = array<i64: 1, 50>}, {pipeline_mode = #tpu.pipeline_mode<synchronous>, transform_indices = @transform_5, window_bounds = array<i64: 50, 50>}]} {
    %c0 = arith.constant 0 : index
    %c0_0 = arith.constant 0 : index
    %0 = vector.load %arg3[%c0, %c0_0] : memref<225x50xf32, #tpu.memory_space<vmem>>, vector<225x50xf32>
    %1 = arith.truncf %0 : vector<225x50xf32> to vector<225x50xbf16>
    %c0_1 = arith.constant 0 : index
    %c0_2 = arith.constant 0 : index
    %c0_3 = arith.constant 0 : index
    %2 = vector.load %arg1[%c0_1, %c0_2, %c0_3] : memref<4x50x225xf32, #tpu.memory_space<vmem>>, vector<1x50x225xf32>
    %3 = vector.shape_cast %2 : vector<1x50x225xf32> to vector<50x225xf32>
    %4 = arith.truncf %3 : vector<50x225xf32> to vector<50x225xbf16>
    %cst = arith.constant dense<0.000000e+00> : vector<50x50xf32>
    %5 = tpu.matmul %4, %1, %cst {dimension_numbers = #tpu.dot_dimension_numbers<[1], [0], [0], [1], [0, 0, 1, 1], [], []>} : vector<50x225xbf16>, vector<225x50xbf16>, vector<50x50xf32> -> vector<50x50xf32>
    %c1 = arith.constant 1 : index
    %c0_4 = arith.constant 0 : index
    %c0_5 = arith.constant 0 : index
    %6 = vector.load %arg1[%c1, %c0_4, %c0_5] : memref<4x50x225xf32, #tpu.memory_space<vmem>>, vector<1x50x225xf32>
    %7 = vector.shape_cast %6 : vector<1x50x225xf32> to vector<50x225xf32>
    %8 = arith.truncf %7 : vector<50x225xf32> to vector<50x225xbf16>
    %cst_6 = arith.constant dense<0.000000e+00> : vector<50x50xf32>
    %9 = tpu.matmul %8, %1, %cst_6 {dimension_numbers = #tpu.dot_dimension_numbers<[1], [0], [0], [1], [0, 0, 1, 1], [], []>} : vector<50x225xbf16>, vector<225x50xbf16>, vector<50x50xf32> -> vector<50x50xf32>
    %c2 = arith.constant 2 : index
    %c0_7 = arith.constant 0 : index
    %c0_8 = arith.constant 0 : index
    %10 = vector.load %arg1[%c2, %c0_7, %c0_8] : memref<4x50x225xf32, #tpu.memory_space<vmem>>, vector<1x50x225xf32>
    %11 = vector.shape_cast %10 : vector<1x50x225xf32> to vector<50x225xf32>
    %12 = arith.truncf %11 : vector<50x225xf32> to vector<50x225xbf16>
    %cst_9 = arith.constant dense<0.000000e+00> : vector<50x50xf32>
    %13 = tpu.matmul %12, %1, %cst_9 {dimension_numbers = #tpu.dot_dimension_numbers<[1], [0], [0], [1], [0, 0, 1, 1], [], []>} : vector<50x225xbf16>, vector<225x50xbf16>, vector<50x50xf32> -> vector<50x50xf32>
    %c3 = arith.constant 3 : index
    %c0_10 = arith.constant 0 : index
    %c0_11 = arith.constant 0 : index
    %14 = vector.load %arg1[%c3, %c0_10, %c0_11] : memref<4x50x225xf32, #tpu.memory_space<vmem>>, vector<1x50x225xf32>
    %15 = vector.shape_cast %14 : vector<1x50x225xf32> to vector<50x225xf32>
    %16 = arith.truncf %15 : vector<50x225xf32> to vector<50x225xbf16>
    %cst_12 = arith.constant dense<0.000000e+00> : vector<50x50xf32>
    %17 = tpu.matmul %16, %1, %cst_12 {dimension_numbers = #tpu.dot_dimension_numbers<[1], [0], [0], [1], [0, 0, 1, 1], [], []>} : vector<50x225xbf16>, vector<225x50xbf16>, vector<50x50xf32> -> vector<50x50xf32>
    %18 = arith.addf %5, %9 : vector<50x50xf32>
    %19 = arith.addf %18, %13 : vector<50x50xf32>
    %20 = arith.addf %19, %17 : vector<50x50xf32>
    %cst_13 = arith.constant dense<0.000000e+00> : vector<50xf32>
    %21 = vector.multi_reduction <add>, %20, %cst_13 [0] : vector<50x50xf32> to vector<50xf32>
    %22 = vector.shape_cast %21 : vector<50xf32> to vector<1x50xf32>
    %23 = arith.mulf %5, %5 : vector<50x50xf32>
    %24 = arith.mulf %9, %9 : vector<50x50xf32>
    %25 = arith.addf %23, %24 : vector<50x50xf32>
    %26 = arith.mulf %13, %13 : vector<50x50xf32>
    %27 = arith.addf %25, %26 : vector<50x50xf32>
    %28 = arith.mulf %17, %17 : vector<50x50xf32>
    %29 = arith.addf %27, %28 : vector<50x50xf32>
    %cst_14 = arith.constant dense<0.000000e+00> : vector<50xf32>
    %30 = vector.multi_reduction <add>, %29, %cst_14 [0] : vector<50x50xf32> to vector<50xf32>
    %31 = vector.shape_cast %30 : vector<50xf32> to vector<1x50xf32>
    %c0_15 = arith.constant 0 : index
    %c0_16 = arith.constant 0 : index
    %32 = vector.load %arg2[%c0_15, %c0_16] : memref<42x225xf32, #tpu.memory_space<vmem>>, vector<42x225xf32>
    %33 = arith.truncf %32 : vector<42x225xf32> to vector<42x225xbf16>
    %cst_17 = arith.constant dense<0.000000e+00> : vector<42x50xf32>
    %34 = tpu.matmul %33, %1, %cst_17 {dimension_numbers = #tpu.dot_dimension_numbers<[1], [0], [0], [1], [0, 0, 1, 1], [], []>} : vector<42x225xbf16>, vector<225x50xbf16>, vector<42x50xf32> -> vector<42x50xf32>
    %cst_18 = arith.constant dense<0.000000e+00> : vector<50xf32>
    %35 = vector.multi_reduction <add>, %34, %cst_18 [0] : vector<42x50xf32> to vector<50xf32>
    %36 = vector.shape_cast %35 : vector<50xf32> to vector<1x50xf32>
    %37 = arith.addf %22, %36 : vector<1x50xf32>
    %38 = arith.mulf %34, %34 : vector<42x50xf32>
    %cst_19 = arith.constant dense<0.000000e+00> : vector<50xf32>
    %39 = vector.multi_reduction <add>, %38, %cst_19 [0] : vector<42x50xf32> to vector<50xf32>
    %40 = vector.shape_cast %39 : vector<50xf32> to vector<1x50xf32>
    %41 = arith.addf %31, %40 : vector<1x50xf32>
    %cst_20 = arith.constant 0.00413223123 : f32
    %42 = vector.broadcast %cst_20 : f32 to vector<1x50xf32>
    %43 = arith.mulf %37, %42 : vector<1x50xf32>
    %cst_21 = arith.constant 0.00413223123 : f32
    %44 = vector.broadcast %cst_21 : f32 to vector<1x50xf32>
    %45 = arith.mulf %41, %44 : vector<1x50xf32>
    %46 = arith.mulf %43, %43 : vector<1x50xf32>
    %47 = arith.subf %45, %46 : vector<1x50xf32>
    %c0_22 = arith.constant 0 : index
    %c0_23 = arith.constant 0 : index
    %48 = vector.load %arg4[%c0_22, %c0_23] : memref<1x50xf32, #tpu.memory_space<vmem>>, vector<1x50xf32>
    %cst_24 = arith.constant 9.99999974E-6 : f32
    %49 = vector.broadcast %cst_24 : f32 to vector<1x50xf32>
    %50 = arith.addf %47, %49 : vector<1x50xf32>
    %51 = math.rsqrt %50 : vector<1x50xf32>
    %52 = arith.mulf %48, %51 : vector<1x50xf32>
    %c0_25 = arith.constant 0 : index
    %c0_26 = arith.constant 0 : index
    %53 = vector.load %arg5[%c0_25, %c0_26] : memref<1x50xf32, #tpu.memory_space<vmem>>, vector<1x50xf32>
    %54 = arith.mulf %43, %52 : vector<1x50xf32>
    %55 = arith.subf %53, %54 : vector<1x50xf32>
    %56 = vector.broadcast %52 : vector<1x50xf32> to vector<50x50xf32>
    %57 = arith.mulf %5, %56 : vector<50x50xf32>
    %58 = vector.broadcast %55 : vector<1x50xf32> to vector<50x50xf32>
    %59 = arith.addf %57, %58 : vector<50x50xf32>
    %60 = vector.broadcast %52 : vector<1x50xf32> to vector<50x50xf32>
    %61 = arith.mulf %9, %60 : vector<50x50xf32>
    %62 = vector.broadcast %55 : vector<1x50xf32> to vector<50x50xf32>
    %63 = arith.addf %61, %62 : vector<50x50xf32>
    %64 = vector.broadcast %52 : vector<1x50xf32> to vector<50x50xf32>
    %65 = arith.mulf %13, %64 : vector<50x50xf32>
    %66 = vector.broadcast %55 : vector<1x50xf32> to vector<50x50xf32>
    %67 = arith.addf %65, %66 : vector<50x50xf32>
    %68 = vector.broadcast %52 : vector<1x50xf32> to vector<50x50xf32>
    %69 = arith.mulf %17, %68 : vector<50x50xf32>
    %70 = vector.broadcast %55 : vector<1x50xf32> to vector<50x50xf32>
    %71 = arith.addf %69, %70 : vector<50x50xf32>
    %72 = arith.maximumf %59, %63 : vector<50x50xf32>
    %73 = arith.maximumf %67, %71 : vector<50x50xf32>
    %74 = arith.maximumf %72, %73 : vector<50x50xf32>
    %cst_27 = arith.constant 0.000000e+00 : f32
    %75 = vector.broadcast %cst_27 : f32 to vector<50x50xf32>
    %76 = arith.maximumf %74, %75 : vector<50x50xf32>
    %c0_28 = arith.constant 0 : index
    %c0_29 = arith.constant 0 : index
    %77 = vector.load %arg6[%c0_28, %c0_29] : memref<50x50xf32, #tpu.memory_space<vmem>>, vector<50x50xf32>
    tpu.vector_store %arg6[%c0_28, %c0_29], %76 {strides = array<i32>} : memref<50x50xf32, #tpu.memory_space<vmem>>, vector<50x50xf32>,
    return
  }
  func.func @transform_0(%arg0: i32) -> (i32, i32, i32) {
    %c0_i32 = arith.constant 0 : i32
    %c0_i32_0 = arith.constant 0 : i32
    %c0_i32_1 = arith.constant 0 : i32
    %c0_i32_2 = arith.constant 0 : i32
    return %c0_i32, %c0_i32_0, %c0_i32_1 : i32, i32, i32
  }
  func.func @transform_1(%arg0: i32) -> (i32, i32) {
    %c0_i32 = arith.constant 0 : i32
    %c0_i32_0 = arith.constant 0 : i32
    %c0_i32_1 = arith.constant 0 : i32
    return %c0_i32, %c0_i32_0 : i32, i32
  }
  func.func @transform_2(%arg0: i32) -> (i32, i32) {
    %c0_i32 = arith.constant 0 : i32
    %c0_i32_0 = arith.constant 0 : i32
    %c0_i32_1 = arith.constant 0 : i32
    return %c0_i32, %c0_i32_0 : i32, i32
  }
  func.func @transform_3(%arg0: i32) -> (i32, i32) {
    %c0_i32 = arith.constant 0 : i32
    %c0_i32_0 = arith.constant 0 : i32
    %c0_i32_1 = arith.constant 0 : i32
    return %c0_i32, %c0_i32_0 : i32, i32
  }
  func.func @transform_4(%arg0: i32) -> (i32, i32) {
    %c0_i32 = arith.constant 0 : i32
    %c0_i32_0 = arith.constant 0 : i32
    %c0_i32_1 = arith.constant 0 : i32
    return %c0_i32, %c0_i32_0 : i32, i32
  }
  func.func @transform_5(%arg0: i32) -> (i32, i32) {
    %c0_i32 = arith.constant 0 : i32
    %c0_i32_0 = arith.constant 0 : i32
    %c0_i32_1 = arith.constant 0 : i32
    return %c0_i32, %c0_i32_0 : i32, i32
  }
}

module attributes {stable_mosaic.version = 11 : i64} {
  func.func @fc_kernel(%arg0: i32, %arg1: memref<2x1250xf32, #tpu.memory_space<vmem>>, %arg2: memref<1250x1024xf32, #tpu.memory_space<vmem>>, %arg3: memref<1x1024xf32, #tpu.memory_space<vmem>>, %arg4: memref<1024x128xf32, #tpu.memory_space<vmem>>, %arg5: memref<1x128xf32, #tpu.memory_space<vmem>>, %arg6: memref<128x10xf32, #tpu.memory_space<vmem>>, %arg7: memref<1x10xf32, #tpu.memory_space<vmem>>, %arg8: memref<2x10xf32, #tpu.memory_space<vmem>>) attributes {dimension_semantics = [#tpu.dimension_semantics<parallel>], iteration_bounds = array<i64: 1>, scalar_prefetch = 0 : i64, scratch_operands = 0 : i64, tpu.core_type = #tpu.core_type<tc>, window_params = [{transform_indices = @transform_0, window_bounds = array<i64: 2, 1250>}, {pipeline_mode = #tpu.pipeline_mode<synchronous>, transform_indices = @transform_1, window_bounds = array<i64: 1250, 1024>}, {pipeline_mode = #tpu.pipeline_mode<synchronous>, transform_indices = @transform_2, window_bounds = array<i64: 1, 1024>}, {pipeline_mode = #tpu.pipeline_mode<synchronous>, transform_indices = @transform_3, window_bounds = array<i64: 1024, 128>}, {pipeline_mode = #tpu.pipeline_mode<synchronous>, transform_indices = @transform_4, window_bounds = array<i64: 1, 128>}, {pipeline_mode = #tpu.pipeline_mode<synchronous>, transform_indices = @transform_5, window_bounds = array<i64: 128, 10>}, {pipeline_mode = #tpu.pipeline_mode<synchronous>, transform_indices = @transform_6, window_bounds = array<i64: 1, 10>}, {transform_indices = @transform_7, window_bounds = array<i64: 2, 10>}]} {
    %c0 = arith.constant 0 : index
    %c0_0 = arith.constant 0 : index
    %0 = vector.load %arg1[%c0, %c0_0] : memref<2x1250xf32, #tpu.memory_space<vmem>>, vector<2x1250xf32>
    %1 = arith.truncf %0 : vector<2x1250xf32> to vector<2x1250xbf16>
    %c0_1 = arith.constant 0 : index
    %c0_2 = arith.constant 0 : index
    %2 = vector.load %arg2[%c0_1, %c0_2] : memref<1250x1024xf32, #tpu.memory_space<vmem>>, vector<1250x1024xf32>
    %3 = arith.truncf %2 : vector<1250x1024xf32> to vector<1250x1024xbf16>
    %cst = arith.constant dense<0.000000e+00> : vector<2x1024xf32>
    %4 = tpu.matmul %1, %3, %cst {dimension_numbers = #tpu.dot_dimension_numbers<[1], [0], [0], [1], [0, 0, 1, 1], [], []>} : vector<2x1250xbf16>, vector<1250x1024xbf16>, vector<2x1024xf32> -> vector<2x1024xf32>
    %c0_3 = arith.constant 0 : index
    %c0_4 = arith.constant 0 : index
    %5 = vector.load %arg3[%c0_3, %c0_4] : memref<1x1024xf32, #tpu.memory_space<vmem>>, vector<1x1024xf32>
    %6 = vector.broadcast %5 : vector<1x1024xf32> to vector<2x1024xf32>
    %7 = arith.addf %4, %6 : vector<2x1024xf32>
    %cst_5 = arith.constant 0.000000e+00 : f32
    %8 = vector.broadcast %cst_5 : f32 to vector<2x1024xf32>
    %9 = arith.maximumf %7, %8 : vector<2x1024xf32>
    %10 = arith.truncf %9 : vector<2x1024xf32> to vector<2x1024xbf16>
    %c0_6 = arith.constant 0 : index
    %c0_7 = arith.constant 0 : index
    %11 = vector.load %arg4[%c0_6, %c0_7] : memref<1024x128xf32, #tpu.memory_space<vmem>>, vector<1024x128xf32>
    %12 = arith.truncf %11 : vector<1024x128xf32> to vector<1024x128xbf16>
    %cst_8 = arith.constant dense<0.000000e+00> : vector<2x128xf32>
    %13 = tpu.matmul %10, %12, %cst_8 {dimension_numbers = #tpu.dot_dimension_numbers<[1], [0], [0], [1], [0, 0, 1, 1], [], []>} : vector<2x1024xbf16>, vector<1024x128xbf16>, vector<2x128xf32> -> vector<2x128xf32>
    %c0_9 = arith.constant 0 : index
    %c0_10 = arith.constant 0 : index
    %14 = vector.load %arg5[%c0_9, %c0_10] : memref<1x128xf32, #tpu.memory_space<vmem>>, vector<1x128xf32>
    %15 = vector.broadcast %14 : vector<1x128xf32> to vector<2x128xf32>
    %16 = arith.addf %13, %15 : vector<2x128xf32>
    %cst_11 = arith.constant 0.000000e+00 : f32
    %17 = vector.broadcast %cst_11 : f32 to vector<2x128xf32>
    %18 = arith.maximumf %16, %17 : vector<2x128xf32>
    %19 = arith.truncf %18 : vector<2x128xf32> to vector<2x128xbf16>
    %c0_12 = arith.constant 0 : index
    %c0_13 = arith.constant 0 : index
    %20 = vector.load %arg6[%c0_12, %c0_13] : memref<128x10xf32, #tpu.memory_space<vmem>>, vector<128x10xf32>
    %21 = arith.truncf %20 : vector<128x10xf32> to vector<128x10xbf16>
    %cst_14 = arith.constant dense<0.000000e+00> : vector<2x10xf32>
    %22 = tpu.matmul %19, %21, %cst_14 {dimension_numbers = #tpu.dot_dimension_numbers<[1], [0], [0], [1], [0, 0, 1, 1], [], []>} : vector<2x128xbf16>, vector<128x10xbf16>, vector<2x10xf32> -> vector<2x10xf32>
    %c0_15 = arith.constant 0 : index
    %c0_16 = arith.constant 0 : index
    %23 = vector.load %arg7[%c0_15, %c0_16] : memref<1x10xf32, #tpu.memory_space<vmem>>, vector<1x10xf32>
    %24 = vector.broadcast %23 : vector<1x10xf32> to vector<2x10xf32>
    %25 = arith.addf %22, %24 : vector<2x10xf32>
    %c0_17 = arith.constant 0 : index
    %c0_18 = arith.constant 0 : index
    %26 = vector.load %arg8[%c0_17, %c0_18] : memref<2x10xf32, #tpu.memory_space<vmem>>, vector<2x10xf32>
    tpu.vector_store %arg8[%c0_17, %c0_18], %25 {strides = array<i32>} : memref<2x10xf32, #tpu.memory_space<vmem>>, vector<2x10xf32>,
    return
  }
  func.func @transform_0(%arg0: i32) -> (i32, i32) {
    %c0_i32 = arith.constant 0 : i32
    %c0_i32_0 = arith.constant 0 : i32
    return %arg0, %c0_i32 : i32, i32
  }
  func.func @transform_1(%arg0: i32) -> (i32, i32) {
    %c0_i32 = arith.constant 0 : i32
    %c0_i32_0 = arith.constant 0 : i32
    %c0_i32_1 = arith.constant 0 : i32
    return %c0_i32, %c0_i32_0 : i32, i32
  }
  func.func @transform_2(%arg0: i32) -> (i32, i32) {
    %c0_i32 = arith.constant 0 : i32
    %c0_i32_0 = arith.constant 0 : i32
    %c0_i32_1 = arith.constant 0 : i32
    return %c0_i32, %c0_i32_0 : i32, i32
  }
  func.func @transform_3(%arg0: i32) -> (i32, i32) {
    %c0_i32 = arith.constant 0 : i32
    %c0_i32_0 = arith.constant 0 : i32
    %c0_i32_1 = arith.constant 0 : i32
    return %c0_i32, %c0_i32_0 : i32, i32
  }
  func.func @transform_4(%arg0: i32) -> (i32, i32) {
    %c0_i32 = arith.constant 0 : i32
    %c0_i32_0 = arith.constant 0 : i32
    %c0_i32_1 = arith.constant 0 : i32
    return %c0_i32, %c0_i32_0 : i32, i32
  }
  func.func @transform_5(%arg0: i32) -> (i32, i32) {
    %c0_i32 = arith.constant 0 : i32
    %c0_i32_0 = arith.constant 0 : i32
    %c0_i32_1 = arith.constant 0 : i32
    return %c0_i32, %c0_i32_0 : i32, i32
  }
  func.func @transform_6(%arg0: i32) -> (i32, i32) {
    %c0_i32 = arith.constant 0 : i32
    %c0_i32_0 = arith.constant 0 : i32
    %c0_i32_1 = arith.constant 0 : i32
    return %c0_i32, %c0_i32_0 : i32, i32
  }
  func.func @transform_7(%arg0: i32) -> (i32, i32) {
    %c0_i32 = arith.constant 0 : i32
    %c0_i32_0 = arith.constant 0 : i32
    return %arg0, %c0_i32 : i32, i32
  }
}

</mosaic_0001>

<llo_original>
// kernel: cnn_forward.3
$region0: #{cnn_forward.3}
  #allocation0 [shape = 'u32[]', space=smem, size = 0x4, offset = 0x4, fixed_abs, tag = 'smem constant byte address 0x4 - core index']
  #allocation1 [shape = 'u32[144,128]{1,0:T(1,128)}', space=vmem, size = 0x12000, scoped, tag = 'internal scratch']
  %s0 = inlined_call_operand.vmem [shape: f32[4,338,9], index: 0, kind: input, shape index: {}]
  %s1 = inlined_call_operand.vmem [shape: f32[9,25], index: 1, kind: input, shape index: {}]
  %s2 = inlined_call_operand.vmem [shape: f32[1,25], index: 2, kind: input, shape index: {}]
  %s3 = inlined_call_operand.vmem [shape: f32[1,25], index: 3, kind: input, shape index: {}]
  %s4 = inlined_call_operand.vmem [shape: f32[338,25], index: 4, kind: output, shape index: {}]
  %s5 = sld [smem:[#allocation0]]
  $region26: #{cnn_forward.3} parent=0
    _
  %s7 = ssub.s32 1, %s5
  %s8 = scalar_select 0, %s7, %s5
  // Predicated region
  $region2: #{cnn_forward.3} parent=0 // pred_check
    _
  $region3: #{cnn_forward.3} parent=0 // pred_check_branch
    %10 = sbr.rel (0) target = $region5
  $region4: #{cnn_forward.3} parent=0 // pred_region
    _
  $region5: #{cnn_forward.3} parent=0 // pred_fallthru
    _
  // Predicated region
  $region6: #{cnn_forward.3} parent=0 // pred_check
    _
  $region7: #{cnn_forward.3} parent=0 // pred_check_branch
    %12 = sbr.rel (0) target = $region9
  $region8: #{cnn_forward.3} parent=0 // pred_region
    _
  $region9: #{cnn_forward.3} parent=0 // pred_fallthru
    _
  // Predicated region
  $region10: #{cnn_forward.3} parent=0 // pred_check
    _
  $region11: #{cnn_forward.3} parent=0 // pred_check_branch
    %14 = sbr.rel (0) target = $region13
  $region12: #{cnn_forward.3} parent=0 // pred_region
    _
  $region13: #{cnn_forward.3} parent=0 // pred_fallthru
    _
  // Predicated region
  $region14: #{cnn_forward.3} parent=0 // pred_check
    _
  $region15: #{cnn_forward.3} parent=0 // pred_check_branch
    %16 = sbr.rel (0) target = $region17
  $region16: #{cnn_forward.3} parent=0 // pred_region
    _
  $region17: #{cnn_forward.3} parent=0 // pred_fallthru
    _
  %v18 = vld [vmem:[%s1] sm:$0xff]
  %v19 = vld [vmem:[%s1 + $0x8] sm:$0x1]
  %v20 = vpack.c.bf16 %v19, %v18
  %v21 = vld [vmem:[%s0] sm:$0xff]
  %v22 = vld [vmem:[%s0 + $0x8] sm:$0xff]
  %v23 = vld [vmem:[%s0 + $0x10] sm:$0xff]
  %v24 = vld [vmem:[%s0 + $0x18] sm:$0xff]
  %v25 = vld [vmem:[%s0 + $0x20] sm:$0xff]
  %v26 = vld [vmem:[%s0 + $0x28] sm:$0xff]
  %v27 = vld [vmem:[%s0 + $0x30] sm:$0xff]
  %v28 = vld [vmem:[%s0 + $0x38] sm:$0xff]
  %v29 = vld [vmem:[%s0 + $0x40] sm:$0xff]
  %v30 = vld [vmem:[%s0 + $0x48] sm:$0xff]
  %v31 = vld [vmem:[%s0 + $0x50] sm:$0xff]
  %v32 = vld [vmem:[%s0 + $0x58] sm:$0xff]
  %v33 = vld [vmem:[%s0 + $0x60] sm:$0xff]
  %v34 = vld [vmem:[%s0 + $0x68] sm:$0xff]
  %v35 = vld [vmem:[%s0 + $0x70] sm:$0xff]
  %v36 = vld [vmem:[%s0 + $0x78] sm:$0xff]
  %v37 = vld [vmem:[%s0 + $0x80] sm:$0xff]
  %v38 = vld [vmem:[%s0 + $0x88] sm:$0xff]
  %v39 = vld [vmem:[%s0 + $0x90] sm:$0xff]
  %v40 = vld [vmem:[%s0 + $0x98] sm:$0xff]
  %v41 = vld [vmem:[%s0 + $0xa0] sm:$0xff]
  %v42 = vld [vmem:[%s0 + $0xa8] sm:$0xff]
  %v43 = vld [vmem:[%s0 + $0xb0] sm:$0xff]
  %v44 = vld [vmem:[%s0 + $0xb8] sm:$0xff]
  %v45 = vld [vmem:[%s0 + $0xc0] sm:$0xff]
  %v46 = vld [vmem:[%s0 + $0xc8] sm:$0xff]
  %v47 = vld [vmem:[%s0 + $0xd0] sm:$0xff]
  %v48 = vld [vmem:[%s0 + $0xd8] sm:$0xff]
  %v49 = vld [vmem:[%s0 + $0xe0] sm:$0xff]
  %v50 = vld [vmem:[%s0 + $0xe8] sm:$0xff]
  %v51 = vld [vmem:[%s0 + $0xf0] sm:$0xff]
  %v52 = vld [vmem:[%s0 + $0xf8] sm:$0xff]
  %v53 = vld [vmem:[%s0 + $0x100] sm:$0xff]
  %v54 = vld [vmem:[%s0 + $0x108] sm:$0xff]
  %v55 = vld [vmem:[%s0 + $0x110] sm:$0xff]
  %v56 = vld [vmem:[%s0 + $0x118] sm:$0xff]
  %v57 = vld [vmem:[%s0 + $0x120] sm:$0xff]
  %v58 = vld [vmem:[%s0 + $0x128] sm:$0xff]
  %v59 = vld [vmem:[%s0 + $0x130] sm:$0xff]
  %v60 = vld [vmem:[%s0 + $0x138] sm:$0xff]
  %v61 = vld [vmem:[%s0 + $0x140] sm:$0xff]
  %v62 = vld [vmem:[%s0 + $0x148] sm:$0xff]
  %v63 = vld [vmem:[%s0 + $0x150] sm:$0x3]
  %v64 = vpack.c.bf16 %v22, %v21
  %v65 = vpack.c.bf16 %v24, %v23
  %v66 = vpack.c.bf16 %v26, %v25
  %v67 = vpack.c.bf16 %v28, %v27
  %v68 = vpack.c.bf16 %v30, %v29
  %v69 = vpack.c.bf16 %v32, %v31
  %v70 = vpack.c.bf16 %v34, %v33
  %v71 = vpack.c.bf16 %v36, %v35
  %v72 = vpack.c.bf16 %v38, %v37
  %v73 = vpack.c.bf16 %v40, %v39
  %v74 = vpack.c.bf16 %v42, %v41
  %v75 = vpack.c.bf16 %v44, %v43
  %v76 = vpack.c.bf16 %v46, %v45
  %v77 = vpack.c.bf16 %v48, %v47
  %v78 = vpack.c.bf16 %v50, %v49
  %v79 = vpack.c.bf16 %v52, %v51
  %v80 = vpack.c.bf16 %v54, %v53
  %v81 = vpack.c.bf16 %v56, %v55
  %v82 = vpack.c.bf16 %v58, %v57
  %v83 = vpack.c.bf16 %v60, %v59
  %v84 = vpack.c.bf16 %v62, %v61
  %v85 = vpack.c.bf16 %v63, %v63
  %vm86 = vcmask 72704
  %v88 = vsel %vm86, %v64, 0
  %v91 = vsel %vm86, %v65, 0
  %v94 = vsel %vm86, %v66, 0
  %v97 = vsel %vm86, %v67, 0
  %v100 = vsel %vm86, %v68, 0
  %v103 = vsel %vm86, %v69, 0
  %v106 = vsel %vm86, %v70, 0
  %v109 = vsel %vm86, %v71, 0
  %v112 = vsel %vm86, %v72, 0
  %v115 = vsel %vm86, %v73, 0
  %v118 = vsel %vm86, %v74, 0
  %v121 = vsel %vm86, %v75, 0
  %v124 = vsel %vm86, %v76, 0
  %v127 = vsel %vm86, %v77, 0
  %v130 = vsel %vm86, %v78, 0
  %v133 = vsel %vm86, %v79, 0
  %v136 = vsel %vm86, %v80, 0
  %v139 = vsel %vm86, %v81, 0
  %v142 = vsel %vm86, %v82, 0
  %v145 = vsel %vm86, %v83, 0
  %v148 = vsel %vm86, %v84, 0
  %v151 = vsel %vm86, %v85, 0
  %vm153 = vcmask 1043456
  %vm154 = vcmask 1044480
  %v155 = vsel %vm153, 4294967295, 65535
  %v156 = vsel %vm154, %v155, 0
  %v158 = vand.u32 %v20, %v156
  %160 = vmatprep.subr.bf16.mxu0 0
  %161 = vmatpush1.bf16.msra.mxu0 0
  %162 = vmatprep.subr.bf16.mxu0 0
  %163 = vmatpush1.bf16.msra.mxu0 0
  %164 = vmatprep.subr.bf16.mxu0 0
  %165 = vmatpush1.bf16.msra.mxu0 0
  %166 = vmatprep.subr.bf16.mxu0 0
  %167 = vmatpush1.bf16.msra.mxu0 0
  %168 = vmatprep.subr.bf16.mxu0 0
  %169 = vmatpush1.bf16.msra.mxu0 0
  %170 = vmatprep.subr.bf16.mxu0 0
  %171 = vmatpush1.bf16.msra.mxu0 0
  %172 = vmatprep.subr.bf16.mxu0 0
  %173 = vmatpush1.bf16.msra.mxu0 0
  %174 = vmatprep.subr.bf16.mxu0 0
  %175 = vmatpush1.bf16.msra.mxu0 %v158
  %176 = vmatprep.subr.bf16.mxu0 0
  %177 = vmatpush2.bf16.msra.mxu0 0
  %178 = vmatprep.subr.bf16.mxu0 0
  %179 = vmatpush2.bf16.msra.mxu0 0
  %180 = vmatprep.subr.bf16.mxu0 0
  %181 = vmatpush2.bf16.msra.mxu0 0
  %182 = vmatprep.subr.bf16.mxu0 0
  %183 = vmatpush2.bf16.msra.mxu0 0
  %184 = vmatprep.subr.bf16.mxu0 0
  %185 = vmatpush2.bf16.msra.mxu0 0
  %186 = vmatprep.subr.bf16.mxu0 0
  %187 = vmatpush2.bf16.msra.mxu0 0
  %188 = vmatprep.subr.bf16.mxu0 0
  %189 = vmatpush2.bf16.msra.mxu0 0
  %190 = vmatprep.subr.bf16.mxu0 0
  %191 = vmatpush2.bf16.msra.mxu0 0
  %192 = vmatprep.mubr.bf16.mxu0 0
  %193 = vmatmul.mubr.bf16.gmra.mxu0 %v88
  %v194 = vpop.f32.mrf.mxu0
  %v195 = vadd.f32 0.0, %v194
  %v196 = vpop.f32.mrf.mxu0
  %v197 = vpop.f32.mrf.mxu0
  %v198 = vadd.f32 0.0, %v197
  %v199 = vpop.f32.mrf.mxu0
  %200 = vmatprep.mubr.bf16.mxu0 0
  %201 = vmatmul.mubr.bf16.gmra.mxu0 %v91
  %v202 = vpop.f32.mrf.mxu0
  %v203 = vadd.f32 0.0, %v202
  %v204 = vpop.f32.mrf.mxu0
  %v205 = vpop.f32.mrf.mxu0
  %v206 = vadd.f32 0.0, %v205
  %v207 = vpop.f32.mrf.mxu0
  %208 = vmatprep.mubr.bf16.mxu0 0
  %209 = vmatmul.mubr.bf16.gmra.mxu0 %v94
  %v210 = vpop.f32.mrf.mxu0
  %v211 = vadd.f32 0.0, %v210
  %v212 = vpop.f32.mrf.mxu0
  %v213 = vpop.f32.mrf.mxu0
  %v214 = vadd.f32 0.0, %v213
  %v215 = vpop.f32.mrf.mxu0
  %216 = vmatprep.mubr.bf16.mxu0 0
  %217 = vmatmul.mubr.bf16.gmra.mxu0 %v97
  %v218 = vpop.f32.mrf.mxu0
  %v219 = vadd.f32 0.0, %v218
  %v220 = vpop.f32.mrf.mxu0
  %v221 = vpop.f32.mrf.mxu0
  %v222 = vadd.f32 0.0, %v221
  %v223 = vpop.f32.mrf.mxu0
  %224 = vmatprep.mubr.bf16.mxu0 0
  %225 = vmatmul.mubr.bf16.gmra.mxu0 %v100
  %v226 = vpop.f32.mrf.mxu0
  %v227 = vadd.f32 0.0, %v226
  %v228 = vpop.f32.mrf.mxu0
  %v229 = vpop.f32.mrf.mxu0
  %v230 = vadd.f32 0.0, %v229
  %v231 = vpop.f32.mrf.mxu0
  %232 = vmatprep.mubr.bf16.mxu0 0
  %233 = vmatmul.mubr.bf16.gmra.mxu0 %v103
  %v234 = vpop.f32.mrf.mxu0
  %v235 = vadd.f32 0.0, %v234
  %v236 = vpop.f32.mrf.mxu0
  %v237 = vpop.f32.mrf.mxu0
  %v238 = vadd.f32 0.0, %v237
  %v239 = vpop.f32.mrf.mxu0
  %240 = vmatprep.mubr.bf16.mxu0 0
  %241 = vmatmul.mubr.bf16.gmra.mxu0 %v106
  %v242 = vpop.f32.mrf.mxu0
  %v243 = vadd.f32 0.0, %v242
  %v244 = vpop.f32.mrf.mxu0
  %v245 = vpop.f32.mrf.mxu0
  %v246 = vadd.f32 0.0, %v245
  %v247 = vpop.f32.mrf.mxu0
  %248 = vmatprep.mubr.bf16.mxu0 0
  %249 = vmatmul.mubr.bf16.gmra.mxu0 %v109
  %v250 = vpop.f32.mrf.mxu0
  %v251 = vadd.f32 0.0, %v250
  %v252 = vpop.f32.mrf.mxu0
  %v253 = vpop.f32.mrf.mxu0
  %v254 = vadd.f32 0.0, %v253
  %v255 = vpop.f32.mrf.mxu0
  %256 = vmatprep.mubr.bf16.mxu0 0
  %257 = vmatmul.mubr.bf16.gmra.mxu0 %v112
  %v258 = vpop.f32.mrf.mxu0
  %v259 = vadd.f32 0.0, %v258
  %v260 = vpop.f32.mrf.mxu0
  %v261 = vpop.f32.mrf.mxu0
  %v262 = vadd.f32 0.0, %v261
  %v263 = vpop.f32.mrf.mxu0
  %264 = vmatprep.mubr.bf16.mxu0 0
  %265 = vmatmul.mubr.bf16.gmra.mxu0 %v115
  %v266 = vpop.f32.mrf.mxu0
  %v267 = vadd.f32 0.0, %v266
  %v268 = vpop.f32.mrf.mxu0
  %v269 = vpop.f32.mrf.mxu0
  %v270 = vadd.f32 0.0, %v269
  %v271 = vpop.f32.mrf.mxu0
  %272 = vmatprep.mubr.bf16.mxu0 0
  %273 = vmatmul.mubr.bf16.gmra.mxu0 %v118
  %v274 = vpop.f32.mrf.mxu0
  %v275 = vadd.f32 0.0, %v274
  %v276 = vpop.f32.mrf.mxu0
  %v277 = vpop.f32.mrf.mxu0
  %v278 = vadd.f32 0.0, %v277
  %v279 = vpop.f32.mrf.mxu0
  %280 = vmatprep.mubr.bf16.mxu0 0
  %281 = vmatmul.mubr.bf16.gmra.mxu0 %v121
  %v282 = vpop.f32.mrf.mxu0
  %v283 = vadd.f32 0.0, %v282
  %v284 = vpop.f32.mrf.mxu0
  %v285 = vpop.f32.mrf.mxu0
  %v286 = vadd.f32 0.0, %v285
  %v287 = vpop.f32.mrf.mxu0
  %288 = vmatprep.mubr.bf16.mxu0 0
  %289 = vmatmul.mubr.bf16.gmra.mxu0 %v124
  %v290 = vpop.f32.mrf.mxu0
  %v291 = vadd.f32 0.0, %v290
  %v292 = vpop.f32.mrf.mxu0
  %v293 = vpop.f32.mrf.mxu0
  %v294 = vadd.f32 0.0, %v293
  %v295 = vpop.f32.mrf.mxu0
  %296 = vmatprep.mubr.bf16.mxu0 0
  %297 = vmatmul.mubr.bf16.gmra.mxu0 %v127
  %v298 = vpop.f32.mrf.mxu0
  %v299 = vadd.f32 0.0, %v298
  %v300 = vpop.f32.mrf.mxu0
  %v301 = vpop.f32.mrf.mxu0
  %v302 = vadd.f32 0.0, %v301
  %v303 = vpop.f32.mrf.mxu0
  %304 = vmatprep.mubr.bf16.mxu0 0
  %305 = vmatmul.mubr.bf16.gmra.mxu0 %v130
  %v306 = vpop.f32.mrf.mxu0
  %v307 = vadd.f32 0.0, %v306
  %v308 = vpop.f32.mrf.mxu0
  %v309 = vpop.f32.mrf.mxu0
  %v310 = vadd.f32 0.0, %v309
  %v311 = vpop.f32.mrf.mxu0
  %312 = vmatprep.mubr.bf16.mxu0 0
  %313 = vmatmul.mubr.bf16.gmra.mxu0 %v133
  %v314 = vpop.f32.mrf.mxu0
  %v315 = vadd.f32 0.0, %v314
  %v316 = vpop.f32.mrf.mxu0
  %v317 = vpop.f32.mrf.mxu0
  %v318 = vadd.f32 0.0, %v317
  %v319 = vpop.f32.mrf.mxu0
  %320 = vmatprep.mubr.bf16.mxu0 0
  %321 = vmatmul.mubr.bf16.gmra.mxu0 %v136
  %v322 = vpop.f32.mrf.mxu0
  %v323 = vadd.f32 0.0, %v322
  %v324 = vpop.f32.mrf.mxu0
  %v325 = vpop.f32.mrf.mxu0
  %v326 = vadd.f32 0.0, %v325
  %v327 = vpop.f32.mrf.mxu0
  %328 = vmatprep.mubr.bf16.mxu0 0
  %329 = vmatmul.mubr.bf16.gmra.mxu0 %v139
  %v330 = vpop.f32.mrf.mxu0
  %v331 = vadd.f32 0.0, %v330
  %v332 = vpop.f32.mrf.mxu0
  %v333 = vpop.f32.mrf.mxu0
  %v334 = vadd.f32 0.0, %v333
  %v335 = vpop.f32.mrf.mxu0
  %336 = vmatprep.mubr.bf16.mxu0 0
  %337 = vmatmul.mubr.bf16.gmra.mxu0 %v142
  %v338 = vpop.f32.mrf.mxu0
  %v339 = vadd.f32 0.0, %v338
  %v340 = vpop.f32.mrf.mxu0
  %v341 = vpop.f32.mrf.mxu0
  %v342 = vadd.f32 0.0, %v341
  %v343 = vpop.f32.mrf.mxu0
  %344 = vmatprep.mubr.bf16.mxu0 0
  %345 = vmatmul.mubr.bf16.gmra.mxu0 %v145
  %v346 = vpop.f32.mrf.mxu0
  %v347 = vadd.f32 0.0, %v346
  %v348 = vpop.f32.mrf.mxu0
  %v349 = vpop.f32.mrf.mxu0
  %v350 = vadd.f32 0.0, %v349
  %v351 = vpop.f32.mrf.mxu0
  %352 = vmatprep.mubr.bf16.mxu0 0
  %353 = vmatmul.mubr.bf16.gmra.mxu0 %v148
  %v354 = vpop.f32.mrf.mxu0
  %v355 = vadd.f32 0.0, %v354
  %v356 = vpop.f32.mrf.mxu0
  %v357 = vpop.f32.mrf.mxu0
  %v358 = vadd.f32 0.0, %v357
  %v359 = vpop.f32.mrf.mxu0
  %360 = vmatprep.mubr.bf16.mxu0 0
  %361 = vmatmul.mubr.bf16.gmra.mxu0 %v151
  %v362 = vpop.f32.mrf.mxu0
  %v363 = vadd.f32 0.0, %v362
  %v364 = vpop.f32.mrf.mxu0
  %v365 = vpop.f32.mrf.mxu0
  %v366 = vpop.f32.mrf.mxu0
  %367 = vdwg.mxu0
  %s368 = scalar_lea.vmem %s0, 344
  %v369 = vld [vmem:[%s368] sm:$0xff]
  %v370 = vld [vmem:[%s368 + $0x8] sm:$0xff]
  %v371 = vld [vmem:[%s368 + $0x10] sm:$0xff]
  %v372 = vld [vmem:[%s368 + $0x18] sm:$0xff]
  %v373 = vld [vmem:[%s368 + $0x20] sm:$0xff]
  %v374 = vld [vmem:[%s368 + $0x28] sm:$0xff]
  %v375 = vld [vmem:[%s368 + $0x30] sm:$0xff]
  %v376 = vld [vmem:[%s368 + $0x38] sm:$0xff]
  %v377 = vld [vmem:[%s368 + $0x40] sm:$0xff]
  %v378 = vld [vmem:[%s368 + $0x48] sm:$0xff]
  %v379 = vld [vmem:[%s368 + $0x50] sm:$0xff]
  %v380 = vld [vmem:[%s368 + $0x58] sm:$0xff]
  %v381 = vld [vmem:[%s368 + $0x60] sm:$0xff]
  %v382 = vld [vmem:[%s368 + $0x68] sm:$0xff]
  %v383 = vld [vmem:[%s368 + $0x70] sm:$0xff]
  %v384 = vld [vmem:[%s368 + $0x78] sm:$0xff]
  %v385 = vld [vmem:[%s368 + $0x80] sm:$0xff]
  %v386 = vld [vmem:[%s368 + $0x88] sm:$0xff]
  %v387 = vld [vmem:[%s368 + $0x90] sm:$0xff]
  %v388 = vld [vmem:[%s368 + $0x98] sm:$0xff]
  %v389 = vld [vmem:[%s368 + $0xa0] sm:$0xff]
  %v390 = vld [vmem:[%s368 + $0xa8] sm:$0xff]
  %v391 = vld [vmem:[%s368 + $0xb0] sm:$0xff]
  %v392 = vld [vmem:[%s368 + $0xb8] sm:$0xff]
  %v393 = vld [vmem:[%s368 + $0xc0] sm:$0xff]
  %v394 = vld [vmem:[%s368 + $0xc8] sm:$0xff]
  %v395 = vld [vmem:[%s368 + $0xd0] sm:$0xff]
  %v396 = vld [vmem:[%s368 + $0xd8] sm:$0xff]
  %v397 = vld [vmem:[%s368 + $0xe0] sm:$0xff]
  %v398 = vld [vmem:[%s368 + $0xe8] sm:$0xff]
  %v399 = vld [vmem:[%s368 + $0xf0] sm:$0xff]
  %v400 = vld [vmem:[%s368 + $0xf8] sm:$0xff]
  %v401 = vld [vmem:[%s368 + $0x100] sm:$0xff]
  %v402 = vld [vmem:[%s368 + $0x108] sm:$0xff]
  %v403 = vld [vmem:[%s368 + $0x110] sm:$0xff]
  %v404 = vld [vmem:[%s368 + $0x118] sm:$0xff]
  %v405 = vld [vmem:[%s368 + $0x120] sm:$0xff]
  %v406 = vld [vmem:[%s368 + $0x128] sm:$0xff]
  %v407 = vld [vmem:[%s368 + $0x130] sm:$0xff]
  %v408 = vld [vmem:[%s368 + $0x138] sm:$0xff]
  %v409 = vld [vmem:[%s368 + $0x140] sm:$0xff]
  %v410 = vld [vmem:[%s368 + $0x148] sm:$0xff]
  %v411 = vld [vmem:[%s368 + $0x150] sm:$0x3]
  %v412 = vpack.c.bf16 %v370, %v369
  %v413 = vpack.c.bf16 %v372, %v371
  %v414 = vpack.c.bf16 %v374, %v373
  %v415 = vpack.c.bf16 %v376, %v375
  %v416 = vpack.c.bf16 %v378, %v377
  %v417 = vpack.c.bf16 %v380, %v379
  %v418 = vpack.c.bf16 %v382, %v381
  %v419 = vpack.c.bf16 %v384, %v383
  %v420 = vpack.c.bf16 %v386, %v385
  %v421 = vpack.c.bf16 %v388, %v387
  %v422 = vpack.c.bf16 %v390, %v389
  %v423 = vpack.c.bf16 %v392, %v391
  %v424 = vpack.c.bf16 %v394, %v393
  %v425 = vpack.c.bf16 %v396, %v395
  %v426 = vpack.c.bf16 %v398, %v397
  %v427 = vpack.c.bf16 %v400, %v399
  %v428 = vpack.c.bf16 %v402, %v401
  %v429 = vpack.c.bf16 %v404, %v403
  %v430 = vpack.c.bf16 %v406, %v405
  %v431 = vpack.c.bf16 %v408, %v407
  %v432 = vpack.c.bf16 %v410, %v409
  %v433 = vpack.c.bf16 %v411, %v411
  %v435 = vsel %vm86, %v412, 0
  %v438 = vsel %vm86, %v413, 0
  %v441 = vsel %vm86, %v414, 0
  %v444 = vsel %vm86, %v415, 0
  %v447 = vsel %vm86, %v416, 0
  %v450 = vsel %vm86, %v417, 0
  %v453 = vsel %vm86, %v418, 0
  %v456 = vsel %vm86, %v419, 0
  %v459 = vsel %vm86, %v420, 0
  %v462 = vsel %vm86, %v421, 0
  %v465 = vsel %vm86, %v422, 0
  %v468 = vsel %vm86, %v423, 0
  %v471 = vsel %vm86, %v424, 0
  %v474 = vsel %vm86, %v425, 0
  %v477 = vsel %vm86, %v426, 0
  %v480 = vsel %vm86, %v427, 0
  %v483 = vsel %vm86, %v428, 0
  %v486 = vsel %vm86, %v429, 0
  %v489 = vsel %vm86, %v430, 0
  %v492 = vsel %vm86, %v431, 0
  %v495 = vsel %vm86, %v432, 0
  %v498 = vsel %vm86, %v433, 0
  %500 = vmatprep.subr.bf16.mxu0 0
  %501 = vmatpush1.bf16.msra.mxu0 0
  %502 = vmatprep.subr.bf16.mxu0 0
  %503 = vmatpush1.bf16.msra.mxu0 0
  %504 = vmatprep.subr.bf16.mxu0 0
  %505 = vmatpush1.bf16.msra.mxu0 0
  %506 = vmatprep.subr.bf16.mxu0 0
  %507 = vmatpush1.bf16.msra.mxu0 0
  %508 = vmatprep.subr.bf16.mxu0 0
  %509 = vmatpush1.bf16.msra.mxu0 0
  %510 = vmatprep.subr.bf16.mxu0 0
  %511 = vmatpush1.bf16.msra.mxu0 0
  %512 = vmatprep.subr.bf16.mxu0 0
  %513 = vmatpush1.bf16.msra.mxu0 0
  %514 = vmatprep.subr.bf16.mxu0 0
  %515 = vmatpush1.bf16.msra.mxu0 %v158
  %516 = vmatprep.subr.bf16.mxu0 0
  %517 = vmatpush2.bf16.msra.mxu0 0
  %518 = vmatprep.subr.bf16.mxu0 0
  %519 = vmatpush2.bf16.msra.mxu0 0
  %520 = vmatprep.subr.bf16.mxu0 0
  %521 = vmatpush2.bf16.msra.mxu0 0
  %522 = vmatprep.subr.bf16.mxu0 0
  %523 = vmatpush2.bf16.msra.mxu0 0
  %524 = vmatprep.subr.bf16.mxu0 0
  %525 = vmatpush2.bf16.msra.mxu0 0
  %526 = vmatprep.subr.bf16.mxu0 0
  %527 = vmatpush2.bf16.msra.mxu0 0
  %528 = vmatprep.subr.bf16.mxu0 0
  %529 = vmatpush2.bf16.msra.mxu0 0
  %530 = vmatprep.subr.bf16.mxu0 0
  %531 = vmatpush2.bf16.msra.mxu0 0
  %532 = vmatprep.mubr.bf16.mxu0 0
  %533 = vmatmul.mubr.bf16.gmra.mxu0 %v435
  %v534 = vpop.f32.mrf.mxu0
  %v535 = vadd.f32 0.0, %v534
  %v536 = vpop.f32.mrf.mxu0
  %v537 = vpop.f32.mrf.mxu0
  %v538 = vadd.f32 0.0, %v537
  %v539 = vpop.f32.mrf.mxu0
  %540 = vmatprep.mubr.bf16.mxu0 0
  %541 = vmatmul.mubr.bf16.gmra.mxu0 %v438
  %v542 = vpop.f32.mrf.mxu0
  %v543 = vadd.f32 0.0, %v542
  %v544 = vpop.f32.mrf.mxu0
  %v545 = vpop.f32.mrf.mxu0
  %v546 = vadd.f32 0.0, %v545
  %v547 = vpop.f32.mrf.mxu0
  %548 = vmatprep.mubr.bf16.mxu0 0
  %549 = vmatmul.mubr.bf16.gmra.mxu0 %v441
  %v550 = vpop.f32.mrf.mxu0
  %v551 = vadd.f32 0.0, %v550
  %v552 = vpop.f32.mrf.mxu0
  %v553 = vpop.f32.mrf.mxu0
  %v554 = vadd.f32 0.0, %v553
  %v555 = vpop.f32.mrf.mxu0
  %556 = vmatprep.mubr.bf16.mxu0 0
  %557 = vmatmul.mubr.bf16.gmra.mxu0 %v444
  %v558 = vpop.f32.mrf.mxu0
  %v559 = vadd.f32 0.0, %v558
  %v560 = vpop.f32.mrf.mxu0
  %v561 = vpop.f32.mrf.mxu0
  %v562 = vadd.f32 0.0, %v561
  %v563 = vpop.f32.mrf.mxu0
  %564 = vmatprep.mubr.bf16.mxu0 0
  %565 = vmatmul.mubr.bf16.gmra.mxu0 %v447
  %v566 = vpop.f32.mrf.mxu0
  %v567 = vadd.f32 0.0, %v566
  %v568 = vpop.f32.mrf.mxu0
  %v569 = vpop.f32.mrf.mxu0
  %v570 = vadd.f32 0.0, %v569
  %v571 = vpop.f32.mrf.mxu0
  %572 = vmatprep.mubr.bf16.mxu0 0
  %573 = vmatmul.mubr.bf16.gmra.mxu0 %v450
  %v574 = vpop.f32.mrf.mxu0
  %v575 = vadd.f32 0.0, %v574
  %v576 = vpop.f32.mrf.mxu0
  %v577 = vpop.f32.mrf.mxu0
  %v578 = vadd.f32 0.0, %v577
  %v579 = vpop.f32.mrf.mxu0
  %580 = vmatprep.mubr.bf16.mxu0 0
  %581 = vmatmul.mubr.bf16.gmra.mxu0 %v453
  %v582 = vpop.f32.mrf.mxu0
  %v583 = vadd.f32 0.0, %v582
  %v584 = vpop.f32.mrf.mxu0
  %v585 = vpop.f32.mrf.mxu0
  %v586 = vadd.f32 0.0, %v585
  %v587 = vpop.f32.mrf.mxu0
  %588 = vmatprep.mubr.bf16.mxu0 0
  %589 = vmatmul.mubr.bf16.gmra.mxu0 %v456
  %v590 = vpop.f32.mrf.mxu0
  %v591 = vadd.f32 0.0, %v590
  %v592 = vpop.f32.mrf.mxu0
  %v593 = vpop.f32.mrf.mxu0
  %v594 = vadd.f32 0.0, %v593
  %v595 = vpop.f32.mrf.mxu0
  %596 = vmatprep.mubr.bf16.mxu0 0
  %597 = vmatmul.mubr.bf16.gmra.mxu0 %v459
  %v598 = vpop.f32.mrf.mxu0
  %v599 = vadd.f32 0.0, %v598
  %v600 = vpop.f32.mrf.mxu0
  %v601 = vpop.f32.mrf.mxu0
  %v602 = vadd.f32 0.0, %v601
  %v603 = vpop.f32.mrf.mxu0
  %604 = vmatprep.mubr.bf16.mxu0 0
  %605 = vmatmul.mubr.bf16.gmra.mxu0 %v462
  %v606 = vpop.f32.mrf.mxu0
  %v607 = vadd.f32 0.0, %v606
  %v608 = vpop.f32.mrf.mxu0
  %v609 = vpop.f32.mrf.mxu0
  %v610 = vadd.f32 0.0, %v609
  %v611 = vpop.f32.mrf.mxu0
  %612 = vmatprep.mubr.bf16.mxu0 0
  %613 = vmatmul.mubr.bf16.gmra.mxu0 %v465
  %v614 = vpop.f32.mrf.mxu0
  %v615 = vadd.f32 0.0, %v614
  %v616 = vpop.f32.mrf.mxu0
  %v617 = vpop.f32.mrf.mxu0
  %v618 = vadd.f32 0.0, %v617
  %v619 = vpop.f32.mrf.mxu0
  %620 = vmatprep.mubr.bf16.mxu0 0
  %621 = vmatmul.mubr.bf16.gmra.mxu0 %v468
  %v622 = vpop.f32.mrf.mxu0
  %v623 = vadd.f32 0.0, %v622
  %v624 = vpop.f32.mrf.mxu0
  %v625 = vpop.f32.mrf.mxu0
  %v626 = vadd.f32 0.0, %v625
  %v627 = vpop.f32.mrf.mxu0
  %628 = vmatprep.mubr.bf16.mxu0 0
  %629 = vmatmul.mubr.bf16.gmra.mxu0 %v471
  %v630 = vpop.f32.mrf.mxu0
  %v631 = vadd.f32 0.0, %v630
  %v632 = vpop.f32.mrf.mxu0
  %v633 = vpop.f32.mrf.mxu0
  %v634 = vadd.f32 0.0, %v633
  %v635 = vpop.f32.mrf.mxu0
  %636 = vmatprep.mubr.bf16.mxu0 0
  %637 = vmatmul.mubr.bf16.gmra.mxu0 %v474
  %v638 = vpop.f32.mrf.mxu0
  %v639 = vadd.f32 0.0, %v638
  %v640 = vpop.f32.mrf.mxu0
  %v641 = vpop.f32.mrf.mxu0
  %v642 = vadd.f32 0.0, %v641
  %v643 = vpop.f32.mrf.mxu0
  %644 = vmatprep.mubr.bf16.mxu0 0
  %645 = vmatmul.mubr.bf16.gmra.mxu0 %v477
  %v646 = vpop.f32.mrf.mxu0
  %v647 = vadd.f32 0.0, %v646
  %v648 = vpop.f32.mrf.mxu0
  %v649 = vpop.f32.mrf.mxu0
  %v650 = vadd.f32 0.0, %v649
  %v651 = vpop.f32.mrf.mxu0
  %652 = vmatprep.mubr.bf16.mxu0 0
  %653 = vmatmul.mubr.bf16.gmra.mxu0 %v480
  %v654 = vpop.f32.mrf.mxu0
  %v655 = vadd.f32 0.0, %v654
  %v656 = vpop.f32.mrf.mxu0
  %v657 = vpop.f32.mrf.mxu0
  %v658 = vadd.f32 0.0, %v657
  %v659 = vpop.f32.mrf.mxu0
  %660 = vmatprep.mubr.bf16.mxu0 0
  %661 = vmatmul.mubr.bf16.gmra.mxu0 %v483
  %v662 = vpop.f32.mrf.mxu0
  %v663 = vadd.f32 0.0, %v662
  %v664 = vpop.f32.mrf.mxu0
  %v665 = vpop.f32.mrf.mxu0
  %v666 = vadd.f32 0.0, %v665
  %v667 = vpop.f32.mrf.mxu0
  %668 = vmatprep.mubr.bf16.mxu0 0
  %669 = vmatmul.mubr.bf16.gmra.mxu0 %v486
  %v670 = vpop.f32.mrf.mxu0
  %v671 = vadd.f32 0.0, %v670
  %v672 = vpop.f32.mrf.mxu0
  %v673 = vpop.f32.mrf.mxu0
  %v674 = vadd.f32 0.0, %v673
  %v675 = vpop.f32.mrf.mxu0
  %676 = vmatprep.mubr.bf16.mxu0 0
  %677 = vmatmul.mubr.bf16.gmra.mxu0 %v489
  %v678 = vpop.f32.mrf.mxu0
  %v679 = vadd.f32 0.0, %v678
  %v680 = vpop.f32.mrf.mxu0
  %v681 = vpop.f32.mrf.mxu0
  %v682 = vadd.f32 0.0, %v681
  %v683 = vpop.f32.mrf.mxu0
  %684 = vmatprep.mubr.bf16.mxu0 0
  %685 = vmatmul.mubr.bf16.gmra.mxu0 %v492
  %v686 = vpop.f32.mrf.mxu0
  %v687 = vadd.f32 0.0, %v686
  %v688 = vpop.f32.mrf.mxu0
  %v689 = vpop.f32.mrf.mxu0
  %v690 = vadd.f32 0.0, %v689
  %v691 = vpop.f32.mrf.mxu0
  %692 = vmatprep.mubr.bf16.mxu0 0
  %693 = vmatmul.mubr.bf16.gmra.mxu0 %v495
  %v694 = vpop.f32.mrf.mxu0
  %v695 = vadd.f32 0.0, %v694
  %v696 = vpop.f32.mrf.mxu0
  %v697 = vpop.f32.mrf.mxu0
  %v698 = vadd.f32 0.0, %v697
  %v699 = vpop.f32.mrf.mxu0
  %700 = vmatprep.mubr.bf16.mxu0 0
  %701 = vmatmul.mubr.bf16.gmra.mxu0 %v498
  %v702 = vpop.f32.mrf.mxu0
  %v703 = vadd.f32 0.0, %v702
  %v704 = vpop.f32.mrf.mxu0
  %v705 = vpop.f32.mrf.mxu0
  %v706 = vpop.f32.mrf.mxu0
  %707 = vdwg.mxu0
  %s708 = scalar_lea.vmem %s0, 688
  %v709 = vld [vmem:[%s708] sm:$0xff]
  %v710 = vld [vmem:[%s708 + $0x8] sm:$0xff]
  %v711 = vld [vmem:[%s708 + $0x10] sm:$0xff]
  %v712 = vld [vmem:[%s708 + $0x18] sm:$0xff]
  %v713 = vld [vmem:[%s708 + $0x20] sm:$0xff]
  %v714 = vld [vmem:[%s708 + $0x28] sm:$0xff]
  %v715 = vld [vmem:[%s708 + $0x30] sm:$0xff]
  %v716 = vld [vmem:[%s708 + $0x38] sm:$0xff]
  %v717 = vld [vmem:[%s708 + $0x40] sm:$0xff]
  %v718 = vld [vmem:[%s708 + $0x48] sm:$0xff]
  %v719 = vld [vmem:[%s708 + $0x50] sm:$0xff]
  %v720 = vld [vmem:[%s708 + $0x58] sm:$0xff]
  %v721 = vld [vmem:[%s708 + $0x60] sm:$0xff]
  %v722 = vld [vmem:[%s708 + $0x68] sm:$0xff]
  %v723 = vld [vmem:[%s708 + $0x70] sm:$0xff]
  %v724 = vld [vmem:[%s708 + $0x78] sm:$0xff]
  %v725 = vld [vmem:[%s708 + $0x80] sm:$0xff]
  %v726 = vld [vmem:[%s708 + $0x88] sm:$0xff]
  %v727 = vld [vmem:[%s708 + $0x90] sm:$0xff]
  %v728 = vld [vmem:[%s708 + $0x98] sm:$0xff]
  %v729 = vld [vmem:[%s708 + $0xa0] sm:$0xff]
  %v730 = vld [vmem:[%s708 + $0xa8] sm:$0xff]
  %v731 = vld [vmem:[%s708 + $0xb0] sm:$0xff]
  %v732 = vld [vmem:[%s708 + $0xb8] sm:$0xff]
  %v733 = vld [vmem:[%s708 + $0xc0] sm:$0xff]
  %v734 = vld [vmem:[%s708 + $0xc8] sm:$0xff]
  %v735 = vld [vmem:[%s708 + $0xd0] sm:$0xff]
  %v736 = vld [vmem:[%s708 + $0xd8] sm:$0xff]
  %v737 = vld [vmem:[%s708 + $0xe0] sm:$0xff]
  %v738 = vld [vmem:[%s708 + $0xe8] sm:$0xff]
  %v739 = vld [vmem:[%s708 + $0xf0] sm:$0xff]
  %v740 = vld [vmem:[%s708 + $0xf8] sm:$0xff]
  %v741 = vld [vmem:[%s708 + $0x100] sm:$0xff]
  %v742 = vld [vmem:[%s708 + $0x108] sm:$0xff]
  %v743 = vld [vmem:[%s708 + $0x110] sm:$0xff]
  %v744 = vld [vmem:[%s708 + $0x118] sm:$0xff]
  %v745 = vld [vmem:[%s708 + $0x120] sm:$0xff]
  %v746 = vld [vmem:[%s708 + $0x128] sm:$0xff]
  %v747 = vld [vmem:[%s708 + $0x130] sm:$0xff]
  %v748 = vld [vmem:[%s708 + $0x138] sm:$0xff]
  %v749 = vld [vmem:[%s708 + $0x140] sm:$0xff]
  %v750 = vld [vmem:[%s708 + $0x148] sm:$0xff]
  %v751 = vld [vmem:[%s708 + $0x150] sm:$0x3]
  %v752 = vpack.c.bf16 %v710, %v709
  %v753 = vpack.c.bf16 %v712, %v711
  %v754 = vpack.c.bf16 %v714, %v713
  %v755 = vpack.c.bf16 %v716, %v715
  %v756 = vpack.c.bf16 %v718, %v717
  %v757 = vpack.c.bf16 %v720, %v719
  %v758 = vpack.c.bf16 %v722, %v721
  %v759 = vpack.c.bf16 %v724, %v723
  %v760 = vpack.c.bf16 %v726, %v725
  %v761 = vpack.c.bf16 %v728, %v727
  %v762 = vpack.c.bf16 %v730, %v729
  %v763 = vpack.c.bf16 %v732, %v731
  %v764 = vpack.c.bf16 %v734, %v733
  %v765 = vpack.c.bf16 %v736, %v735
  %v766 = vpack.c.bf16 %v738, %v737
  %v767 = vpack.c.bf16 %v740, %v739
  %v768 = vpack.c.bf16 %v742, %v741
  %v769 = vpack.c.bf16 %v744, %v743
  %v770 = vpack.c.bf16 %v746, %v745
  %v771 = vpack.c.bf16 %v748, %v747
  %v772 = vpack.c.bf16 %v750, %v749
  %v773 = vpack.c.bf16 %v751, %v751
  %v775 = vsel %vm86, %v752, 0
  %v778 = vsel %vm86, %v753, 0
  %v781 = vsel %vm86, %v754, 0
  %v784 = vsel %vm86, %v755, 0
  %v787 = vsel %vm86, %v756, 0
  %v790 = vsel %vm86, %v757, 0
  %v793 = vsel %vm86, %v758, 0
  %v796 = vsel %vm86, %v759, 0
  %v799 = vsel %vm86, %v760, 0
  %v802 = vsel %vm86, %v761, 0
  %v805 = vsel %vm86, %v762, 0
  %v808 = vsel %vm86, %v763, 0
  %v811 = vsel %vm86, %v764, 0
  %v814 = vsel %vm86, %v765, 0
  %v817 = vsel %vm86, %v766, 0
  %v820 = vsel %vm86, %v767, 0
  %v823 = vsel %vm86, %v768, 0
  %v826 = vsel %vm86, %v769, 0
  %v829 = vsel %vm86, %v770, 0
  %v832 = vsel %vm86, %v771, 0
  %v835 = vsel %vm86, %v772, 0
  %v838 = vsel %vm86, %v773, 0
  %840 = vmatprep.subr.bf16.mxu0 0
  %841 = vmatpush1.bf16.msra.mxu0 0
  %842 = vmatprep.subr.bf16.mxu0 0
  %843 = vmatpush1.bf16.msra.mxu0 0
  %844 = vmatprep.subr.bf16.mxu0 0
  %845 = vmatpush1.bf16.msra.mxu0 0
  %846 = vmatprep.subr.bf16.mxu0 0
  %847 = vmatpush1.bf16.msra.mxu0 0
  %848 = vmatprep.subr.bf16.mxu0 0
  %849 = vmatpush1.bf16.msra.mxu0 0
  %850 = vmatprep.subr.bf16.mxu0 0
  %851 = vmatpush1.bf16.msra.mxu0 0
  %852 = vmatprep.subr.bf16.mxu0 0
  %853 = vmatpush1.bf16.msra.mxu0 0
  %854 = vmatprep.subr.bf16.mxu0 0
  %855 = vmatpush1.bf16.msra.mxu0 %v158
  %856 = vmatprep.subr.bf16.mxu0 0
  %857 = vmatpush2.bf16.msra.mxu0 0
  %858 = vmatprep.subr.bf16.mxu0 0
  %859 = vmatpush2.bf16.msra.mxu0 0
  %860 = vmatprep.subr.bf16.mxu0 0
  %861 = vmatpush2.bf16.msra.mxu0 0
  %862 = vmatprep.subr.bf16.mxu0 0
  %863 = vmatpush2.bf16.msra.mxu0 0
  %864 = vmatprep.subr.bf16.mxu0 0
  %865 = vmatpush2.bf16.msra.mxu0 0
  %866 = vmatprep.subr.bf16.mxu0 0
  %867 = vmatpush2.bf16.msra.mxu0 0
  %868 = vmatprep.subr.bf16.mxu0 0
  %869 = vmatpush2.bf16.msra.mxu0 0
  %870 = vmatprep.subr.bf16.mxu0 0
  %871 = vmatpush2.bf16.msra.mxu0 0
  %872 = vmatprep.mubr.bf16.mxu0 0
  %873 = vmatmul.mubr.bf16.gmra.mxu0 %v775
  %v874 = vpop.f32.mrf.mxu0
  %v875 = vadd.f32 0.0, %v874
  %v876 = vpop.f32.mrf.mxu0
  %v877 = vpop.f32.mrf.mxu0
  %v878 = vadd.f32 0.0, %v877
  %v879 = vpop.f32.mrf.mxu0
  %880 = vmatprep.mubr.bf16.mxu0 0
  %881 = vmatmul.mubr.bf16.gmra.mxu0 %v778
  %v882 = vpop.f32.mrf.mxu0
  %v883 = vadd.f32 0.0, %v882
  %v884 = vpop.f32.mrf.mxu0
  %v885 = vpop.f32.mrf.mxu0
  %v886 = vadd.f32 0.0, %v885
  %v887 = vpop.f32.mrf.mxu0
  %888 = vmatprep.mubr.bf16.mxu0 0
  %889 = vmatmul.mubr.bf16.gmra.mxu0 %v781
  %v890 = vpop.f32.mrf.mxu0
  %v891 = vadd.f32 0.0, %v890
  %v892 = vpop.f32.mrf.mxu0
  %v893 = vpop.f32.mrf.mxu0
  %v894 = vadd.f32 0.0, %v893
  %v895 = vpop.f32.mrf.mxu0
  %896 = vmatprep.mubr.bf16.mxu0 0
  %897 = vmatmul.mubr.bf16.gmra.mxu0 %v784
  %v898 = vpop.f32.mrf.mxu0
  %v899 = vadd.f32 0.0, %v898
  %v900 = vpop.f32.mrf.mxu0
  %v901 = vpop.f32.mrf.mxu0
  %v902 = vadd.f32 0.0, %v901
  %v903 = vpop.f32.mrf.mxu0
  %904 = vmatprep.mubr.bf16.mxu0 0
  %905 = vmatmul.mubr.bf16.gmra.mxu0 %v787
  %v906 = vpop.f32.mrf.mxu0
  %v907 = vadd.f32 0.0, %v906
  %v908 = vpop.f32.mrf.mxu0
  %v909 = vpop.f32.mrf.mxu0
  %v910 = vadd.f32 0.0, %v909
  %v911 = vpop.f32.mrf.mxu0
  %912 = vmatprep.mubr.bf16.mxu0 0
  %913 = vmatmul.mubr.bf16.gmra.mxu0 %v790
  %v914 = vpop.f32.mrf.mxu0
  %v915 = vadd.f32 0.0, %v914
  %v916 = vpop.f32.mrf.mxu0
  %v917 = vpop.f32.mrf.mxu0
  %v918 = vadd.f32 0.0, %v917
  %v919 = vpop.f32.mrf.mxu0
  %920 = vmatprep.mubr.bf16.mxu0 0
  %921 = vmatmul.mubr.bf16.gmra.mxu0 %v793
  %v922 = vpop.f32.mrf.mxu0
  %v923 = vadd.f32 0.0, %v922
  %v924 = vpop.f32.mrf.mxu0
  %v925 = vpop.f32.mrf.mxu0
  %v926 = vadd.f32 0.0, %v925
  %v927 = vpop.f32.mrf.mxu0
  %928 = vmatprep.mubr.bf16.mxu0 0
  %929 = vmatmul.mubr.bf16.gmra.mxu0 %v796
  %v930 = vpop.f32.mrf.mxu0
  %v931 = vadd.f32 0.0, %v930
  %v932 = vpop.f32.mrf.mxu0
  %v933 = vpop.f32.mrf.mxu0
  %v934 = vadd.f32 0.0, %v933
  %v935 = vpop.f32.mrf.mxu0
  %936 = vmatprep.mubr.bf16.mxu0 0
  %937 = vmatmul.mubr.bf16.gmra.mxu0 %v799
  %v938 = vpop.f32.mrf.mxu0
  %v939 = vadd.f32 0.0, %v938
  %v940 = vpop.f32.mrf.mxu0
  %v941 = vpop.f32.mrf.mxu0
  %v942 = vadd.f32 0.0, %v941
  %v943 = vpop.f32.mrf.mxu0
  %944 = vmatprep.mubr.bf16.mxu0 0
  %945 = vmatmul.mubr.bf16.gmra.mxu0 %v802
  %v946 = vpop.f32.mrf.mxu0
  %v947 = vadd.f32 0.0, %v946
  %v948 = vpop.f32.mrf.mxu0
  %v949 = vpop.f32.mrf.mxu0
  %v950 = vadd.f32 0.0, %v949
  %v951 = vpop.f32.mrf.mxu0
  %952 = vmatprep.mubr.bf16.mxu0 0
  %953 = vmatmul.mubr.bf16.gmra.mxu0 %v805
  %v954 = vpop.f32.mrf.mxu0
  %v955 = vadd.f32 0.0, %v954
  %v956 = vpop.f32.mrf.mxu0
  %v957 = vpop.f32.mrf.mxu0
  %v958 = vadd.f32 0.0, %v957
  %v959 = vpop.f32.mrf.mxu0
  %960 = vmatprep.mubr.bf16.mxu0 0
  %961 = vmatmul.mubr.bf16.gmra.mxu0 %v808
  %v962 = vpop.f32.mrf.mxu0
  %v963 = vadd.f32 0.0, %v962
  %v964 = vpop.f32.mrf.mxu0
  %v965 = vpop.f32.mrf.mxu0
  %v966 = vadd.f32 0.0, %v965
  %v967 = vpop.f32.mrf.mxu0
  %968 = vmatprep.mubr.bf16.mxu0 0
  %969 = vmatmul.mubr.bf16.gmra.mxu0 %v811
  %v970 = vpop.f32.mrf.mxu0
  %v971 = vadd.f32 0.0, %v970
  %v972 = vpop.f32.mrf.mxu0
  %v973 = vpop.f32.mrf.mxu0
  %v974 = vadd.f32 0.0, %v973
  %v975 = vpop.f32.mrf.mxu0
  %976 = vmatprep.mubr.bf16.mxu0 0
  %977 = vmatmul.mubr.bf16.gmra.mxu0 %v814
  %v978 = vpop.f32.mrf.mxu0
  %v979 = vadd.f32 0.0, %v978
  %v980 = vpop.f32.mrf.mxu0
  %v981 = vpop.f32.mrf.mxu0
  %v982 = vadd.f32 0.0, %v981
  %v983 = vpop.f32.mrf.mxu0
  %984 = vmatprep.mubr.bf16.mxu0 0
  %985 = vmatmul.mubr.bf16.gmra.mxu0 %v817
  %v986 = vpop.f32.mrf.mxu0
  %v987 = vadd.f32 0.0, %v986
  %v988 = vpop.f32.mrf.mxu0
  %v989 = vpop.f32.mrf.mxu0
  %v990 = vadd.f32 0.0, %v989
  %v991 = vpop.f32.mrf.mxu0
  %992 = vmatprep.mubr.bf16.mxu0 0
  %993 = vmatmul.mubr.bf16.gmra.mxu0 %v820
  %v994 = vpop.f32.mrf.mxu0
  %v995 = vadd.f32 0.0, %v994
  %v996 = vpop.f32.mrf.mxu0
  %v997 = vpop.f32.mrf.mxu0
  %v998 = vadd.f32 0.0, %v997
  %v999 = vpop.f32.mrf.mxu0
  %1000 = vmatprep.mubr.bf16.mxu0 0
  %1001 = vmatmul.mubr.bf16.gmra.mxu0 %v823
  %v1002 = vpop.f32.mrf.mxu0
  %v1003 = vadd.f32 0.0, %v1002
  %v1004 = vpop.f32.mrf.mxu0
  %v1005 = vpop.f32.mrf.mxu0
  %v1006 = vadd.f32 0.0, %v1005
  %v1007 = vpop.f32.mrf.mxu0
  %1008 = vmatprep.mubr.bf16.mxu0 0
  %1009 = vmatmul.mubr.bf16.gmra.mxu0 %v826
  %v1010 = vpop.f32.mrf.mxu0
  %v1011 = vadd.f32 0.0, %v1010
  %v1012 = vpop.f32.mrf.mxu0
  %v1013 = vpop.f32.mrf.mxu0
  %v1014 = vadd.f32 0.0, %v1013
  %v1015 = vpop.f32.mrf.mxu0
  %1016 = vmatprep.mubr.bf16.mxu0 0
  %1017 = vmatmul.mubr.bf16.gmra.mxu0 %v829
  %v1018 = vpop.f32.mrf.mxu0
  %v1019 = vadd.f32 0.0, %v1018
  %v1020 = vpop.f32.mrf.mxu0
  %v1021 = vpop.f32.mrf.mxu0
  %v1022 = vadd.f32 0.0, %v1021
  %v1023 = vpop.f32.mrf.mxu0
  %1024 = vmatprep.mubr.bf16.mxu0 0
  %1025 = vmatmul.mubr.bf16.gmra.mxu0 %v832
  %v1026 = vpop.f32.mrf.mxu0
  %v1027 = vadd.f32 0.0, %v1026
  %v1028 = vpop.f32.mrf.mxu0
  %v1029 = vpop.f32.mrf.mxu0
  %v1030 = vadd.f32 0.0, %v1029
  %v1031 = vpop.f32.mrf.mxu0
  %1032 = vmatprep.mubr.bf16.mxu0 0
  %1033 = vmatmul.mubr.bf16.gmra.mxu0 %v835
  %v1034 = vpop.f32.mrf.mxu0
  %v1035 = vadd.f32 0.0, %v1034
  %v1036 = vpop.f32.mrf.mxu0
  %v1037 = vpop.f32.mrf.mxu0
  %v1038 = vadd.f32 0.0, %v1037
  %v1039 = vpop.f32.mrf.mxu0
  %1040 = vmatprep.mubr.bf16.mxu0 0
  %1041 = vmatmul.mubr.bf16.gmra.mxu0 %v838
  %v1042 = vpop.f32.mrf.mxu0
  %v1043 = vadd.f32 0.0, %v1042
  %v1044 = vpop.f32.mrf.mxu0
  %v1045 = vpop.f32.mrf.mxu0
  %v1046 = vpop.f32.mrf.mxu0
  %1047 = vdwg.mxu0
  %s1048 = scalar_lea.vmem %s0, 1032
  %v1049 = vld [vmem:[%s1048] sm:$0xff]
  %v1050 = vld [vmem:[%s1048 + $0x8] sm:$0xff]
  %v1051 = vld [vmem:[%s1048 + $0x10] sm:$0xff]
  %v1052 = vld [vmem:[%s1048 + $0x18] sm:$0xff]
  %v1053 = vld [vmem:[%s1048 + $0x20] sm:$0xff]
  %v1054 = vld [vmem:[%s1048 + $0x28] sm:$0xff]
  %v1055 = vld [vmem:[%s1048 + $0x30] sm:$0xff]
  %v1056 = vld [vmem:[%s1048 + $0x38] sm:$0xff]
  %v1057 = vld [vmem:[%s1048 + $0x40] sm:$0xff]
  %v1058 = vld [vmem:[%s1048 + $0x48] sm:$0xff]
  %v1059 = vld [vmem:[%s1048 + $0x50] sm:$0xff]
  %v1060 = vld [vmem:[%s1048 + $0x58] sm:$0xff]
  %v1061 = vld [vmem:[%s1048 + $0x60] sm:$0xff]
  %v1062 = vld [vmem:[%s1048 + $0x68] sm:$0xff]
  %v1063 = vld [vmem:[%s1048 + $0x70] sm:$0xff]
  %v1064 = vld [vmem:[%s1048 + $0x78] sm:$0xff]
  %v1065 = vld [vmem:[%s1048 + $0x80] sm:$0xff]
  %v1066 = vld [vmem:[%s1048 + $0x88] sm:$0xff]
  %v1067 = vld [vmem:[%s1048 + $0x90] sm:$0xff]
  %v1068 = vld [vmem:[%s1048 + $0x98] sm:$0xff]
  %v1069 = vld [vmem:[%s1048 + $0xa0] sm:$0xff]
  %v1070 = vld [vmem:[%s1048 + $0xa8] sm:$0xff]
  %v1071 = vld [vmem:[%s1048 + $0xb0] sm:$0xff]
  %v1072 = vld [vmem:[%s1048 + $0xb8] sm:$0xff]
  %v1073 = vld [vmem:[%s1048 + $0xc0] sm:$0xff]
  %v1074 = vld [vmem:[%s1048 + $0xc8] sm:$0xff]
  %v1075 = vld [vmem:[%s1048 + $0xd0] sm:$0xff]
  %v1076 = vld [vmem:[%s1048 + $0xd8] sm:$0xff]
  %v1077 = vld [vmem:[%s1048 + $0xe0] sm:$0xff]
  %v1078 = vld [vmem:[%s1048 + $0xe8] sm:$0xff]
  %v1079 = vld [vmem:[%s1048 + $0xf0] sm:$0xff]
  %v1080 = vld [vmem:[%s1048 + $0xf8] sm:$0xff]
  %v1081 = vld [vmem:[%s1048 + $0x100] sm:$0xff]
  %v1082 = vld [vmem:[%s1048 + $0x108] sm:$0xff]
  %v1083 = vld [vmem:[%s1048 + $0x110] sm:$0xff]
  %v1084 = vld [vmem:[%s1048 + $0x118] sm:$0xff]
  %v1085 = vld [vmem:[%s1048 + $0x120] sm:$0xff]
  %v1086 = vld [vmem:[%s1048 + $0x128] sm:$0xff]
  %v1087 = vld [vmem:[%s1048 + $0x130] sm:$0xff]
  %v1088 = vld [vmem:[%s1048 + $0x138] sm:$0xff]
  %v1089 = vld [vmem:[%s1048 + $0x140] sm:$0xff]
  %v1090 = vld [vmem:[%s1048 + $0x148] sm:$0xff]
  %v1091 = vld [vmem:[%s1048 + $0x150] sm:$0x3]
  %v1092 = vpack.c.bf16 %v1050, %v1049
  %v1093 = vpack.c.bf16 %v1052, %v1051
  %v1094 = vpack.c.bf16 %v1054, %v1053
  %v1095 = vpack.c.bf16 %v1056, %v1055
  %v1096 = vpack.c.bf16 %v1058, %v1057
  %v1097 = vpack.c.bf16 %v1060, %v1059
  %v1098 = vpack.c.bf16 %v1062, %v1061
  %v1099 = vpack.c.bf16 %v1064, %v1063
  %v1100 = vpack.c.bf16 %v1066, %v1065
  %v1101 = vpack.c.bf16 %v1068, %v1067
  %v1102 = vpack.c.bf16 %v1070, %v1069
  %v1103 = vpack.c.bf16 %v1072, %v1071
  %v1104 = vpack.c.bf16 %v1074, %v1073
  %v1105 = vpack.c.bf16 %v1076, %v1075
  %v1106 = vpack.c.bf16 %v1078, %v1077
  %v1107 = vpack.c.bf16 %v1080, %v1079
  %v1108 = vpack.c.bf16 %v1082, %v1081
  %v1109 = vpack.c.bf16 %v1084, %v1083
  %v1110 = vpack.c.bf16 %v1086, %v1085
  %v1111 = vpack.c.bf16 %v1088, %v1087
  %v1112 = vpack.c.bf16 %v1090, %v1089
  %v1113 = vpack.c.bf16 %v1091, %v1091
  %v1115 = vsel %vm86, %v1092, 0
  %v1118 = vsel %vm86, %v1093, 0
  %v1121 = vsel %vm86, %v1094, 0
  %v1124 = vsel %vm86, %v1095, 0
  %v1127 = vsel %vm86, %v1096, 0
  %v1130 = vsel %vm86, %v1097, 0
  %v1133 = vsel %vm86, %v1098, 0
  %v1136 = vsel %vm86, %v1099, 0
  %v1139 = vsel %vm86, %v1100, 0
  %v1142 = vsel %vm86, %v1101, 0
  %v1145 = vsel %vm86, %v1102, 0
  %v1148 = vsel %vm86, %v1103, 0
  %v1151 = vsel %vm86, %v1104, 0
  %v1154 = vsel %vm86, %v1105, 0
  %v1157 = vsel %vm86, %v1106, 0
  %v1160 = vsel %vm86, %v1107, 0
  %v1163 = vsel %vm86, %v1108, 0
  %v1166 = vsel %vm86, %v1109, 0
  %v1169 = vsel %vm86, %v1110, 0
  %v1172 = vsel %vm86, %v1111, 0
  %v1175 = vsel %vm86, %v1112, 0
  %v1178 = vsel %vm86, %v1113, 0
  %1180 = vmatprep.subr.bf16.mxu0 0
  %1181 = vmatpush1.bf16.msra.mxu0 0
  %1182 = vmatprep.subr.bf16.mxu0 0
  %1183 = vmatpush1.bf16.msra.mxu0 0
  %1184 = vmatprep.subr.bf16.mxu0 0
  %1185 = vmatpush1.bf16.msra.mxu0 0
  %1186 = vmatprep.subr.bf16.mxu0 0
  %1187 = vmatpush1.bf16.msra.mxu0 0
  %1188 = vmatprep.subr.bf16.mxu0 0
  %1189 = vmatpush1.bf16.msra.mxu0 0
  %1190 = vmatprep.subr.bf16.mxu0 0
  %1191 = vmatpush1.bf16.msra.mxu0 0
  %1192 = vmatprep.subr.bf16.mxu0 0
  %1193 = vmatpush1.bf16.msra.mxu0 0
  %1194 = vmatprep.subr.bf16.mxu0 0
  %1195 = vmatpush1.bf16.msra.mxu0 %v158
  %1196 = vmatprep.subr.bf16.mxu0 0
  %1197 = vmatpush2.bf16.msra.mxu0 0
  %1198 = vmatprep.subr.bf16.mxu0 0
  %1199 = vmatpush2.bf16.msra.mxu0 0
  %1200 = vmatprep.subr.bf16.mxu0 0
  %1201 = vmatpush2.bf16.msra.mxu0 0
  %1202 = vmatprep.subr.bf16.mxu0 0
  %1203 = vmatpush2.bf16.msra.mxu0 0
  %1204 = vmatprep.subr.bf16.mxu0 0
  %1205 = vmatpush2.bf16.msra.mxu0 0
  %1206 = vmatprep.subr.bf16.mxu0 0
  %1207 = vmatpush2.bf16.msra.mxu0 0
  %1208 = vmatprep.subr.bf16.mxu0 0
  %1209 = vmatpush2.bf16.msra.mxu0 0
  %1210 = vmatprep.subr.bf16.mxu0 0
  %1211 = vmatpush2.bf16.msra.mxu0 0
  %1212 = vmatprep.mubr.bf16.mxu0 0
  %1213 = vmatmul.mubr.bf16.gmra.mxu0 %v1115
  %v1214 = vpop.f32.mrf.mxu0
  %v1215 = vadd.f32 0.0, %v1214
  %v1216 = vpop.f32.mrf.mxu0
  %v1217 = vpop.f32.mrf.mxu0
  %v1218 = vadd.f32 0.0, %v1217
  %v1219 = vpop.f32.mrf.mxu0
  %1220 = vmatprep.mubr.bf16.mxu0 0
  %1221 = vmatmul.mubr.bf16.gmra.mxu0 %v1118
  %v1222 = vpop.f32.mrf.mxu0
  %v1223 = vadd.f32 0.0, %v1222
  %v1224 = vpop.f32.mrf.mxu0
  %v1225 = vpop.f32.mrf.mxu0
  %v1226 = vadd.f32 0.0, %v1225
  %v1227 = vpop.f32.mrf.mxu0
  %1228 = vmatprep.mubr.bf16.mxu0 0
  %1229 = vmatmul.mubr.bf16.gmra.mxu0 %v1121
  %v1230 = vpop.f32.mrf.mxu0
  %v1231 = vadd.f32 0.0, %v1230
  %v1232 = vpop.f32.mrf.mxu0
  %v1233 = vpop.f32.mrf.mxu0
  %v1234 = vadd.f32 0.0, %v1233
  %v1235 = vpop.f32.mrf.mxu0
  %1236 = vmatprep.mubr.bf16.mxu0 0
  %1237 = vmatmul.mubr.bf16.gmra.mxu0 %v1124
  %v1238 = vpop.f32.mrf.mxu0
  %v1239 = vadd.f32 0.0, %v1238
  %v1240 = vpop.f32.mrf.mxu0
  %v1241 = vpop.f32.mrf.mxu0
  %v1242 = vadd.f32 0.0, %v1241
  %v1243 = vpop.f32.mrf.mxu0
  %1244 = vmatprep.mubr.bf16.mxu0 0
  %1245 = vmatmul.mubr.bf16.gmra.mxu0 %v1127
  %v1246 = vpop.f32.mrf.mxu0
  %v1247 = vadd.f32 0.0, %v1246
  %v1248 = vpop.f32.mrf.mxu0
  %v1249 = vpop.f32.mrf.mxu0
  %v1250 = vadd.f32 0.0, %v1249
  %v1251 = vpop.f32.mrf.mxu0
  %1252 = vmatprep.mubr.bf16.mxu0 0
  %1253 = vmatmul.mubr.bf16.gmra.mxu0 %v1130
  %v1254 = vpop.f32.mrf.mxu0
  %v1255 = vadd.f32 0.0, %v1254
  %v1256 = vpop.f32.mrf.mxu0
  %v1257 = vpop.f32.mrf.mxu0
  %v1258 = vadd.f32 0.0, %v1257
  %v1259 = vpop.f32.mrf.mxu0
  %1260 = vmatprep.mubr.bf16.mxu0 0
  %1261 = vmatmul.mubr.bf16.gmra.mxu0 %v1133
  %v1262 = vpop.f32.mrf.mxu0
  %v1263 = vadd.f32 0.0, %v1262
  %v1264 = vpop.f32.mrf.mxu0
  %v1265 = vpop.f32.mrf.mxu0
  %v1266 = vadd.f32 0.0, %v1265
  %v1267 = vpop.f32.mrf.mxu0
  %1268 = vmatprep.mubr.bf16.mxu0 0
  %1269 = vmatmul.mubr.bf16.gmra.mxu0 %v1136
  %v1270 = vpop.f32.mrf.mxu0
  %v1271 = vadd.f32 0.0, %v1270
  %v1272 = vpop.f32.mrf.mxu0
  %v1273 = vpop.f32.mrf.mxu0
  %v1274 = vadd.f32 0.0, %v1273
  %v1275 = vpop.f32.mrf.mxu0
  %1276 = vmatprep.mubr.bf16.mxu0 0
  %1277 = vmatmul.mubr.bf16.gmra.mxu0 %v1139
  %v1278 = vpop.f32.mrf.mxu0
  %v1279 = vadd.f32 0.0, %v1278
  %v1280 = vpop.f32.mrf.mxu0
  %v1281 = vpop.f32.mrf.mxu0
  %v1282 = vadd.f32 0.0, %v1281
  %v1283 = vpop.f32.mrf.mxu0
  %1284 = vmatprep.mubr.bf16.mxu0 0
  %1285 = vmatmul.mubr.bf16.gmra.mxu0 %v1142
  %v1286 = vpop.f32.mrf.mxu0
  %v1287 = vadd.f32 0.0, %v1286
  %v1288 = vpop.f32.mrf.mxu0
  %v1289 = vpop.f32.mrf.mxu0
  %v1290 = vadd.f32 0.0, %v1289
  %v1291 = vpop.f32.mrf.mxu0
  %1292 = vmatprep.mubr.bf16.mxu0 0
  %1293 = vmatmul.mubr.bf16.gmra.mxu0 %v1145
  %v1294 = vpop.f32.mrf.mxu0
  %v1295 = vadd.f32 0.0, %v1294
  %v1296 = vpop.f32.mrf.mxu0
  %v1297 = vpop.f32.mrf.mxu0
  %v1298 = vadd.f32 0.0, %v1297
  %v1299 = vpop.f32.mrf.mxu0
  %1300 = vmatprep.mubr.bf16.mxu0 0
  %1301 = vmatmul.mubr.bf16.gmra.mxu0 %v1148
  %v1302 = vpop.f32.mrf.mxu0
  %v1303 = vadd.f32 0.0, %v1302
  %v1304 = vpop.f32.mrf.mxu0
  %v1305 = vpop.f32.mrf.mxu0
  %v1306 = vadd.f32 0.0, %v1305
  %v1307 = vpop.f32.mrf.mxu0
  %1308 = vmatprep.mubr.bf16.mxu0 0
  %1309 = vmatmul.mubr.bf16.gmra.mxu0 %v1151
  %v1310 = vpop.f32.mrf.mxu0
  %v1311 = vadd.f32 0.0, %v1310
  %v1312 = vpop.f32.mrf.mxu0
  %v1313 = vpop.f32.mrf.mxu0
  %v1314 = vadd.f32 0.0, %v1313
  %v1315 = vpop.f32.mrf.mxu0
  %1316 = vmatprep.mubr.bf16.mxu0 0
  %1317 = vmatmul.mubr.bf16.gmra.mxu0 %v1154
  %v1318 = vpop.f32.mrf.mxu0
  %v1319 = vadd.f32 0.0, %v1318
  %v1320 = vpop.f32.mrf.mxu0
  %v1321 = vpop.f32.mrf.mxu0
  %v1322 = vadd.f32 0.0, %v1321
  %v1323 = vpop.f32.mrf.mxu0
  %1324 = vmatprep.mubr.bf16.mxu0 0
  %1325 = vmatmul.mubr.bf16.gmra.mxu0 %v1157
  %v1326 = vpop.f32.mrf.mxu0
  %v1327 = vadd.f32 0.0, %v1326
  %v1328 = vpop.f32.mrf.mxu0
  %v1329 = vpop.f32.mrf.mxu0
  %v1330 = vadd.f32 0.0, %v1329
  %v1331 = vpop.f32.mrf.mxu0
  %1332 = vmatprep.mubr.bf16.mxu0 0
  %1333 = vmatmul.mubr.bf16.gmra.mxu0 %v1160
  %v1334 = vpop.f32.mrf.mxu0
  %v1335 = vadd.f32 0.0, %v1334
  %v1336 = vpop.f32.mrf.mxu0
  %v1337 = vpop.f32.mrf.mxu0
  %v1338 = vadd.f32 0.0, %v1337
  %v1339 = vpop.f32.mrf.mxu0
  %1340 = vmatprep.mubr.bf16.mxu0 0
  %1341 = vmatmul.mubr.bf16.gmra.mxu0 %v1163
  %v1342 = vpop.f32.mrf.mxu0
  %v1343 = vadd.f32 0.0, %v1342
  %v1344 = vpop.f32.mrf.mxu0
  %v1345 = vpop.f32.mrf.mxu0
  %v1346 = vadd.f32 0.0, %v1345
  %v1347 = vpop.f32.mrf.mxu0
  %1348 = vmatprep.mubr.bf16.mxu0 0
  %1349 = vmatmul.mubr.bf16.gmra.mxu0 %v1166
  %v1350 = vpop.f32.mrf.mxu0
  %v1351 = vadd.f32 0.0, %v1350
  %v1352 = vpop.f32.mrf.mxu0
  %v1353 = vpop.f32.mrf.mxu0
  %v1354 = vadd.f32 0.0, %v1353
  %v1355 = vpop.f32.mrf.mxu0
  %1356 = vmatprep.mubr.bf16.mxu0 0
  %1357 = vmatmul.mubr.bf16.gmra.mxu0 %v1169
  %v1358 = vpop.f32.mrf.mxu0
  %v1359 = vadd.f32 0.0, %v1358
  %v1360 = vpop.f32.mrf.mxu0
  %v1361 = vpop.f32.mrf.mxu0
  %v1362 = vadd.f32 0.0, %v1361
  %v1363 = vpop.f32.mrf.mxu0
  %1364 = vmatprep.mubr.bf16.mxu0 0
  %1365 = vmatmul.mubr.bf16.gmra.mxu0 %v1172
  %v1366 = vpop.f32.mrf.mxu0
  %v1367 = vadd.f32 0.0, %v1366
  %v1368 = vpop.f32.mrf.mxu0
  %v1369 = vpop.f32.mrf.mxu0
  %v1370 = vadd.f32 0.0, %v1369
  %v1371 = vpop.f32.mrf.mxu0
  %1372 = vmatprep.mubr.bf16.mxu0 0
  %1373 = vmatmul.mubr.bf16.gmra.mxu0 %v1175
  %v1374 = vpop.f32.mrf.mxu0
  %v1375 = vadd.f32 0.0, %v1374
  %v1376 = vpop.f32.mrf.mxu0
  %v1377 = vpop.f32.mrf.mxu0
  %v1378 = vadd.f32 0.0, %v1377
  %v1379 = vpop.f32.mrf.mxu0
  %1380 = vmatprep.mubr.bf16.mxu0 0
  %1381 = vmatmul.mubr.bf16.gmra.mxu0 %v1178
  %v1382 = vpop.f32.mrf.mxu0
  %v1383 = vadd.f32 0.0, %v1382
  %v1384 = vpop.f32.mrf.mxu0
  %v1385 = vpop.f32.mrf.mxu0
  %v1386 = vpop.f32.mrf.mxu0
  %1387 = vdwg.mxu0
  %v1388 = vadd.f32 %v195, %v535
  %v1389 = vadd.f32 %v198, %v538
  %v1390 = vadd.f32 %v203, %v543
  %v1391 = vadd.f32 %v206, %v546
  %v1392 = vadd.f32 %v211, %v551
  %v1393 = vadd.f32 %v214, %v554
  %v1394 = vadd.f32 %v219, %v559
  %v1395 = vadd.f32 %v222, %v562
  %v1396 = vadd.f32 %v227, %v567
  %v1397 = vadd.f32 %v230, %v570
  %v1398 = vadd.f32 %v235, %v575
  %v1399 = vadd.f32 %v238, %v578
  %v1400 = vadd.f32 %v243, %v583
  %v1401 = vadd.f32 %v246, %v586
  %v1402 = vadd.f32 %v251, %v591
  %v1403 = vadd.f32 %v254, %v594
  %v1404 = vadd.f32 %v259, %v599
  %v1405 = vadd.f32 %v262, %v602
  %v1406 = vadd.f32 %v267, %v607
  %v1407 = vadd.f32 %v270, %v610
  %v1408 = vadd.f32 %v275, %v615
  %v1409 = vadd.f32 %v278, %v618
  %v1410 = vadd.f32 %v283, %v623
  %v1411 = vadd.f32 %v286, %v626
  %v1412 = vadd.f32 %v291, %v631
  %v1413 = vadd.f32 %v294, %v634
  %v1414 = vadd.f32 %v299, %v639
  %v1415 = vadd.f32 %v302, %v642
  %v1416 = vadd.f32 %v307, %v647
  %v1417 = vadd.f32 %v310, %v650
  %v1418 = vadd.f32 %v315, %v655
  %v1419 = vadd.f32 %v318, %v658
  %v1420 = vadd.f32 %v323, %v663
  %v1421 = vadd.f32 %v326, %v666
  %v1422 = vadd.f32 %v331, %v671
  %v1423 = vadd.f32 %v334, %v674
  %v1424 = vadd.f32 %v339, %v679
  %v1425 = vadd.f32 %v342, %v682
  %v1426 = vadd.f32 %v347, %v687
  %v1427 = vadd.f32 %v350, %v690
  %v1428 = vadd.f32 %v355, %v695
  %v1429 = vadd.f32 %v358, %v698
  %v1430 = vadd.f32 %v363, %v703
  %v1431 = vadd.f32 %v1388, %v875
  %v1432 = vadd.f32 %v1389, %v878
  %v1433 = vadd.f32 %v1390, %v883
  %v1434 = vadd.f32 %v1391, %v886
  %v1435 = vadd.f32 %v1392, %v891
  %v1436 = vadd.f32 %v1393, %v894
  %v1437 = vadd.f32 %v1394, %v899
  %v1438 = vadd.f32 %v1395, %v902
  %v1439 = vadd.f32 %v1396, %v907
  %v1440 = vadd.f32 %v1397, %v910
  %v1441 = vadd.f32 %v1398, %v915
  %v1442 = vadd.f32 %v1399, %v918
  %v1443 = vadd.f32 %v1400, %v923
  %v1444 = vadd.f32 %v1401, %v926
  %v1445 = vadd.f32 %v1402, %v931
  %v1446 = vadd.f32 %v1403, %v934
  %v1447 = vadd.f32 %v1404, %v939
  %v1448 = vadd.f32 %v1405, %v942
  %v1449 = vadd.f32 %v1406, %v947
  %v1450 = vadd.f32 %v1407, %v950
  %v1451 = vadd.f32 %v1408, %v955
  %v1452 = vadd.f32 %v1409, %v958
  %v1453 = vadd.f32 %v1410, %v963
  %v1454 = vadd.f32 %v1411, %v966
  %v1455 = vadd.f32 %v1412, %v971
  %v1456 = vadd.f32 %v1413, %v974
  %v1457 = vadd.f32 %v1414, %v979
  %v1458 = vadd.f32 %v1415, %v982
  %v1459 = vadd.f32 %v1416, %v987
  %v1460 = vadd.f32 %v1417, %v990
  %v1461 = vadd.f32 %v1418, %v995
  %v1462 = vadd.f32 %v1419, %v998
  %v1463 = vadd.f32 %v1420, %v1003
  %v1464 = vadd.f32 %v1421, %v1006
  %v1465 = vadd.f32 %v1422, %v1011
  %v1466 = vadd.f32 %v1423, %v1014
  %v1467 = vadd.f32 %v1424, %v1019
  %v1468 = vadd.f32 %v1425, %v1022
  %v1469 = vadd.f32 %v1426, %v1027
  %v1470 = vadd.f32 %v1427, %v1030
  %v1471 = vadd.f32 %v1428, %v1035
  %v1472 = vadd.f32 %v1429, %v1038
  %v1473 = vadd.f32 %v1430, %v1043
  %v1474 = vadd.f32 %v1431, %v1215
  %v1475 = vadd.f32 %v1432, %v1218
  %v1476 = vadd.f32 %v1433, %v1223
  %v1477 = vadd.f32 %v1434, %v1226
  %v1478 = vadd.f32 %v1435, %v1231
  %v1479 = vadd.f32 %v1436, %v1234
  %v1480 = vadd.f32 %v1437, %v1239
  %v1481 = vadd.f32 %v1438, %v1242
  %v1482 = vadd.f32 %v1439, %v1247
  %v1483 = vadd.f32 %v1440, %v1250
  %v1484 = vadd.f32 %v1441, %v1255
  %v1485 = vadd.f32 %v1442, %v1258
  %v1486 = vadd.f32 %v1443, %v1263
  %v1487 = vadd.f32 %v1444, %v1266
  %v1488 = vadd.f32 %v1445, %v1271
  %v1489 = vadd.f32 %v1446, %v1274
  %v1490 = vadd.f32 %v1447, %v1279
  %v1491 = vadd.f32 %v1448, %v1282
  %v1492 = vadd.f32 %v1449, %v1287
  %v1493 = vadd.f32 %v1450, %v1290
  %v1494 = vadd.f32 %v1451, %v1295
  %v1495 = vadd.f32 %v1452, %v1298
  %v1496 = vadd.f32 %v1453, %v1303
  %v1497 = vadd.f32 %v1454, %v1306
  %v1498 = vadd.f32 %v1455, %v1311
  %v1499 = vadd.f32 %v1456, %v1314
  %v1500 = vadd.f32 %v1457, %v1319
  %v1501 = vadd.f32 %v1458, %v1322
  %v1502 = vadd.f32 %v1459, %v1327
  %v1503 = vadd.f32 %v1460, %v1330
  %v1504 = vadd.f32 %v1461, %v1335
  %v1505 = vadd.f32 %v1462, %v1338
  %v1506 = vadd.f32 %v1463, %v1343
  %v1507 = vadd.f32 %v1464, %v1346
  %v1508 = vadd.f32 %v1465, %v1351
  %v1509 = vadd.f32 %v1466, %v1354
  %v1510 = vadd.f32 %v1467, %v1359
  %v1511 = vadd.f32 %v1468, %v1362
  %v1512 = vadd.f32 %v1469, %v1367
  %v1513 = vadd.f32 %v1470, %v1370
  %v1514 = vadd.f32 %v1471, %v1375
  %v1515 = vadd.f32 %v1472, %v1378
  %v1516 = vadd.f32 %v1473, %v1383
  %vm1517 = vcmask 203776
  %v1518 = vsel %vm1517, %v1474, 0.0
  %v1519 = vsel %vm1517, %v1475, 0.0
  %v1520 = vadd.f32 %v1518, %v1519
  %v1521 = vsel %vm1517, %v1476, 0.0
  %v1522 = vadd.f32 %v1520, %v1521
  %v1523 = vsel %vm1517, %v1477, 0.0
  %v1524 = vadd.f32 %v1522, %v1523
  %v1525 = vsel %vm1517, %v1478, 0.0
  %v1526 = vadd.f32 %v1524, %v1525
  %v1527 = vsel %vm1517, %v1479, 0.0
  %v1528 = vadd.f32 %v1526, %v1527
  %v1529 = vsel %vm1517, %v1480, 0.0
  %v1530 = vadd.f32 %v1528, %v1529
  %v1531 = vsel %vm1517, %v1481, 0.0
  %v1532 = vadd.f32 %v1530, %v1531
  %v1533 = vsel %vm1517, %v1482, 0.0
  %v1534 = vadd.f32 %v1532, %v1533
  %v1535 = vsel %vm1517, %v1483, 0.0
  %v1536 = vadd.f32 %v1534, %v1535
  %v1537 = vsel %vm1517, %v1484, 0.0
  %v1538 = vadd.f32 %v1536, %v1537
  %v1539 = vsel %vm1517, %v1485, 0.0
  %v1540 = vadd.f32 %v1538, %v1539
  %v1541 = vsel %vm1517, %v1486, 0.0
  %v1542 = vadd.f32 %v1540, %v1541
  %v1543 = vsel %vm1517, %v1487, 0.0
  %v1544 = vadd.f32 %v1542, %v1543
  %v1545 = vsel %vm1517, %v1488, 0.0
  %v1546 = vadd.f32 %v1544, %v1545
  %v1547 = vsel %vm1517, %v1489, 0.0
  %v1548 = vadd.f32 %v1546, %v1547
  %v1549 = vsel %vm1517, %v1490, 0.0
  %v1550 = vadd.f32 %v1548, %v1549
  %v1551 = vsel %vm1517, %v1491, 0.0
  %v1552 = vadd.f32 %v1550, %v1551
  %v1553 = vsel %vm1517, %v1492, 0.0
  %v1554 = vadd.f32 %v1552, %v1553
  %v1555 = vsel %vm1517, %v1493, 0.0
  %v1556 = vadd.f32 %v1554, %v1555
  %v1557 = vsel %vm1517, %v1494, 0.0
  %v1558 = vadd.f32 %v1556, %v1557
  %v1559 = vsel %vm1517, %v1495, 0.0
  %v1560 = vadd.f32 %v1558, %v1559
  %v1561 = vsel %vm1517, %v1496, 0.0
  %v1562 = vadd.f32 %v1560, %v1561
  %v1563 = vsel %vm1517, %v1497, 0.0
  %v1564 = vadd.f32 %v1562, %v1563
  %v1565 = vsel %vm1517, %v1498, 0.0
  %v1566 = vadd.f32 %v1564, %v1565
  %v1567 = vsel %vm1517, %v1499, 0.0
  %v1568 = vadd.f32 %v1566, %v1567
  %v1569 = vsel %vm1517, %v1500, 0.0
  %v1570 = vadd.f32 %v1568, %v1569
  %v1571 = vsel %vm1517, %v1501, 0.0
  %v1572 = vadd.f32 %v1570, %v1571
  %v1573 = vsel %vm1517, %v1502, 0.0
  %v1574 = vadd.f32 %v1572, %v1573
  %v1575 = vsel %vm1517, %v1503, 0.0
  %v1576 = vadd.f32 %v1574, %v1575
  %v1577 = vsel %vm1517, %v1504, 0.0
  %v1578 = vadd.f32 %v1576, %v1577
  %v1579 = vsel %vm1517, %v1505, 0.0
  %v1580 = vadd.f32 %v1578, %v1579
  %v1581 = vsel %vm1517, %v1506, 0.0
  %v1582 = vadd.f32 %v1580, %v1581
  %v1583 = vsel %vm1517, %v1507, 0.0
  %v1584 = vadd.f32 %v1582, %v1583
  %v1585 = vsel %vm1517, %v1508, 0.0
  %v1586 = vadd.f32 %v1584, %v1585
  %v1587 = vsel %vm1517, %v1509, 0.0
  %v1588 = vadd.f32 %v1586, %v1587
  %v1589 = vsel %vm1517, %v1510, 0.0
  %v1590 = vadd.f32 %v1588, %v1589
  %v1591 = vsel %vm1517, %v1511, 0.0
  %v1592 = vadd.f32 %v1590, %v1591
  %v1593 = vsel %vm1517, %v1512, 0.0
  %v1594 = vadd.f32 %v1592, %v1593
  %v1595 = vsel %vm1517, %v1513, 0.0
  %v1596 = vadd.f32 %v1594, %v1595
  %v1597 = vsel %vm1517, %v1514, 0.0
  %v1598 = vadd.f32 %v1596, %v1597
  %v1599 = vsel %vm1517, %v1515, 0.0
  %v1600 = vadd.f32 %v1598, %v1599
  %vm1601 = vcmask 197632
  %v1602 = vsel %vm1601, %v1516, 0.0
  %v1603 = vadd.f32 %v1600, %v1602
  %v1604 = vrot.slane %v1603, 4
  %v1605 = vadd.f32 %v1603, %v1604
  %v1606 = vrot.slane %v1605, 2
  %v1607 = vadd.f32 %v1605, %v1606
  %v1608 = vrot.slane %v1607, 1
  %v1609 = vadd.f32 %v1607, %v1608
  %v1610 = vmul.f32 %v195, %v195
  %v1611 = vmul.f32 %v198, %v198
  %v1612 = vmul.f32 %v203, %v203
  %v1613 = vmul.f32 %v206, %v206
  %v1614 = vmul.f32 %v211, %v211
  %v1615 = vmul.f32 %v214, %v214
  %v1616 = vmul.f32 %v219, %v219
  %v1617 = vmul.f32 %v222, %v222
  %v1618 = vmul.f32 %v227, %v227
  %v1619 = vmul.f32 %v230, %v230
  %v1620 = vmul.f32 %v235, %v235
  %v1621 = vmul.f32 %v238, %v238
  %v1622 = vmul.f32 %v243, %v243
  %v1623 = vmul.f32 %v246, %v246
  %v1624 = vmul.f32 %v251, %v251
  %v1625 = vmul.f32 %v254, %v254
  %v1626 = vmul.f32 %v259, %v259
  %v1627 = vmul.f32 %v262, %v262
  %v1628 = vmul.f32 %v267, %v267
  %v1629 = vmul.f32 %v270, %v270
  %v1630 = vmul.f32 %v275, %v275
  %v1631 = vmul.f32 %v278, %v278
  %v1632 = vmul.f32 %v283, %v283
  %v1633 = vmul.f32 %v286, %v286
  %v1634 = vmul.f32 %v291, %v291
  %v1635 = vmul.f32 %v294, %v294
  %v1636 = vmul.f32 %v299, %v299
  %v1637 = vmul.f32 %v302, %v302
  %v1638 = vmul.f32 %v307, %v307
  %v1639 = vmul.f32 %v310, %v310
  %v1640 = vmul.f32 %v315, %v315
  %v1641 = vmul.f32 %v318, %v318
  %v1642 = vmul.f32 %v323, %v323
  %v1643 = vmul.f32 %v326, %v326
  %v1644 = vmul.f32 %v331, %v331
  %v1645 = vmul.f32 %v334, %v334
  %v1646 = vmul.f32 %v339, %v339
  %v1647 = vmul.f32 %v342, %v342
  %v1648 = vmul.f32 %v347, %v347
  %v1649 = vmul.f32 %v350, %v350
  %v1650 = vmul.f32 %v355, %v355
  %v1651 = vmul.f32 %v358, %v358
  %v1652 = vmul.f32 %v363, %v363
  %v1653 = vmul.f32 %v535, %v535
  %v1654 = vmul.f32 %v538, %v538
  %v1655 = vmul.f32 %v543, %v543
  %v1656 = vmul.f32 %v546, %v546
  %v1657 = vmul.f32 %v551, %v551
  %v1658 = vmul.f32 %v554, %v554
  %v1659 = vmul.f32 %v559, %v559
  %v1660 = vmul.f32 %v562, %v562
  %v1661 = vmul.f32 %v567, %v567
  %v1662 = vmul.f32 %v570, %v570
  %v1663 = vmul.f32 %v575, %v575
  %v1664 = vmul.f32 %v578, %v578
  %v1665 = vmul.f32 %v583, %v583
  %v1666 = vmul.f32 %v586, %v586
  %v1667 = vmul.f32 %v591, %v591
  %v1668 = vmul.f32 %v594, %v594
  %v1669 = vmul.f32 %v599, %v599
  %v1670 = vmul.f32 %v602, %v602
  %v1671 = vmul.f32 %v607, %v607
  %v1672 = vmul.f32 %v610, %v610
  %v1673 = vmul.f32 %v615, %v615
  %v1674 = vmul.f32 %v618, %v618
  %v1675 = vmul.f32 %v623, %v623
  %v1676 = vmul.f32 %v626, %v626
  %v1677 = vmul.f32 %v631, %v631
  %v1678 = vmul.f32 %v634, %v634
  %v1679 = vmul.f32 %v639, %v639
  %v1680 = vmul.f32 %v642, %v642
  %v1681 = vmul.f32 %v647, %v647
  %v1682 = vmul.f32 %v650, %v650
  %v1683 = vmul.f32 %v655, %v655
  %v1684 = vmul.f32 %v658, %v658
  %v1685 = vmul.f32 %v663, %v663
  %v1686 = vmul.f32 %v666, %v666
  %v1687 = vmul.f32 %v671, %v671
  %v1688 = vmul.f32 %v674, %v674
  %v1689 = vmul.f32 %v679, %v679
  %v1690 = vmul.f32 %v682, %v682
  %v1691 = vmul.f32 %v687, %v687
  %v1692 = vmul.f32 %v690, %v690
  %v1693 = vmul.f32 %v695, %v695
  %v1694 = vmul.f32 %v698, %v698
  %v1695 = vmul.f32 %v703, %v703
  %v1696 = vadd.f32 %v1610, %v1653
  %v1697 = vadd.f32 %v1611, %v1654
  %v1698 = vadd.f32 %v1612, %v1655
  %v1699 = vadd.f32 %v1613, %v1656
  %v1700 = vadd.f32 %v1614, %v1657
  %v1701 = vadd.f32 %v1615, %v1658
  %v1702 = vadd.f32 %v1616, %v1659
  %v1703 = vadd.f32 %v1617, %v1660
  %v1704 = vadd.f32 %v1618, %v1661
  %v1705 = vadd.f32 %v1619, %v1662
  %v1706 = vadd.f32 %v1620, %v1663
  %v1707 = vadd.f32 %v1621, %v1664
  %v1708 = vadd.f32 %v1622, %v1665
  %v1709 = vadd.f32 %v1623, %v1666
  %v1710 = vadd.f32 %v1624, %v1667
  %v1711 = vadd.f32 %v1625, %v1668
  %v1712 = vadd.f32 %v1626, %v1669
  %v1713 = vadd.f32 %v1627, %v1670
  %v1714 = vadd.f32 %v1628, %v1671
  %v1715 = vadd.f32 %v1629, %v1672
  %v1716 = vadd.f32 %v1630, %v1673
  %v1717 = vadd.f32 %v1631, %v1674
  %v1718 = vadd.f32 %v1632, %v1675
  %v1719 = vadd.f32 %v1633, %v1676
  %v1720 = vadd.f32 %v1634, %v1677
  %v1721 = vadd.f32 %v1635, %v1678
  %v1722 = vadd.f32 %v1636, %v1679
  %v1723 = vadd.f32 %v1637, %v1680
  %v1724 = vadd.f32 %v1638, %v1681
  %v1725 = vadd.f32 %v1639, %v1682
  %v1726 = vadd.f32 %v1640, %v1683
  %v1727 = vadd.f32 %v1641, %v1684
  %v1728 = vadd.f32 %v1642, %v1685
  %v1729 = vadd.f32 %v1643, %v1686
  %v1730 = vadd.f32 %v1644, %v1687
  %v1731 = vadd.f32 %v1645, %v1688
  %v1732 = vadd.f32 %v1646, %v1689
  %v1733 = vadd.f32 %v1647, %v1690
  %v1734 = vadd.f32 %v1648, %v1691
  %v1735 = vadd.f32 %v1649, %v1692
  %v1736 = vadd.f32 %v1650, %v1693
  %v1737 = vadd.f32 %v1651, %v1694
  %v1738 = vadd.f32 %v1652, %v1695
  %v1739 = vmul.f32 %v875, %v875
  %v1740 = vmul.f32 %v878, %v878
  %v1741 = vmul.f32 %v883, %v883
  %v1742 = vmul.f32 %v886, %v886
  %v1743 = vmul.f32 %v891, %v891
  %v1744 = vmul.f32 %v894, %v894
  %v1745 = vmul.f32 %v899, %v899
  %v1746 = vmul.f32 %v902, %v902
  %v1747 = vmul.f32 %v907, %v907
  %v1748 = vmul.f32 %v910, %v910
  %v1749 = vmul.f32 %v915, %v915
  %v1750 = vmul.f32 %v918, %v918
  %v1751 = vmul.f32 %v923, %v923
  %v1752 = vmul.f32 %v926, %v926
  %v1753 = vmul.f32 %v931, %v931
  %v1754 = vmul.f32 %v934, %v934
  %v1755 = vmul.f32 %v939, %v939
  %v1756 = vmul.f32 %v942, %v942
  %v1757 = vmul.f32 %v947, %v947
  %v1758 = vmul.f32 %v950, %v950
  %v1759 = vmul.f32 %v955, %v955
  %v1760 = vmul.f32 %v958, %v958
  %v1761 = vmul.f32 %v963, %v963
  %v1762 = vmul.f32 %v966, %v966
  %v1763 = vmul.f32 %v971, %v971
  %v1764 = vmul.f32 %v974, %v974
  %v1765 = vmul.f32 %v979, %v979
  %v1766 = vmul.f32 %v982, %v982
  %v1767 = vmul.f32 %v987, %v987
  %v1768 = vmul.f32 %v990, %v990
  %v1769 = vmul.f32 %v995, %v995
  %v1770 = vmul.f32 %v998, %v998
  %v1771 = vmul.f32 %v1003, %v1003
  %v1772 = vmul.f32 %v1006, %v1006
  %v1773 = vmul.f32 %v1011, %v1011
  %v1774 = vmul.f32 %v1014, %v1014
  %v1775 = vmul.f32 %v1019, %v1019
  %v1776 = vmul.f32 %v1022, %v1022
  %v1777 = vmul.f32 %v1027, %v1027
  %v1778 = vmul.f32 %v1030, %v1030
  %v1779 = vmul.f32 %v1035, %v1035
  %v1780 = vmul.f32 %v1038, %v1038
  %v1781 = vmul.f32 %v1043, %v1043
  %v1782 = vadd.f32 %v1696, %v1739
  %v1783 = vadd.f32 %v1697, %v1740
  %v1784 = vadd.f32 %v1698, %v1741
  %v1785 = vadd.f32 %v1699, %v1742
  %v1786 = vadd.f32 %v1700, %v1743
  %v1787 = vadd.f32 %v1701, %v1744
  %v1788 = vadd.f32 %v1702, %v1745
  %v1789 = vadd.f32 %v1703, %v1746
  %v1790 = vadd.f32 %v1704, %v1747
  %v1791 = vadd.f32 %v1705, %v1748
  %v1792 = vadd.f32 %v1706, %v1749
  %v1793 = vadd.f32 %v1707, %v1750
  %v1794 = vadd.f32 %v1708, %v1751
  %v1795 = vadd.f32 %v1709, %v1752
  %v1796 = vadd.f32 %v1710, %v1753
  %v1797 = vadd.f32 %v1711, %v1754
  %v1798 = vadd.f32 %v1712, %v1755
  %v1799 = vadd.f32 %v1713, %v1756
  %v1800 = vadd.f32 %v1714, %v1757
  %v1801 = vadd.f32 %v1715, %v1758
  %v1802 = vadd.f32 %v1716, %v1759
  %v1803 = vadd.f32 %v1717, %v1760
  %v1804 = vadd.f32 %v1718, %v1761
  %v1805 = vadd.f32 %v1719, %v1762
  %v1806 = vadd.f32 %v1720, %v1763
  %v1807 = vadd.f32 %v1721, %v1764
  %v1808 = vadd.f32 %v1722, %v1765
  %v1809 = vadd.f32 %v1723, %v1766
  %v1810 = vadd.f32 %v1724, %v1767
  %v1811 = vadd.f32 %v1725, %v1768
  %v1812 = vadd.f32 %v1726, %v1769
  %v1813 = vadd.f32 %v1727, %v1770
  %v1814 = vadd.f32 %v1728, %v1771
  %v1815 = vadd.f32 %v1729, %v1772
  %v1816 = vadd.f32 %v1730, %v1773
  %v1817 = vadd.f32 %v1731, %v1774
  %v1818 = vadd.f32 %v1732, %v1775
  %v1819 = vadd.f32 %v1733, %v1776
  %v1820 = vadd.f32 %v1734, %v1777
  %v1821 = vadd.f32 %v1735, %v1778
  %v1822 = vadd.f32 %v1736, %v1779
  %v1823 = vadd.f32 %v1737, %v1780
  %v1824 = vadd.f32 %v1738, %v1781
  %v1825 = vmul.f32 %v1215, %v1215
  %v1826 = vmul.f32 %v1218, %v1218
  %v1827 = vmul.f32 %v1223, %v1223
  %v1828 = vmul.f32 %v1226, %v1226
  %v1829 = vmul.f32 %v1231, %v1231
  %v1830 = vmul.f32 %v1234, %v1234
  %v1831 = vmul.f32 %v1239, %v1239
  %v1832 = vmul.f32 %v1242, %v1242
  %v1833 = vmul.f32 %v1247, %v1247
  %v1834 = vmul.f32 %v1250, %v1250
  %v1835 = vmul.f32 %v1255, %v1255
  %v1836 = vmul.f32 %v1258, %v1258
  %v1837 = vmul.f32 %v1263, %v1263
  %v1838 = vmul.f32 %v1266, %v1266
  %v1839 = vmul.f32 %v1271, %v1271
  %v1840 = vmul.f32 %v1274, %v1274
  %v1841 = vmul.f32 %v1279, %v1279
  %v1842 = vmul.f32 %v1282, %v1282
  %v1843 = vmul.f32 %v1287, %v1287
  %v1844 = vmul.f32 %v1290, %v1290
  %v1845 = vmul.f32 %v1295, %v1295
  %v1846 = vmul.f32 %v1298, %v1298
  %v1847 = vmul.f32 %v1303, %v1303
  %v1848 = vmul.f32 %v1306, %v1306
  %v1849 = vmul.f32 %v1311, %v1311
  %v1850 = vmul.f32 %v1314, %v1314
  %v1851 = vmul.f32 %v1319, %v1319
  %v1852 = vmul.f32 %v1322, %v1322
  %v1853 = vmul.f32 %v1327, %v1327
  %v1854 = vmul.f32 %v1330, %v1330
  %v1855 = vmul.f32 %v1335, %v1335
  %v1856 = vmul.f32 %v1338, %v1338
  %v1857 = vmul.f32 %v1343, %v1343
  %v1858 = vmul.f32 %v1346, %v1346
  %v1859 = vmul.f32 %v1351, %v1351
  %v1860 = vmul.f32 %v1354, %v1354
  %v1861 = vmul.f32 %v1359, %v1359
  %v1862 = vmul.f32 %v1362, %v1362
  %v1863 = vmul.f32 %v1367, %v1367
  %v1864 = vmul.f32 %v1370, %v1370
  %v1865 = vmul.f32 %v1375, %v1375
  %v1866 = vmul.f32 %v1378, %v1378
  %v1867 = vmul.f32 %v1383, %v1383
  %v1868 = vadd.f32 %v1782, %v1825
  %v1869 = vadd.f32 %v1783, %v1826
  %v1870 = vadd.f32 %v1784, %v1827
  %v1871 = vadd.f32 %v1785, %v1828
  %v1872 = vadd.f32 %v1786, %v1829
  %v1873 = vadd.f32 %v1787, %v1830
  %v1874 = vadd.f32 %v1788, %v1831
  %v1875 = vadd.f32 %v1789, %v1832
  %v1876 = vadd.f32 %v1790, %v1833
  %v1877 = vadd.f32 %v1791, %v1834
  %v1878 = vadd.f32 %v1792, %v1835
  %v1879 = vadd.f32 %v1793, %v1836
  %v1880 = vadd.f32 %v1794, %v1837
  %v1881 = vadd.f32 %v1795, %v1838
  %v1882 = vadd.f32 %v1796, %v1839
  %v1883 = vadd.f32 %v1797, %v1840
  %v1884 = vadd.f32 %v1798, %v1841
  %v1885 = vadd.f32 %v1799, %v1842
  %v1886 = vadd.f32 %v1800, %v1843
  %v1887 = vadd.f32 %v1801, %v1844
  %v1888 = vadd.f32 %v1802, %v1845
  %v1889 = vadd.f32 %v1803, %v1846
  %v1890 = vadd.f32 %v1804, %v1847
  %v1891 = vadd.f32 %v1805, %v1848
  %v1892 = vadd.f32 %v1806, %v1849
  %v1893 = vadd.f32 %v1807, %v1850
  %v1894 = vadd.f32 %v1808, %v1851
  %v1895 = vadd.f32 %v1809, %v1852
  %v1896 = vadd.f32 %v1810, %v1853
  %v1897 = vadd.f32 %v1811, %v1854
  %v1898 = vadd.f32 %v1812, %v1855
  %v1899 = vadd.f32 %v1813, %v1856
  %v1900 = vadd.f32 %v1814, %v1857
  %v1901 = vadd.f32 %v1815, %v1858
  %v1902 = vadd.f32 %v1816, %v1859
  %v1903 = vadd.f32 %v1817, %v1860
  %v1904 = vadd.f32 %v1818, %v1861
  %v1905 = vadd.f32 %v1819, %v1862
  %v1906 = vadd.f32 %v1820, %v1863
  %v1907 = vadd.f32 %v1821, %v1864
  %v1908 = vadd.f32 %v1822, %v1865
  %v1909 = vadd.f32 %v1823, %v1866
  %v1910 = vadd.f32 %v1824, %v1867
  %v1911 = vsel %vm1517, %v1868, 0.0
  %v1912 = vsel %vm1517, %v1869, 0.0
  %v1913 = vadd.f32 %v1911, %v1912
  %v1914 = vsel %vm1517, %v1870, 0.0
  %v1915 = vadd.f32 %v1913, %v1914
  %v1916 = vsel %vm1517, %v1871, 0.0
  %v1917 = vadd.f32 %v1915, %v1916
  %v1918 = vsel %vm1517, %v1872, 0.0
  %v1919 = vadd.f32 %v1917, %v1918
  %v1920 = vsel %vm1517, %v1873, 0.0
  %v1921 = vadd.f32 %v1919, %v1920
  %v1922 = vsel %vm1517, %v1874, 0.0
  %v1923 = vadd.f32 %v1921, %v1922
  %v1924 = vsel %vm1517, %v1875, 0.0
  %v1925 = vadd.f32 %v1923, %v1924
  %v1926 = vsel %vm1517, %v1876, 0.0
  %v1927 = vadd.f32 %v1925, %v1926
  %v1928 = vsel %vm1517, %v1877, 0.0
  %v1929 = vadd.f32 %v1927, %v1928
  %v1930 = vsel %vm1517, %v1878, 0.0
  %v1931 = vadd.f32 %v1929, %v1930
  %v1932 = vsel %vm1517, %v1879, 0.0
  %v1933 = vadd.f32 %v1931, %v1932
  %v1934 = vsel %vm1517, %v1880, 0.0
  %v1935 = vadd.f32 %v1933, %v1934
  %v1936 = vsel %vm1517, %v1881, 0.0
  %v1937 = vadd.f32 %v1935, %v1936
  %v1938 = vsel %vm1517, %v1882, 0.0
  %v1939 = vadd.f32 %v1937, %v1938
  %v1940 = vsel %vm1517, %v1883, 0.0
  %v1941 = vadd.f32 %v1939, %v1940
  %v1942 = vsel %vm1517, %v1884, 0.0
  %v1943 = vadd.f32 %v1941, %v1942
  %v1944 = vsel %vm1517, %v1885, 0.0
  %v1945 = vadd.f32 %v1943, %v1944
  %v1946 = vsel %vm1517, %v1886, 0.0
  %v1947 = vadd.f32 %v1945, %v1946
  %v1948 = vsel %vm1517, %v1887, 0.0
  %v1949 = vadd.f32 %v1947, %v1948
  %v1950 = vsel %vm1517, %v1888, 0.0
  %v1951 = vadd.f32 %v1949, %v1950
  %v1952 = vsel %vm1517, %v1889, 0.0
  %v1953 = vadd.f32 %v1951, %v1952
  %v1954 = vsel %vm1517, %v1890, 0.0
  %v1955 = vadd.f32 %v1953, %v1954
  %v1956 = vsel %vm1517, %v1891, 0.0
  %v1957 = vadd.f32 %v1955, %v1956
  %v1958 = vsel %vm1517, %v1892, 0.0
  %v1959 = vadd.f32 %v1957, %v1958
  %v1960 = vsel %vm1517, %v1893, 0.0
  %v1961 = vadd.f32 %v1959, %v1960
  %v1962 = vsel %vm1517, %v1894, 0.0
  %v1963 = vadd.f32 %v1961, %v1962
  %v1964 = vsel %vm1517, %v1895, 0.0
  %v1965 = vadd.f32 %v1963, %v1964
  %v1966 = vsel %vm1517, %v1896, 0.0
  %v1967 = vadd.f32 %v1965, %v1966
  %v1968 = vsel %vm1517, %v1897, 0.0
  %v1969 = vadd.f32 %v1967, %v1968
  %v1970 = vsel %vm1517, %v1898, 0.0
  %v1971 = vadd.f32 %v1969, %v1970
  %v1972 = vsel %vm1517, %v1899, 0.0
  %v1973 = vadd.f32 %v1971, %v1972
  %v1974 = vsel %vm1517, %v1900, 0.0
  %v1975 = vadd.f32 %v1973, %v1974
  %v1976 = vsel %vm1517, %v1901, 0.0
  %v1977 = vadd.f32 %v1975, %v1976
  %v1978 = vsel %vm1517, %v1902, 0.0
  %v1979 = vadd.f32 %v1977, %v1978
  %v1980 = vsel %vm1517, %v1903, 0.0
  %v1981 = vadd.f32 %v1979, %v1980
  %v1982 = vsel %vm1517, %v1904, 0.0
  %v1983 = vadd.f32 %v1981, %v1982
  %v1984 = vsel %vm1517, %v1905, 0.0
  %v1985 = vadd.f32 %v1983, %v1984
  %v1986 = vsel %vm1517, %v1906, 0.0
  %v1987 = vadd.f32 %v1985, %v1986
  %v1988 = vsel %vm1517, %v1907, 0.0
  %v1989 = vadd.f32 %v1987, %v1988
  %v1990 = vsel %vm1517, %v1908, 0.0
  %v1991 = vadd.f32 %v1989, %v1990
  %v1992 = vsel %vm1517, %v1909, 0.0
  %v1993 = vadd.f32 %v1991, %v1992
  %v1994 = vsel %vm1601, %v1910, 0.0
  %v1995 = vadd.f32 %v1993, %v1994
  %v1996 = vrot.slane %v1995, 4
  %v1997 = vadd.f32 %v1995, %v1996
  %v1998 = vrot.slane %v1997, 2
  %v1999 = vadd.f32 %v1997, %v1998
  %v2000 = vrot.slane %v1999, 1
  %v2001 = vadd.f32 %v1999, %v2000
  %v2002 = vmul.f32 %v1609, 0.000739645
  %v2003 = vmul.f32 %v2001, 0.000739645
  %v2004 = vmul.f32 %v2002, %v2002
  %v2005 = vsub.f32 %v2003, %v2004
  %v2006 = vld [vmem:[%s2] sm:$0x1]
  %v2007 = vadd.f32 %v2005, 1e-05
  %v2008 = vrsqrt.pop %v2007
  %v2009 = vmul.f32 %v2006, %v2008
  %v2010 = vld [vmem:[%s3] sm:$0x1]
  %v2011 = vmul.f32 %v2002, %v2009
  %v2012 = vsub.f32 %v2010, %v2011
  %v2014 = vlaneseq
  %v2015 = vshrl.u32 %v2014, 7
  %v2016 = vsub.s32 0, %v2015
  %v2017 = vrot.slane %v2009, %v2016
  %v2019 = vmul.f32 %v195, %v2017
  %v2020 = vmul.f32 %v198, %v2017
  %v2021 = vmul.f32 %v203, %v2017
  %v2022 = vmul.f32 %v206, %v2017
  %v2023 = vmul.f32 %v211, %v2017
  %v2024 = vmul.f32 %v214, %v2017
  %v2025 = vmul.f32 %v219, %v2017
  %v2026 = vmul.f32 %v222, %v2017
  %v2027 = vmul.f32 %v227, %v2017
  %v2028 = vmul.f32 %v230, %v2017
  %v2029 = vmul.f32 %v235, %v2017
  %v2030 = vmul.f32 %v238, %v2017
  %v2031 = vmul.f32 %v243, %v2017
  %v2032 = vmul.f32 %v246, %v2017
  %v2033 = vmul.f32 %v251, %v2017
  %v2034 = vmul.f32 %v254, %v2017
  %v2035 = vmul.f32 %v259, %v2017
  %v2036 = vmul.f32 %v262, %v2017
  %v2037 = vmul.f32 %v267, %v2017
  %v2038 = vmul.f32 %v270, %v2017
  %v2039 = vmul.f32 %v275, %v2017
  %v2040 = vmul.f32 %v278, %v2017
  %v2041 = vmul.f32 %v283, %v2017
  %v2042 = vmul.f32 %v286, %v2017
  %v2043 = vmul.f32 %v291, %v2017
  %v2044 = vmul.f32 %v294, %v2017
  %v2045 = vmul.f32 %v299, %v2017
  %v2046 = vmul.f32 %v302, %v2017
  %v2047 = vmul.f32 %v307, %v2017
  %v2048 = vmul.f32 %v310, %v2017
  %v2049 = vmul.f32 %v315, %v2017
  %v2050 = vmul.f32 %v318, %v2017
  %v2051 = vmul.f32 %v323, %v2017
  %v2052 = vmul.f32 %v326, %v2017
  %v2053 = vmul.f32 %v331, %v2017
  %v2054 = vmul.f32 %v334, %v2017
  %v2055 = vmul.f32 %v339, %v2017
  %v2056 = vmul.f32 %v342, %v2017
  %v2057 = vmul.f32 %v347, %v2017
  %v2058 = vmul.f32 %v350, %v2017
  %v2059 = vmul.f32 %v355, %v2017
  %v2060 = vmul.f32 %v358, %v2017
  %v2061 = vmul.f32 %v363, %v2017
  %v2063 = vlaneseq
  %v2064 = vshrl.u32 %v2063, 7
  %v2065 = vsub.s32 0, %v2064
  %v2066 = vrot.slane %v2012, %v2065
  %v2068 = vadd.f32 %v2019, %v2066
  %v2069 = vadd.f32 %v2020, %v2066
  %v2070 = vadd.f32 %v2021, %v2066
  %v2071 = vadd.f32 %v2022, %v2066
  %v2072 = vadd.f32 %v2023, %v2066
  %v2073 = vadd.f32 %v2024, %v2066
  %v2074 = vadd.f32 %v2025, %v2066
  %v2075 = vadd.f32 %v2026, %v2066
  %v2076 = vadd.f32 %v2027, %v2066
  %v2077 = vadd.f32 %v2028, %v2066
  %v2078 = vadd.f32 %v2029, %v2066
  %v2079 = vadd.f32 %v2030, %v2066
  %v2080 = vadd.f32 %v2031, %v2066
  %v2081 = vadd.f32 %v2032, %v2066
  %v2082 = vadd.f32 %v2033, %v2066
  %v2083 = vadd.f32 %v2034, %v2066
  %v2084 = vadd.f32 %v2035, %v2066
  %v2085 = vadd.f32 %v2036, %v2066
  %v2086 = vadd.f32 %v2037, %v2066
  %v2087 = vadd.f32 %v2038, %v2066
  %v2088 = vadd.f32 %v2039, %v2066
  %v2089 = vadd.f32 %v2040, %v2066
  %v2090 = vadd.f32 %v2041, %v2066
  %v2091 = vadd.f32 %v2042, %v2066
  %v2092 = vadd.f32 %v2043, %v2066
  %v2093 = vadd.f32 %v2044, %v2066
  %v2094 = vadd.f32 %v2045, %v2066
  %v2095 = vadd.f32 %v2046, %v2066
  %v2096 = vadd.f32 %v2047, %v2066
  %v2097 = vadd.f32 %v2048, %v2066
  %v2098 = vadd.f32 %v2049, %v2066
  %v2099 = vadd.f32 %v2050, %v2066
  %v2100 = vadd.f32 %v2051, %v2066
  %v2101 = vadd.f32 %v2052, %v2066
  %v2102 = vadd.f32 %v2053, %v2066
  %v2103 = vadd.f32 %v2054, %v2066
  %v2104 = vadd.f32 %v2055, %v2066
  %v2105 = vadd.f32 %v2056, %v2066
  %v2106 = vadd.f32 %v2057, %v2066
  %v2107 = vadd.f32 %v2058, %v2066
  %v2108 = vadd.f32 %v2059, %v2066
  %v2109 = vadd.f32 %v2060, %v2066
  %v2110 = vadd.f32 %v2061, %v2066
  %v2111 = vmul.f32 %v535, %v2017
  %v2112 = vmul.f32 %v538, %v2017
  %v2113 = vmul.f32 %v543, %v2017
  %v2114 = vmul.f32 %v546, %v2017
  %v2115 = vmul.f32 %v551, %v2017
  %v2116 = vmul.f32 %v554, %v2017
  %v2117 = vmul.f32 %v559, %v2017
  %v2118 = vmul.f32 %v562, %v2017
  %v2119 = vmul.f32 %v567, %v2017
  %v2120 = vmul.f32 %v570, %v2017
  %v2121 = vmul.f32 %v575, %v2017
  %v2122 = vmul.f32 %v578, %v2017
  %v2123 = vmul.f32 %v583, %v2017
  %v2124 = vmul.f32 %v586, %v2017
  %v2125 = vmul.f32 %v591, %v2017
  %v2126 = vmul.f32 %v594, %v2017
  %v2127 = vmul.f32 %v599, %v2017
  %v2128 = vmul.f32 %v602, %v2017
  %v2129 = vmul.f32 %v607, %v2017
  %v2130 = vmul.f32 %v610, %v2017
  %v2131 = vmul.f32 %v615, %v2017
  %v2132 = vmul.f32 %v618, %v2017
  %v2133 = vmul.f32 %v623, %v2017
  %v2134 = vmul.f32 %v626, %v2017
  %v2135 = vmul.f32 %v631, %v2017
  %v2136 = vmul.f32 %v634, %v2017
  %v2137 = vmul.f32 %v639, %v2017
  %v2138 = vmul.f32 %v642, %v2017
  %v2139 = vmul.f32 %v647, %v2017
  %v2140 = vmul.f32 %v650, %v2017
  %v2141 = vmul.f32 %v655, %v2017
  %v2142 = vmul.f32 %v658, %v2017
  %v2143 = vmul.f32 %v663, %v2017
  %v2144 = vmul.f32 %v666, %v2017
  %v2145 = vmul.f32 %v671, %v2017
  %v2146 = vmul.f32 %v674, %v2017
  %v2147 = vmul.f32 %v679, %v2017
  %v2148 = vmul.f32 %v682, %v2017
  %v2149 = vmul.f32 %v687, %v2017
  %v2150 = vmul.f32 %v690, %v2017
  %v2151 = vmul.f32 %v695, %v2017
  %v2152 = vmul.f32 %v698, %v2017
  %v2153 = vmul.f32 %v703, %v2017
  %v2154 = vadd.f32 %v2111, %v2066
  %v2155 = vadd.f32 %v2112, %v2066
  %v2156 = vadd.f32 %v2113, %v2066
  %v2157 = vadd.f32 %v2114, %v2066
  %v2158 = vadd.f32 %v2115, %v2066
  %v2159 = vadd.f32 %v2116, %v2066
  %v2160 = vadd.f32 %v2117, %v2066
  %v2161 = vadd.f32 %v2118, %v2066
  %v2162 = vadd.f32 %v2119, %v2066
  %v2163 = vadd.f32 %v2120, %v2066
  %v2164 = vadd.f32 %v2121, %v2066
  %v2165 = vadd.f32 %v2122, %v2066
  %v2166 = vadd.f32 %v2123, %v2066
  %v2167 = vadd.f32 %v2124, %v2066
  %v2168 = vadd.f32 %v2125, %v2066
  %v2169 = vadd.f32 %v2126, %v2066
  %v2170 = vadd.f32 %v2127, %v2066
  %v2171 = vadd.f32 %v2128, %v2066
  %v2172 = vadd.f32 %v2129, %v2066
  %v2173 = vadd.f32 %v2130, %v2066
  %v2174 = vadd.f32 %v2131, %v2066
  %v2175 = vadd.f32 %v2132, %v2066
  %v2176 = vadd.f32 %v2133, %v2066
  %v2177 = vadd.f32 %v2134, %v2066
  %v2178 = vadd.f32 %v2135, %v2066
  %v2179 = vadd.f32 %v2136, %v2066
  %v2180 = vadd.f32 %v2137, %v2066
  %v2181 = vadd.f32 %v2138, %v2066
  %v2182 = vadd.f32 %v2139, %v2066
  %v2183 = vadd.f32 %v2140, %v2066
  %v2184 = vadd.f32 %v2141, %v2066
  %v2185 = vadd.f32 %v2142, %v2066
  %v2186 = vadd.f32 %v2143, %v2066
  %v2187 = vadd.f32 %v2144, %v2066
  %v2188 = vadd.f32 %v2145, %v2066
  %v2189 = vadd.f32 %v2146, %v2066
  %v2190 = vadd.f32 %v2147, %v2066
  %v2191 = vadd.f32 %v2148, %v2066
  %v2192 = vadd.f32 %v2149, %v2066
  %v2193 = vadd.f32 %v2150, %v2066
  %v2194 = vadd.f32 %v2151, %v2066
  %v2195 = vadd.f32 %v2152, %v2066
  %v2196 = vadd.f32 %v2153, %v2066
  %v2197 = vmul.f32 %v875, %v2017
  %v2198 = vmul.f32 %v878, %v2017
  %v2199 = vmul.f32 %v883, %v2017
  %v2200 = vmul.f32 %v886, %v2017
  %v2201 = vmul.f32 %v891, %v2017
  %v2202 = vmul.f32 %v894, %v2017
  %v2203 = vmul.f32 %v899, %v2017
  %v2204 = vmul.f32 %v902, %v2017
  %v2205 = vmul.f32 %v907, %v2017
  %v2206 = vmul.f32 %v910, %v2017
  %v2207 = vmul.f32 %v915, %v2017
  %v2208 = vmul.f32 %v918, %v2017
  %v2209 = vmul.f32 %v923, %v2017
  %v2210 = vmul.f32 %v926, %v2017
  %v2211 = vmul.f32 %v931, %v2017
  %v2212 = vmul.f32 %v934, %v2017
  %v2213 = vmul.f32 %v939, %v2017
  %v2214 = vmul.f32 %v942, %v2017
  %v2215 = vmul.f32 %v947, %v2017
  %v2216 = vmul.f32 %v950, %v2017
  %v2217 = vmul.f32 %v955, %v2017
  %v2218 = vmul.f32 %v958, %v2017
  %v2219 = vmul.f32 %v963, %v2017
  %v2220 = vmul.f32 %v966, %v2017
  %v2221 = vmul.f32 %v971, %v2017
  %v2222 = vmul.f32 %v974, %v2017
  %v2223 = vmul.f32 %v979, %v2017
  %v2224 = vmul.f32 %v982, %v2017
  %v2225 = vmul.f32 %v987, %v2017
  %v2226 = vmul.f32 %v990, %v2017
  %v2227 = vmul.f32 %v995, %v2017
  %v2228 = vmul.f32 %v998, %v2017
  %v2229 = vmul.f32 %v1003, %v2017
  %v2230 = vmul.f32 %v1006, %v2017
  %v2231 = vmul.f32 %v1011, %v2017
  %v2232 = vmul.f32 %v1014, %v2017
  %v2233 = vmul.f32 %v1019, %v2017
  %v2234 = vmul.f32 %v1022, %v2017
  %v2235 = vmul.f32 %v1027, %v2017
  %v2236 = vmul.f32 %v1030, %v2017
  %v2237 = vmul.f32 %v1035, %v2017
  %v2238 = vmul.f32 %v1038, %v2017
  %v2239 = vmul.f32 %v1043, %v2017
  %v2240 = vadd.f32 %v2197, %v2066
  %v2241 = vadd.f32 %v2198, %v2066
  %v2242 = vadd.f32 %v2199, %v2066
  %v2243 = vadd.f32 %v2200, %v2066
  %v2244 = vadd.f32 %v2201, %v2066
  %v2245 = vadd.f32 %v2202, %v2066
  %v2246 = vadd.f32 %v2203, %v2066
  %v2247 = vadd.f32 %v2204, %v2066
  %v2248 = vadd.f32 %v2205, %v2066
  %v2249 = vadd.f32 %v2206, %v2066
  %v2250 = vadd.f32 %v2207, %v2066
  %v2251 = vadd.f32 %v2208, %v2066
  %v2252 = vadd.f32 %v2209, %v2066
  %v2253 = vadd.f32 %v2210, %v2066
  %v2254 = vadd.f32 %v2211, %v2066
  %v2255 = vadd.f32 %v2212, %v2066
  %v2256 = vadd.f32 %v2213, %v2066
  %v2257 = vadd.f32 %v2214, %v2066
  %v2258 = vadd.f32 %v2215, %v2066
  %v2259 = vadd.f32 %v2216, %v2066
  %v2260 = vadd.f32 %v2217, %v2066
  %v2261 = vadd.f32 %v2218, %v2066
  %v2262 = vadd.f32 %v2219, %v2066
  %v2263 = vadd.f32 %v2220, %v2066
  %v2264 = vadd.f32 %v2221, %v2066
  %v2265 = vadd.f32 %v2222, %v2066
  %v2266 = vadd.f32 %v2223, %v2066
  %v2267 = vadd.f32 %v2224, %v2066
  %v2268 = vadd.f32 %v2225, %v2066
  %v2269 = vadd.f32 %v2226, %v2066
  %v2270 = vadd.f32 %v2227, %v2066
  %v2271 = vadd.f32 %v2228, %v2066
  %v2272 = vadd.f32 %v2229, %v2066
  %v2273 = vadd.f32 %v2230, %v2066
  %v2274 = vadd.f32 %v2231, %v2066
  %v2275 = vadd.f32 %v2232, %v2066
  %v2276 = vadd.f32 %v2233, %v2066
  %v2277 = vadd.f32 %v2234, %v2066
  %v2278 = vadd.f32 %v2235, %v2066
  %v2279 = vadd.f32 %v2236, %v2066
  %v2280 = vadd.f32 %v2237, %v2066
  %v2281 = vadd.f32 %v2238, %v2066
  %v2282 = vadd.f32 %v2239, %v2066
  %v2283 = vmul.f32 %v1215, %v2017
  %v2284 = vmul.f32 %v1218, %v2017
  %v2285 = vmul.f32 %v1223, %v2017
  %v2286 = vmul.f32 %v1226, %v2017
  %v2287 = vmul.f32 %v1231, %v2017
  %v2288 = vmul.f32 %v1234, %v2017
  %v2289 = vmul.f32 %v1239, %v2017
  %v2290 = vmul.f32 %v1242, %v2017
  %v2291 = vmul.f32 %v1247, %v2017
  %v2292 = vmul.f32 %v1250, %v2017
  %v2293 = vmul.f32 %v1255, %v2017
  %v2294 = vmul.f32 %v1258, %v2017
  %v2295 = vmul.f32 %v1263, %v2017
  %v2296 = vmul.f32 %v1266, %v2017
  %v2297 = vmul.f32 %v1271, %v2017
  %v2298 = vmul.f32 %v1274, %v2017
  %v2299 = vmul.f32 %v1279, %v2017
  %v2300 = vmul.f32 %v1282, %v2017
  %v2301 = vmul.f32 %v1287, %v2017
  %v2302 = vmul.f32 %v1290, %v2017
  %v2303 = vmul.f32 %v1295, %v2017
  %v2304 = vmul.f32 %v1298, %v2017
  %v2305 = vmul.f32 %v1303, %v2017
  %v2306 = vmul.f32 %v1306, %v2017
  %v2307 = vmul.f32 %v1311, %v2017
  %v2308 = vmul.f32 %v1314, %v2017
  %v2309 = vmul.f32 %v1319, %v2017
  %v2310 = vmul.f32 %v1322, %v2017
  %v2311 = vmul.f32 %v1327, %v2017
  %v2312 = vmul.f32 %v1330, %v2017
  %v2313 = vmul.f32 %v1335, %v2017
  %v2314 = vmul.f32 %v1338, %v2017
  %v2315 = vmul.f32 %v1343, %v2017
  %v2316 = vmul.f32 %v1346, %v2017
  %v2317 = vmul.f32 %v1351, %v2017
  %v2318 = vmul.f32 %v1354, %v2017
  %v2319 = vmul.f32 %v1359, %v2017
  %v2320 = vmul.f32 %v1362, %v2017
  %v2321 = vmul.f32 %v1367, %v2017
  %v2322 = vmul.f32 %v1370, %v2017
  %v2323 = vmul.f32 %v1375, %v2017
  %v2324 = vmul.f32 %v1378, %v2017
  %v2325 = vmul.f32 %v1383, %v2017
  %v2326 = vadd.f32 %v2283, %v2066
  %v2327 = vadd.f32 %v2284, %v2066
  %v2328 = vadd.f32 %v2285, %v2066
  %v2329 = vadd.f32 %v2286, %v2066
  %v2330 = vadd.f32 %v2287, %v2066
  %v2331 = vadd.f32 %v2288, %v2066
  %v2332 = vadd.f32 %v2289, %v2066
  %v2333 = vadd.f32 %v2290, %v2066
  %v2334 = vadd.f32 %v2291, %v2066
  %v2335 = vadd.f32 %v2292, %v2066
  %v2336 = vadd.f32 %v2293, %v2066
  %v2337 = vadd.f32 %v2294, %v2066
  %v2338 = vadd.f32 %v2295, %v2066
  %v2339 = vadd.f32 %v2296, %v2066
  %v2340 = vadd.f32 %v2297, %v2066
  %v2341 = vadd.f32 %v2298, %v2066
  %v2342 = vadd.f32 %v2299, %v2066
  %v2343 = vadd.f32 %v2300, %v2066
  %v2344 = vadd.f32 %v2301, %v2066
  %v2345 = vadd.f32 %v2302, %v2066
  %v2346 = vadd.f32 %v2303, %v2066
  %v2347 = vadd.f32 %v2304, %v2066
  %v2348 = vadd.f32 %v2305, %v2066
  %v2349 = vadd.f32 %v2306, %v2066
  %v2350 = vadd.f32 %v2307, %v2066
  %v2351 = vadd.f32 %v2308, %v2066
  %v2352 = vadd.f32 %v2309, %v2066
  %v2353 = vadd.f32 %v2310, %v2066
  %v2354 = vadd.f32 %v2311, %v2066
  %v2355 = vadd.f32 %v2312, %v2066
  %v2356 = vadd.f32 %v2313, %v2066
  %v2357 = vadd.f32 %v2314, %v2066
  %v2358 = vadd.f32 %v2315, %v2066
  %v2359 = vadd.f32 %v2316, %v2066
  %v2360 = vadd.f32 %v2317, %v2066
  %v2361 = vadd.f32 %v2318, %v2066
  %v2362 = vadd.f32 %v2319, %v2066
  %v2363 = vadd.f32 %v2320, %v2066
  %v2364 = vadd.f32 %v2321, %v2066
  %v2365 = vadd.f32 %v2322, %v2066
  %v2366 = vadd.f32 %v2323, %v2066
  %v2367 = vadd.f32 %v2324, %v2066
  %v2368 = vadd.f32 %v2325, %v2066
  %v2369 = vmax.f32 %v2068, %v2154
  %v2370 = vmax.f32 %v2069, %v2155
  %v2371 = vmax.f32 %v2070, %v2156
  %v2372 = vmax.f32 %v2071, %v2157
  %v2373 = vmax.f32 %v2072, %v2158
  %v2374 = vmax.f32 %v2073, %v2159
  %v2375 = vmax.f32 %v2074, %v2160
  %v2376 = vmax.f32 %v2075, %v2161
  %v2377 = vmax.f32 %v2076, %v2162
  %v2378 = vmax.f32 %v2077, %v2163
  %v2379 = vmax.f32 %v2078, %v2164
  %v2380 = vmax.f32 %v2079, %v2165
  %v2381 = vmax.f32 %v2080, %v2166
  %v2382 = vmax.f32 %v2081, %v2167
  %v2383 = vmax.f32 %v2082, %v2168
  %v2384 = vmax.f32 %v2083, %v2169
  %v2385 = vmax.f32 %v2084, %v2170
  %v2386 = vmax.f32 %v2085, %v2171
  %v2387 = vmax.f32 %v2086, %v2172
  %v2388 = vmax.f32 %v2087, %v2173
  %v2389 = vmax.f32 %v2088, %v2174
  %v2390 = vmax.f32 %v2089, %v2175
  %v2391 = vmax.f32 %v2090, %v2176
  %v2392 = vmax.f32 %v2091, %v2177
  %v2393 = vmax.f32 %v2092, %v2178
  %v2394 = vmax.f32 %v2093, %v2179
  %v2395 = vmax.f32 %v2094, %v2180
  %v2396 = vmax.f32 %v2095, %v2181
  %v2397 = vmax.f32 %v2096, %v2182
  %v2398 = vmax.f32 %v2097, %v2183
  %v2399 = vmax.f32 %v2098, %v2184
  %v2400 = vmax.f32 %v2099, %v2185
  %v2401 = vmax.f32 %v2100, %v2186
  %v2402 = vmax.f32 %v2101, %v2187
  %v2403 = vmax.f32 %v2102, %v2188
  %v2404 = vmax.f32 %v2103, %v2189
  %v2405 = vmax.f32 %v2104, %v2190
  %v2406 = vmax.f32 %v2105, %v2191
  %v2407 = vmax.f32 %v2106, %v2192
  %v2408 = vmax.f32 %v2107, %v2193
  %v2409 = vmax.f32 %v2108, %v2194
  %v2410 = vmax.f32 %v2109, %v2195
  %v2411 = vmax.f32 %v2110, %v2196
  %v2412 = vmax.f32 %v2240, %v2326
  %v2413 = vmax.f32 %v2241, %v2327
  %v2414 = vmax.f32 %v2242, %v2328
  %v2415 = vmax.f32 %v2243, %v2329
  %v2416 = vmax.f32 %v2244, %v2330
  %v2417 = vmax.f32 %v2245, %v2331
  %v2418 = vmax.f32 %v2246, %v2332
  %v2419 = vmax.f32 %v2247, %v2333
  %v2420 = vmax.f32 %v2248, %v2334
  %v2421 = vmax.f32 %v2249, %v2335
  %v2422 = vmax.f32 %v2250, %v2336
  %v2423 = vmax.f32 %v2251, %v2337
  %v2424 = vmax.f32 %v2252, %v2338
  %v2425 = vmax.f32 %v2253, %v2339
  %v2426 = vmax.f32 %v2254, %v2340
  %v2427 = vmax.f32 %v2255, %v2341
  %v2428 = vmax.f32 %v2256, %v2342
  %v2429 = vmax.f32 %v2257, %v2343
  %v2430 = vmax.f32 %v2258, %v2344
  %v2431 = vmax.f32 %v2259, %v2345
  %v2432 = vmax.f32 %v2260, %v2346
  %v2433 = vmax.f32 %v2261, %v2347
  %v2434 = vmax.f32 %v2262, %v2348
  %v2435 = vmax.f32 %v2263, %v2349
  %v2436 = vmax.f32 %v2264, %v2350
  %v2437 = vmax.f32 %v2265, %v2351
  %v2438 = vmax.f32 %v2266, %v2352
  %v2439 = vmax.f32 %v2267, %v2353
  %v2440 = vmax.f32 %v2268, %v2354
  %v2441 = vmax.f32 %v2269, %v2355
  %v2442 = vmax.f32 %v2270, %v2356
  %v2443 = vmax.f32 %v2271, %v2357
  %v2444 = vmax.f32 %v2272, %v2358
  %v2445 = vmax.f32 %v2273, %v2359
  %v2446 = vmax.f32 %v2274, %v2360
  %v2447 = vmax.f32 %v2275, %v2361
  %v2448 = vmax.f32 %v2276, %v2362
  %v2449 = vmax.f32 %v2277, %v2363
  %v2450 = vmax.f32 %v2278, %v2364
  %v2451 = vmax.f32 %v2279, %v2365
  %v2452 = vmax.f32 %v2280, %v2366
  %v2453 = vmax.f32 %v2281, %v2367
  %v2454 = vmax.f32 %v2282, %v2368
  %v2455 = vmax.f32 %v2369, %v2412
  %v2456 = vmax.f32 %v2370, %v2413
  %v2457 = vmax.f32 %v2371, %v2414
  %v2458 = vmax.f32 %v2372, %v2415
  %v2459 = vmax.f32 %v2373, %v2416
  %v2460 = vmax.f32 %v2374, %v2417
  %v2461 = vmax.f32 %v2375, %v2418
  %v2462 = vmax.f32 %v2376, %v2419
  %v2463 = vmax.f32 %v2377, %v2420
  %v2464 = vmax.f32 %v2378, %v2421
  %v2465 = vmax.f32 %v2379, %v2422
  %v2466 = vmax.f32 %v2380, %v2423
  %v2467 = vmax.f32 %v2381, %v2424
  %v2468 = vmax.f32 %v2382, %v2425
  %v2469 = vmax.f32 %v2383, %v2426
  %v2470 = vmax.f32 %v2384, %v2427
  %v2471 = vmax.f32 %v2385, %v2428
  %v2472 = vmax.f32 %v2386, %v2429
  %v2473 = vmax.f32 %v2387, %v2430
  %v2474 = vmax.f32 %v2388, %v2431
  %v2475 = vmax.f32 %v2389, %v2432
  %v2476 = vmax.f32 %v2390, %v2433
  %v2477 = vmax.f32 %v2391, %v2434
  %v2478 = vmax.f32 %v2392, %v2435
  %v2479 = vmax.f32 %v2393, %v2436
  %v2480 = vmax.f32 %v2394, %v2437
  %v2481 = vmax.f32 %v2395, %v2438
  %v2482 = vmax.f32 %v2396, %v2439
  %v2483 = vmax.f32 %v2397, %v2440
  %v2484 = vmax.f32 %v2398, %v2441
  %v2485 = vmax.f32 %v2399, %v2442
  %v2486 = vmax.f32 %v2400, %v2443
  %v2487 = vmax.f32 %v2401, %v2444
  %v2488 = vmax.f32 %v2402, %v2445
  %v2489 = vmax.f32 %v2403, %v2446
  %v2490 = vmax.f32 %v2404, %v2447
  %v2491 = vmax.f32 %v2405, %v2448
  %v2492 = vmax.f32 %v2406, %v2449
  %v2493 = vmax.f32 %v2407, %v2450
  %v2494 = vmax.f32 %v2408, %v2451
  %v2495 = vmax.f32 %v2409, %v2452
  %v2496 = vmax.f32 %v2410, %v2453
  %v2497 = vmax.f32 %v2411, %v2454
  %v2498 = vmax.f32 %v2455, 0.0
  %v2499 = vmax.f32 %v2456, 0.0
  %v2500 = vmax.f32 %v2457, 0.0
  %v2501 = vmax.f32 %v2458, 0.0
  %v2502 = vmax.f32 %v2459, 0.0
  %v2503 = vmax.f32 %v2460, 0.0
  %v2504 = vmax.f32 %v2461, 0.0
  %v2505 = vmax.f32 %v2462, 0.0
  %v2506 = vmax.f32 %v2463, 0.0
  %v2507 = vmax.f32 %v2464, 0.0
  %v2508 = vmax.f32 %v2465, 0.0
  %v2509 = vmax.f32 %v2466, 0.0
  %v2510 = vmax.f32 %v2467, 0.0
  %v2511 = vmax.f32 %v2468, 0.0
  %v2512 = vmax.f32 %v2469, 0.0
  %v2513 = vmax.f32 %v2470, 0.0
  %v2514 = vmax.f32 %v2471, 0.0
  %v2515 = vmax.f32 %v2472, 0.0
  %v2516 = vmax.f32 %v2473, 0.0
  %v2517 = vmax.f32 %v2474, 0.0
  %v2518 = vmax.f32 %v2475, 0.0
  %v2519 = vmax.f32 %v2476, 0.0
  %v2520 = vmax.f32 %v2477, 0.0
  %v2521 = vmax.f32 %v2478, 0.0
  %v2522 = vmax.f32 %v2479, 0.0
  %v2523 = vmax.f32 %v2480, 0.0
  %v2524 = vmax.f32 %v2481, 0.0
  %v2525 = vmax.f32 %v2482, 0.0
  %v2526 = vmax.f32 %v2483, 0.0
  %v2527 = vmax.f32 %v2484, 0.0
  %v2528 = vmax.f32 %v2485, 0.0
  %v2529 = vmax.f32 %v2486, 0.0
  %v2530 = vmax.f32 %v2487, 0.0
  %v2531 = vmax.f32 %v2488, 0.0
  %v2532 = vmax.f32 %v2489, 0.0
  %v2533 = vmax.f32 %v2490, 0.0
  %v2534 = vmax.f32 %v2491, 0.0
  %v2535 = vmax.f32 %v2492, 0.0
  %v2536 = vmax.f32 %v2493, 0.0
  %v2537 = vmax.f32 %v2494, 0.0
  %v2538 = vmax.f32 %v2495, 0.0
  %v2539 = vmax.f32 %v2496, 0.0
  %v2540 = vmax.f32 %v2497, 0.0
  %2541 = vst.msk [vmem:[%s4] sm:$0xff] %vm1517, %v2498
  %2542 = vst.msk [vmem:[%s4 + $0x8] sm:$0xff] %vm1517, %v2499
  %2543 = vst.msk [vmem:[%s4 + $0x10] sm:$0xff] %vm1517, %v2500
  %2544 = vst.msk [vmem:[%s4 + $0x18] sm:$0xff] %vm1517, %v2501
  %2545 = vst.msk [vmem:[%s4 + $0x20] sm:$0xff] %vm1517, %v2502
  %2546 = vst.msk [vmem:[%s4 + $0x28] sm:$0xff] %vm1517, %v2503
  %2547 = vst.msk [vmem:[%s4 + $0x30] sm:$0xff] %vm1517, %v2504
  %2548 = vst.msk [vmem:[%s4 + $0x38] sm:$0xff] %vm1517, %v2505
  %2549 = vst.msk [vmem:[%s4 + $0x40] sm:$0xff] %vm1517, %v2506
  %2550 = vst.msk [vmem:[%s4 + $0x48] sm:$0xff] %vm1517, %v2507
  %2551 = vst.msk [vmem:[%s4 + $0x50] sm:$0xff] %vm1517, %v2508
  %2552 = vst.msk [vmem:[%s4 + $0x58] sm:$0xff] %vm1517, %v2509
  %2553 = vst.msk [vmem:[%s4 + $0x60] sm:$0xff] %vm1517, %v2510
  %2554 = vst.msk [vmem:[%s4 + $0x68] sm:$0xff] %vm1517, %v2511
  %2555 = vst.msk [vmem:[%s4 + $0x70] sm:$0xff] %vm1517, %v2512
  %2556 = vst.msk [vmem:[%s4 + $0x78] sm:$0xff] %vm1517, %v2513
  %2557 = vst.msk [vmem:[%s4 + $0x80] sm:$0xff] %vm1517, %v2514
  %2558 = vst.msk [vmem:[%s4 + $0x88] sm:$0xff] %vm1517, %v2515
  %2559 = vst.msk [vmem:[%s4 + $0x90] sm:$0xff] %vm1517, %v2516
  %2560 = vst.msk [vmem:[%s4 + $0x98] sm:$0xff] %vm1517, %v2517
  %2561 = vst.msk [vmem:[%s4 + $0xa0] sm:$0xff] %vm1517, %v2518
  %2562 = vst.msk [vmem:[%s4 + $0xa8] sm:$0xff] %vm1517, %v2519
  %2563 = vst.msk [vmem:[%s4 + $0xb0] sm:$0xff] %vm1517, %v2520
  %2564 = vst.msk [vmem:[%s4 + $0xb8] sm:$0xff] %vm1517, %v2521
  %2565 = vst.msk [vmem:[%s4 + $0xc0] sm:$0xff] %vm1517, %v2522
  %2566 = vst.msk [vmem:[%s4 + $0xc8] sm:$0xff] %vm1517, %v2523
  %2567 = vst.msk [vmem:[%s4 + $0xd0] sm:$0xff] %vm1517, %v2524
  %2568 = vst.msk [vmem:[%s4 + $0xd8] sm:$0xff] %vm1517, %v2525
  %2569 = vst.msk [vmem:[%s4 + $0xe0] sm:$0xff] %vm1517, %v2526
  %2570 = vst.msk [vmem:[%s4 + $0xe8] sm:$0xff] %vm1517, %v2527
  %2571 = vst.msk [vmem:[%s4 + $0xf0] sm:$0xff] %vm1517, %v2528
  %2572 = vst.msk [vmem:[%s4 + $0xf8] sm:$0xff] %vm1517, %v2529
  %2573 = vst.msk [vmem:[%s4 + $0x100] sm:$0xff] %vm1517, %v2530
  %2574 = vst.msk [vmem:[%s4 + $0x108] sm:$0xff] %vm1517, %v2531
  %2575 = vst.msk [vmem:[%s4 + $0x110] sm:$0xff] %vm1517, %v2532
  %2576 = vst.msk [vmem:[%s4 + $0x118] sm:$0xff] %vm1517, %v2533
  %2577 = vst.msk [vmem:[%s4 + $0x120] sm:$0xff] %vm1517, %v2534
  %2578 = vst.msk [vmem:[%s4 + $0x128] sm:$0xff] %vm1517, %v2535
  %2579 = vst.msk [vmem:[%s4 + $0x130] sm:$0xff] %vm1517, %v2536
  %2580 = vst.msk [vmem:[%s4 + $0x138] sm:$0xff] %vm1517, %v2537
  %2581 = vst.msk [vmem:[%s4 + $0x140] sm:$0xff] %vm1517, %v2538
  %2582 = vst.msk [vmem:[%s4 + $0x148] sm:$0xff] %vm1517, %v2539
  %2583 = vst.msk [vmem:[%s4 + $0x150] sm:$0x3] %vm1601, %v2540
  // Predicated region
  $region18: #{cnn_forward.3} parent=0 // pred_check
    _
  $region19: #{cnn_forward.3} parent=0 // pred_check_branch
    %2585 = sbr.rel (0) target = $region21
  $region20: #{cnn_forward.3} parent=0 // pred_region
    _
  $region21: #{cnn_forward.3} parent=0 // pred_fallthru
    _
  // Predicated region
  $region22: #{cnn_forward.3} parent=0 // pred_check
    _
  $region23: #{cnn_forward.3} parent=0 // pred_check_branch
    %2587 = sbr.rel (0) target = $region25
  $region24: #{cnn_forward.3} parent=0 // pred_region
    _
  $region25: #{cnn_forward.3} parent=0 // pred_fallthru
    _

// kernel: cnn_forward.4
$region0: #{cnn_forward.4}
  #allocation0 [shape = 'u32[]', space=smem, size = 0x4, offset = 0x4, fixed_abs, tag = 'smem constant byte address 0x4 - core index']
  #allocation1 [shape = 'u32[144,128]{1,0:T(1,128)}', space=vmem, size = 0x12000, scoped, tag = 'internal scratch']
  %s0 = inlined_call_operand.vmem [shape: f32[4,50,225], index: 0, kind: input, shape index: {}]
  %s1 = inlined_call_operand.vmem [shape: f32[42,225], index: 1, kind: input, shape index: {}]
  %s2 = inlined_call_operand.vmem [shape: f32[225,50], index: 2, kind: input, shape index: {}]
  %s3 = inlined_call_operand.vmem [shape: f32[1,50], index: 3, kind: input, shape index: {}]
  %s4 = inlined_call_operand.vmem [shape: f32[1,50], index: 4, kind: input, shape index: {}]
  %s5 = inlined_call_operand.vmem [shape: f32[50,50], index: 5, kind: output, shape index: {}]
  %s6 = sld [smem:[#allocation0]]
  $region30: #{cnn_forward.4} parent=0
    _
  %s8 = ssub.s32 1, %s6
  %s9 = scalar_select 0, %s8, %s6
  // Predicated region
  $region2: #{cnn_forward.4} parent=0 // pred_check
    _
  $region3: #{cnn_forward.4} parent=0 // pred_check_branch
    %11 = sbr.rel (0) target = $region5
  $region4: #{cnn_forward.4} parent=0 // pred_region
    _
  $region5: #{cnn_forward.4} parent=0 // pred_fallthru
    _
  // Predicated region
  $region6: #{cnn_forward.4} parent=0 // pred_check
    _
  $region7: #{cnn_forward.4} parent=0 // pred_check_branch
    %13 = sbr.rel (0) target = $region9
  $region8: #{cnn_forward.4} parent=0 // pred_region
    _
  $region9: #{cnn_forward.4} parent=0 // pred_fallthru
    _
  // Predicated region
  $region10: #{cnn_forward.4} parent=0 // pred_check
    _
  $region11: #{cnn_forward.4} parent=0 // pred_check_branch
    %15 = sbr.rel (0) target = $region13
  $region12: #{cnn_forward.4} parent=0 // pred_region
    _
  $region13: #{cnn_forward.4} parent=0 // pred_fallthru
    _
  // Predicated region
  $region14: #{cnn_forward.4} parent=0 // pred_check
    _
  $region15: #{cnn_forward.4} parent=0 // pred_check_branch
    %17 = sbr.rel (0) target = $region17
  $region16: #{cnn_forward.4} parent=0 // pred_region
    _
  $region17: #{cnn_forward.4} parent=0 // pred_fallthru
    _
  // Predicated region
  $region18: #{cnn_forward.4} parent=0 // pred_check
    _
  $region19: #{cnn_forward.4} parent=0 // pred_check_branch
    %19 = sbr.rel (0) target = $region21
  $region20: #{cnn_forward.4} parent=0 // pred_region
    _
  $region21: #{cnn_forward.4} parent=0 // pred_fallthru
    _
  %v21 = vld [vmem:[%s2] sm:$0xff]
  %v22 = vld [vmem:[%s2 + $0x8] sm:$0xff]
  %v23 = vld [vmem:[%s2 + $0x10] sm:$0xff]
  %v24 = vld [vmem:[%s2 + $0x18] sm:$0xff]
  %v25 = vld [vmem:[%s2 + $0x20] sm:$0xff]
  %v26 = vld [vmem:[%s2 + $0x28] sm:$0xff]
  %v27 = vld [vmem:[%s2 + $0x30] sm:$0xff]
  %v28 = vld [vmem:[%s2 + $0x38] sm:$0xff]
  %v29 = vld [vmem:[%s2 + $0x40] sm:$0xff]
  %v30 = vld [vmem:[%s2 + $0x48] sm:$0xff]
  %v31 = vld [vmem:[%s2 + $0x50] sm:$0xff]
  %v32 = vld [vmem:[%s2 + $0x58] sm:$0xff]
  %v33 = vld [vmem:[%s2 + $0x60] sm:$0xff]
  %v34 = vld [vmem:[%s2 + $0x68] sm:$0xff]
  %v35 = vld [vmem:[%s2 + $0x70] sm:$0xff]
  %v36 = vld [vmem:[%s2 + $0x78] sm:$0xff]
  %v37 = vld [vmem:[%s2 + $0x80] sm:$0xff]
  %v38 = vld [vmem:[%s2 + $0x88] sm:$0xff]
  %v39 = vld [vmem:[%s2 + $0x90] sm:$0xff]
  %v40 = vld [vmem:[%s2 + $0x98] sm:$0xff]
  %v41 = vld [vmem:[%s2 + $0xa0] sm:$0xff]
  %v42 = vld [vmem:[%s2 + $0xa8] sm:$0xff]
  %v43 = vld [vmem:[%s2 + $0xb0] sm:$0xff]
  %v44 = vld [vmem:[%s2 + $0xb8] sm:$0xff]
  %v45 = vld [vmem:[%s2 + $0xc0] sm:$0xff]
  %v46 = vld [vmem:[%s2 + $0xc8] sm:$0xff]
  %v47 = vld [vmem:[%s2 + $0xd0] sm:$0xff]
  %v48 = vld [vmem:[%s2 + $0xd8] sm:$0xff]
  %v49 = vld [vmem:[%s2 + $0xe0] sm:$0x1]
  %v50 = vpack.c.bf16 %v22, %v21
  %v51 = vpack.c.bf16 %v24, %v23
  %v52 = vpack.c.bf16 %v26, %v25
  %v53 = vpack.c.bf16 %v28, %v27
  %v54 = vpack.c.bf16 %v30, %v29
  %v55 = vpack.c.bf16 %v32, %v31
  %v56 = vpack.c.bf16 %v34, %v33
  %v57 = vpack.c.bf16 %v36, %v35
  %v58 = vpack.c.bf16 %v38, %v37
  %v59 = vpack.c.bf16 %v40, %v39
  %v60 = vpack.c.bf16 %v42, %v41
  %v61 = vpack.c.bf16 %v44, %v43
  %v62 = vpack.c.bf16 %v46, %v45
  %v63 = vpack.c.bf16 %v48, %v47
  %v64 = vpack.c.bf16 %v49, %v49
  %v65 = vld [vmem:[%s0] sm:$0xff]
  %v66 = vld [vmem:[%s0 + $0x8] sm:$0xff]
  %v67 = vld [vmem:[%s0 + $0x10] sm:$0xff]
  %v68 = vld [vmem:[%s0 + $0x18] sm:$0xff]
  %v69 = vld [vmem:[%s0 + $0x20] sm:$0xff]
  %v70 = vld [vmem:[%s0 + $0x28] sm:$0xff]
  %v71 = vld [vmem:[%s0 + $0x30] sm:$0xff]
  %v72 = vld [vmem:[%s0 + $0x38] sm:$0xff]
  %v73 = vld [vmem:[%s0 + $0x40] sm:$0xff]
  %v74 = vld [vmem:[%s0 + $0x48] sm:$0xff]
  %v75 = vld [vmem:[%s0 + $0x50] sm:$0xff]
  %v76 = vld [vmem:[%s0 + $0x58] sm:$0xff]
  %v77 = vld [vmem:[%s0 + $0x60] sm:$0x3]
  %v78 = vld [vmem:[%s0 + $0x68] sm:$0x3]
  %v79 = vpack.c.bf16 %v67, %v65
  %v80 = vpack.c.bf16 %v68, %v66
  %v81 = vpack.c.bf16 %v71, %v69
  %v82 = vpack.c.bf16 %v72, %v70
  %v83 = vpack.c.bf16 %v75, %v73
  %v84 = vpack.c.bf16 %v76, %v74
  %v85 = vpack.c.bf16 %v77, %v77
  %v86 = vpack.c.bf16 %v78, %v78
  %vm87 = vcmask 793600
  %v89 = vsel %vm87, %v80, 0
  %v92 = vsel %vm87, %v82, 0
  %v95 = vsel %vm87, %v84, 0
  %v98 = vsel %vm87, %v86, 0
  %vm100 = vcmask 1040384
  %v101 = vsel 0, 4294967295, 65535
  %v102 = vsel %vm100, %v101, 0
  %v104 = vand.u32 %v64, %v102
  %106 = vmatprep.subr.bf16.mxu0 0
  %107 = vmatpush1.bf16.msra.mxu0 %v57
  %108 = vmatprep.subr.bf16.mxu0 0
  %109 = vmatpush1.bf16.msra.mxu0 %v56
  %110 = vmatprep.subr.bf16.mxu0 0
  %111 = vmatpush1.bf16.msra.mxu0 %v55
  %112 = vmatprep.subr.bf16.mxu0 0
  %113 = vmatpush1.bf16.msra.mxu0 %v54
  %114 = vmatprep.subr.bf16.mxu0 0
  %115 = vmatpush1.bf16.msra.mxu0 %v53
  %116 = vmatprep.subr.bf16.mxu0 0
  %117 = vmatpush1.bf16.msra.mxu0 %v52
  %118 = vmatprep.subr.bf16.mxu0 0
  %119 = vmatpush1.bf16.msra.mxu0 %v51
  %120 = vmatprep.subr.bf16.mxu0 0
  %121 = vmatpush1.bf16.msra.mxu0 %v50
  %122 = vmatprep.subr.bf16.mxu0 0
  %123 = vmatpush2.bf16.msra.mxu0 0
  %124 = vmatprep.subr.bf16.mxu0 0
  %125 = vmatpush2.bf16.msra.mxu0 %v104
  %126 = vmatprep.subr.bf16.mxu0 0
  %127 = vmatpush2.bf16.msra.mxu0 %v63
  %128 = vmatprep.subr.bf16.mxu0 0
  %129 = vmatpush2.bf16.msra.mxu0 %v62
  %130 = vmatprep.subr.bf16.mxu0 0
  %131 = vmatpush2.bf16.msra.mxu0 %v61
  %132 = vmatprep.subr.bf16.mxu0 0
  %133 = vmatpush2.bf16.msra.mxu0 %v60
  %134 = vmatprep.subr.bf16.mxu0 0
  %135 = vmatpush2.bf16.msra.mxu0 %v59
  %136 = vmatprep.subr.bf16.mxu0 0
  %137 = vmatpush2.bf16.msra.mxu0 %v58
  %138 = vmatprep.mubr.bf16.mxu0 %v89
  %139 = vmatmul.mubr.bf16.gmra.mxu0 %v79
  %v140 = vpop.f32.mrf.mxu0
  %v141 = vadd.f32 0.0, %v140
  %v142 = vpop.f32.mrf.mxu0
  %v143 = vpop.f32.mrf.mxu0
  %v144 = vadd.f32 0.0, %v143
  %v145 = vpop.f32.mrf.mxu0
  %146 = vmatprep.mubr.bf16.mxu0 %v92
  %147 = vmatmul.mubr.bf16.gmra.mxu0 %v81
  %v148 = vpop.f32.mrf.mxu0
  %v149 = vadd.f32 0.0, %v148
  %v150 = vpop.f32.mrf.mxu0
  %v151 = vpop.f32.mrf.mxu0
  %v152 = vadd.f32 0.0, %v151
  %v153 = vpop.f32.mrf.mxu0
  %154 = vmatprep.mubr.bf16.mxu0 %v95
  %155 = vmatmul.mubr.bf16.gmra.mxu0 %v83
  %v156 = vpop.f32.mrf.mxu0
  %v157 = vadd.f32 0.0, %v156
  %v158 = vpop.f32.mrf.mxu0
  %v159 = vpop.f32.mrf.mxu0
  %v160 = vadd.f32 0.0, %v159
  %v161 = vpop.f32.mrf.mxu0
  %162 = vmatprep.mubr.bf16.mxu0 %v98
  %163 = vmatmul.mubr.bf16.gmra.mxu0 %v85
  %v164 = vpop.f32.mrf.mxu0
  %v165 = vadd.f32 0.0, %v164
  %v166 = vpop.f32.mrf.mxu0
  %v167 = vpop.f32.mrf.mxu0
  %v168 = vpop.f32.mrf.mxu0
  %169 = vdwg.mxu0
  %s170 = scalar_lea.vmem %s0, 112
  %v171 = vld [vmem:[%s170] sm:$0xff]
  %v172 = vld [vmem:[%s170 + $0x8] sm:$0xff]
  %v173 = vld [vmem:[%s170 + $0x10] sm:$0xff]
  %v174 = vld [vmem:[%s170 + $0x18] sm:$0xff]
  %v175 = vld [vmem:[%s170 + $0x20] sm:$0xff]
  %v176 = vld [vmem:[%s170 + $0x28] sm:$0xff]
  %v177 = vld [vmem:[%s170 + $0x30] sm:$0xff]
  %v178 = vld [vmem:[%s170 + $0x38] sm:$0xff]
  %v179 = vld [vmem:[%s170 + $0x40] sm:$0xff]
  %v180 = vld [vmem:[%s170 + $0x48] sm:$0xff]
  %v181 = vld [vmem:[%s170 + $0x50] sm:$0xff]
  %v182 = vld [vmem:[%s170 + $0x58] sm:$0xff]
  %v183 = vld [vmem:[%s170 + $0x60] sm:$0x3]
  %v184 = vld [vmem:[%s170 + $0x68] sm:$0x3]
  %v185 = vpack.c.bf16 %v173, %v171
  %v186 = vpack.c.bf16 %v174, %v172
  %v187 = vpack.c.bf16 %v177, %v175
  %v188 = vpack.c.bf16 %v178, %v176
  %v189 = vpack.c.bf16 %v181, %v179
  %v190 = vpack.c.bf16 %v182, %v180
  %v191 = vpack.c.bf16 %v183, %v183
  %v192 = vpack.c.bf16 %v184, %v184
  %v194 = vsel %vm87, %v186, 0
  %v197 = vsel %vm87, %v188, 0
  %v200 = vsel %vm87, %v190, 0
  %v203 = vsel %vm87, %v192, 0
  %205 = vmatprep.subr.bf16.mxu0 0
  %206 = vmatpush1.bf16.msra.mxu0 %v57
  %207 = vmatprep.subr.bf16.mxu0 0
  %208 = vmatpush1.bf16.msra.mxu0 %v56
  %209 = vmatprep.subr.bf16.mxu0 0
  %210 = vmatpush1.bf16.msra.mxu0 %v55
  %211 = vmatprep.subr.bf16.mxu0 0
  %212 = vmatpush1.bf16.msra.mxu0 %v54
  %213 = vmatprep.subr.bf16.mxu0 0
  %214 = vmatpush1.bf16.msra.mxu0 %v53
  %215 = vmatprep.subr.bf16.mxu0 0
  %216 = vmatpush1.bf16.msra.mxu0 %v52
  %217 = vmatprep.subr.bf16.mxu0 0
  %218 = vmatpush1.bf16.msra.mxu0 %v51
  %219 = vmatprep.subr.bf16.mxu0 0
  %220 = vmatpush1.bf16.msra.mxu0 %v50
  %221 = vmatprep.subr.bf16.mxu0 0
  %222 = vmatpush2.bf16.msra.mxu0 0
  %223 = vmatprep.subr.bf16.mxu0 0
  %224 = vmatpush2.bf16.msra.mxu0 %v104
  %225 = vmatprep.subr.bf16.mxu0 0
  %226 = vmatpush2.bf16.msra.mxu0 %v63
  %227 = vmatprep.subr.bf16.mxu0 0
  %228 = vmatpush2.bf16.msra.mxu0 %v62
  %229 = vmatprep.subr.bf16.mxu0 0
  %230 = vmatpush2.bf16.msra.mxu0 %v61
  %231 = vmatprep.subr.bf16.mxu0 0
  %232 = vmatpush2.bf16.msra.mxu0 %v60
  %233 = vmatprep.subr.bf16.mxu0 0
  %234 = vmatpush2.bf16.msra.mxu0 %v59
  %235 = vmatprep.subr.bf16.mxu0 0
  %236 = vmatpush2.bf16.msra.mxu0 %v58
  %237 = vmatprep.mubr.bf16.mxu0 %v194
  %238 = vmatmul.mubr.bf16.gmra.mxu0 %v185
  %v239 = vpop.f32.mrf.mxu0
  %v240 = vadd.f32 0.0, %v239
  %v241 = vpop.f32.mrf.mxu0
  %v242 = vpop.f32.mrf.mxu0
  %v243 = vadd.f32 0.0, %v242
  %v244 = vpop.f32.mrf.mxu0
  %245 = vmatprep.mubr.bf16.mxu0 %v197
  %246 = vmatmul.mubr.bf16.gmra.mxu0 %v187
  %v247 = vpop.f32.mrf.mxu0
  %v248 = vadd.f32 0.0, %v247
  %v249 = vpop.f32.mrf.mxu0
  %v250 = vpop.f32.mrf.mxu0
  %v251 = vadd.f32 0.0, %v250
  %v252 = vpop.f32.mrf.mxu0
  %253 = vmatprep.mubr.bf16.mxu0 %v200
  %254 = vmatmul.mubr.bf16.gmra.mxu0 %v189
  %v255 = vpop.f32.mrf.mxu0
  %v256 = vadd.f32 0.0, %v255
  %v257 = vpop.f32.mrf.mxu0
  %v258 = vpop.f32.mrf.mxu0
  %v259 = vadd.f32 0.0, %v258
  %v260 = vpop.f32.mrf.mxu0
  %261 = vmatprep.mubr.bf16.mxu0 %v203
  %262 = vmatmul.mubr.bf16.gmra.mxu0 %v191
  %v263 = vpop.f32.mrf.mxu0
  %v264 = vadd.f32 0.0, %v263
  %v265 = vpop.f32.mrf.mxu0
  %v266 = vpop.f32.mrf.mxu0
  %v267 = vpop.f32.mrf.mxu0
  %268 = vdwg.mxu0
  %s269 = scalar_lea.vmem %s0, 224
  %v270 = vld [vmem:[%s269] sm:$0xff]
  %v271 = vld [vmem:[%s269 + $0x8] sm:$0xff]
  %v272 = vld [vmem:[%s269 + $0x10] sm:$0xff]
  %v273 = vld [vmem:[%s269 + $0x18] sm:$0xff]
  %v274 = vld [vmem:[%s269 + $0x20] sm:$0xff]
  %v275 = vld [vmem:[%s269 + $0x28] sm:$0xff]
  %v276 = vld [vmem:[%s269 + $0x30] sm:$0xff]
  %v277 = vld [vmem:[%s269 + $0x38] sm:$0xff]
  %v278 = vld [vmem:[%s269 + $0x40] sm:$0xff]
  %v279 = vld [vmem:[%s269 + $0x48] sm:$0xff]
  %v280 = vld [vmem:[%s269 + $0x50] sm:$0xff]
  %v281 = vld [vmem:[%s269 + $0x58] sm:$0xff]
  %v282 = vld [vmem:[%s269 + $0x60] sm:$0x3]
  %v283 = vld [vmem:[%s269 + $0x68] sm:$0x3]
  %v284 = vpack.c.bf16 %v272, %v270
  %v285 = vpack.c.bf16 %v273, %v271
  %v286 = vpack.c.bf16 %v276, %v274
  %v287 = vpack.c.bf16 %v277, %v275
  %v288 = vpack.c.bf16 %v280, %v278
  %v289 = vpack.c.bf16 %v281, %v279
  %v290 = vpack.c.bf16 %v282, %v282
  %v291 = vpack.c.bf16 %v283, %v283
  %v293 = vsel %vm87, %v285, 0
  %v296 = vsel %vm87, %v287, 0
  %v299 = vsel %vm87, %v289, 0
  %v302 = vsel %vm87, %v291, 0
  %304 = vmatprep.subr.bf16.mxu0 0
  %305 = vmatpush1.bf16.msra.mxu0 %v57
  %306 = vmatprep.subr.bf16.mxu0 0
  %307 = vmatpush1.bf16.msra.mxu0 %v56
  %308 = vmatprep.subr.bf16.mxu0 0
  %309 = vmatpush1.bf16.msra.mxu0 %v55
  %310 = vmatprep.subr.bf16.mxu0 0
  %311 = vmatpush1.bf16.msra.mxu0 %v54
  %312 = vmatprep.subr.bf16.mxu0 0
  %313 = vmatpush1.bf16.msra.mxu0 %v53
  %314 = vmatprep.subr.bf16.mxu0 0
  %315 = vmatpush1.bf16.msra.mxu0 %v52
  %316 = vmatprep.subr.bf16.mxu0 0
  %317 = vmatpush1.bf16.msra.mxu0 %v51
  %318 = vmatprep.subr.bf16.mxu0 0
  %319 = vmatpush1.bf16.msra.mxu0 %v50
  %320 = vmatprep.subr.bf16.mxu0 0
  %321 = vmatpush2.bf16.msra.mxu0 0
  %322 = vmatprep.subr.bf16.mxu0 0
  %323 = vmatpush2.bf16.msra.mxu0 %v104
  %324 = vmatprep.subr.bf16.mxu0 0
  %325 = vmatpush2.bf16.msra.mxu0 %v63
  %326 = vmatprep.subr.bf16.mxu0 0
  %327 = vmatpush2.bf16.msra.mxu0 %v62
  %328 = vmatprep.subr.bf16.mxu0 0
  %329 = vmatpush2.bf16.msra.mxu0 %v61
  %330 = vmatprep.subr.bf16.mxu0 0
  %331 = vmatpush2.bf16.msra.mxu0 %v60
  %332 = vmatprep.subr.bf16.mxu0 0
  %333 = vmatpush2.bf16.msra.mxu0 %v59
  %334 = vmatprep.subr.bf16.mxu0 0
  %335 = vmatpush2.bf16.msra.mxu0 %v58
  %336 = vmatprep.mubr.bf16.mxu0 %v293
  %337 = vmatmul.mubr.bf16.gmra.mxu0 %v284
  %v338 = vpop.f32.mrf.mxu0
  %v339 = vadd.f32 0.0, %v338
  %v340 = vpop.f32.mrf.mxu0
  %v341 = vpop.f32.mrf.mxu0
  %v342 = vadd.f32 0.0, %v341
  %v343 = vpop.f32.mrf.mxu0
  %344 = vmatprep.mubr.bf16.mxu0 %v296
  %345 = vmatmul.mubr.bf16.gmra.mxu0 %v286
  %v346 = vpop.f32.mrf.mxu0
  %v347 = vadd.f32 0.0, %v346
  %v348 = vpop.f32.mrf.mxu0
  %v349 = vpop.f32.mrf.mxu0
  %v350 = vadd.f32 0.0, %v349
  %v351 = vpop.f32.mrf.mxu0
  %352 = vmatprep.mubr.bf16.mxu0 %v299
  %353 = vmatmul.mubr.bf16.gmra.mxu0 %v288
  %v354 = vpop.f32.mrf.mxu0
  %v355 = vadd.f32 0.0, %v354
  %v356 = vpop.f32.mrf.mxu0
  %v357 = vpop.f32.mrf.mxu0
  %v358 = vadd.f32 0.0, %v357
  %v359 = vpop.f32.mrf.mxu0
  %360 = vmatprep.mubr.bf16.mxu0 %v302
  %361 = vmatmul.mubr.bf16.gmra.mxu0 %v290
  %v362 = vpop.f32.mrf.mxu0
  %v363 = vadd.f32 0.0, %v362
  %v364 = vpop.f32.mrf.mxu0
  %v365 = vpop.f32.mrf.mxu0
  %v366 = vpop.f32.mrf.mxu0
  %367 = vdwg.mxu0
  %s368 = scalar_lea.vmem %s0, 336
  %v369 = vld [vmem:[%s368] sm:$0xff]
  %v370 = vld [vmem:[%s368 + $0x8] sm:$0xff]
  %v371 = vld [vmem:[%s368 + $0x10] sm:$0xff]
  %v372 = vld [vmem:[%s368 + $0x18] sm:$0xff]
  %v373 = vld [vmem:[%s368 + $0x20] sm:$0xff]
  %v374 = vld [vmem:[%s368 + $0x28] sm:$0xff]
  %v375 = vld [vmem:[%s368 + $0x30] sm:$0xff]
  %v376 = vld [vmem:[%s368 + $0x38] sm:$0xff]
  %v377 = vld [vmem:[%s368 + $0x40] sm:$0xff]
  %v378 = vld [vmem:[%s368 + $0x48] sm:$0xff]
  %v379 = vld [vmem:[%s368 + $0x50] sm:$0xff]
  %v380 = vld [vmem:[%s368 + $0x58] sm:$0xff]
  %v381 = vld [vmem:[%s368 + $0x60] sm:$0x3]
  %v382 = vld [vmem:[%s368 + $0x68] sm:$0x3]
  %v383 = vpack.c.bf16 %v371, %v369
  %v384 = vpack.c.bf16 %v372, %v370
  %v385 = vpack.c.bf16 %v375, %v373
  %v386 = vpack.c.bf16 %v376, %v374
  %v387 = vpack.c.bf16 %v379, %v377
  %v388 = vpack.c.bf16 %v380, %v378
  %v389 = vpack.c.bf16 %v381, %v381
  %v390 = vpack.c.bf16 %v382, %v382
  %v392 = vsel %vm87, %v384, 0
  %v395 = vsel %vm87, %v386, 0
  %v398 = vsel %vm87, %v388, 0
  %v401 = vsel %vm87, %v390, 0
  %403 = vmatprep.subr.bf16.mxu0 0
  %404 = vmatpush1.bf16.msra.mxu0 %v57
  %405 = vmatprep.subr.bf16.mxu0 0
  %406 = vmatpush1.bf16.msra.mxu0 %v56
  %407 = vmatprep.subr.bf16.mxu0 0
  %408 = vmatpush1.bf16.msra.mxu0 %v55
  %409 = vmatprep.subr.bf16.mxu0 0
  %410 = vmatpush1.bf16.msra.mxu0 %v54
  %411 = vmatprep.subr.bf16.mxu0 0
  %412 = vmatpush1.bf16.msra.mxu0 %v53
  %413 = vmatprep.subr.bf16.mxu0 0
  %414 = vmatpush1.bf16.msra.mxu0 %v52
  %415 = vmatprep.subr.bf16.mxu0 0
  %416 = vmatpush1.bf16.msra.mxu0 %v51
  %417 = vmatprep.subr.bf16.mxu0 0
  %418 = vmatpush1.bf16.msra.mxu0 %v50
  %419 = vmatprep.subr.bf16.mxu0 0
  %420 = vmatpush2.bf16.msra.mxu0 0
  %421 = vmatprep.subr.bf16.mxu0 0
  %422 = vmatpush2.bf16.msra.mxu0 %v104
  %423 = vmatprep.subr.bf16.mxu0 0
  %424 = vmatpush2.bf16.msra.mxu0 %v63
  %425 = vmatprep.subr.bf16.mxu0 0
  %426 = vmatpush2.bf16.msra.mxu0 %v62
  %427 = vmatprep.subr.bf16.mxu0 0
  %428 = vmatpush2.bf16.msra.mxu0 %v61
  %429 = vmatprep.subr.bf16.mxu0 0
  %430 = vmatpush2.bf16.msra.mxu0 %v60
  %431 = vmatprep.subr.bf16.mxu0 0
  %432 = vmatpush2.bf16.msra.mxu0 %v59
  %433 = vmatprep.subr.bf16.mxu0 0
  %434 = vmatpush2.bf16.msra.mxu0 %v58
  %435 = vmatprep.mubr.bf16.mxu0 %v392
  %436 = vmatmul.mubr.bf16.gmra.mxu0 %v383
  %v437 = vpop.f32.mrf.mxu0
  %v438 = vadd.f32 0.0, %v437
  %v439 = vpop.f32.mrf.mxu0
  %v440 = vpop.f32.mrf.mxu0
  %v441 = vadd.f32 0.0, %v440
  %v442 = vpop.f32.mrf.mxu0
  %443 = vmatprep.mubr.bf16.mxu0 %v395
  %444 = vmatmul.mubr.bf16.gmra.mxu0 %v385
  %v445 = vpop.f32.mrf.mxu0
  %v446 = vadd.f32 0.0, %v445
  %v447 = vpop.f32.mrf.mxu0
  %v448 = vpop.f32.mrf.mxu0
  %v449 = vadd.f32 0.0, %v448
  %v450 = vpop.f32.mrf.mxu0
  %451 = vmatprep.mubr.bf16.mxu0 %v398
  %452 = vmatmul.mubr.bf16.gmra.mxu0 %v387
  %v453 = vpop.f32.mrf.mxu0
  %v454 = vadd.f32 0.0, %v453
  %v455 = vpop.f32.mrf.mxu0
  %v456 = vpop.f32.mrf.mxu0
  %v457 = vadd.f32 0.0, %v456
  %v458 = vpop.f32.mrf.mxu0
  %459 = vmatprep.mubr.bf16.mxu0 %v401
  %460 = vmatmul.mubr.bf16.gmra.mxu0 %v389
  %v461 = vpop.f32.mrf.mxu0
  %v462 = vadd.f32 0.0, %v461
  %v463 = vpop.f32.mrf.mxu0
  %v464 = vpop.f32.mrf.mxu0
  %v465 = vpop.f32.mrf.mxu0
  %466 = vdwg.mxu0
  %v467 = vadd.f32 %v141, %v240
  %v468 = vadd.f32 %v144, %v243
  %v469 = vadd.f32 %v149, %v248
  %v470 = vadd.f32 %v152, %v251
  %v471 = vadd.f32 %v157, %v256
  %v472 = vadd.f32 %v160, %v259
  %v473 = vadd.f32 %v165, %v264
  %v474 = vadd.f32 %v467, %v339
  %v475 = vadd.f32 %v468, %v342
  %v476 = vadd.f32 %v469, %v347
  %v477 = vadd.f32 %v470, %v350
  %v478 = vadd.f32 %v471, %v355
  %v479 = vadd.f32 %v472, %v358
  %v480 = vadd.f32 %v473, %v363
  %v481 = vadd.f32 %v474, %v438
  %v482 = vadd.f32 %v475, %v441
  %v483 = vadd.f32 %v476, %v446
  %v484 = vadd.f32 %v477, %v449
  %v485 = vadd.f32 %v478, %v454
  %v486 = vadd.f32 %v479, %v457
  %v487 = vadd.f32 %v480, %v462
  %vm488 = vcmask 408576
  %v489 = vsel %vm488, %v481, 0.0
  %v490 = vsel %vm488, %v482, 0.0
  %v491 = vadd.f32 %v489, %v490
  %v492 = vsel %vm488, %v483, 0.0
  %v493 = vadd.f32 %v491, %v492
  %v494 = vsel %vm488, %v484, 0.0
  %v495 = vadd.f32 %v493, %v494
  %v496 = vsel %vm488, %v485, 0.0
  %v497 = vadd.f32 %v495, %v496
  %v498 = vsel %vm488, %v486, 0.0
  %v499 = vadd.f32 %v497, %v498
  %vm500 = vcmask 402432
  %v501 = vsel %vm500, %v487, 0.0
  %v502 = vadd.f32 %v499, %v501
  %v503 = vrot.slane %v502, 4
  %v504 = vadd.f32 %v502, %v503
  %v505 = vrot.slane %v504, 2
  %v506 = vadd.f32 %v504, %v505
  %v507 = vrot.slane %v506, 1
  %v508 = vadd.f32 %v506, %v507
  %v509 = vmul.f32 %v141, %v141
  %v510 = vmul.f32 %v144, %v144
  %v511 = vmul.f32 %v149, %v149
  %v512 = vmul.f32 %v152, %v152
  %v513 = vmul.f32 %v157, %v157
  %v514 = vmul.f32 %v160, %v160
  %v515 = vmul.f32 %v165, %v165
  %v516 = vmul.f32 %v240, %v240
  %v517 = vmul.f32 %v243, %v243
  %v518 = vmul.f32 %v248, %v248
  %v519 = vmul.f32 %v251, %v251
  %v520 = vmul.f32 %v256, %v256
  %v521 = vmul.f32 %v259, %v259
  %v522 = vmul.f32 %v264, %v264
  %v523 = vadd.f32 %v509, %v516
  %v524 = vadd.f32 %v510, %v517
  %v525 = vadd.f32 %v511, %v518
  %v526 = vadd.f32 %v512, %v519
  %v527 = vadd.f32 %v513, %v520
  %v528 = vadd.f32 %v514, %v521
  %v529 = vadd.f32 %v515, %v522
  %v530 = vmul.f32 %v339, %v339
  %v531 = vmul.f32 %v342, %v342
  %v532 = vmul.f32 %v347, %v347
  %v533 = vmul.f32 %v350, %v350
  %v534 = vmul.f32 %v355, %v355
  %v535 = vmul.f32 %v358, %v358
  %v536 = vmul.f32 %v363, %v363
  %v537 = vadd.f32 %v523, %v530
  %v538 = vadd.f32 %v524, %v531
  %v539 = vadd.f32 %v525, %v532
  %v540 = vadd.f32 %v526, %v533
  %v541 = vadd.f32 %v527, %v534
  %v542 = vadd.f32 %v528, %v535
  %v543 = vadd.f32 %v529, %v536
  %v544 = vmul.f32 %v438, %v438
  %v545 = vmul.f32 %v441, %v441
  %v546 = vmul.f32 %v446, %v446
  %v547 = vmul.f32 %v449, %v449
  %v548 = vmul.f32 %v454, %v454
  %v549 = vmul.f32 %v457, %v457
  %v550 = vmul.f32 %v462, %v462
  %v551 = vadd.f32 %v537, %v544
  %v552 = vadd.f32 %v538, %v545
  %v553 = vadd.f32 %v539, %v546
  %v554 = vadd.f32 %v540, %v547
  %v555 = vadd.f32 %v541, %v548
  %v556 = vadd.f32 %v542, %v549
  %v557 = vadd.f32 %v543, %v550
  %v558 = vsel %vm488, %v551, 0.0
  %v559 = vsel %vm488, %v552, 0.0
  %v560 = vadd.f32 %v558, %v559
  %v561 = vsel %vm488, %v553, 0.0
  %v562 = vadd.f32 %v560, %v561
  %v563 = vsel %vm488, %v554, 0.0
  %v564 = vadd.f32 %v562, %v563
  %v565 = vsel %vm488, %v555, 0.0
  %v566 = vadd.f32 %v564, %v565
  %v567 = vsel %vm488, %v556, 0.0
  %v568 = vadd.f32 %v566, %v567
  %v569 = vsel %vm500, %v557, 0.0
  %v570 = vadd.f32 %v568, %v569
  %v571 = vrot.slane %v570, 4
  %v572 = vadd.f32 %v570, %v571
  %v573 = vrot.slane %v572, 2
  %v574 = vadd.f32 %v572, %v573
  %v575 = vrot.slane %v574, 1
  %v576 = vadd.f32 %v574, %v575
  %v577 = vld [vmem:[%s1] sm:$0xff]
  %v578 = vld [vmem:[%s1 + $0x8] sm:$0xff]
  %v579 = vld [vmem:[%s1 + $0x10] sm:$0xff]
  %v580 = vld [vmem:[%s1 + $0x18] sm:$0xff]
  %v581 = vld [vmem:[%s1 + $0x20] sm:$0xff]
  %v582 = vld [vmem:[%s1 + $0x28] sm:$0xff]
  %v583 = vld [vmem:[%s1 + $0x30] sm:$0xff]
  %v584 = vld [vmem:[%s1 + $0x38] sm:$0xff]
  %v585 = vld [vmem:[%s1 + $0x40] sm:$0xff]
  %v586 = vld [vmem:[%s1 + $0x48] sm:$0xff]
  %v587 = vld [vmem:[%s1 + $0x50] sm:$0x3]
  %v588 = vld [vmem:[%s1 + $0x58] sm:$0x3]
  %v589 = vpack.c.bf16 %v579, %v577
  %v590 = vpack.c.bf16 %v580, %v578
  %v591 = vpack.c.bf16 %v583, %v581
  %v592 = vpack.c.bf16 %v584, %v582
  %v593 = vpack.c.bf16 %v587, %v585
  %v594 = vpack.c.bf16 %v588, %v586
  %v596 = vsel %vm87, %v590, 0
  %v599 = vsel %vm87, %v592, 0
  %v602 = vsel %vm87, %v594, 0
  %604 = vmatprep.subr.bf16.mxu0 0
  %605 = vmatpush1.bf16.msra.mxu0 %v57
  %606 = vmatprep.subr.bf16.mxu0 0
  %607 = vmatpush1.bf16.msra.mxu0 %v56
  %608 = vmatprep.subr.bf16.mxu0 0
  %609 = vmatpush1.bf16.msra.mxu0 %v55
  %610 = vmatprep.subr.bf16.mxu0 0
  %611 = vmatpush1.bf16.msra.mxu0 %v54
  %612 = vmatprep.subr.bf16.mxu0 0
  %613 = vmatpush1.bf16.msra.mxu0 %v53
  %614 = vmatprep.subr.bf16.mxu0 0
  %615 = vmatpush1.bf16.msra.mxu0 %v52
  %616 = vmatprep.subr.bf16.mxu0 0
  %617 = vmatpush1.bf16.msra.mxu0 %v51
  %618 = vmatprep.subr.bf16.mxu0 0
  %619 = vmatpush1.bf16.msra.mxu0 %v50
  %620 = vmatprep.subr.bf16.mxu0 0
  %621 = vmatpush2.bf16.msra.mxu0 0
  %622 = vmatprep.subr.bf16.mxu0 0
  %623 = vmatpush2.bf16.msra.mxu0 %v104
  %624 = vmatprep.subr.bf16.mxu0 0
  %625 = vmatpush2.bf16.msra.mxu0 %v63
  %626 = vmatprep.subr.bf16.mxu0 0
  %627 = vmatpush2.bf16.msra.mxu0 %v62
  %628 = vmatprep.subr.bf16.mxu0 0
  %629 = vmatpush2.bf16.msra.mxu0 %v61
  %630 = vmatprep.subr.bf16.mxu0 0
  %631 = vmatpush2.bf16.msra.mxu0 %v60
  %632 = vmatprep.subr.bf16.mxu0 0
  %633 = vmatpush2.bf16.msra.mxu0 %v59
  %634 = vmatprep.subr.bf16.mxu0 0
  %635 = vmatpush2.bf16.msra.mxu0 %v58
  %636 = vmatprep.mubr.bf16.mxu0 %v596
  %637 = vmatmul.mubr.bf16.gmra.mxu0 %v589
  %v638 = vpop.f32.mrf.mxu0
  %v639 = vadd.f32 0.0, %v638
  %v640 = vpop.f32.mrf.mxu0
  %v641 = vpop.f32.mrf.mxu0
  %v642 = vadd.f32 0.0, %v641
  %v643 = vpop.f32.mrf.mxu0
  %644 = vmatprep.mubr.bf16.mxu0 %v599
  %645 = vmatmul.mubr.bf16.gmra.mxu0 %v591
  %v646 = vpop.f32.mrf.mxu0
  %v647 = vadd.f32 0.0, %v646
  %v648 = vpop.f32.mrf.mxu0
  %v649 = vpop.f32.mrf.mxu0
  %v650 = vadd.f32 0.0, %v649
  %v651 = vpop.f32.mrf.mxu0
  %652 = vmatprep.mubr.bf16.mxu0 %v602
  %653 = vmatmul.mubr.bf16.gmra.mxu0 %v593
  %v654 = vpop.f32.mrf.mxu0
  %v655 = vadd.f32 0.0, %v654
  %v656 = vpop.f32.mrf.mxu0
  %v657 = vpop.f32.mrf.mxu0
  %v658 = vadd.f32 0.0, %v657
  %v659 = vpop.f32.mrf.mxu0
  %660 = vdwg.mxu0
  %v661 = vsel %vm488, %v639, 0.0
  %v662 = vsel %vm488, %v642, 0.0
  %v663 = vadd.f32 %v661, %v662
  %v664 = vsel %vm488, %v647, 0.0
  %v665 = vadd.f32 %v663, %v664
  %v666 = vsel %vm488, %v650, 0.0
  %v667 = vadd.f32 %v665, %v666
  %v668 = vsel %vm488, %v655, 0.0
  %v669 = vadd.f32 %v667, %v668
  %v670 = vsel %vm500, %v658, 0.0
  %v671 = vadd.f32 %v669, %v670
  %v672 = vrot.slane %v671, 4
  %v673 = vadd.f32 %v671, %v672
  %v674 = vrot.slane %v673, 2
  %v675 = vadd.f32 %v673, %v674
  %v676 = vrot.slane %v675, 1
  %v677 = vadd.f32 %v675, %v676
  %v678 = vadd.f32 %v508, %v677
  %v679 = vmul.f32 %v639, %v639
  %v680 = vmul.f32 %v642, %v642
  %v681 = vmul.f32 %v647, %v647
  %v682 = vmul.f32 %v650, %v650
  %v683 = vmul.f32 %v655, %v655
  %v684 = vmul.f32 %v658, %v658
  %v685 = vsel %vm488, %v679, 0.0
  %v686 = vsel %vm488, %v680, 0.0
  %v687 = vadd.f32 %v685, %v686
  %v688 = vsel %vm488, %v681, 0.0
  %v689 = vadd.f32 %v687, %v688
  %v690 = vsel %vm488, %v682, 0.0
  %v691 = vadd.f32 %v689, %v690
  %v692 = vsel %vm488, %v683, 0.0
  %v693 = vadd.f32 %v691, %v692
  %v694 = vsel %vm500, %v684, 0.0
  %v695 = vadd.f32 %v693, %v694
  %v696 = vrot.slane %v695, 4
  %v697 = vadd.f32 %v695, %v696
  %v698 = vrot.slane %v697, 2
  %v699 = vadd.f32 %v697, %v698
  %v700 = vrot.slane %v699, 1
  %v701 = vadd.f32 %v699, %v700
  %v702 = vadd.f32 %v576, %v701
  %v703 = vmul.f32 %v678, 0.004132231
  %v704 = vmul.f32 %v702, 0.004132231
  %v705 = vmul.f32 %v703, %v703
  %v706 = vsub.f32 %v704, %v705
  %v707 = vld [vmem:[%s3] sm:$0x1]
  %v708 = vadd.f32 %v706, 1e-05
  %v709 = vrsqrt.pop %v708
  %v710 = vmul.f32 %v707, %v709
  %v711 = vld [vmem:[%s4] sm:$0x1]
  %v712 = vmul.f32 %v703, %v710
  %v713 = vsub.f32 %v711, %v712
  %v715 = vlaneseq
  %v716 = vshrl.u32 %v715, 7
  %v717 = vsub.s32 0, %v716
  %v718 = vrot.slane %v710, %v717
  %v720 = vmul.f32 %v141, %v718
  %v721 = vmul.f32 %v144, %v718
  %v722 = vmul.f32 %v149, %v718
  %v723 = vmul.f32 %v152, %v718
  %v724 = vmul.f32 %v157, %v718
  %v725 = vmul.f32 %v160, %v718
  %v726 = vmul.f32 %v165, %v718
  %v728 = vlaneseq
  %v729 = vshrl.u32 %v728, 7
  %v730 = vsub.s32 0, %v729
  %v731 = vrot.slane %v713, %v730
  %v733 = vadd.f32 %v720, %v731
  %v734 = vadd.f32 %v721, %v731
  %v735 = vadd.f32 %v722, %v731
  %v736 = vadd.f32 %v723, %v731
  %v737 = vadd.f32 %v724, %v731
  %v738 = vadd.f32 %v725, %v731
  %v739 = vadd.f32 %v726, %v731
  %v740 = vmul.f32 %v240, %v718
  %v741 = vmul.f32 %v243, %v718
  %v742 = vmul.f32 %v248, %v718
  %v743 = vmul.f32 %v251, %v718
  %v744 = vmul.f32 %v256, %v718
  %v745 = vmul.f32 %v259, %v718
  %v746 = vmul.f32 %v264, %v718
  %v747 = vadd.f32 %v740, %v731
  %v748 = vadd.f32 %v741, %v731
  %v749 = vadd.f32 %v742, %v731
  %v750 = vadd.f32 %v743, %v731
  %v751 = vadd.f32 %v744, %v731
  %v752 = vadd.f32 %v745, %v731
  %v753 = vadd.f32 %v746, %v731
  %v754 = vmul.f32 %v339, %v718
  %v755 = vmul.f32 %v342, %v718
  %v756 = vmul.f32 %v347, %v718
  %v757 = vmul.f32 %v350, %v718
  %v758 = vmul.f32 %v355, %v718
  %v759 = vmul.f32 %v358, %v718
  %v760 = vmul.f32 %v363, %v718
  %v761 = vadd.f32 %v754, %v731
  %v762 = vadd.f32 %v755, %v731
  %v763 = vadd.f32 %v756, %v731
  %v764 = vadd.f32 %v757, %v731
  %v765 = vadd.f32 %v758, %v731
  %v766 = vadd.f32 %v759, %v731
  %v767 = vadd.f32 %v760, %v731
  %v768 = vmul.f32 %v438, %v718
  %v769 = vmul.f32 %v441, %v718
  %v770 = vmul.f32 %v446, %v718
  %v771 = vmul.f32 %v449, %v718
  %v772 = vmul.f32 %v454, %v718
  %v773 = vmul.f32 %v457, %v718
  %v774 = vmul.f32 %v462, %v718
  %v775 = vadd.f32 %v768, %v731
  %v776 = vadd.f32 %v769, %v731
  %v777 = vadd.f32 %v770, %v731
  %v778 = vadd.f32 %v771, %v731
  %v779 = vadd.f32 %v772, %v731
  %v780 = vadd.f32 %v773, %v731
  %v781 = vadd.f32 %v774, %v731
  %v782 = vmax.f32 %v733, %v747
  %v783 = vmax.f32 %v734, %v748
  %v784 = vmax.f32 %v735, %v749
  %v785 = vmax.f32 %v736, %v750
  %v786 = vmax.f32 %v737, %v751
  %v787 = vmax.f32 %v738, %v752
  %v788 = vmax.f32 %v739, %v753
  %v789 = vmax.f32 %v761, %v775
  %v790 = vmax.f32 %v762, %v776
  %v791 = vmax.f32 %v763, %v777
  %v792 = vmax.f32 %v764, %v778
  %v793 = vmax.f32 %v765, %v779
  %v794 = vmax.f32 %v766, %v780
  %v795 = vmax.f32 %v767, %v781
  %v796 = vmax.f32 %v782, %v789
  %v797 = vmax.f32 %v783, %v790
  %v798 = vmax.f32 %v784, %v791
  %v799 = vmax.f32 %v785, %v792
  %v800 = vmax.f32 %v786, %v793
  %v801 = vmax.f32 %v787, %v794
  %v802 = vmax.f32 %v788, %v795
  %v803 = vmax.f32 %v796, 0.0
  %v804 = vmax.f32 %v797, 0.0
  %v805 = vmax.f32 %v798, 0.0
  %v806 = vmax.f32 %v799, 0.0
  %v807 = vmax.f32 %v800, 0.0
  %v808 = vmax.f32 %v801, 0.0
  %v809 = vmax.f32 %v802, 0.0
  %810 = vst.msk [vmem:[%s5] sm:$0xff] %vm488, %v803
  %811 = vst.msk [vmem:[%s5 + $0x8] sm:$0xff] %vm488, %v804
  %812 = vst.msk [vmem:[%s5 + $0x10] sm:$0xff] %vm488, %v805
  %813 = vst.msk [vmem:[%s5 + $0x18] sm:$0xff] %vm488, %v806
  %814 = vst.msk [vmem:[%s5 + $0x20] sm:$0xff] %vm488, %v807
  %815 = vst.msk [vmem:[%s5 + $0x28] sm:$0xff] %vm488, %v808
  %816 = vst.msk [vmem:[%s5 + $0x30] sm:$0x3] %vm500, %v809
  // Predicated region
  $region22: #{cnn_forward.4} parent=0 // pred_check
    _
  $region23: #{cnn_forward.4} parent=0 // pred_check_branch
    %818 = sbr.rel (0) target = $region25
  $region24: #{cnn_forward.4} parent=0 // pred_region
    _
  $region25: #{cnn_forward.4} parent=0 // pred_fallthru
    _
  // Predicated region
  $region26: #{cnn_forward.4} parent=0 // pred_check
    _
  $region27: #{cnn_forward.4} parent=0 // pred_check_branch
    %820 = sbr.rel (0) target = $region29
  $region28: #{cnn_forward.4} parent=0 // pred_region
    _
  $region29: #{cnn_forward.4} parent=0 // pred_fallthru
    _

// kernel: cnn_forward.5
$region0: #{cnn_forward.5}
  #allocation0 [shape = 'u32[]', space=smem, size = 0x4, offset = 0x4, fixed_abs, tag = 'smem constant byte address 0x4 - core index']
  #allocation1 [shape = 'u32[144,128]{1,0:T(1,128)}', space=vmem, size = 0x12000, scoped, tag = 'internal scratch']
  %s0 = inlined_call_operand.vmem [shape: f32[2,1250], index: 0, kind: input, shape index: {}]
  %s1 = inlined_call_operand.vmem [shape: f32[1250,1024], index: 1, kind: input, shape index: {}]
  %s2 = inlined_call_operand.vmem [shape: f32[1,1024], index: 2, kind: input, shape index: {}]
  %s3 = inlined_call_operand.vmem [shape: f32[1024,128], index: 3, kind: input, shape index: {}]
  %s4 = inlined_call_operand.vmem [shape: f32[1,128], index: 4, kind: input, shape index: {}]
  %s5 = inlined_call_operand.vmem [shape: f32[128,10], index: 5, kind: input, shape index: {}]
  %s6 = inlined_call_operand.vmem [shape: f32[1,10], index: 6, kind: input, shape index: {}]
  %s7 = inlined_call_operand.hbm [shape: f32[2,10], index: 7, kind: output, shape index: {}]
  %s8 = sld [smem:[#allocation0]]
  $region38: #{cnn_forward.5} parent=0
    _
  %s10 = ssub.s32 1, %s8
  %s11 = scalar_select 0, %s10, %s8
  $region1: #{cnn_forward.5} parent=0
    #allocation2 [shape = 'u8[1024]{0}', space=vmem, size = 0x400, scoped, tag = 'output window, operand 0, single buffered']
    #allocation3 [shape = 's32[1]{0}', space=sflag, size = 0x4, scoped, tag = 'scoped memory for cnn_forward.5']
    %12 = vsyncpa [#allocation3], 0
    // Predicated region
    $region2: #{cnn_forward.5} parent=1 // pred_check
      _
    $region3: #{cnn_forward.5} parent=1 // pred_check_branch
      %14 = sbr.rel (0) target = $region5
    $region4: #{cnn_forward.5} parent=1 // pred_region
      _
    $region5: #{cnn_forward.5} parent=1 // pred_fallthru
      _
    // Predicated region
    $region6: #{cnn_forward.5} parent=1 // pred_check
      _
    $region7: #{cnn_forward.5} parent=1 // pred_check_branch
      %16 = sbr.rel (0) target = $region9
    $region8: #{cnn_forward.5} parent=1 // pred_region
      _
    $region9: #{cnn_forward.5} parent=1 // pred_fallthru
      _
    // Predicated region
    $region10: #{cnn_forward.5} parent=1 // pred_check
      _
    $region11: #{cnn_forward.5} parent=1 // pred_check_branch
      %18 = sbr.rel (0) target = $region13
    $region12: #{cnn_forward.5} parent=1 // pred_region
      _
    $region13: #{cnn_forward.5} parent=1 // pred_fallthru
      _
    // Predicated region
    $region14: #{cnn_forward.5} parent=1 // pred_check
      _
    $region15: #{cnn_forward.5} parent=1 // pred_check_branch
      %20 = sbr.rel (0) target = $region17
    $region16: #{cnn_forward.5} parent=1 // pred_region
      _
    $region17: #{cnn_forward.5} parent=1 // pred_fallthru
      _
    // Predicated region
    $region18: #{cnn_forward.5} parent=1 // pred_check
      _
    $region19: #{cnn_forward.5} parent=1 // pred_check_branch
      %22 = sbr.rel (0) target = $region21
    $region20: #{cnn_forward.5} parent=1 // pred_region
      _
    $region21: #{cnn_forward.5} parent=1 // pred_fallthru
      _
    // Predicated region
    $region22: #{cnn_forward.5} parent=1 // pred_check
      _
    $region23: #{cnn_forward.5} parent=1 // pred_check_branch
      %24 = sbr.rel (0) target = $region25
    $region24: #{cnn_forward.5} parent=1 // pred_region
      _
    $region25: #{cnn_forward.5} parent=1 // pred_fallthru
      _
    // Predicated region
    $region26: #{cnn_forward.5} parent=1 // pred_check
      _
    $region27: #{cnn_forward.5} parent=1 // pred_check_branch
      %26 = sbr.rel (0) target = $region29
    $region28: #{cnn_forward.5} parent=1 // pred_region
      _
    $region29: #{cnn_forward.5} parent=1 // pred_fallthru
      _
    %v28 = vld [vmem:[%s0] sm:$0xff]
    %v29 = vld [vmem:[%s0 + $0x8] sm:$0xff]
    %v30 = vld [vmem:[%s0 + $0x10] sm:$0xf]
    %v34 = vcombine.high %v28, %v28
    %v36 = vunpack.c.l.s4 1983009808
    %v37 = vunpack.c.0.s8 %v36
    %v38 = vlaneseq
    %v39 = vshrl.u32 %v38, 7
    %v40 = vsub.s32 %v37, %v39
    %v41 = vrot.slane %v28, %v40
    %v43 = vunpack.c.l.s4 1983009808
    %v44 = vunpack.c.0.s8 %v43
    %v45 = vlaneseq
    %v46 = vshrl.u32 %v45, 7
    %v47 = vsub.s32 %v44, %v46
    %v48 = vrot.slane %v34, %v47
    %v49 = vcombine.high %v41, %v41
    %v50 = vcombine.high %v48, %v48
    %v51 = vcombine.high %v29, %v29
    %v53 = vunpack.c.l.s4 1983009808
    %v54 = vunpack.c.0.s8 %v53
    %v55 = vlaneseq
    %v56 = vshrl.u32 %v55, 7
    %v57 = vsub.s32 %v54, %v56
    %v58 = vrot.slane %v29, %v57
    %v60 = vunpack.c.l.s4 1983009808
    %v61 = vunpack.c.0.s8 %v60
    %v62 = vlaneseq
    %v63 = vshrl.u32 %v62, 7
    %v64 = vsub.s32 %v61, %v63
    %v65 = vrot.slane %v51, %v64
    %v66 = vcombine.high %v58, %v58
    %v67 = vcombine.high %v65, %v65
    %v69 = vunpack.c.l.s4 1983009808
    %v70 = vunpack.c.0.s8 %v69
    %v71 = vlaneseq
    %v72 = vshrl.u32 %v71, 7
    %v73 = vsub.s32 %v70, %v72
    %v74 = vrot.slane %v30, %v73
    %v75 = vcombine.high %v74, %v74
    %v86 = vpack.c.bf16 %v41, %v41
    %v87 = vpack.c.bf16 %v49, %v49
    %v88 = vpack.c.bf16 %v48, %v48
    %v89 = vpack.c.bf16 %v50, %v50
    %v90 = vpack.c.bf16 %v58, %v58
    %v91 = vpack.c.bf16 %v66, %v66
    %v92 = vpack.c.bf16 %v65, %v65
    %v93 = vpack.c.bf16 %v67, %v67
    %v94 = vpack.c.bf16 %v74, %v74
    %v95 = vpack.c.bf16 %v75, %v75
    %v96 = vld [vmem:[%s1] sm:$0xff]
    %v97 = vld [vmem:[%s1 + $0x8] sm:$0xff]
    %v98 = vld [vmem:[%s1 + $0x10] sm:$0xff]
    %v99 = vld [vmem:[%s1 + $0x18] sm:$0xff]
    %v100 = vld [vmem:[%s1 + $0x20] sm:$0xff]
    %v101 = vld [vmem:[%s1 + $0x28] sm:$0xff]
    %v102 = vld [vmem:[%s1 + $0x30] sm:$0xff]
    %v103 = vld [vmem:[%s1 + $0x38] sm:$0xff]
    %v104 = vld [vmem:[%s1 + $0x40] sm:$0xff]
    %v105 = vld [vmem:[%s1 + $0x48] sm:$0xff]
    %v106 = vld [vmem:[%s1 + $0x50] sm:$0xff]
    %v107 = vld [vmem:[%s1 + $0x58] sm:$0xff]
    %v108 = vld [vmem:[%s1 + $0x60] sm:$0xff]
    %v109 = vld [vmem:[%s1 + $0x68] sm:$0xff]
    %v110 = vld [vmem:[%s1 + $0x70] sm:$0xff]
    %v111 = vld [vmem:[%s1 + $0x78] sm:$0xff]
    %v112 = vld [vmem:[%s1 + $0x80] sm:$0xff]
    %v113 = vld [vmem:[%s1 + $0x88] sm:$0xff]
    %v114 = vld [vmem:[%s1 + $0x90] sm:$0xff]
    %v115 = vld [vmem:[%s1 + $0x98] sm:$0xff]
    %v116 = vld [vmem:[%s1 + $0xa0] sm:$0xff]
    %v117 = vld [vmem:[%s1 + $0xa8] sm:$0xff]
    %v118 = vld [vmem:[%s1 + $0xb0] sm:$0xff]
    %v119 = vld [vmem:[%s1 + $0xb8] sm:$0xff]
    %v120 = vld [vmem:[%s1 + $0xc0] sm:$0xff]
    %v121 = vld [vmem:[%s1 + $0xc8] sm:$0xff]
    %v122 = vld [vmem:[%s1 + $0xd0] sm:$0xff]
    %v123 = vld [vmem:[%s1 + $0xd8] sm:$0xff]
    %v124 = vld [vmem:[%s1 + $0xe0] sm:$0xff]
    %v125 = vld [vmem:[%s1 + $0xe8] sm:$0xff]
    %v126 = vld [vmem:[%s1 + $0xf0] sm:$0xff]
    %v127 = vld [vmem:[%s1 + $0xf8] sm:$0xff]
    %v128 = vld [vmem:[%s1 + $0x100] sm:$0xff]
    %v129 = vld [vmem:[%s1 + $0x108] sm:$0xff]
    %v130 = vld [vmem:[%s1 + $0x110] sm:$0xff]
    %v131 = vld [vmem:[%s1 + $0x118] sm:$0xff]
    %v132 = vld [vmem:[%s1 + $0x120] sm:$0xff]
    %v133 = vld [vmem:[%s1 + $0x128] sm:$0xff]
    %v134 = vld [vmem:[%s1 + $0x130] sm:$0xff]
    %v135 = vld [vmem:[%s1 + $0x138] sm:$0xff]
    %v136 = vld [vmem:[%s1 + $0x140] sm:$0xff]
    %v137 = vld [vmem:[%s1 + $0x148] sm:$0xff]
    %v138 = vld [vmem:[%s1 + $0x150] sm:$0xff]
    %v139 = vld [vmem:[%s1 + $0x158] sm:$0xff]
    %v140 = vld [vmem:[%s1 + $0x160] sm:$0xff]
    %v141 = vld [vmem:[%s1 + $0x168] sm:$0xff]
    %v142 = vld [vmem:[%s1 + $0x170] sm:$0xff]
    %v143 = vld [vmem:[%s1 + $0x178] sm:$0xff]
    %v144 = vld [vmem:[%s1 + $0x180] sm:$0xff]
    %v145 = vld [vmem:[%s1 + $0x188] sm:$0xff]
    %v146 = vld [vmem:[%s1 + $0x190] sm:$0xff]
    %v147 = vld [vmem:[%s1 + $0x198] sm:$0xff]
    %v148 = vld [vmem:[%s1 + $0x1a0] sm:$0xff]
    %v149 = vld [vmem:[%s1 + $0x1a8] sm:$0xff]
    %v150 = vld [vmem:[%s1 + $0x1b0] sm:$0xff]
    %v151 = vld [vmem:[%s1 + $0x1b8] sm:$0xff]
    %v152 = vld [vmem:[%s1 + $0x1c0] sm:$0xff]
    %v153 = vld [vmem:[%s1 + $0x1c8] sm:$0xff]
    %v154 = vld [vmem:[%s1 + $0x1d0] sm:$0xff]
    %v155 = vld [vmem:[%s1 + $0x1d8] sm:$0xff]
    %v156 = vld [vmem:[%s1 + $0x1e0] sm:$0xff]
    %v157 = vld [vmem:[%s1 + $0x1e8] sm:$0xff]
    %v158 = vld [vmem:[%s1 + $0x1f0] sm:$0xff]
    %v159 = vld [vmem:[%s1 + $0x1f8] sm:$0xff]
    %v160 = vld [vmem:[%s1 + $0x200] sm:$0xff]
    %v161 = vld [vmem:[%s1 + $0x208] sm:$0xff]
    %v162 = vld [vmem:[%s1 + $0x210] sm:$0xff]
    %v163 = vld [vmem:[%s1 + $0x218] sm:$0xff]
    %v164 = vld [vmem:[%s1 + $0x220] sm:$0xff]
    %v165 = vld [vmem:[%s1 + $0x228] sm:$0xff]
    %v166 = vld [vmem:[%s1 + $0x230] sm:$0xff]
    %v167 = vld [vmem:[%s1 + $0x238] sm:$0xff]
    %v168 = vld [vmem:[%s1 + $0x240] sm:$0xff]
    %v169 = vld [vmem:[%s1 + $0x248] sm:$0xff]
    %v170 = vld [vmem:[%s1 + $0x250] sm:$0xff]
    %v171 = vld [vmem:[%s1 + $0x258] sm:$0xff]
    %v172 = vld [vmem:[%s1 + $0x260] sm:$0xff]
    %v173 = vld [vmem:[%s1 + $0x268] sm:$0xff]
    %v174 = vld [vmem:[%s1 + $0x270] sm:$0xff]
    %v175 = vld [vmem:[%s1 + $0x278] sm:$0xff]
    %v176 = vld [vmem:[%s1 + $0x280] sm:$0xff]
    %v177 = vld [vmem:[%s1 + $0x288] sm:$0xff]
    %v178 = vld [vmem:[%s1 + $0x290] sm:$0xff]
    %v179 = vld [vmem:[%s1 + $0x298] sm:$0xff]
    %v180 = vld [vmem:[%s1 + $0x2a0] sm:$0xff]
    %v181 = vld [vmem:[%s1 + $0x2a8] sm:$0xff]
    %v182 = vld [vmem:[%s1 + $0x2b0] sm:$0xff]
    %v183 = vld [vmem:[%s1 + $0x2b8] sm:$0xff]
    %v184 = vld [vmem:[%s1 + $0x2c0] sm:$0xff]
    %v185 = vld [vmem:[%s1 + $0x2c8] sm:$0xff]
    %v186 = vld [vmem:[%s1 + $0x2d0] sm:$0xff]
    %v187 = vld [vmem:[%s1 + $0x2d8] sm:$0xff]
    %v188 = vld [vmem:[%s1 + $0x2e0] sm:$0xff]
    %v189 = vld [vmem:[%s1 + $0x2e8] sm:$0xff]
    %v190 = vld [vmem:[%s1 + $0x2f0] sm:$0xff]
    %v191 = vld [vmem:[%s1 + $0x2f8] sm:$0xff]
    %v192 = vld [vmem:[%s1 + $0x300] sm:$0xff]
    %v193 = vld [vmem:[%s1 + $0x308] sm:$0xff]
    %v194 = vld [vmem:[%s1 + $0x310] sm:$0xff]
    %v195 = vld [vmem:[%s1 + $0x318] sm:$0xff]
    %v196 = vld [vmem:[%s1 + $0x320] sm:$0xff]
    %v197 = vld [vmem:[%s1 + $0x328] sm:$0xff]
    %v198 = vld [vmem:[%s1 + $0x330] sm:$0xff]
    %v199 = vld [vmem:[%s1 + $0x338] sm:$0xff]
    %v200 = vld [vmem:[%s1 + $0x340] sm:$0xff]
    %v201 = vld [vmem:[%s1 + $0x348] sm:$0xff]
    %v202 = vld [vmem:[%s1 + $0x350] sm:$0xff]
    %v203 = vld [vmem:[%s1 + $0x358] sm:$0xff]
    %v204 = vld [vmem:[%s1 + $0x360] sm:$0xff]
    %v205 = vld [vmem:[%s1 + $0x368] sm:$0xff]
    %v206 = vld [vmem:[%s1 + $0x370] sm:$0xff]
    %v207 = vld [vmem:[%s1 + $0x378] sm:$0xff]
    %v208 = vld [vmem:[%s1 + $0x380] sm:$0xff]
    %v209 = vld [vmem:[%s1 + $0x388] sm:$0xff]
    %v210 = vld [vmem:[%s1 + $0x390] sm:$0xff]
    %v211 = vld [vmem:[%s1 + $0x398] sm:$0xff]
    %v212 = vld [vmem:[%s1 + $0x3a0] sm:$0xff]
    %v213 = vld [vmem:[%s1 + $0x3a8] sm:$0xff]
    %v214 = vld [vmem:[%s1 + $0x3b0] sm:$0xff]
    %v215 = vld [vmem:[%s1 + $0x3b8] sm:$0xff]
    %v216 = vld [vmem:[%s1 + $0x3c0] sm:$0xff]
    %v217 = vld [vmem:[%s1 + $0x3c8] sm:$0xff]
    %v218 = vld [vmem:[%s1 + $0x3d0] sm:$0xff]
    %v219 = vld [vmem:[%s1 + $0x3d8] sm:$0xff]
    %v220 = vld [vmem:[%s1 + $0x3e0] sm:$0xff]
    %v221 = vld [vmem:[%s1 + $0x3e8] sm:$0xff]
    %v222 = vld [vmem:[%s1 + $0x3f0] sm:$0xff]
    %v223 = vld [vmem:[%s1 + $0x3f8] sm:$0xff]
    %v224 = vld [vmem:[%s1 + $0x400] sm:$0xff]
    %v225 = vld [vmem:[%s1 + $0x408] sm:$0xff]
    %v226 = vld [vmem:[%s1 + $0x410] sm:$0xff]
    %v227 = vld [vmem:[%s1 + $0x418] sm:$0xff]
    %v228 = vld [vmem:[%s1 + $0x420] sm:$0xff]
    %v229 = vld [vmem:[%s1 + $0x428] sm:$0xff]
    %v230 = vld [vmem:[%s1 + $0x430] sm:$0xff]
    %v231 = vld [vmem:[%s1 + $0x438] sm:$0xff]
    %v232 = vld [vmem:[%s1 + $0x440] sm:$0xff]
    %v233 = vld [vmem:[%s1 + $0x448] sm:$0xff]
    %v234 = vld [vmem:[%s1 + $0x450] sm:$0xff]
    %v235 = vld [vmem:[%s1 + $0x458] sm:$0xff]
    %v236 = vld [vmem:[%s1 + $0x460] sm:$0xff]
    %v237 = vld [vmem:[%s1 + $0x468] sm:$0xff]
    %v238 = vld [vmem:[%s1 + $0x470] sm:$0xff]
    %v239 = vld [vmem:[%s1 + $0x478] sm:$0xff]
    %v240 = vld [vmem:[%s1 + $0x480] sm:$0xff]
    %v241 = vld [vmem:[%s1 + $0x488] sm:$0xff]
    %v242 = vld [vmem:[%s1 + $0x490] sm:$0xff]
    %v243 = vld [vmem:[%s1 + $0x498] sm:$0xff]
    %v244 = vld [vmem:[%s1 + $0x4a0] sm:$0xff]
    %v245 = vld [vmem:[%s1 + $0x4a8] sm:$0xff]
    %v246 = vld [vmem:[%s1 + $0x4b0] sm:$0xff]
    %v247 = vld [vmem:[%s1 + $0x4b8] sm:$0xff]
    %v248 = vld [vmem:[%s1 + $0x4c0] sm:$0xff]
    %v249 = vld [vmem:[%s1 + $0x4c8] sm:$0xff]
    %v250 = vld [vmem:[%s1 + $0x4d0] sm:$0xff]
    %v251 = vld [vmem:[%s1 + $0x4d8] sm:$0xff]
    %v252 = vld [vmem:[%s1 + $0x4e0] sm:$0xff]
    %v253 = vld [vmem:[%s1 + $0x4e8] sm:$0xff]
    %v254 = vld [vmem:[%s1 + $0x4f0] sm:$0xff]
    %v255 = vld [vmem:[%s1 + $0x4f8] sm:$0xff]
    %v256 = vld [vmem:[%s1 + $0x500] sm:$0xff]
    %v257 = vld [vmem:[%s1 + $0x508] sm:$0xff]
    %v258 = vld [vmem:[%s1 + $0x510] sm:$0xff]
    %v259 = vld [vmem:[%s1 + $0x518] sm:$0xff]
    %v260 = vld [vmem:[%s1 + $0x520] sm:$0xff]
    %v261 = vld [vmem:[%s1 + $0x528] sm:$0xff]
    %v262 = vld [vmem:[%s1 + $0x530] sm:$0xff]
    %v263 = vld [vmem:[%s1 + $0x538] sm:$0xff]
    %v264 = vld [vmem:[%s1 + $0x540] sm:$0xff]
    %v265 = vld [vmem:[%s1 + $0x548] sm:$0xff]
    %v266 = vld [vmem:[%s1 + $0x550] sm:$0xff]
    %v267 = vld [vmem:[%s1 + $0x558] sm:$0xff]
    %v268 = vld [vmem:[%s1 + $0x560] sm:$0xff]
    %v269 = vld [vmem:[%s1 + $0x568] sm:$0xff]
    %v270 = vld [vmem:[%s1 + $0x570] sm:$0xff]
    %v271 = vld [vmem:[%s1 + $0x578] sm:$0xff]
    %v272 = vld [vmem:[%s1 + $0x580] sm:$0xff]
    %v273 = vld [vmem:[%s1 + $0x588] sm:$0xff]
    %v274 = vld [vmem:[%s1 + $0x590] sm:$0xff]
    %v275 = vld [vmem:[%s1 + $0x598] sm:$0xff]
    %v276 = vld [vmem:[%s1 + $0x5a0] sm:$0xff]
    %v277 = vld [vmem:[%s1 + $0x5a8] sm:$0xff]
    %v278 = vld [vmem:[%s1 + $0x5b0] sm:$0xff]
    %v279 = vld [vmem:[%s1 + $0x5b8] sm:$0xff]
    %v280 = vld [vmem:[%s1 + $0x5c0] sm:$0xff]
    %v281 = vld [vmem:[%s1 + $0x5c8] sm:$0xff]
    %v282 = vld [vmem:[%s1 + $0x5d0] sm:$0xff]
    %v283 = vld [vmem:[%s1 + $0x5d8] sm:$0xff]
    %v284 = vld [vmem:[%s1 + $0x5e0] sm:$0xff]
    %v285 = vld [vmem:[%s1 + $0x5e8] sm:$0xff]
    %v286 = vld [vmem:[%s1 + $0x5f0] sm:$0xff]
    %v287 = vld [vmem:[%s1 + $0x5f8] sm:$0xff]
    %v288 = vld [vmem:[%s1 + $0x600] sm:$0xff]
    %v289 = vld [vmem:[%s1 + $0x608] sm:$0xff]
    %v290 = vld [vmem:[%s1 + $0x610] sm:$0xff]
    %v291 = vld [vmem:[%s1 + $0x618] sm:$0xff]
    %v292 = vld [vmem:[%s1 + $0x620] sm:$0xff]
    %v293 = vld [vmem:[%s1 + $0x628] sm:$0xff]
    %v294 = vld [vmem:[%s1 + $0x630] sm:$0xff]
    %v295 = vld [vmem:[%s1 + $0x638] sm:$0xff]
    %v296 = vld [vmem:[%s1 + $0x640] sm:$0xff]
    %v297 = vld [vmem:[%s1 + $0x648] sm:$0xff]
    %v298 = vld [vmem:[%s1 + $0x650] sm:$0xff]
    %v299 = vld [vmem:[%s1 + $0x658] sm:$0xff]
    %v300 = vld [vmem:[%s1 + $0x660] sm:$0xff]
    %v301 = vld [vmem:[%s1 + $0x668] sm:$0xff]
    %v302 = vld [vmem:[%s1 + $0x670] sm:$0xff]
    %v303 = vld [vmem:[%s1 + $0x678] sm:$0xff]
    %v304 = vld [vmem:[%s1 + $0x680] sm:$0xff]
    %v305 = vld [vmem:[%s1 + $0x688] sm:$0xff]
    %v306 = vld [vmem:[%s1 + $0x690] sm:$0xff]
    %v307 = vld [vmem:[%s1 + $0x698] sm:$0xff]
    %v308 = vld [vmem:[%s1 + $0x6a0] sm:$0xff]
    %v309 = vld [vmem:[%s1 + $0x6a8] sm:$0xff]
    %v310 = vld [vmem:[%s1 + $0x6b0] sm:$0xff]
    %v311 = vld [vmem:[%s1 + $0x6b8] sm:$0xff]
    %v312 = vld [vmem:[%s1 + $0x6c0] sm:$0xff]
    %v313 = vld [vmem:[%s1 + $0x6c8] sm:$0xff]
    %v314 = vld [vmem:[%s1 + $0x6d0] sm:$0xff]
    %v315 = vld [vmem:[%s1 + $0x6d8] sm:$0xff]
    %v316 = vld [vmem:[%s1 + $0x6e0] sm:$0xff]
    %v317 = vld [vmem:[%s1 + $0x6e8] sm:$0xff]
    %v318 = vld [vmem:[%s1 + $0x6f0] sm:$0xff]
    %v319 = vld [vmem:[%s1 + $0x6f8] sm:$0xff]
    %v320 = vld [vmem:[%s1 + $0x700] sm:$0xff]
    %v321 = vld [vmem:[%s1 + $0x708] sm:$0xff]
    %v322 = vld [vmem:[%s1 + $0x710] sm:$0xff]
    %v323 = vld [vmem:[%s1 + $0x718] sm:$0xff]
    %v324 = vld [vmem:[%s1 + $0x720] sm:$0xff]
    %v325 = vld [vmem:[%s1 + $0x728] sm:$0xff]
    %v326 = vld [vmem:[%s1 + $0x730] sm:$0xff]
    %v327 = vld [vmem:[%s1 + $0x738] sm:$0xff]
    %v328 = vld [vmem:[%s1 + $0x740] sm:$0xff]
    %v329 = vld [vmem:[%s1 + $0x748] sm:$0xff]
    %v330 = vld [vmem:[%s1 + $0x750] sm:$0xff]
    %v331 = vld [vmem:[%s1 + $0x758] sm:$0xff]
    %v332 = vld [vmem:[%s1 + $0x760] sm:$0xff]
    %v333 = vld [vmem:[%s1 + $0x768] sm:$0xff]
    %v334 = vld [vmem:[%s1 + $0x770] sm:$0xff]
    %v335 = vld [vmem:[%s1 + $0x778] sm:$0xff]
    %v336 = vld [vmem:[%s1 + $0x780] sm:$0xff]
    %v337 = vld [vmem:[%s1 + $0x788] sm:$0xff]
    %v338 = vld [vmem:[%s1 + $0x790] sm:$0xff]
    %v339 = vld [vmem:[%s1 + $0x798] sm:$0xff]
    %v340 = vld [vmem:[%s1 + $0x7a0] sm:$0xff]
    %v341 = vld [vmem:[%s1 + $0x7a8] sm:$0xff]
    %v342 = vld [vmem:[%s1 + $0x7b0] sm:$0xff]
    %v343 = vld [vmem:[%s1 + $0x7b8] sm:$0xff]
    %v344 = vld [vmem:[%s1 + $0x7c0] sm:$0xff]
    %v345 = vld [vmem:[%s1 + $0x7c8] sm:$0xff]
    %v346 = vld [vmem:[%s1 + $0x7d0] sm:$0xff]
    %v347 = vld [vmem:[%s1 + $0x7d8] sm:$0xff]
    %v348 = vld [vmem:[%s1 + $0x7e0] sm:$0xff]
    %v349 = vld [vmem:[%s1 + $0x7e8] sm:$0xff]
    %v350 = vld [vmem:[%s1 + $0x7f0] sm:$0xff]
    %v351 = vld [vmem:[%s1 + $0x7f8] sm:$0xff]
    %v352 = vld [vmem:[%s1 + $0x800] sm:$0xff]
    %v353 = vld [vmem:[%s1 + $0x808] sm:$0xff]
    %v354 = vld [vmem:[%s1 + $0x810] sm:$0xff]
    %v355 = vld [vmem:[%s1 + $0x818] sm:$0xff]
    %v356 = vld [vmem:[%s1 + $0x820] sm:$0xff]
    %v357 = vld [vmem:[%s1 + $0x828] sm:$0xff]
    %v358 = vld [vmem:[%s1 + $0x830] sm:$0xff]
    %v359 = vld [vmem:[%s1 + $0x838] sm:$0xff]
    %v360 = vld [vmem:[%s1 + $0x840] sm:$0xff]
    %v361 = vld [vmem:[%s1 + $0x848] sm:$0xff]
    %v362 = vld [vmem:[%s1 + $0x850] sm:$0xff]
    %v363 = vld [vmem:[%s1 + $0x858] sm:$0xff]
    %v364 = vld [vmem:[%s1 + $0x860] sm:$0xff]
    %v365 = vld [vmem:[%s1 + $0x868] sm:$0xff]
    %v366 = vld [vmem:[%s1 + $0x870] sm:$0xff]
    %v367 = vld [vmem:[%s1 + $0x878] sm:$0xff]
    %v368 = vld [vmem:[%s1 + $0x880] sm:$0xff]
    %v369 = vld [vmem:[%s1 + $0x888] sm:$0xff]
    %v370 = vld [vmem:[%s1 + $0x890] sm:$0xff]
    %v371 = vld [vmem:[%s1 + $0x898] sm:$0xff]
    %v372 = vld [vmem:[%s1 + $0x8a0] sm:$0xff]
    %v373 = vld [vmem:[%s1 + $0x8a8] sm:$0xff]
    %v374 = vld [vmem:[%s1 + $0x8b0] sm:$0xff]
    %v375 = vld [vmem:[%s1 + $0x8b8] sm:$0xff]
    %v376 = vld [vmem:[%s1 + $0x8c0] sm:$0xff]
    %v377 = vld [vmem:[%s1 + $0x8c8] sm:$0xff]
    %v378 = vld [vmem:[%s1 + $0x8d0] sm:$0xff]
    %v379 = vld [vmem:[%s1 + $0x8d8] sm:$0xff]
    %v380 = vld [vmem:[%s1 + $0x8e0] sm:$0xff]
    %v381 = vld [vmem:[%s1 + $0x8e8] sm:$0xff]
    %v382 = vld [vmem:[%s1 + $0x8f0] sm:$0xff]
    %v383 = vld [vmem:[%s1 + $0x8f8] sm:$0xff]
    %v384 = vld [vmem:[%s1 + $0x900] sm:$0xff]
    %v385 = vld [vmem:[%s1 + $0x908] sm:$0xff]
    %v386 = vld [vmem:[%s1 + $0x910] sm:$0xff]
    %v387 = vld [vmem:[%s1 + $0x918] sm:$0xff]
    %v388 = vld [vmem:[%s1 + $0x920] sm:$0xff]
    %v389 = vld [vmem:[%s1 + $0x928] sm:$0xff]
    %v390 = vld [vmem:[%s1 + $0x930] sm:$0xff]
    %v391 = vld [vmem:[%s1 + $0x938] sm:$0xff]
    %v392 = vld [vmem:[%s1 + $0x940] sm:$0xff]
    %v393 = vld [vmem:[%s1 + $0x948] sm:$0xff]
    %v394 = vld [vmem:[%s1 + $0x950] sm:$0xff]
    %v395 = vld [vmem:[%s1 + $0x958] sm:$0xff]
    %v396 = vld [vmem:[%s1 + $0x960] sm:$0xff]
    %v397 = vld [vmem:[%s1 + $0x968] sm:$0xff]
    %v398 = vld [vmem:[%s1 + $0x970] sm:$0xff]
    %v399 = vld [vmem:[%s1 + $0x978] sm:$0xff]
    %v400 = vld [vmem:[%s1 + $0x980] sm:$0xff]
    %v401 = vld [vmem:[%s1 + $0x988] sm:$0xff]
    %v402 = vld [vmem:[%s1 + $0x990] sm:$0xff]
    %v403 = vld [vmem:[%s1 + $0x998] sm:$0xff]
    %v404 = vld [vmem:[%s1 + $0x9a0] sm:$0xff]
    %v405 = vld [vmem:[%s1 + $0x9a8] sm:$0xff]
    %v406 = vld [vmem:[%s1 + $0x9b0] sm:$0xff]
    %v407 = vld [vmem:[%s1 + $0x9b8] sm:$0xff]
    %v408 = vld [vmem:[%s1 + $0x9c0] sm:$0xff]
    %v409 = vld [vmem:[%s1 + $0x9c8] sm:$0xff]
    %v410 = vld [vmem:[%s1 + $0x9d0] sm:$0xff]
    %v411 = vld [vmem:[%s1 + $0x9d8] sm:$0xff]
    %v412 = vld [vmem:[%s1 + $0x9e0] sm:$0xff]
    %v413 = vld [vmem:[%s1 + $0x9e8] sm:$0xff]
    %v414 = vld [vmem:[%s1 + $0x9f0] sm:$0xff]
    %v415 = vld [vmem:[%s1 + $0x9f8] sm:$0xff]
    %v416 = vld [vmem:[%s1 + $0xa00] sm:$0xff]
    %v417 = vld [vmem:[%s1 + $0xa08] sm:$0xff]
    %v418 = vld [vmem:[%s1 + $0xa10] sm:$0xff]
    %v419 = vld [vmem:[%s1 + $0xa18] sm:$0xff]
    %v420 = vld [vmem:[%s1 + $0xa20] sm:$0xff]
    %v421 = vld [vmem:[%s1 + $0xa28] sm:$0xff]
    %v422 = vld [vmem:[%s1 + $0xa30] sm:$0xff]
    %v423 = vld [vmem:[%s1 + $0xa38] sm:$0xff]
    %v424 = vld [vmem:[%s1 + $0xa40] sm:$0xff]
    %v425 = vld [vmem:[%s1 + $0xa48] sm:$0xff]
    %v426 = vld [vmem:[%s1 + $0xa50] sm:$0xff]
    %v427 = vld [vmem:[%s1 + $0xa58] sm:$0xff]
    %v428 = vld [vmem:[%s1 + $0xa60] sm:$0xff]
    %v429 = vld [vmem:[%s1 + $0xa68] sm:$0xff]
    %v430 = vld [vmem:[%s1 + $0xa70] sm:$0xff]
    %v431 = vld [vmem:[%s1 + $0xa78] sm:$0xff]
    %v432 = vld [vmem:[%s1 + $0xa80] sm:$0xff]
    %v433 = vld [vmem:[%s1 + $0xa88] sm:$0xff]
    %v434 = vld [vmem:[%s1 + $0xa90] sm:$0xff]
    %v435 = vld [vmem:[%s1 + $0xa98] sm:$0xff]
    %v436 = vld [vmem:[%s1 + $0xaa0] sm:$0xff]
    %v437 = vld [vmem:[%s1 + $0xaa8] sm:$0xff]
    %v438 = vld [vmem:[%s1 + $0xab0] sm:$0xff]
    %v439 = vld [vmem:[%s1 + $0xab8] sm:$0xff]
    %v440 = vld [vmem:[%s1 + $0xac0] sm:$0xff]
    %v441 = vld [vmem:[%s1 + $0xac8] sm:$0xff]
    %v442 = vld [vmem:[%s1 + $0xad0] sm:$0xff]
    %v443 = vld [vmem:[%s1 + $0xad8] sm:$0xff]
    %v444 = vld [vmem:[%s1 + $0xae0] sm:$0xff]
    %v445 = vld [vmem:[%s1 + $0xae8] sm:$0xff]
    %v446 = vld [vmem:[%s1 + $0xaf0] sm:$0xff]
    %v447 = vld [vmem:[%s1 + $0xaf8] sm:$0xff]
    %v448 = vld [vmem:[%s1 + $0xb00] sm:$0xff]
    %v449 = vld [vmem:[%s1 + $0xb08] sm:$0xff]
    %v450 = vld [vmem:[%s1 + $0xb10] sm:$0xff]
    %v451 = vld [vmem:[%s1 + $0xb18] sm:$0xff]
    %v452 = vld [vmem:[%s1 + $0xb20] sm:$0xff]
    %v453 = vld [vmem:[%s1 + $0xb28] sm:$0xff]
    %v454 = vld [vmem:[%s1 + $0xb30] sm:$0xff]
    %v455 = vld [vmem:[%s1 + $0xb38] sm:$0xff]
    %v456 = vld [vmem:[%s1 + $0xb40] sm:$0xff]
    %v457 = vld [vmem:[%s1 + $0xb48] sm:$0xff]
    %v458 = vld [vmem:[%s1 + $0xb50] sm:$0xff]
    %v459 = vld [vmem:[%s1 + $0xb58] sm:$0xff]
    %v460 = vld [vmem:[%s1 + $0xb60] sm:$0xff]
    %v461 = vld [vmem:[%s1 + $0xb68] sm:$0xff]
    %v462 = vld [vmem:[%s1 + $0xb70] sm:$0xff]
    %v463 = vld [vmem:[%s1 + $0xb78] sm:$0xff]
    %v464 = vld [vmem:[%s1 + $0xb80] sm:$0xff]
    %v465 = vld [vmem:[%s1 + $0xb88] sm:$0xff]
    %v466 = vld [vmem:[%s1 + $0xb90] sm:$0xff]
    %v467 = vld [vmem:[%s1 + $0xb98] sm:$0xff]
    %v468 = vld [vmem:[%s1 + $0xba0] sm:$0xff]
    %v469 = vld [vmem:[%s1 + $0xba8] sm:$0xff]
    %v470 = vld [vmem:[%s1 + $0xbb0] sm:$0xff]
    %v471 = vld [vmem:[%s1 + $0xbb8] sm:$0xff]
    %v472 = vld [vmem:[%s1 + $0xbc0] sm:$0xff]
    %v473 = vld [vmem:[%s1 + $0xbc8] sm:$0xff]
    %v474 = vld [vmem:[%s1 + $0xbd0] sm:$0xff]
    %v475 = vld [vmem:[%s1 + $0xbd8] sm:$0xff]
    %v476 = vld [vmem:[%s1 + $0xbe0] sm:$0xff]
    %v477 = vld [vmem:[%s1 + $0xbe8] sm:$0xff]
    %v478 = vld [vmem:[%s1 + $0xbf0] sm:$0xff]
    %v479 = vld [vmem:[%s1 + $0xbf8] sm:$0xff]
    %v480 = vld [vmem:[%s1 + $0xc00] sm:$0xff]
    %v481 = vld [vmem:[%s1 + $0xc08] sm:$0xff]
    %v482 = vld [vmem:[%s1 + $0xc10] sm:$0xff]
    %v483 = vld [vmem:[%s1 + $0xc18] sm:$0xff]
    %v484 = vld [vmem:[%s1 + $0xc20] sm:$0xff]
    %v485 = vld [vmem:[%s1 + $0xc28] sm:$0xff]
    %v486 = vld [vmem:[%s1 + $0xc30] sm:$0xff]
    %v487 = vld [vmem:[%s1 + $0xc38] sm:$0xff]
    %v488 = vld [vmem:[%s1 + $0xc40] sm:$0xff]
    %v489 = vld [vmem:[%s1 + $0xc48] sm:$0xff]
    %v490 = vld [vmem:[%s1 + $0xc50] sm:$0xff]
    %v491 = vld [vmem:[%s1 + $0xc58] sm:$0xff]
    %v492 = vld [vmem:[%s1 + $0xc60] sm:$0xff]
    %v493 = vld [vmem:[%s1 + $0xc68] sm:$0xff]
    %v494 = vld [vmem:[%s1 + $0xc70] sm:$0xff]
    %v495 = vld [vmem:[%s1 + $0xc78] sm:$0xff]
    %v496 = vld [vmem:[%s1 + $0xc80] sm:$0xff]
    %v497 = vld [vmem:[%s1 + $0xc88] sm:$0xff]
    %v498 = vld [vmem:[%s1 + $0xc90] sm:$0xff]
    %v499 = vld [vmem:[%s1 + $0xc98] sm:$0xff]
    %v500 = vld [vmem:[%s1 + $0xca0] sm:$0xff]
    %v501 = vld [vmem:[%s1 + $0xca8] sm:$0xff]
    %v502 = vld [vmem:[%s1 + $0xcb0] sm:$0xff]
    %v503 = vld [vmem:[%s1 + $0xcb8] sm:$0xff]
    %v504 = vld [vmem:[%s1 + $0xcc0] sm:$0xff]
    %v505 = vld [vmem:[%s1 + $0xcc8] sm:$0xff]
    %v506 = vld [vmem:[%s1 + $0xcd0] sm:$0xff]
    %v507 = vld [vmem:[%s1 + $0xcd8] sm:$0xff]
    %v508 = vld [vmem:[%s1 + $0xce0] sm:$0xff]
    %v509 = vld [vmem:[%s1 + $0xce8] sm:$0xff]
    %v510 = vld [vmem:[%s1 + $0xcf0] sm:$0xff]
    %v511 = vld [vmem:[%s1 + $0xcf8] sm:$0xff]
    %v512 = vld [vmem:[%s1 + $0xd00] sm:$0xff]
    %v513 = vld [vmem:[%s1 + $0xd08] sm:$0xff]
    %v514 = vld [vmem:[%s1 + $0xd10] sm:$0xff]
    %v515 = vld [vmem:[%s1 + $0xd18] sm:$0xff]
    %v516 = vld [vmem:[%s1 + $0xd20] sm:$0xff]
    %v517 = vld [vmem:[%s1 + $0xd28] sm:$0xff]
    %v518 = vld [vmem:[%s1 + $0xd30] sm:$0xff]
    %v519 = vld [vmem:[%s1 + $0xd38] sm:$0xff]
    %v520 = vld [vmem:[%s1 + $0xd40] sm:$0xff]
    %v521 = vld [vmem:[%s1 + $0xd48] sm:$0xff]
    %v522 = vld [vmem:[%s1 + $0xd50] sm:$0xff]
    %v523 = vld [vmem:[%s1 + $0xd58] sm:$0xff]
    %v524 = vld [vmem:[%s1 + $0xd60] sm:$0xff]
    %v525 = vld [vmem:[%s1 + $0xd68] sm:$0xff]
    %v526 = vld [vmem:[%s1 + $0xd70] sm:$0xff]
    %v527 = vld [vmem:[%s1 + $0xd78] sm:$0xff]
    %v528 = vld [vmem:[%s1 + $0xd80] sm:$0xff]
    %v529 = vld [vmem:[%s1 + $0xd88] sm:$0xff]
    %v530 = vld [vmem:[%s1 + $0xd90] sm:$0xff]
    %v531 = vld [vmem:[%s1 + $0xd98] sm:$0xff]
    %v532 = vld [vmem:[%s1 + $0xda0] sm:$0xff]
    %v533 = vld [vmem:[%s1 + $0xda8] sm:$0xff]
    %v534 = vld [vmem:[%s1 + $0xdb0] sm:$0xff]
    %v535 = vld [vmem:[%s1 + $0xdb8] sm:$0xff]
    %v536 = vld [vmem:[%s1 + $0xdc0] sm:$0xff]
    %v537 = vld [vmem:[%s1 + $0xdc8] sm:$0xff]
    %v538 = vld [vmem:[%s1 + $0xdd0] sm:$0xff]
    %v539 = vld [vmem:[%s1 + $0xdd8] sm:$0xff]
    %v540 = vld [vmem:[%s1 + $0xde0] sm:$0xff]
    %v541 = vld [vmem:[%s1 + $0xde8] sm:$0xff]
    %v542 = vld [vmem:[%s1 + $0xdf0] sm:$0xff]
    %v543 = vld [vmem:[%s1 + $0xdf8] sm:$0xff]
    %v544 = vld [vmem:[%s1 + $0xe00] sm:$0xff]
    %v545 = vld [vmem:[%s1 + $0xe08] sm:$0xff]
    %v546 = vld [vmem:[%s1 + $0xe10] sm:$0xff]
    %v547 = vld [vmem:[%s1 + $0xe18] sm:$0xff]
    %v548 = vld [vmem:[%s1 + $0xe20] sm:$0xff]
    %v549 = vld [vmem:[%s1 + $0xe28] sm:$0xff]
    %v550 = vld [vmem:[%s1 + $0xe30] sm:$0xff]
    %v551 = vld [vmem:[%s1 + $0xe38] sm:$0xff]
    %v552 = vld [vmem:[%s1 + $0xe40] sm:$0xff]
    %v553 = vld [vmem:[%s1 + $0xe48] sm:$0xff]
    %v554 = vld [vmem:[%s1 + $0xe50] sm:$0xff]
    %v555 = vld [vmem:[%s1 + $0xe58] sm:$0xff]
    %v556 = vld [vmem:[%s1 + $0xe60] sm:$0xff]
    %v557 = vld [vmem:[%s1 + $0xe68] sm:$0xff]
    %v558 = vld [vmem:[%s1 + $0xe70] sm:$0xff]
    %v559 = vld [vmem:[%s1 + $0xe78] sm:$0xff]
    %v560 = vld [vmem:[%s1 + $0xe80] sm:$0xff]
    %v561 = vld [vmem:[%s1 + $0xe88] sm:$0xff]
    %v562 = vld [vmem:[%s1 + $0xe90] sm:$0xff]
    %v563 = vld [vmem:[%s1 + $0xe98] sm:$0xff]
    %v564 = vld [vmem:[%s1 + $0xea0] sm:$0xff]
    %v565 = vld [vmem:[%s1 + $0xea8] sm:$0xff]
    %v566 = vld [vmem:[%s1 + $0xeb0] sm:$0xff]
    %v567 = vld [vmem:[%s1 + $0xeb8] sm:$0xff]
    %v568 = vld [vmem:[%s1 + $0xec0] sm:$0xff]
    %v569 = vld [vmem:[%s1 + $0xec8] sm:$0xff]
    %v570 = vld [vmem:[%s1 + $0xed0] sm:$0xff]
    %v571 = vld [vmem:[%s1 + $0xed8] sm:$0xff]
    %v572 = vld [vmem:[%s1 + $0xee0] sm:$0xff]
    %v573 = vld [vmem:[%s1 + $0xee8] sm:$0xff]
    %v574 = vld [vmem:[%s1 + $0xef0] sm:$0xff]
    %v575 = vld [vmem:[%s1 + $0xef8] sm:$0xff]
    %v576 = vld [vmem:[%s1 + $0xf00] sm:$0xff]
    %v577 = vld [vmem:[%s1 + $0xf08] sm:$0xff]
    %v578 = vld [vmem:[%s1 + $0xf10] sm:$0xff]
    %v579 = vld [vmem:[%s1 + $0xf18] sm:$0xff]
    %v580 = vld [vmem:[%s1 + $0xf20] sm:$0xff]
    %v581 = vld [vmem:[%s1 + $0xf28] sm:$0xff]
    %v582 = vld [vmem:[%s1 + $0xf30] sm:$0xff]
    %v583 = vld [vmem:[%s1 + $0xf38] sm:$0xff]
    %v584 = vld [vmem:[%s1 + $0xf40] sm:$0xff]
    %v585 = vld [vmem:[%s1 + $0xf48] sm:$0xff]
    %v586 = vld [vmem:[%s1 + $0xf50] sm:$0xff]
    %v587 = vld [vmem:[%s1 + $0xf58] sm:$0xff]
    %v588 = vld [vmem:[%s1 + $0xf60] sm:$0xff]
    %v589 = vld [vmem:[%s1 + $0xf68] sm:$0xff]
    %v590 = vld [vmem:[%s1 + $0xf70] sm:$0xff]
    %v591 = vld [vmem:[%s1 + $0xf78] sm:$0xff]
    %v592 = vld [vmem:[%s1 + $0xf80] sm:$0xff]
    %v593 = vld [vmem:[%s1 + $0xf88] sm:$0xff]
    %v594 = vld [vmem:[%s1 + $0xf90] sm:$0xff]
    %v595 = vld [vmem:[%s1 + $0xf98] sm:$0xff]
    %v596 = vld [vmem:[%s1 + $0xfa0] sm:$0xff]
    %v597 = vld [vmem:[%s1 + $0xfa8] sm:$0xff]
    %v598 = vld [vmem:[%s1 + $0xfb0] sm:$0xff]
    %v599 = vld [vmem:[%s1 + $0xfb8] sm:$0xff]
    %v600 = vld [vmem:[%s1 + $0xfc0] sm:$0xff]
    %v601 = vld [vmem:[%s1 + $0xfc8] sm:$0xff]
    %v602 = vld [vmem:[%s1 + $0xfd0] sm:$0xff]
    %v603 = vld [vmem:[%s1 + $0xfd8] sm:$0xff]
    %v604 = vld [vmem:[%s1 + $0xfe0] sm:$0xff]
    %v605 = vld [vmem:[%s1 + $0xfe8] sm:$0xff]
    %v606 = vld [vmem:[%s1 + $0xff0] sm:$0xff]
    %v607 = vld [vmem:[%s1 + $0xff8] sm:$0xff]
    %v608 = vld [vmem:[%s1 + $0x1000] sm:$0xff]
    %v609 = vld [vmem:[%s1 + $0x1008] sm:$0xff]
    %v610 = vld [vmem:[%s1 + $0x1010] sm:$0xff]
    %v611 = vld [vmem:[%s1 + $0x1018] sm:$0xff]
    %v612 = vld [vmem:[%s1 + $0x1020] sm:$0xff]
    %v613 = vld [vmem:[%s1 + $0x1028] sm:$0xff]
    %v614 = vld [vmem:[%s1 + $0x1030] sm:$0xff]
    %v615 = vld [vmem:[%s1 + $0x1038] sm:$0xff]
    %v616 = vld [vmem:[%s1 + $0x1040] sm:$0xff]
    %v617 = vld [vmem:[%s1 + $0x1048] sm:$0xff]
    %v618 = vld [vmem:[%s1 + $0x1050] sm:$0xff]
    %v619 = vld [vmem:[%s1 + $0x1058] sm:$0xff]
    %v620 = vld [vmem:[%s1 + $0x1060] sm:$0xff]
    %v621 = vld [vmem:[%s1 + $0x1068] sm:$0xff]
    %v622 = vld [vmem:[%s1 + $0x1070] sm:$0xff]
    %v623 = vld [vmem:[%s1 + $0x1078] sm:$0xff]
    %v624 = vld [vmem:[%s1 + $0x1080] sm:$0xff]
    %v625 = vld [vmem:[%s1 + $0x1088] sm:$0xff]
    %v626 = vld [vmem:[%s1 + $0x1090] sm:$0xff]
    %v627 = vld [vmem:[%s1 + $0x1098] sm:$0xff]
    %v628 = vld [vmem:[%s1 + $0x10a0] sm:$0xff]
    %v629 = vld [vmem:[%s1 + $0x10a8] sm:$0xff]
    %v630 = vld [vmem:[%s1 + $0x10b0] sm:$0xff]
    %v631 = vld [vmem:[%s1 + $0x10b8] sm:$0xff]
    %v632 = vld [vmem:[%s1 + $0x10c0] sm:$0xff]
    %v633 = vld [vmem:[%s1 + $0x10c8] sm:$0xff]
    %v634 = vld [vmem:[%s1 + $0x10d0] sm:$0xff]
    %v635 = vld [vmem:[%s1 + $0x10d8] sm:$0xff]
    %v636 = vld [vmem:[%s1 + $0x10e0] sm:$0xff]
    %v637 = vld [vmem:[%s1 + $0x10e8] sm:$0xff]
    %v638 = vld [vmem:[%s1 + $0x10f0] sm:$0xff]
    %v639 = vld [vmem:[%s1 + $0x10f8] sm:$0xff]
    %v640 = vld [vmem:[%s1 + $0x1100] sm:$0xff]
    %v641 = vld [vmem:[%s1 + $0x1108] sm:$0xff]
    %v642 = vld [vmem:[%s1 + $0x1110] sm:$0xff]
    %v643 = vld [vmem:[%s1 + $0x1118] sm:$0xff]
    %v644 = vld [vmem:[%s1 + $0x1120] sm:$0xff]
    %v645 = vld [vmem:[%s1 + $0x1128] sm:$0xff]
    %v646 = vld [vmem:[%s1 + $0x1130] sm:$0xff]
    %v647 = vld [vmem:[%s1 + $0x1138] sm:$0xff]
    %v648 = vld [vmem:[%s1 + $0x1140] sm:$0xff]
    %v649 = vld [vmem:[%s1 + $0x1148] sm:$0xff]
    %v650 = vld [vmem:[%s1 + $0x1150] sm:$0xff]
    %v651 = vld [vmem:[%s1 + $0x1158] sm:$0xff]
    %v652 = vld [vmem:[%s1 + $0x1160] sm:$0xff]
    %v653 = vld [vmem:[%s1 + $0x1168] sm:$0xff]
    %v654 = vld [vmem:[%s1 + $0x1170] sm:$0xff]
    %v655 = vld [vmem:[%s1 + $0x1178] sm:$0xff]
    %v656 = vld [vmem:[%s1 + $0x1180] sm:$0xff]
    %v657 = vld [vmem:[%s1 + $0x1188] sm:$0xff]
    %v658 = vld [vmem:[%s1 + $0x1190] sm:$0xff]
    %v659 = vld [vmem:[%s1 + $0x1198] sm:$0xff]
    %v660 = vld [vmem:[%s1 + $0x11a0] sm:$0xff]
    %v661 = vld [vmem:[%s1 + $0x11a8] sm:$0xff]
    %v662 = vld [vmem:[%s1 + $0x11b0] sm:$0xff]
    %v663 = vld [vmem:[%s1 + $0x11b8] sm:$0xff]
    %v664 = vld [vmem:[%s1 + $0x11c0] sm:$0xff]
    %v665 = vld [vmem:[%s1 + $0x11c8] sm:$0xff]
    %v666 = vld [vmem:[%s1 + $0x11d0] sm:$0xff]
    %v667 = vld [vmem:[%s1 + $0x11d8] sm:$0xff]
    %v668 = vld [vmem:[%s1 + $0x11e0] sm:$0xff]
    %v669 = vld [vmem:[%s1 + $0x11e8] sm:$0xff]
    %v670 = vld [vmem:[%s1 + $0x11f0] sm:$0xff]
    %v671 = vld [vmem:[%s1 + $0x11f8] sm:$0xff]
    %v672 = vld [vmem:[%s1 + $0x1200] sm:$0xff]
    %v673 = vld [vmem:[%s1 + $0x1208] sm:$0xff]
    %v674 = vld [vmem:[%s1 + $0x1210] sm:$0xff]
    %v675 = vld [vmem:[%s1 + $0x1218] sm:$0xff]
    %v676 = vld [vmem:[%s1 + $0x1220] sm:$0xff]
    %v677 = vld [vmem:[%s1 + $0x1228] sm:$0xff]
    %v678 = vld [vmem:[%s1 + $0x1230] sm:$0xff]
    %v679 = vld [vmem:[%s1 + $0x1238] sm:$0xff]
    %v680 = vld [vmem:[%s1 + $0x1240] sm:$0xff]
    %v681 = vld [vmem:[%s1 + $0x1248] sm:$0xff]
    %v682 = vld [vmem:[%s1 + $0x1250] sm:$0xff]
    %v683 = vld [vmem:[%s1 + $0x1258] sm:$0xff]
    %v684 = vld [vmem:[%s1 + $0x1260] sm:$0xff]
    %v685 = vld [vmem:[%s1 + $0x1268] sm:$0xff]
    %v686 = vld [vmem:[%s1 + $0x1270] sm:$0xff]
    %v687 = vld [vmem:[%s1 + $0x1278] sm:$0xff]
    %v688 = vld [vmem:[%s1 + $0x1280] sm:$0xff]
    %v689 = vld [vmem:[%s1 + $0x1288] sm:$0xff]
    %v690 = vld [vmem:[%s1 + $0x1290] sm:$0xff]
    %v691 = vld [vmem:[%s1 + $0x1298] sm:$0xff]
    %v692 = vld [vmem:[%s1 + $0x12a0] sm:$0xff]
    %v693 = vld [vmem:[%s1 + $0x12a8] sm:$0xff]
    %v694 = vld [vmem:[%s1 + $0x12b0] sm:$0xff]
    %v695 = vld [vmem:[%s1 + $0x12b8] sm:$0xff]
    %v696 = vld [vmem:[%s1 + $0x12c0] sm:$0xff]
    %v697 = vld [vmem:[%s1 + $0x12c8] sm:$0xff]
    %v698 = vld [vmem:[%s1 + $0x12d0] sm:$0xff]
    %v699 = vld [vmem:[%s1 + $0x12d8] sm:$0xff]
    %v700 = vld [vmem:[%s1 + $0x12e0] sm:$0xff]
    %v701 = vld [vmem:[%s1 + $0x12e8] sm:$0xff]
    %v702 = vld [vmem:[%s1 + $0x12f0] sm:$0xff]
    %v703 = vld [vmem:[%s1 + $0x12f8] sm:$0xff]
    %v704 = vld [vmem:[%s1 + $0x1300] sm:$0xff]
    %v705 = vld [vmem:[%s1 + $0x1308] sm:$0xff]
    %v706 = vld [vmem:[%s1 + $0x1310] sm:$0xff]
    %v707 = vld [vmem:[%s1 + $0x1318] sm:$0xff]
    %v708 = vld [vmem:[%s1 + $0x1320] sm:$0xff]
    %v709 = vld [vmem:[%s1 + $0x1328] sm:$0xff]
    %v710 = vld [vmem:[%s1 + $0x1330] sm:$0xff]
    %v711 = vld [vmem:[%s1 + $0x1338] sm:$0xff]
    %v712 = vld [vmem:[%s1 + $0x1340] sm:$0xff]
    %v713 = vld [vmem:[%s1 + $0x1348] sm:$0xff]
    %v714 = vld [vmem:[%s1 + $0x1350] sm:$0xff]
    %v715 = vld [vmem:[%s1 + $0x1358] sm:$0xff]
    %v716 = vld [vmem:[%s1 + $0x1360] sm:$0xff]
    %v717 = vld [vmem:[%s1 + $0x1368] sm:$0xff]
    %v718 = vld [vmem:[%s1 + $0x1370] sm:$0xff]
    %v719 = vld [vmem:[%s1 + $0x1378] sm:$0xff]
    %v720 = vld [vmem:[%s1 + $0x1380] sm:$0xff]
    %v721 = vld [vmem:[%s1 + $0x1388] sm:$0xff]
    %v722 = vld [vmem:[%s1 + $0x1390] sm:$0xff]
    %v723 = vld [vmem:[%s1 + $0x1398] sm:$0xff]
    %v724 = vld [vmem:[%s1 + $0x13a0] sm:$0xff]
    %v725 = vld [vmem:[%s1 + $0x13a8] sm:$0xff]
    %v726 = vld [vmem:[%s1 + $0x13b0] sm:$0xff]
    %v727 = vld [vmem:[%s1 + $0x13b8] sm:$0xff]
    %v728 = vld [vmem:[%s1 + $0x13c0] sm:$0xff]
    %v729 = vld [vmem:[%s1 + $0x13c8] sm:$0xff]
    %v730 = vld [vmem:[%s1 + $0x13d0] sm:$0xff]
    %v731 = vld [vmem:[%s1 + $0x13d8] sm:$0xff]
    %v732 = vld [vmem:[%s1 + $0x13e0] sm:$0xff]
    %v733 = vld [vmem:[%s1 + $0x13e8] sm:$0xff]
    %v734 = vld [vmem:[%s1 + $0x13f0] sm:$0xff]
    %v735 = vld [vmem:[%s1 + $0x13f8] sm:$0xff]
    %v736 = vld [vmem:[%s1 + $0x1400] sm:$0xff]
    %v737 = vld [vmem:[%s1 + $0x1408] sm:$0xff]
    %v738 = vld [vmem:[%s1 + $0x1410] sm:$0xff]
    %v739 = vld [vmem:[%s1 + $0x1418] sm:$0xff]
    %v740 = vld [vmem:[%s1 + $0x1420] sm:$0xff]
    %v741 = vld [vmem:[%s1 + $0x1428] sm:$0xff]
    %v742 = vld [vmem:[%s1 + $0x1430] sm:$0xff]
    %v743 = vld [vmem:[%s1 + $0x1438] sm:$0xff]
    %v744 = vld [vmem:[%s1 + $0x1440] sm:$0xff]
    %v745 = vld [vmem:[%s1 + $0x1448] sm:$0xff]
    %v746 = vld [vmem:[%s1 + $0x1450] sm:$0xff]
    %v747 = vld [vmem:[%s1 + $0x1458] sm:$0xff]
    %v748 = vld [vmem:[%s1 + $0x1460] sm:$0xff]
    %v749 = vld [vmem:[%s1 + $0x1468] sm:$0xff]
    %v750 = vld [vmem:[%s1 + $0x1470] sm:$0xff]
    %v751 = vld [vmem:[%s1 + $0x1478] sm:$0xff]
    %v752 = vld [vmem:[%s1 + $0x1480] sm:$0xff]
    %v753 = vld [vmem:[%s1 + $0x1488] sm:$0xff]
    %v754 = vld [vmem:[%s1 + $0x1490] sm:$0xff]
    %v755 = vld [vmem:[%s1 + $0x1498] sm:$0xff]
    %v756 = vld [vmem:[%s1 + $0x14a0] sm:$0xff]
    %v757 = vld [vmem:[%s1 + $0x14a8] sm:$0xff]
    %v758 = vld [vmem:[%s1 + $0x14b0] sm:$0xff]
    %v759 = vld [vmem:[%s1 + $0x14b8] sm:$0xff]
    %v760 = vld [vmem:[%s1 + $0x14c0] sm:$0xff]
    %v761 = vld [vmem:[%s1 + $0x14c8] sm:$0xff]
    %v762 = vld [vmem:[%s1 + $0x14d0] sm:$0xff]
    %v763 = vld [vmem:[%s1 + $0x14d8] sm:$0xff]
    %v764 = vld [vmem:[%s1 + $0x14e0] sm:$0xff]
    %v765 = vld [vmem:[%s1 + $0x14e8] sm:$0xff]
    %v766 = vld [vmem:[%s1 + $0x14f0] sm:$0xff]
    %v767 = vld [vmem:[%s1 + $0x14f8] sm:$0xff]
    %v768 = vld [vmem:[%s1 + $0x1500] sm:$0xff]
    %v769 = vld [vmem:[%s1 + $0x1508] sm:$0xff]
    %v770 = vld [vmem:[%s1 + $0x1510] sm:$0xff]
    %v771 = vld [vmem:[%s1 + $0x1518] sm:$0xff]
    %v772 = vld [vmem:[%s1 + $0x1520] sm:$0xff]
    %v773 = vld [vmem:[%s1 + $0x1528] sm:$0xff]
    %v774 = vld [vmem:[%s1 + $0x1530] sm:$0xff]
    %v775 = vld [vmem:[%s1 + $0x1538] sm:$0xff]
    %v776 = vld [vmem:[%s1 + $0x1540] sm:$0xff]
    %v777 = vld [vmem:[%s1 + $0x1548] sm:$0xff]
    %v778 = vld [vmem:[%s1 + $0x1550] sm:$0xff]
    %v779 = vld [vmem:[%s1 + $0x1558] sm:$0xff]
    %v780 = vld [vmem:[%s1 + $0x1560] sm:$0xff]
    %v781 = vld [vmem:[%s1 + $0x1568] sm:$0xff]
    %v782 = vld [vmem:[%s1 + $0x1570] sm:$0xff]
    %v783 = vld [vmem:[%s1 + $0x1578] sm:$0xff]
    %v784 = vld [vmem:[%s1 + $0x1580] sm:$0xff]
    %v785 = vld [vmem:[%s1 + $0x1588] sm:$0xff]
    %v786 = vld [vmem:[%s1 + $0x1590] sm:$0xff]
    %v787 = vld [vmem:[%s1 + $0x1598] sm:$0xff]
    %v788 = vld [vmem:[%s1 + $0x15a0] sm:$0xff]
    %v789 = vld [vmem:[%s1 + $0x15a8] sm:$0xff]
    %v790 = vld [vmem:[%s1 + $0x15b0] sm:$0xff]
    %v791 = vld [vmem:[%s1 + $0x15b8] sm:$0xff]
    %v792 = vld [vmem:[%s1 + $0x15c0] sm:$0xff]
    %v793 = vld [vmem:[%s1 + $0x15c8] sm:$0xff]
    %v794 = vld [vmem:[%s1 + $0x15d0] sm:$0xff]
    %v795 = vld [vmem:[%s1 + $0x15d8] sm:$0xff]
    %v796 = vld [vmem:[%s1 + $0x15e0] sm:$0xff]
    %v797 = vld [vmem:[%s1 + $0x15e8] sm:$0xff]
    %v798 = vld [vmem:[%s1 + $0x15f0] sm:$0xff]
    %v799 = vld [vmem:[%s1 + $0x15f8] sm:$0xff]
    %v800 = vld [vmem:[%s1 + $0x1600] sm:$0xff]
    %v801 = vld [vmem:[%s1 + $0x1608] sm:$0xff]
    %v802 = vld [vmem:[%s1 + $0x1610] sm:$0xff]
    %v803 = vld [vmem:[%s1 + $0x1618] sm:$0xff]
    %v804 = vld [vmem:[%s1 + $0x1620] sm:$0xff]
    %v805 = vld [vmem:[%s1 + $0x1628] sm:$0xff]
    %v806 = vld [vmem:[%s1 + $0x1630] sm:$0xff]
    %v807 = vld [vmem:[%s1 + $0x1638] sm:$0xff]
    %v808 = vld [vmem:[%s1 + $0x1640] sm:$0xff]
    %v809 = vld [vmem:[%s1 + $0x1648] sm:$0xff]
    %v810 = vld [vmem:[%s1 + $0x1650] sm:$0xff]
    %v811 = vld [vmem:[%s1 + $0x1658] sm:$0xff]
    %v812 = vld [vmem:[%s1 + $0x1660] sm:$0xff]
    %v813 = vld [vmem:[%s1 + $0x1668] sm:$0xff]
    %v814 = vld [vmem:[%s1 + $0x1670] sm:$0xff]
    %v815 = vld [vmem:[%s1 + $0x1678] sm:$0xff]
    %v816 = vld [vmem:[%s1 + $0x1680] sm:$0xff]
    %v817 = vld [vmem:[%s1 + $0x1688] sm:$0xff]
    %v818 = vld [vmem:[%s1 + $0x1690] sm:$0xff]
    %v819 = vld [vmem:[%s1 + $0x1698] sm:$0xff]
    %v820 = vld [vmem:[%s1 + $0x16a0] sm:$0xff]
    %v821 = vld [vmem:[%s1 + $0x16a8] sm:$0xff]
    %v822 = vld [vmem:[%s1 + $0x16b0] sm:$0xff]
    %v823 = vld [vmem:[%s1 + $0x16b8] sm:$0xff]
    %v824 = vld [vmem:[%s1 + $0x16c0] sm:$0xff]
    %v825 = vld [vmem:[%s1 + $0x16c8] sm:$0xff]
    %v826 = vld [vmem:[%s1 + $0x16d0] sm:$0xff]
    %v827 = vld [vmem:[%s1 + $0x16d8] sm:$0xff]
    %v828 = vld [vmem:[%s1 + $0x16e0] sm:$0xff]
    %v829 = vld [vmem:[%s1 + $0x16e8] sm:$0xff]
    %v830 = vld [vmem:[%s1 + $0x16f0] sm:$0xff]
    %v831 = vld [vmem:[%s1 + $0x16f8] sm:$0xff]
    %v832 = vld [vmem:[%s1 + $0x1700] sm:$0xff]
    %v833 = vld [vmem:[%s1 + $0x1708] sm:$0xff]
    %v834 = vld [vmem:[%s1 + $0x1710] sm:$0xff]
    %v835 = vld [vmem:[%s1 + $0x1718] sm:$0xff]
    %v836 = vld [vmem:[%s1 + $0x1720] sm:$0xff]
    %v837 = vld [vmem:[%s1 + $0x1728] sm:$0xff]
    %v838 = vld [vmem:[%s1 + $0x1730] sm:$0xff]
    %v839 = vld [vmem:[%s1 + $0x1738] sm:$0xff]
    %v840 = vld [vmem:[%s1 + $0x1740] sm:$0xff]
    %v841 = vld [vmem:[%s1 + $0x1748] sm:$0xff]
    %v842 = vld [vmem:[%s1 + $0x1750] sm:$0xff]
    %v843 = vld [vmem:[%s1 + $0x1758] sm:$0xff]
    %v844 = vld [vmem:[%s1 + $0x1760] sm:$0xff]
    %v845 = vld [vmem:[%s1 + $0x1768] sm:$0xff]
    %v846 = vld [vmem:[%s1 + $0x1770] sm:$0xff]
    %v847 = vld [vmem:[%s1 + $0x1778] sm:$0xff]
    %v848 = vld [vmem:[%s1 + $0x1780] sm:$0xff]
    %v849 = vld [vmem:[%s1 + $0x1788] sm:$0xff]
    %v850 = vld [vmem:[%s1 + $0x1790] sm:$0xff]
    %v851 = vld [vmem:[%s1 + $0x1798] sm:$0xff]
    %v852 = vld [vmem:[%s1 + $0x17a0] sm:$0xff]
    %v853 = vld [vmem:[%s1 + $0x17a8] sm:$0xff]
    %v854 = vld [vmem:[%s1 + $0x17b0] sm:$0xff]
    %v855 = vld [vmem:[%s1 + $0x17b8] sm:$0xff]
    %v856 = vld [vmem:[%s1 + $0x17c0] sm:$0xff]
    %v857 = vld [vmem:[%s1 + $0x17c8] sm:$0xff]
    %v858 = vld [vmem:[%s1 + $0x17d0] sm:$0xff]
    %v859 = vld [vmem:[%s1 + $0x17d8] sm:$0xff]
    %v860 = vld [vmem:[%s1 + $0x17e0] sm:$0xff]
    %v861 = vld [vmem:[%s1 + $0x17e8] sm:$0xff]
    %v862 = vld [vmem:[%s1 + $0x17f0] sm:$0xff]
    %v863 = vld [vmem:[%s1 + $0x17f8] sm:$0xff]
    %v864 = vld [vmem:[%s1 + $0x1800] sm:$0xff]
    %v865 = vld [vmem:[%s1 + $0x1808] sm:$0xff]
    %v866 = vld [vmem:[%s1 + $0x1810] sm:$0xff]
    %v867 = vld [vmem:[%s1 + $0x1818] sm:$0xff]
    %v868 = vld [vmem:[%s1 + $0x1820] sm:$0xff]
    %v869 = vld [vmem:[%s1 + $0x1828] sm:$0xff]
    %v870 = vld [vmem:[%s1 + $0x1830] sm:$0xff]
    %v871 = vld [vmem:[%s1 + $0x1838] sm:$0xff]
    %v872 = vld [vmem:[%s1 + $0x1840] sm:$0xff]
    %v873 = vld [vmem:[%s1 + $0x1848] sm:$0xff]
    %v874 = vld [vmem:[%s1 + $0x1850] sm:$0xff]
    %v875 = vld [vmem:[%s1 + $0x1858] sm:$0xff]
    %v876 = vld [vmem:[%s1 + $0x1860] sm:$0xff]
    %v877 = vld [vmem:[%s1 + $0x1868] sm:$0xff]
    %v878 = vld [vmem:[%s1 + $0x1870] sm:$0xff]
    %v879 = vld [vmem:[%s1 + $0x1878] sm:$0xff]
    %v880 = vld [vmem:[%s1 + $0x1880] sm:$0xff]
    %v881 = vld [vmem:[%s1 + $0x1888] sm:$0xff]
    %v882 = vld [vmem:[%s1 + $0x1890] sm:$0xff]
    %v883 = vld [vmem:[%s1 + $0x1898] sm:$0xff]
    %v884 = vld [vmem:[%s1 + $0x18a0] sm:$0xff]
    %v885 = vld [vmem:[%s1 + $0x18a8] sm:$0xff]
    %v886 = vld [vmem:[%s1 + $0x18b0] sm:$0xff]
    %v887 = vld [vmem:[%s1 + $0x18b8] sm:$0xff]
    %v888 = vld [vmem:[%s1 + $0x18c0] sm:$0xff]
    %v889 = vld [vmem:[%s1 + $0x18c8] sm:$0xff]
    %v890 = vld [vmem:[%s1 + $0x18d0] sm:$0xff]
    %v891 = vld [vmem:[%s1 + $0x18d8] sm:$0xff]
    %v892 = vld [vmem:[%s1 + $0x18e0] sm:$0xff]
    %v893 = vld [vmem:[%s1 + $0x18e8] sm:$0xff]
    %v894 = vld [vmem:[%s1 + $0x18f0] sm:$0xff]
    %v895 = vld [vmem:[%s1 + $0x18f8] sm:$0xff]
    %v896 = vld [vmem:[%s1 + $0x1900] sm:$0xff]
    %v897 = vld [vmem:[%s1 + $0x1908] sm:$0xff]
    %v898 = vld [vmem:[%s1 + $0x1910] sm:$0xff]
    %v899 = vld [vmem:[%s1 + $0x1918] sm:$0xff]
    %v900 = vld [vmem:[%s1 + $0x1920] sm:$0xff]
    %v901 = vld [vmem:[%s1 + $0x1928] sm:$0xff]
    %v902 = vld [vmem:[%s1 + $0x1930] sm:$0xff]
    %v903 = vld [vmem:[%s1 + $0x1938] sm:$0xff]
    %v904 = vld [vmem:[%s1 + $0x1940] sm:$0xff]
    %v905 = vld [vmem:[%s1 + $0x1948] sm:$0xff]
    %v906 = vld [vmem:[%s1 + $0x1950] sm:$0xff]
    %v907 = vld [vmem:[%s1 + $0x1958] sm:$0xff]
    %v908 = vld [vmem:[%s1 + $0x1960] sm:$0xff]
    %v909 = vld [vmem:[%s1 + $0x1968] sm:$0xff]
    %v910 = vld [vmem:[%s1 + $0x1970] sm:$0xff]
    %v911 = vld [vmem:[%s1 + $0x1978] sm:$0xff]
    %v912 = vld [vmem:[%s1 + $0x1980] sm:$0xff]
    %v913 = vld [vmem:[%s1 + $0x1988] sm:$0xff]
    %v914 = vld [vmem:[%s1 + $0x1990] sm:$0xff]
    %v915 = vld [vmem:[%s1 + $0x1998] sm:$0xff]
    %v916 = vld [vmem:[%s1 + $0x19a0] sm:$0xff]
    %v917 = vld [vmem:[%s1 + $0x19a8] sm:$0xff]
    %v918 = vld [vmem:[%s1 + $0x19b0] sm:$0xff]
    %v919 = vld [vmem:[%s1 + $0x19b8] sm:$0xff]
    %v920 = vld [vmem:[%s1 + $0x19c0] sm:$0xff]
    %v921 = vld [vmem:[%s1 + $0x19c8] sm:$0xff]
    %v922 = vld [vmem:[%s1 + $0x19d0] sm:$0xff]
    %v923 = vld [vmem:[%s1 + $0x19d8] sm:$0xff]
    %v924 = vld [vmem:[%s1 + $0x19e0] sm:$0xff]
    %v925 = vld [vmem:[%s1 + $0x19e8] sm:$0xff]
    %v926 = vld [vmem:[%s1 + $0x19f0] sm:$0xff]
    %v927 = vld [vmem:[%s1 + $0x19f8] sm:$0xff]
    %v928 = vld [vmem:[%s1 + $0x1a00] sm:$0xff]
    %v929 = vld [vmem:[%s1 + $0x1a08] sm:$0xff]
    %v930 = vld [vmem:[%s1 + $0x1a10] sm:$0xff]
    %v931 = vld [vmem:[%s1 + $0x1a18] sm:$0xff]
    %v932 = vld [vmem:[%s1 + $0x1a20] sm:$0xff]
    %v933 = vld [vmem:[%s1 + $0x1a28] sm:$0xff]
    %v934 = vld [vmem:[%s1 + $0x1a30] sm:$0xff]
    %v935 = vld [vmem:[%s1 + $0x1a38] sm:$0xff]
    %v936 = vld [vmem:[%s1 + $0x1a40] sm:$0xff]
    %v937 = vld [vmem:[%s1 + $0x1a48] sm:$0xff]
    %v938 = vld [vmem:[%s1 + $0x1a50] sm:$0xff]
    %v939 = vld [vmem:[%s1 + $0x1a58] sm:$0xff]
    %v940 = vld [vmem:[%s1 + $0x1a60] sm:$0xff]
    %v941 = vld [vmem:[%s1 + $0x1a68] sm:$0xff]
    %v942 = vld [vmem:[%s1 + $0x1a70] sm:$0xff]
    %v943 = vld [vmem:[%s1 + $0x1a78] sm:$0xff]
    %v944 = vld [vmem:[%s1 + $0x1a80] sm:$0xff]
    %v945 = vld [vmem:[%s1 + $0x1a88] sm:$0xff]
    %v946 = vld [vmem:[%s1 + $0x1a90] sm:$0xff]
    %v947 = vld [vmem:[%s1 + $0x1a98] sm:$0xff]
    %v948 = vld [vmem:[%s1 + $0x1aa0] sm:$0xff]
    %v949 = vld [vmem:[%s1 + $0x1aa8] sm:$0xff]
    %v950 = vld [vmem:[%s1 + $0x1ab0] sm:$0xff]
    %v951 = vld [vmem:[%s1 + $0x1ab8] sm:$0xff]
    %v952 = vld [vmem:[%s1 + $0x1ac0] sm:$0xff]
    %v953 = vld [vmem:[%s1 + $0x1ac8] sm:$0xff]
    %v954 = vld [vmem:[%s1 + $0x1ad0] sm:$0xff]
    %v955 = vld [vmem:[%s1 + $0x1ad8] sm:$0xff]
    %v956 = vld [vmem:[%s1 + $0x1ae0] sm:$0xff]
    %v957 = vld [vmem:[%s1 + $0x1ae8] sm:$0xff]
    %v958 = vld [vmem:[%s1 + $0x1af0] sm:$0xff]
    %v959 = vld [vmem:[%s1 + $0x1af8] sm:$0xff]
    %v960 = vld [vmem:[%s1 + $0x1b00] sm:$0xff]
    %v961 = vld [vmem:[%s1 + $0x1b08] sm:$0xff]
    %v962 = vld [vmem:[%s1 + $0x1b10] sm:$0xff]
    %v963 = vld [vmem:[%s1 + $0x1b18] sm:$0xff]
    %v964 = vld [vmem:[%s1 + $0x1b20] sm:$0xff]
    %v965 = vld [vmem:[%s1 + $0x1b28] sm:$0xff]
    %v966 = vld [vmem:[%s1 + $0x1b30] sm:$0xff]
    %v967 = vld [vmem:[%s1 + $0x1b38] sm:$0xff]
    %v968 = vld [vmem:[%s1 + $0x1b40] sm:$0xff]
    %v969 = vld [vmem:[%s1 + $0x1b48] sm:$0xff]
    %v970 = vld [vmem:[%s1 + $0x1b50] sm:$0xff]
    %v971 = vld [vmem:[%s1 + $0x1b58] sm:$0xff]
    %v972 = vld [vmem:[%s1 + $0x1b60] sm:$0xff]
    %v973 = vld [vmem:[%s1 + $0x1b68] sm:$0xff]
    %v974 = vld [vmem:[%s1 + $0x1b70] sm:$0xff]
    %v975 = vld [vmem:[%s1 + $0x1b78] sm:$0xff]
    %v976 = vld [vmem:[%s1 + $0x1b80] sm:$0xff]
    %v977 = vld [vmem:[%s1 + $0x1b88] sm:$0xff]
    %v978 = vld [vmem:[%s1 + $0x1b90] sm:$0xff]
    %v979 = vld [vmem:[%s1 + $0x1b98] sm:$0xff]
    %v980 = vld [vmem:[%s1 + $0x1ba0] sm:$0xff]
    %v981 = vld [vmem:[%s1 + $0x1ba8] sm:$0xff]
    %v982 = vld [vmem:[%s1 + $0x1bb0] sm:$0xff]
    %v983 = vld [vmem:[%s1 + $0x1bb8] sm:$0xff]
    %v984 = vld [vmem:[%s1 + $0x1bc0] sm:$0xff]
    %v985 = vld [vmem:[%s1 + $0x1bc8] sm:$0xff]
    %v986 = vld [vmem:[%s1 + $0x1bd0] sm:$0xff]
    %v987 = vld [vmem:[%s1 + $0x1bd8] sm:$0xff]
    %v988 = vld [vmem:[%s1 + $0x1be0] sm:$0xff]
    %v989 = vld [vmem:[%s1 + $0x1be8] sm:$0xff]
    %v990 = vld [vmem:[%s1 + $0x1bf0] sm:$0xff]
    %v991 = vld [vmem:[%s1 + $0x1bf8] sm:$0xff]
    %v992 = vld [vmem:[%s1 + $0x1c00] sm:$0xff]
    %v993 = vld [vmem:[%s1 + $0x1c08] sm:$0xff]
    %v994 = vld [vmem:[%s1 + $0x1c10] sm:$0xff]
    %v995 = vld [vmem:[%s1 + $0x1c18] sm:$0xff]
    %v996 = vld [vmem:[%s1 + $0x1c20] sm:$0xff]
    %v997 = vld [vmem:[%s1 + $0x1c28] sm:$0xff]
    %v998 = vld [vmem:[%s1 + $0x1c30] sm:$0xff]
    %v999 = vld [vmem:[%s1 + $0x1c38] sm:$0xff]
    %v1000 = vld [vmem:[%s1 + $0x1c40] sm:$0xff]
    %v1001 = vld [vmem:[%s1 + $0x1c48] sm:$0xff]
    %v1002 = vld [vmem:[%s1 + $0x1c50] sm:$0xff]
    %v1003 = vld [vmem:[%s1 + $0x1c58] sm:$0xff]
    %v1004 = vld [vmem:[%s1 + $0x1c60] sm:$0xff]
    %v1005 = vld [vmem:[%s1 + $0x1c68] sm:$0xff]
    %v1006 = vld [vmem:[%s1 + $0x1c70] sm:$0xff]
    %v1007 = vld [vmem:[%s1 + $0x1c78] sm:$0xff]
    %v1008 = vld [vmem:[%s1 + $0x1c80] sm:$0xff]
    %v1009 = vld [vmem:[%s1 + $0x1c88] sm:$0xff]
    %v1010 = vld [vmem:[%s1 + $0x1c90] sm:$0xff]
    %v1011 = vld [vmem:[%s1 + $0x1c98] sm:$0xff]
    %v1012 = vld [vmem:[%s1 + $0x1ca0] sm:$0xff]
    %v1013 = vld [vmem:[%s1 + $0x1ca8] sm:$0xff]
    %v1014 = vld [vmem:[%s1 + $0x1cb0] sm:$0xff]
    %v1015 = vld [vmem:[%s1 + $0x1cb8] sm:$0xff]
    %v1016 = vld [vmem:[%s1 + $0x1cc0] sm:$0xff]
    %v1017 = vld [vmem:[%s1 + $0x1cc8] sm:$0xff]
    %v1018 = vld [vmem:[%s1 + $0x1cd0] sm:$0xff]
    %v1019 = vld [vmem:[%s1 + $0x1cd8] sm:$0xff]
    %v1020 = vld [vmem:[%s1 + $0x1ce0] sm:$0xff]
    %v1021 = vld [vmem:[%s1 + $0x1ce8] sm:$0xff]
    %v1022 = vld [vmem:[%s1 + $0x1cf0] sm:$0xff]
    %v1023 = vld [vmem:[%s1 + $0x1cf8] sm:$0xff]
    %v1024 = vld [vmem:[%s1 + $0x1d00] sm:$0xff]
    %v1025 = vld [vmem:[%s1 + $0x1d08] sm:$0xff]
    %v1026 = vld [vmem:[%s1 + $0x1d10] sm:$0xff]
    %v1027 = vld [vmem:[%s1 + $0x1d18] sm:$0xff]
    %v1028 = vld [vmem:[%s1 + $0x1d20] sm:$0xff]
    %v1029 = vld [vmem:[%s1 + $0x1d28] sm:$0xff]
    %v1030 = vld [vmem:[%s1 + $0x1d30] sm:$0xff]
    %v1031 = vld [vmem:[%s1 + $0x1d38] sm:$0xff]
    %v1032 = vld [vmem:[%s1 + $0x1d40] sm:$0xff]
    %v1033 = vld [vmem:[%s1 + $0x1d48] sm:$0xff]
    %v1034 = vld [vmem:[%s1 + $0x1d50] sm:$0xff]
    %v1035 = vld [vmem:[%s1 + $0x1d58] sm:$0xff]
    %v1036 = vld [vmem:[%s1 + $0x1d60] sm:$0xff]
    %v1037 = vld [vmem:[%s1 + $0x1d68] sm:$0xff]
    %v1038 = vld [vmem:[%s1 + $0x1d70] sm:$0xff]
    %v1039 = vld [vmem:[%s1 + $0x1d78] sm:$0xff]
    %v1040 = vld [vmem:[%s1 + $0x1d80] sm:$0xff]
    %v1041 = vld [vmem:[%s1 + $0x1d88] sm:$0xff]
    %v1042 = vld [vmem:[%s1 + $0x1d90] sm:$0xff]
    %v1043 = vld [vmem:[%s1 + $0x1d98] sm:$0xff]
    %v1044 = vld [vmem:[%s1 + $0x1da0] sm:$0xff]
    %v1045 = vld [vmem:[%s1 + $0x1da8] sm:$0xff]
    %v1046 = vld [vmem:[%s1 + $0x1db0] sm:$0xff]
    %v1047 = vld [vmem:[%s1 + $0x1db8] sm:$0xff]
    %v1048 = vld [vmem:[%s1 + $0x1dc0] sm:$0xff]
    %v1049 = vld [vmem:[%s1 + $0x1dc8] sm:$0xff]
    %v1050 = vld [vmem:[%s1 + $0x1dd0] sm:$0xff]
    %v1051 = vld [vmem:[%s1 + $0x1dd8] sm:$0xff]
    %v1052 = vld [vmem:[%s1 + $0x1de0] sm:$0xff]
    %v1053 = vld [vmem:[%s1 + $0x1de8] sm:$0xff]
    %v1054 = vld [vmem:[%s1 + $0x1df0] sm:$0xff]
    %v1055 = vld [vmem:[%s1 + $0x1df8] sm:$0xff]
    %v1056 = vld [vmem:[%s1 + $0x1e00] sm:$0xff]
    %v1057 = vld [vmem:[%s1 + $0x1e08] sm:$0xff]
    %v1058 = vld [vmem:[%s1 + $0x1e10] sm:$0xff]
    %v1059 = vld [vmem:[%s1 + $0x1e18] sm:$0xff]
    %v1060 = vld [vmem:[%s1 + $0x1e20] sm:$0xff]
    %v1061 = vld [vmem:[%s1 + $0x1e28] sm:$0xff]
    %v1062 = vld [vmem:[%s1 + $0x1e30] sm:$0xff]
    %v1063 = vld [vmem:[%s1 + $0x1e38] sm:$0xff]
    %v1064 = vld [vmem:[%s1 + $0x1e40] sm:$0xff]
    %v1065 = vld [vmem:[%s1 + $0x1e48] sm:$0xff]
    %v1066 = vld [vmem:[%s1 + $0x1e50] sm:$0xff]
    %v1067 = vld [vmem:[%s1 + $0x1e58] sm:$0xff]
    %v1068 = vld [vmem:[%s1 + $0x1e60] sm:$0xff]
    %v1069 = vld [vmem:[%s1 + $0x1e68] sm:$0xff]
    %v1070 = vld [vmem:[%s1 + $0x1e70] sm:$0xff]
    %v1071 = vld [vmem:[%s1 + $0x1e78] sm:$0xff]
    %v1072 = vld [vmem:[%s1 + $0x1e80] sm:$0xff]
    %v1073 = vld [vmem:[%s1 + $0x1e88] sm:$0xff]
    %v1074 = vld [vmem:[%s1 + $0x1e90] sm:$0xff]
    %v1075 = vld [vmem:[%s1 + $0x1e98] sm:$0xff]
    %v1076 = vld [vmem:[%s1 + $0x1ea0] sm:$0xff]
    %v1077 = vld [vmem:[%s1 + $0x1ea8] sm:$0xff]
    %v1078 = vld [vmem:[%s1 + $0x1eb0] sm:$0xff]
    %v1079 = vld [vmem:[%s1 + $0x1eb8] sm:$0xff]
    %v1080 = vld [vmem:[%s1 + $0x1ec0] sm:$0xff]
    %v1081 = vld [vmem:[%s1 + $0x1ec8] sm:$0xff]
    %v1082 = vld [vmem:[%s1 + $0x1ed0] sm:$0xff]
    %v1083 = vld [vmem:[%s1 + $0x1ed8] sm:$0xff]
    %v1084 = vld [vmem:[%s1 + $0x1ee0] sm:$0xff]
    %v1085 = vld [vmem:[%s1 + $0x1ee8] sm:$0xff]
    %v1086 = vld [vmem:[%s1 + $0x1ef0] sm:$0xff]
    %v1087 = vld [vmem:[%s1 + $0x1ef8] sm:$0xff]
    %v1088 = vld [vmem:[%s1 + $0x1f00] sm:$0xff]
    %v1089 = vld [vmem:[%s1 + $0x1f08] sm:$0xff]
    %v1090 = vld [vmem:[%s1 + $0x1f10] sm:$0xff]
    %v1091 = vld [vmem:[%s1 + $0x1f18] sm:$0xff]
    %v1092 = vld [vmem:[%s1 + $0x1f20] sm:$0xff]
    %v1093 = vld [vmem:[%s1 + $0x1f28] sm:$0xff]
    %v1094 = vld [vmem:[%s1 + $0x1f30] sm:$0xff]
    %v1095 = vld [vmem:[%s1 + $0x1f38] sm:$0xff]
    %v1096 = vld [vmem:[%s1 + $0x1f40] sm:$0xff]
    %v1097 = vld [vmem:[%s1 + $0x1f48] sm:$0xff]
    %v1098 = vld [vmem:[%s1 + $0x1f50] sm:$0xff]
    %v1099 = vld [vmem:[%s1 + $0x1f58] sm:$0xff]
    %v1100 = vld [vmem:[%s1 + $0x1f60] sm:$0xff]
    %v1101 = vld [vmem:[%s1 + $0x1f68] sm:$0xff]
    %v1102 = vld [vmem:[%s1 + $0x1f70] sm:$0xff]
    %v1103 = vld [vmem:[%s1 + $0x1f78] sm:$0xff]
    %v1104 = vld [vmem:[%s1 + $0x1f80] sm:$0xff]
    %v1105 = vld [vmem:[%s1 + $0x1f88] sm:$0xff]
    %v1106 = vld [vmem:[%s1 + $0x1f90] sm:$0xff]
    %v1107 = vld [vmem:[%s1 + $0x1f98] sm:$0xff]
    %v1108 = vld [vmem:[%s1 + $0x1fa0] sm:$0xff]
    %v1109 = vld [vmem:[%s1 + $0x1fa8] sm:$0xff]
    %v1110 = vld [vmem:[%s1 + $0x1fb0] sm:$0xff]
    %v1111 = vld [vmem:[%s1 + $0x1fb8] sm:$0xff]
    %v1112 = vld [vmem:[%s1 + $0x1fc0] sm:$0xff]
    %v1113 = vld [vmem:[%s1 + $0x1fc8] sm:$0xff]
    %v1114 = vld [vmem:[%s1 + $0x1fd0] sm:$0xff]
    %v1115 = vld [vmem:[%s1 + $0x1fd8] sm:$0xff]
    %v1116 = vld [vmem:[%s1 + $0x1fe0] sm:$0xff]
    %v1117 = vld [vmem:[%s1 + $0x1fe8] sm:$0xff]
    %v1118 = vld [vmem:[%s1 + $0x1ff0] sm:$0xff]
    %v1119 = vld [vmem:[%s1 + $0x1ff8] sm:$0xff]
    %v1120 = vld [vmem:[%s1 + $0x2000] sm:$0xff]
    %v1121 = vld [vmem:[%s1 + $0x2008] sm:$0xff]
    %v1122 = vld [vmem:[%s1 + $0x2010] sm:$0xff]
    %v1123 = vld [vmem:[%s1 + $0x2018] sm:$0xff]
    %v1124 = vld [vmem:[%s1 + $0x2020] sm:$0xff]
    %v1125 = vld [vmem:[%s1 + $0x2028] sm:$0xff]
    %v1126 = vld [vmem:[%s1 + $0x2030] sm:$0xff]
    %v1127 = vld [vmem:[%s1 + $0x2038] sm:$0xff]
    %v1128 = vld [vmem:[%s1 + $0x2040] sm:$0xff]
    %v1129 = vld [vmem:[%s1 + $0x2048] sm:$0xff]
    %v1130 = vld [vmem:[%s1 + $0x2050] sm:$0xff]
    %v1131 = vld [vmem:[%s1 + $0x2058] sm:$0xff]
    %v1132 = vld [vmem:[%s1 + $0x2060] sm:$0xff]
    %v1133 = vld [vmem:[%s1 + $0x2068] sm:$0xff]
    %v1134 = vld [vmem:[%s1 + $0x2070] sm:$0xff]
    %v1135 = vld [vmem:[%s1 + $0x2078] sm:$0xff]
    %v1136 = vld [vmem:[%s1 + $0x2080] sm:$0xff]
    %v1137 = vld [vmem:[%s1 + $0x2088] sm:$0xff]
    %v1138 = vld [vmem:[%s1 + $0x2090] sm:$0xff]
    %v1139 = vld [vmem:[%s1 + $0x2098] sm:$0xff]
    %v1140 = vld [vmem:[%s1 + $0x20a0] sm:$0xff]
    %v1141 = vld [vmem:[%s1 + $0x20a8] sm:$0xff]
    %v1142 = vld [vmem:[%s1 + $0x20b0] sm:$0xff]
    %v1143 = vld [vmem:[%s1 + $0x20b8] sm:$0xff]
    %v1144 = vld [vmem:[%s1 + $0x20c0] sm:$0xff]
    %v1145 = vld [vmem:[%s1 + $0x20c8] sm:$0xff]
    %v1146 = vld [vmem:[%s1 + $0x20d0] sm:$0xff]
    %v1147 = vld [vmem:[%s1 + $0x20d8] sm:$0xff]
    %v1148 = vld [vmem:[%s1 + $0x20e0] sm:$0xff]
    %v1149 = vld [vmem:[%s1 + $0x20e8] sm:$0xff]
    %v1150 = vld [vmem:[%s1 + $0x20f0] sm:$0xff]
    %v1151 = vld [vmem:[%s1 + $0x20f8] sm:$0xff]
    %v1152 = vld [vmem:[%s1 + $0x2100] sm:$0xff]
    %v1153 = vld [vmem:[%s1 + $0x2108] sm:$0xff]
    %v1154 = vld [vmem:[%s1 + $0x2110] sm:$0xff]
    %v1155 = vld [vmem:[%s1 + $0x2118] sm:$0xff]
    %v1156 = vld [vmem:[%s1 + $0x2120] sm:$0xff]
    %v1157 = vld [vmem:[%s1 + $0x2128] sm:$0xff]
    %v1158 = vld [vmem:[%s1 + $0x2130] sm:$0xff]
    %v1159 = vld [vmem:[%s1 + $0x2138] sm:$0xff]
    %v1160 = vld [vmem:[%s1 + $0x2140] sm:$0xff]
    %v1161 = vld [vmem:[%s1 + $0x2148] sm:$0xff]
    %v1162 = vld [vmem:[%s1 + $0x2150] sm:$0xff]
    %v1163 = vld [vmem:[%s1 + $0x2158] sm:$0xff]
    %v1164 = vld [vmem:[%s1 + $0x2160] sm:$0xff]
    %v1165 = vld [vmem:[%s1 + $0x2168] sm:$0xff]
    %v1166 = vld [vmem:[%s1 + $0x2170] sm:$0xff]
    %v1167 = vld [vmem:[%s1 + $0x2178] sm:$0xff]
    %v1168 = vld [vmem:[%s1 + $0x2180] sm:$0xff]
    %v1169 = vld [vmem:[%s1 + $0x2188] sm:$0xff]
    %v1170 = vld [vmem:[%s1 + $0x2190] sm:$0xff]
    %v1171 = vld [vmem:[%s1 + $0x2198] sm:$0xff]
    %v1172 = vld [vmem:[%s1 + $0x21a0] sm:$0xff]
    %v1173 = vld [vmem:[%s1 + $0x21a8] sm:$0xff]
    %v1174 = vld [vmem:[%s1 + $0x21b0] sm:$0xff]
    %v1175 = vld [vmem:[%s1 + $0x21b8] sm:$0xff]
    %v1176 = vld [vmem:[%s1 + $0x21c0] sm:$0xff]
    %v1177 = vld [vmem:[%s1 + $0x21c8] sm:$0xff]
    %v1178 = vld [vmem:[%s1 + $0x21d0] sm:$0xff]
    %v1179 = vld [vmem:[%s1 + $0x21d8] sm:$0xff]
    %v1180 = vld [vmem:[%s1 + $0x21e0] sm:$0xff]
    %v1181 = vld [vmem:[%s1 + $0x21e8] sm:$0xff]
    %v1182 = vld [vmem:[%s1 + $0x21f0] sm:$0xff]
    %v1183 = vld [vmem:[%s1 + $0x21f8] sm:$0xff]
    %v1184 = vld [vmem:[%s1 + $0x2200] sm:$0xff]
    %v1185 = vld [vmem:[%s1 + $0x2208] sm:$0xff]
    %v1186 = vld [vmem:[%s1 + $0x2210] sm:$0xff]
    %v1187 = vld [vmem:[%s1 + $0x2218] sm:$0xff]
    %v1188 = vld [vmem:[%s1 + $0x2220] sm:$0xff]
    %v1189 = vld [vmem:[%s1 + $0x2228] sm:$0xff]
    %v1190 = vld [vmem:[%s1 + $0x2230] sm:$0xff]
    %v1191 = vld [vmem:[%s1 + $0x2238] sm:$0xff]
    %v1192 = vld [vmem:[%s1 + $0x2240] sm:$0xff]
    %v1193 = vld [vmem:[%s1 + $0x2248] sm:$0xff]
    %v1194 = vld [vmem:[%s1 + $0x2250] sm:$0xff]
    %v1195 = vld [vmem:[%s1 + $0x2258] sm:$0xff]
    %v1196 = vld [vmem:[%s1 + $0x2260] sm:$0xff]
    %v1197 = vld [vmem:[%s1 + $0x2268] sm:$0xff]
    %v1198 = vld [vmem:[%s1 + $0x2270] sm:$0xff]
    %v1199 = vld [vmem:[%s1 + $0x2278] sm:$0xff]
    %v1200 = vld [vmem:[%s1 + $0x2280] sm:$0xff]
    %v1201 = vld [vmem:[%s1 + $0x2288] sm:$0xff]
    %v1202 = vld [vmem:[%s1 + $0x2290] sm:$0xff]
    %v1203 = vld [vmem:[%s1 + $0x2298] sm:$0xff]
    %v1204 = vld [vmem:[%s1 + $0x22a0] sm:$0xff]
    %v1205 = vld [vmem:[%s1 + $0x22a8] sm:$0xff]
    %v1206 = vld [vmem:[%s1 + $0x22b0] sm:$0xff]
    %v1207 = vld [vmem:[%s1 + $0x22b8] sm:$0xff]
    %v1208 = vld [vmem:[%s1 + $0x22c0] sm:$0xff]
    %v1209 = vld [vmem:[%s1 + $0x22c8] sm:$0xff]
    %v1210 = vld [vmem:[%s1 + $0x22d0] sm:$0xff]
    %v1211 = vld [vmem:[%s1 + $0x22d8] sm:$0xff]
    %v1212 = vld [vmem:[%s1 + $0x22e0] sm:$0xff]
    %v1213 = vld [vmem:[%s1 + $0x22e8] sm:$0xff]
    %v1214 = vld [vmem:[%s1 + $0x22f0] sm:$0xff]
    %v1215 = vld [vmem:[%s1 + $0x22f8] sm:$0xff]
    %v1216 = vld [vmem:[%s1 + $0x2300] sm:$0xff]
    %v1217 = vld [vmem:[%s1 + $0x2308] sm:$0xff]
    %v1218 = vld [vmem:[%s1 + $0x2310] sm:$0xff]
    %v1219 = vld [vmem:[%s1 + $0x2318] sm:$0xff]
    %v1220 = vld [vmem:[%s1 + $0x2320] sm:$0xff]
    %v1221 = vld [vmem:[%s1 + $0x2328] sm:$0xff]
    %v1222 = vld [vmem:[%s1 + $0x2330] sm:$0xff]
    %v1223 = vld [vmem:[%s1 + $0x2338] sm:$0xff]
    %v1224 = vld [vmem:[%s1 + $0x2340] sm:$0xff]
    %v1225 = vld [vmem:[%s1 + $0x2348] sm:$0xff]
    %v1226 = vld [vmem:[%s1 + $0x2350] sm:$0xff]
    %v1227 = vld [vmem:[%s1 + $0x2358] sm:$0xff]
    %v1228 = vld [vmem:[%s1 + $0x2360] sm:$0xff]
    %v1229 = vld [vmem:[%s1 + $0x2368] sm:$0xff]
    %v1230 = vld [vmem:[%s1 + $0x2370] sm:$0xff]
    %v1231 = vld [vmem:[%s1 + $0x2378] sm:$0xff]
    %v1232 = vld [vmem:[%s1 + $0x2380] sm:$0xff]
    %v1233 = vld [vmem:[%s1 + $0x2388] sm:$0xff]
    %v1234 = vld [vmem:[%s1 + $0x2390] sm:$0xff]
    %v1235 = vld [vmem:[%s1 + $0x2398] sm:$0xff]
    %v1236 = vld [vmem:[%s1 + $0x23a0] sm:$0xff]
    %v1237 = vld [vmem:[%s1 + $0x23a8] sm:$0xff]
    %v1238 = vld [vmem:[%s1 + $0x23b0] sm:$0xff]
    %v1239 = vld [vmem:[%s1 + $0x23b8] sm:$0xff]
    %v1240 = vld [vmem:[%s1 + $0x23c0] sm:$0xff]
    %v1241 = vld [vmem:[%s1 + $0x23c8] sm:$0xff]
    %v1242 = vld [vmem:[%s1 + $0x23d0] sm:$0xff]
    %v1243 = vld [vmem:[%s1 + $0x23d8] sm:$0xff]
    %v1244 = vld [vmem:[%s1 + $0x23e0] sm:$0xff]
    %v1245 = vld [vmem:[%s1 + $0x23e8] sm:$0xff]
    %v1246 = vld [vmem:[%s1 + $0x23f0] sm:$0xff]
    %v1247 = vld [vmem:[%s1 + $0x23f8] sm:$0xff]
    %v1248 = vld [vmem:[%s1 + $0x2400] sm:$0xff]
    %v1249 = vld [vmem:[%s1 + $0x2408] sm:$0xff]
    %v1250 = vld [vmem:[%s1 + $0x2410] sm:$0xff]
    %v1251 = vld [vmem:[%s1 + $0x2418] sm:$0xff]
    %v1252 = vld [vmem:[%s1 + $0x2420] sm:$0xff]
    %v1253 = vld [vmem:[%s1 + $0x2428] sm:$0xff]
    %v1254 = vld [vmem:[%s1 + $0x2430] sm:$0xff]
    %v1255 = vld [vmem:[%s1 + $0x2438] sm:$0xff]
    %v1256 = vld [vmem:[%s1 + $0x2440] sm:$0xff]
    %v1257 = vld [vmem:[%s1 + $0x2448] sm:$0xff]
    %v1258 = vld [vmem:[%s1 + $0x2450] sm:$0xff]
    %v1259 = vld [vmem:[%s1 + $0x2458] sm:$0xff]
    %v1260 = vld [vmem:[%s1 + $0x2460] sm:$0xff]
    %v1261 = vld [vmem:[%s1 + $0x2468] sm:$0xff]
    %v1262 = vld [vmem:[%s1 + $0x2470] sm:$0xff]
    %v1263 = vld [vmem:[%s1 + $0x2478] sm:$0xff]
    %v1264 = vld [vmem:[%s1 + $0x2480] sm:$0xff]
    %v1265 = vld [vmem:[%s1 + $0x2488] sm:$0xff]
    %v1266 = vld [vmem:[%s1 + $0x2490] sm:$0xff]
    %v1267 = vld [vmem:[%s1 + $0x2498] sm:$0xff]
    %v1268 = vld [vmem:[%s1 + $0x24a0] sm:$0xff]
    %v1269 = vld [vmem:[%s1 + $0x24a8] sm:$0xff]
    %v1270 = vld [vmem:[%s1 + $0x24b0] sm:$0xff]
    %v1271 = vld [vmem:[%s1 + $0x24b8] sm:$0xff]
    %v1272 = vld [vmem:[%s1 + $0x24c0] sm:$0xff]
    %v1273 = vld [vmem:[%s1 + $0x24c8] sm:$0xff]
    %v1274 = vld [vmem:[%s1 + $0x24d0] sm:$0xff]
    %v1275 = vld [vmem:[%s1 + $0x24d8] sm:$0xff]
    %v1276 = vld [vmem:[%s1 + $0x24e0] sm:$0xff]
    %v1277 = vld [vmem:[%s1 + $0x24e8] sm:$0xff]
    %v1278 = vld [vmem:[%s1 + $0x24f0] sm:$0xff]
    %v1279 = vld [vmem:[%s1 + $0x24f8] sm:$0xff]
    %v1280 = vld [vmem:[%s1 + $0x2500] sm:$0xff]
    %v1281 = vld [vmem:[%s1 + $0x2508] sm:$0xff]
    %v1282 = vld [vmem:[%s1 + $0x2510] sm:$0xff]
    %v1283 = vld [vmem:[%s1 + $0x2518] sm:$0xff]
    %v1284 = vld [vmem:[%s1 + $0x2520] sm:$0xff]
    %v1285 = vld [vmem:[%s1 + $0x2528] sm:$0xff]
    %v1286 = vld [vmem:[%s1 + $0x2530] sm:$0xff]
    %v1287 = vld [vmem:[%s1 + $0x2538] sm:$0xff]
    %v1288 = vld [vmem:[%s1 + $0x2540] sm:$0xff]
    %v1289 = vld [vmem:[%s1 + $0x2548] sm:$0xff]
    %v1290 = vld [vmem:[%s1 + $0x2550] sm:$0xff]
    %v1291 = vld [vmem:[%s1 + $0x2558] sm:$0xff]
    %v1292 = vld [vmem:[%s1 + $0x2560] sm:$0xff]
    %v1293 = vld [vmem:[%s1 + $0x2568] sm:$0xff]
    %v1294 = vld [vmem:[%s1 + $0x2570] sm:$0xff]
    %v1295 = vld [vmem:[%s1 + $0x2578] sm:$0xff]
    %v1296 = vld [vmem:[%s1 + $0x2580] sm:$0xff]
    %v1297 = vld [vmem:[%s1 + $0x2588] sm:$0xff]
    %v1298 = vld [vmem:[%s1 + $0x2590] sm:$0xff]
    %v1299 = vld [vmem:[%s1 + $0x2598] sm:$0xff]
    %v1300 = vld [vmem:[%s1 + $0x25a0] sm:$0xff]
    %v1301 = vld [vmem:[%s1 + $0x25a8] sm:$0xff]
    %v1302 = vld [vmem:[%s1 + $0x25b0] sm:$0xff]
    %v1303 = vld [vmem:[%s1 + $0x25b8] sm:$0xff]
    %v1304 = vld [vmem:[%s1 + $0x25c0] sm:$0xff]
    %v1305 = vld [vmem:[%s1 + $0x25c8] sm:$0xff]
    %v1306 = vld [vmem:[%s1 + $0x25d0] sm:$0xff]
    %v1307 = vld [vmem:[%s1 + $0x25d8] sm:$0xff]
    %v1308 = vld [vmem:[%s1 + $0x25e0] sm:$0xff]
    %v1309 = vld [vmem:[%s1 + $0x25e8] sm:$0xff]
    %v1310 = vld [vmem:[%s1 + $0x25f0] sm:$0xff]
    %v1311 = vld [vmem:[%s1 + $0x25f8] sm:$0xff]
    %v1312 = vld [vmem:[%s1 + $0x2600] sm:$0xff]
    %v1313 = vld [vmem:[%s1 + $0x2608] sm:$0xff]
    %v1314 = vld [vmem:[%s1 + $0x2610] sm:$0xff]
    %v1315 = vld [vmem:[%s1 + $0x2618] sm:$0xff]
    %v1316 = vld [vmem:[%s1 + $0x2620] sm:$0xff]
    %v1317 = vld [vmem:[%s1 + $0x2628] sm:$0xff]
    %v1318 = vld [vmem:[%s1 + $0x2630] sm:$0xff]
    %v1319 = vld [vmem:[%s1 + $0x2638] sm:$0xff]
    %v1320 = vld [vmem:[%s1 + $0x2640] sm:$0xff]
    %v1321 = vld [vmem:[%s1 + $0x2648] sm:$0xff]
    %v1322 = vld [vmem:[%s1 + $0x2650] sm:$0xff]
    %v1323 = vld [vmem:[%s1 + $0x2658] sm:$0xff]
    %v1324 = vld [vmem:[%s1 + $0x2660] sm:$0xff]
    %v1325 = vld [vmem:[%s1 + $0x2668] sm:$0xff]
    %v1326 = vld [vmem:[%s1 + $0x2670] sm:$0xff]
    %v1327 = vld [vmem:[%s1 + $0x2678] sm:$0xff]
    %v1328 = vld [vmem:[%s1 + $0x2680] sm:$0xff]
    %v1329 = vld [vmem:[%s1 + $0x2688] sm:$0xff]
    %v1330 = vld [vmem:[%s1 + $0x2690] sm:$0xff]
    %v1331 = vld [vmem:[%s1 + $0x2698] sm:$0xff]
    %v1332 = vld [vmem:[%s1 + $0x26a0] sm:$0xff]
    %v1333 = vld [vmem:[%s1 + $0x26a8] sm:$0xff]
    %v1334 = vld [vmem:[%s1 + $0x26b0] sm:$0xff]
    %v1335 = vld [vmem:[%s1 + $0x26b8] sm:$0xff]
    %v1336 = vld [vmem:[%s1 + $0x26c0] sm:$0xff]
    %v1337 = vld [vmem:[%s1 + $0x26c8] sm:$0xff]
    %v1338 = vld [vmem:[%s1 + $0x26d0] sm:$0xff]
    %v1339 = vld [vmem:[%s1 + $0x26d8] sm:$0xff]
    %v1340 = vld [vmem:[%s1 + $0x26e0] sm:$0xff]
    %v1341 = vld [vmem:[%s1 + $0x26e8] sm:$0xff]
    %v1342 = vld [vmem:[%s1 + $0x26f0] sm:$0xff]
    %v1343 = vld [vmem:[%s1 + $0x26f8] sm:$0xff]
    %v1344 = vld [vmem:[%s1 + $0x2700] sm:$0x3]
    %v1345 = vld [vmem:[%s1 + $0x2708] sm:$0x3]
    %v1346 = vld [vmem:[%s1 + $0x2710] sm:$0x3]
    %v1347 = vld [vmem:[%s1 + $0x2718] sm:$0x3]
    %v1348 = vld [vmem:[%s1 + $0x2720] sm:$0x3]
    %v1349 = vld [vmem:[%s1 + $0x2728] sm:$0x3]
    %v1350 = vld [vmem:[%s1 + $0x2730] sm:$0x3]
    %v1351 = vld [vmem:[%s1 + $0x2738] sm:$0x3]
    %v1352 = vpack.c.bf16 %v104, %v96
    %v1353 = vpack.c.bf16 %v105, %v97
    %v1354 = vpack.c.bf16 %v106, %v98
    %v1355 = vpack.c.bf16 %v107, %v99
    %v1356 = vpack.c.bf16 %v108, %v100
    %v1357 = vpack.c.bf16 %v109, %v101
    %v1358 = vpack.c.bf16 %v110, %v102
    %v1359 = vpack.c.bf16 %v111, %v103
    %v1360 = vpack.c.bf16 %v120, %v112
    %v1361 = vpack.c.bf16 %v121, %v113
    %v1362 = vpack.c.bf16 %v122, %v114
    %v1363 = vpack.c.bf16 %v123, %v115
    %v1364 = vpack.c.bf16 %v124, %v116
    %v1365 = vpack.c.bf16 %v125, %v117
    %v1366 = vpack.c.bf16 %v126, %v118
    %v1367 = vpack.c.bf16 %v127, %v119
    %v1368 = vpack.c.bf16 %v136, %v128
    %v1369 = vpack.c.bf16 %v137, %v129
    %v1370 = vpack.c.bf16 %v138, %v130
    %v1371 = vpack.c.bf16 %v139, %v131
    %v1372 = vpack.c.bf16 %v140, %v132
    %v1373 = vpack.c.bf16 %v141, %v133
    %v1374 = vpack.c.bf16 %v142, %v134
    %v1375 = vpack.c.bf16 %v143, %v135
    %v1376 = vpack.c.bf16 %v152, %v144
    %v1377 = vpack.c.bf16 %v153, %v145
    %v1378 = vpack.c.bf16 %v154, %v146
    %v1379 = vpack.c.bf16 %v155, %v147
    %v1380 = vpack.c.bf16 %v156, %v148
    %v1381 = vpack.c.bf16 %v157, %v149
    %v1382 = vpack.c.bf16 %v158, %v150
    %v1383 = vpack.c.bf16 %v159, %v151
    %v1384 = vpack.c.bf16 %v168, %v160
    %v1385 = vpack.c.bf16 %v169, %v161
    %v1386 = vpack.c.bf16 %v170, %v162
    %v1387 = vpack.c.bf16 %v171, %v163
    %v1388 = vpack.c.bf16 %v172, %v164
    %v1389 = vpack.c.bf16 %v173, %v165
    %v1390 = vpack.c.bf16 %v174, %v166
    %v1391 = vpack.c.bf16 %v175, %v167
    %v1392 = vpack.c.bf16 %v184, %v176
    %v1393 = vpack.c.bf16 %v185, %v177
    %v1394 = vpack.c.bf16 %v186, %v178
    %v1395 = vpack.c.bf16 %v187, %v179
    %v1396 = vpack.c.bf16 %v188, %v180
    %v1397 = vpack.c.bf16 %v189, %v181
    %v1398 = vpack.c.bf16 %v190, %v182
    %v1399 = vpack.c.bf16 %v191, %v183
    %v1400 = vpack.c.bf16 %v200, %v192
    %v1401 = vpack.c.bf16 %v201, %v193
    %v1402 = vpack.c.bf16 %v202, %v194
    %v1403 = vpack.c.bf16 %v203, %v195
    %v1404 = vpack.c.bf16 %v204, %v196
    %v1405 = vpack.c.bf16 %v205, %v197
    %v1406 = vpack.c.bf16 %v206, %v198
    %v1407 = vpack.c.bf16 %v207, %v199
    %v1408 = vpack.c.bf16 %v216, %v208
    %v1409 = vpack.c.bf16 %v217, %v209
    %v1410 = vpack.c.bf16 %v218, %v210
    %v1411 = vpack.c.bf16 %v219, %v211
    %v1412 = vpack.c.bf16 %v220, %v212
    %v1413 = vpack.c.bf16 %v221, %v213
    %v1414 = vpack.c.bf16 %v222, %v214
    %v1415 = vpack.c.bf16 %v223, %v215
    %v1416 = vpack.c.bf16 %v232, %v224
    %v1417 = vpack.c.bf16 %v233, %v225
    %v1418 = vpack.c.bf16 %v234, %v226
    %v1419 = vpack.c.bf16 %v235, %v227
    %v1420 = vpack.c.bf16 %v236, %v228
    %v1421 = vpack.c.bf16 %v237, %v229
    %v1422 = vpack.c.bf16 %v238, %v230
    %v1423 = vpack.c.bf16 %v239, %v231
    %v1424 = vpack.c.bf16 %v248, %v240
    %v1425 = vpack.c.bf16 %v249, %v241
    %v1426 = vpack.c.bf16 %v250, %v242
    %v1427 = vpack.c.bf16 %v251, %v243
    %v1428 = vpack.c.bf16 %v252, %v244
    %v1429 = vpack.c.bf16 %v253, %v245
    %v1430 = vpack.c.bf16 %v254, %v246
    %v1431 = vpack.c.bf16 %v255, %v247
    %v1432 = vpack.c.bf16 %v264, %v256
    %v1433 = vpack.c.bf16 %v265, %v257
    %v1434 = vpack.c.bf16 %v266, %v258
    %v1435 = vpack.c.bf16 %v267, %v259
    %v1436 = vpack.c.bf16 %v268, %v260
    %v1437 = vpack.c.bf16 %v269, %v261
    %v1438 = vpack.c.bf16 %v270, %v262
    %v1439 = vpack.c.bf16 %v271, %v263
    %v1440 = vpack.c.bf16 %v280, %v272
    %v1441 = vpack.c.bf16 %v281, %v273
    %v1442 = vpack.c.bf16 %v282, %v274
    %v1443 = vpack.c.bf16 %v283, %v275
    %v1444 = vpack.c.bf16 %v284, %v276
    %v1445 = vpack.c.bf16 %v285, %v277
    %v1446 = vpack.c.bf16 %v286, %v278
    %v1447 = vpack.c.bf16 %v287, %v279
    %v1448 = vpack.c.bf16 %v296, %v288
    %v1449 = vpack.c.bf16 %v297, %v289
    %v1450 = vpack.c.bf16 %v298, %v290
    %v1451 = vpack.c.bf16 %v299, %v291
    %v1452 = vpack.c.bf16 %v300, %v292
    %v1453 = vpack.c.bf16 %v301, %v293
    %v1454 = vpack.c.bf16 %v302, %v294
    %v1455 = vpack.c.bf16 %v303, %v295
    %v1456 = vpack.c.bf16 %v312, %v304
    %v1457 = vpack.c.bf16 %v313, %v305
    %v1458 = vpack.c.bf16 %v314, %v306
    %v1459 = vpack.c.bf16 %v315, %v307
    %v1460 = vpack.c.bf16 %v316, %v308
    %v1461 = vpack.c.bf16 %v317, %v309
    %v1462 = vpack.c.bf16 %v318, %v310
    %v1463 = vpack.c.bf16 %v319, %v311
    %v1464 = vpack.c.bf16 %v328, %v320
    %v1465 = vpack.c.bf16 %v329, %v321
    %v1466 = vpack.c.bf16 %v330, %v322
    %v1467 = vpack.c.bf16 %v331, %v323
    %v1468 = vpack.c.bf16 %v332, %v324
    %v1469 = vpack.c.bf16 %v333, %v325
    %v1470 = vpack.c.bf16 %v334, %v326
    %v1471 = vpack.c.bf16 %v335, %v327
    %v1472 = vpack.c.bf16 %v344, %v336
    %v1473 = vpack.c.bf16 %v345, %v337
    %v1474 = vpack.c.bf16 %v346, %v338
    %v1475 = vpack.c.bf16 %v347, %v339
    %v1476 = vpack.c.bf16 %v348, %v340
    %v1477 = vpack.c.bf16 %v349, %v341
    %v1478 = vpack.c.bf16 %v350, %v342
    %v1479 = vpack.c.bf16 %v351, %v343
    %v1480 = vpack.c.bf16 %v360, %v352
    %v1481 = vpack.c.bf16 %v361, %v353
    %v1482 = vpack.c.bf16 %v362, %v354
    %v1483 = vpack.c.bf16 %v363, %v355
    %v1484 = vpack.c.bf16 %v364, %v356
    %v1485 = vpack.c.bf16 %v365, %v357
    %v1486 = vpack.c.bf16 %v366, %v358
    %v1487 = vpack.c.bf16 %v367, %v359
    %v1488 = vpack.c.bf16 %v376, %v368
    %v1489 = vpack.c.bf16 %v377, %v369
    %v1490 = vpack.c.bf16 %v378, %v370
    %v1491 = vpack.c.bf16 %v379, %v371
    %v1492 = vpack.c.bf16 %v380, %v372
    %v1493 = vpack.c.bf16 %v381, %v373
    %v1494 = vpack.c.bf16 %v382, %v374
    %v1495 = vpack.c.bf16 %v383, %v375
    %v1496 = vpack.c.bf16 %v392, %v384
    %v1497 = vpack.c.bf16 %v393, %v385
    %v1498 = vpack.c.bf16 %v394, %v386
    %v1499 = vpack.c.bf16 %v395, %v387
    %v1500 = vpack.c.bf16 %v396, %v388
    %v1501 = vpack.c.bf16 %v397, %v389
    %v1502 = vpack.c.bf16 %v398, %v390
    %v1503 = vpack.c.bf16 %v399, %v391
    %v1504 = vpack.c.bf16 %v408, %v400
    %v1505 = vpack.c.bf16 %v409, %v401
    %v1506 = vpack.c.bf16 %v410, %v402
    %v1507 = vpack.c.bf16 %v411, %v403
    %v1508 = vpack.c.bf16 %v412, %v404
    %v1509 = vpack.c.bf16 %v413, %v405
    %v1510 = vpack.c.bf16 %v414, %v406
    %v1511 = vpack.c.bf16 %v415, %v407
    %v1512 = vpack.c.bf16 %v424, %v416
    %v1513 = vpack.c.bf16 %v425, %v417
    %v1514 = vpack.c.bf16 %v426, %v418
    %v1515 = vpack.c.bf16 %v427, %v419
    %v1516 = vpack.c.bf16 %v428, %v420
    %v1517 = vpack.c.bf16 %v429, %v421
    %v1518 = vpack.c.bf16 %v430, %v422
    %v1519 = vpack.c.bf16 %v431, %v423
    %v1520 = vpack.c.bf16 %v440, %v432
    %v1521 = vpack.c.bf16 %v441, %v433
    %v1522 = vpack.c.bf16 %v442, %v434
    %v1523 = vpack.c.bf16 %v443, %v435
    %v1524 = vpack.c.bf16 %v444, %v436
    %v1525 = vpack.c.bf16 %v445, %v437
    %v1526 = vpack.c.bf16 %v446, %v438
    %v1527 = vpack.c.bf16 %v447, %v439
    %v1528 = vpack.c.bf16 %v456, %v448
    %v1529 = vpack.c.bf16 %v457, %v449
    %v1530 = vpack.c.bf16 %v458, %v450
    %v1531 = vpack.c.bf16 %v459, %v451
    %v1532 = vpack.c.bf16 %v460, %v452
    %v1533 = vpack.c.bf16 %v461, %v453
    %v1534 = vpack.c.bf16 %v462, %v454
    %v1535 = vpack.c.bf16 %v463, %v455
    %v1536 = vpack.c.bf16 %v472, %v464
    %v1537 = vpack.c.bf16 %v473, %v465
    %v1538 = vpack.c.bf16 %v474, %v466
    %v1539 = vpack.c.bf16 %v475, %v467
    %v1540 = vpack.c.bf16 %v476, %v468
    %v1541 = vpack.c.bf16 %v477, %v469
    %v1542 = vpack.c.bf16 %v478, %v470
    %v1543 = vpack.c.bf16 %v479, %v471
    %v1544 = vpack.c.bf16 %v488, %v480
    %v1545 = vpack.c.bf16 %v489, %v481
    %v1546 = vpack.c.bf16 %v490, %v482
    %v1547 = vpack.c.bf16 %v491, %v483
    %v1548 = vpack.c.bf16 %v492, %v484
    %v1549 = vpack.c.bf16 %v493, %v485
    %v1550 = vpack.c.bf16 %v494, %v486
    %v1551 = vpack.c.bf16 %v495, %v487
    %v1552 = vpack.c.bf16 %v504, %v496
    %v1553 = vpack.c.bf16 %v505, %v497
    %v1554 = vpack.c.bf16 %v506, %v498
    %v1555 = vpack.c.bf16 %v507, %v499
    %v1556 = vpack.c.bf16 %v508, %v500
    %v1557 = vpack.c.bf16 %v509, %v501
    %v1558 = vpack.c.bf16 %v510, %v502
    %v1559 = vpack.c.bf16 %v511, %v503
    %v1560 = vpack.c.bf16 %v520, %v512
    %v1561 = vpack.c.bf16 %v521, %v513
    %v1562 = vpack.c.bf16 %v522, %v514
    %v1563 = vpack.c.bf16 %v523, %v515
    %v1564 = vpack.c.bf16 %v524, %v516
    %v1565 = vpack.c.bf16 %v525, %v517
    %v1566 = vpack.c.bf16 %v526, %v518
    %v1567 = vpack.c.bf16 %v527, %v519
    %v1568 = vpack.c.bf16 %v536, %v528
    %v1569 = vpack.c.bf16 %v537, %v529
    %v1570 = vpack.c.bf16 %v538, %v530
    %v1571 = vpack.c.bf16 %v539, %v531
    %v1572 = vpack.c.bf16 %v540, %v532
    %v1573 = vpack.c.bf16 %v541, %v533
    %v1574 = vpack.c.bf16 %v542, %v534
    %v1575 = vpack.c.bf16 %v543, %v535
    %v1576 = vpack.c.bf16 %v552, %v544
    %v1577 = vpack.c.bf16 %v553, %v545
    %v1578 = vpack.c.bf16 %v554, %v546
    %v1579 = vpack.c.bf16 %v555, %v547
    %v1580 = vpack.c.bf16 %v556, %v548
    %v1581 = vpack.c.bf16 %v557, %v549
    %v1582 = vpack.c.bf16 %v558, %v550
    %v1583 = vpack.c.bf16 %v559, %v551
    %v1584 = vpack.c.bf16 %v568, %v560
    %v1585 = vpack.c.bf16 %v569, %v561
    %v1586 = vpack.c.bf16 %v570, %v562
    %v1587 = vpack.c.bf16 %v571, %v563
    %v1588 = vpack.c.bf16 %v572, %v564
    %v1589 = vpack.c.bf16 %v573, %v565
    %v1590 = vpack.c.bf16 %v574, %v566
    %v1591 = vpack.c.bf16 %v575, %v567
    %v1592 = vpack.c.bf16 %v584, %v576
    %v1593 = vpack.c.bf16 %v585, %v577
    %v1594 = vpack.c.bf16 %v586, %v578
    %v1595 = vpack.c.bf16 %v587, %v579
    %v1596 = vpack.c.bf16 %v588, %v580
    %v1597 = vpack.c.bf16 %v589, %v581
    %v1598 = vpack.c.bf16 %v590, %v582
    %v1599 = vpack.c.bf16 %v591, %v583
    %v1600 = vpack.c.bf16 %v600, %v592
    %v1601 = vpack.c.bf16 %v601, %v593
    %v1602 = vpack.c.bf16 %v602, %v594
    %v1603 = vpack.c.bf16 %v603, %v595
    %v1604 = vpack.c.bf16 %v604, %v596
    %v1605 = vpack.c.bf16 %v605, %v597
    %v1606 = vpack.c.bf16 %v606, %v598
    %v1607 = vpack.c.bf16 %v607, %v599
    %v1608 = vpack.c.bf16 %v616, %v608
    %v1609 = vpack.c.bf16 %v617, %v609
    %v1610 = vpack.c.bf16 %v618, %v610
    %v1611 = vpack.c.bf16 %v619, %v611
    %v1612 = vpack.c.bf16 %v620, %v612
    %v1613 = vpack.c.bf16 %v621, %v613
    %v1614 = vpack.c.bf16 %v622, %v614
    %v1615 = vpack.c.bf16 %v623, %v615
    %v1616 = vpack.c.bf16 %v632, %v624
    %v1617 = vpack.c.bf16 %v633, %v625
    %v1618 = vpack.c.bf16 %v634, %v626
    %v1619 = vpack.c.bf16 %v635, %v627
    %v1620 = vpack.c.bf16 %v636, %v628
    %v1621 = vpack.c.bf16 %v637, %v629
    %v1622 = vpack.c.bf16 %v638, %v630
    %v1623 = vpack.c.bf16 %v639, %v631
    %v1624 = vpack.c.bf16 %v648, %v640
    %v1625 = vpack.c.bf16 %v649, %v641
    %v1626 = vpack.c.bf16 %v650, %v642
    %v1627 = vpack.c.bf16 %v651, %v643
    %v1628 = vpack.c.bf16 %v652, %v644
    %v1629 = vpack.c.bf16 %v653, %v645
    %v1630 = vpack.c.bf16 %v654, %v646
    %v1631 = vpack.c.bf16 %v655, %v647
    %v1632 = vpack.c.bf16 %v664, %v656
    %v1633 = vpack.c.bf16 %v665, %v657
    %v1634 = vpack.c.bf16 %v666, %v658
    %v1635 = vpack.c.bf16 %v667, %v659
    %v1636 = vpack.c.bf16 %v668, %v660
    %v1637 = vpack.c.bf16 %v669, %v661
    %v1638 = vpack.c.bf16 %v670, %v662
    %v1639 = vpack.c.bf16 %v671, %v663
    %v1640 = vpack.c.bf16 %v680, %v672
    %v1641 = vpack.c.bf16 %v681, %v673
    %v1642 = vpack.c.bf16 %v682, %v674
    %v1643 = vpack.c.bf16 %v683, %v675
    %v1644 = vpack.c.bf16 %v684, %v676
    %v1645 = vpack.c.bf16 %v685, %v677
    %v1646 = vpack.c.bf16 %v686, %v678
    %v1647 = vpack.c.bf16 %v687, %v679
    %v1648 = vpack.c.bf16 %v696, %v688
    %v1649 = vpack.c.bf16 %v697, %v689
    %v1650 = vpack.c.bf16 %v698, %v690
    %v1651 = vpack.c.bf16 %v699, %v691
    %v1652 = vpack.c.bf16 %v700, %v692
    %v1653 = vpack.c.bf16 %v701, %v693
    %v1654 = vpack.c.bf16 %v702, %v694
    %v1655 = vpack.c.bf16 %v703, %v695
    %v1656 = vpack.c.bf16 %v712, %v704
    %v1657 = vpack.c.bf16 %v713, %v705
    %v1658 = vpack.c.bf16 %v714, %v706
    %v1659 = vpack.c.bf16 %v715, %v707
    %v1660 = vpack.c.bf16 %v716, %v708
    %v1661 = vpack.c.bf16 %v717, %v709
    %v1662 = vpack.c.bf16 %v718, %v710
    %v1663 = vpack.c.bf16 %v719, %v711
    %v1664 = vpack.c.bf16 %v728, %v720
    %v1665 = vpack.c.bf16 %v729, %v721
    %v1666 = vpack.c.bf16 %v730, %v722
    %v1667 = vpack.c.bf16 %v731, %v723
    %v1668 = vpack.c.bf16 %v732, %v724
    %v1669 = vpack.c.bf16 %v733, %v725
    %v1670 = vpack.c.bf16 %v734, %v726
    %v1671 = vpack.c.bf16 %v735, %v727
    %v1672 = vpack.c.bf16 %v744, %v736
    %v1673 = vpack.c.bf16 %v745, %v737
    %v1674 = vpack.c.bf16 %v746, %v738
    %v1675 = vpack.c.bf16 %v747, %v739
    %v1676 = vpack.c.bf16 %v748, %v740
    %v1677 = vpack.c.bf16 %v749, %v741
    %v1678 = vpack.c.bf16 %v750, %v742
    %v1679 = vpack.c.bf16 %v751, %v743
    %v1680 = vpack.c.bf16 %v760, %v752
    %v1681 = vpack.c.bf16 %v761, %v753
    %v1682 = vpack.c.bf16 %v762, %v754
    %v1683 = vpack.c.bf16 %v763, %v755
    %v1684 = vpack.c.bf16 %v764, %v756
    %v1685 = vpack.c.bf16 %v765, %v757
    %v1686 = vpack.c.bf16 %v766, %v758
    %v1687 = vpack.c.bf16 %v767, %v759
    %v1688 = vpack.c.bf16 %v776, %v768
    %v1689 = vpack.c.bf16 %v777, %v769
    %v1690 = vpack.c.bf16 %v778, %v770
    %v1691 = vpack.c.bf16 %v779, %v771
    %v1692 = vpack.c.bf16 %v780, %v772
    %v1693 = vpack.c.bf16 %v781, %v773
    %v1694 = vpack.c.bf16 %v782, %v774
    %v1695 = vpack.c.bf16 %v783, %v775
    %v1696 = vpack.c.bf16 %v792, %v784
    %v1697 = vpack.c.bf16 %v793, %v785
    %v1698 = vpack.c.bf16 %v794, %v786
    %v1699 = vpack.c.bf16 %v795, %v787
    %v1700 = vpack.c.bf16 %v796, %v788
    %v1701 = vpack.c.bf16 %v797, %v789
    %v1702 = vpack.c.bf16 %v798, %v790
    %v1703 = vpack.c.bf16 %v799, %v791
    %v1704 = vpack.c.bf16 %v808, %v800
    %v1705 = vpack.c.bf16 %v809, %v801
    %v1706 = vpack.c.bf16 %v810, %v802
    %v1707 = vpack.c.bf16 %v811, %v803
    %v1708 = vpack.c.bf16 %v812, %v804
    %v1709 = vpack.c.bf16 %v813, %v805
    %v1710 = vpack.c.bf16 %v814, %v806
    %v1711 = vpack.c.bf16 %v815, %v807
    %v1712 = vpack.c.bf16 %v824, %v816
    %v1713 = vpack.c.bf16 %v825, %v817
    %v1714 = vpack.c.bf16 %v826, %v818
    %v1715 = vpack.c.bf16 %v827, %v819
    %v1716 = vpack.c.bf16 %v828, %v820
    %v1717 = vpack.c.bf16 %v829, %v821
    %v1718 = vpack.c.bf16 %v830, %v822
    %v1719 = vpack.c.bf16 %v831, %v823
    %v1720 = vpack.c.bf16 %v840, %v832
    %v1721 = vpack.c.bf16 %v841, %v833
    %v1722 = vpack.c.bf16 %v842, %v834
    %v1723 = vpack.c.bf16 %v843, %v835
    %v1724 = vpack.c.bf16 %v844, %v836
    %v1725 = vpack.c.bf16 %v845, %v837
    %v1726 = vpack.c.bf16 %v846, %v838
    %v1727 = vpack.c.bf16 %v847, %v839
    %v1728 = vpack.c.bf16 %v856, %v848
    %v1729 = vpack.c.bf16 %v857, %v849
    %v1730 = vpack.c.bf16 %v858, %v850
    %v1731 = vpack.c.bf16 %v859, %v851
    %v1732 = vpack.c.bf16 %v860, %v852
    %v1733 = vpack.c.bf16 %v861, %v853
    %v1734 = vpack.c.bf16 %v862, %v854
    %v1735 = vpack.c.bf16 %v863, %v855
    %v1736 = vpack.c.bf16 %v872, %v864
    %v1737 = vpack.c.bf16 %v873, %v865
    %v1738 = vpack.c.bf16 %v874, %v866
    %v1739 = vpack.c.bf16 %v875, %v867
    %v1740 = vpack.c.bf16 %v876, %v868
    %v1741 = vpack.c.bf16 %v877, %v869
    %v1742 = vpack.c.bf16 %v878, %v870
    %v1743 = vpack.c.bf16 %v879, %v871
    %v1744 = vpack.c.bf16 %v888, %v880
    %v1745 = vpack.c.bf16 %v889, %v881
    %v1746 = vpack.c.bf16 %v890, %v882
    %v1747 = vpack.c.bf16 %v891, %v883
    %v1748 = vpack.c.bf16 %v892, %v884
    %v1749 = vpack.c.bf16 %v893, %v885
    %v1750 = vpack.c.bf16 %v894, %v886
    %v1751 = vpack.c.bf16 %v895, %v887
    %v1752 = vpack.c.bf16 %v904, %v896
    %v1753 = vpack.c.bf16 %v905, %v897
    %v1754 = vpack.c.bf16 %v906, %v898
    %v1755 = vpack.c.bf16 %v907, %v899
    %v1756 = vpack.c.bf16 %v908, %v900
    %v1757 = vpack.c.bf16 %v909, %v901
    %v1758 = vpack.c.bf16 %v910, %v902
    %v1759 = vpack.c.bf16 %v911, %v903
    %v1760 = vpack.c.bf16 %v920, %v912
    %v1761 = vpack.c.bf16 %v921, %v913
    %v1762 = vpack.c.bf16 %v922, %v914
    %v1763 = vpack.c.bf16 %v923, %v915
    %v1764 = vpack.c.bf16 %v924, %v916
    %v1765 = vpack.c.bf16 %v925, %v917
    %v1766 = vpack.c.bf16 %v926, %v918
    %v1767 = vpack.c.bf16 %v927, %v919
    %v1768 = vpack.c.bf16 %v936, %v928
    %v1769 = vpack.c.bf16 %v937, %v929
    %v1770 = vpack.c.bf16 %v938, %v930
    %v1771 = vpack.c.bf16 %v939, %v931
    %v1772 = vpack.c.bf16 %v940, %v932
    %v1773 = vpack.c.bf16 %v941, %v933
    %v1774 = vpack.c.bf16 %v942, %v934
    %v1775 = vpack.c.bf16 %v943, %v935
    %v1776 = vpack.c.bf16 %v952, %v944
    %v1777 = vpack.c.bf16 %v953, %v945
    %v1778 = vpack.c.bf16 %v954, %v946
    %v1779 = vpack.c.bf16 %v955, %v947
    %v1780 = vpack.c.bf16 %v956, %v948
    %v1781 = vpack.c.bf16 %v957, %v949
    %v1782 = vpack.c.bf16 %v958, %v950
    %v1783 = vpack.c.bf16 %v959, %v951
    %v1784 = vpack.c.bf16 %v968, %v960
    %v1785 = vpack.c.bf16 %v969, %v961
    %v1786 = vpack.c.bf16 %v970, %v962
    %v1787 = vpack.c.bf16 %v971, %v963
    %v1788 = vpack.c.bf16 %v972, %v964
    %v1789 = vpack.c.bf16 %v973, %v965
    %v1790 = vpack.c.bf16 %v974, %v966
    %v1791 = vpack.c.bf16 %v975, %v967
    %v1792 = vpack.c.bf16 %v984, %v976
    %v1793 = vpack.c.bf16 %v985, %v977
    %v1794 = vpack.c.bf16 %v986, %v978
    %v1795 = vpack.c.bf16 %v987, %v979
    %v1796 = vpack.c.bf16 %v988, %v980
    %v1797 = vpack.c.bf16 %v989, %v981
    %v1798 = vpack.c.bf16 %v990, %v982
    %v1799 = vpack.c.bf16 %v991, %v983
    %v1800 = vpack.c.bf16 %v1000, %v992
    %v1801 = vpack.c.bf16 %v1001, %v993
    %v1802 = vpack.c.bf16 %v1002, %v994
    %v1803 = vpack.c.bf16 %v1003, %v995
    %v1804 = vpack.c.bf16 %v1004, %v996
    %v1805 = vpack.c.bf16 %v1005, %v997
    %v1806 = vpack.c.bf16 %v1006, %v998
    %v1807 = vpack.c.bf16 %v1007, %v999
    %v1808 = vpack.c.bf16 %v1016, %v1008
    %v1809 = vpack.c.bf16 %v1017, %v1009
    %v1810 = vpack.c.bf16 %v1018, %v1010
    %v1811 = vpack.c.bf16 %v1019, %v1011
    %v1812 = vpack.c.bf16 %v1020, %v1012
    %v1813 = vpack.c.bf16 %v1021, %v1013
    %v1814 = vpack.c.bf16 %v1022, %v1014
    %v1815 = vpack.c.bf16 %v1023, %v1015
    %v1816 = vpack.c.bf16 %v1032, %v1024
    %v1817 = vpack.c.bf16 %v1033, %v1025
    %v1818 = vpack.c.bf16 %v1034, %v1026
    %v1819 = vpack.c.bf16 %v1035, %v1027
    %v1820 = vpack.c.bf16 %v1036, %v1028
    %v1821 = vpack.c.bf16 %v1037, %v1029
    %v1822 = vpack.c.bf16 %v1038, %v1030
    %v1823 = vpack.c.bf16 %v1039, %v1031
    %v1824 = vpack.c.bf16 %v1048, %v1040
    %v1825 = vpack.c.bf16 %v1049, %v1041
    %v1826 = vpack.c.bf16 %v1050, %v1042
    %v1827 = vpack.c.bf16 %v1051, %v1043
    %v1828 = vpack.c.bf16 %v1052, %v1044
    %v1829 = vpack.c.bf16 %v1053, %v1045
    %v1830 = vpack.c.bf16 %v1054, %v1046
    %v1831 = vpack.c.bf16 %v1055, %v1047
    %v1832 = vpack.c.bf16 %v1064, %v1056
    %v1833 = vpack.c.bf16 %v1065, %v1057
    %v1834 = vpack.c.bf16 %v1066, %v1058
    %v1835 = vpack.c.bf16 %v1067, %v1059
    %v1836 = vpack.c.bf16 %v1068, %v1060
    %v1837 = vpack.c.bf16 %v1069, %v1061
    %v1838 = vpack.c.bf16 %v1070, %v1062
    %v1839 = vpack.c.bf16 %v1071, %v1063
    %v1840 = vpack.c.bf16 %v1080, %v1072
    %v1841 = vpack.c.bf16 %v1081, %v1073
    %v1842 = vpack.c.bf16 %v1082, %v1074
    %v1843 = vpack.c.bf16 %v1083, %v1075
    %v1844 = vpack.c.bf16 %v1084, %v1076
    %v1845 = vpack.c.bf16 %v1085, %v1077
    %v1846 = vpack.c.bf16 %v1086, %v1078
    %v1847 = vpack.c.bf16 %v1087, %v1079
    %v1848 = vpack.c.bf16 %v1096, %v1088
    %v1849 = vpack.c.bf16 %v1097, %v1089
    %v1850 = vpack.c.bf16 %v1098, %v1090
    %v1851 = vpack.c.bf16 %v1099, %v1091
    %v1852 = vpack.c.bf16 %v1100, %v1092
    %v1853 = vpack.c.bf16 %v1101, %v1093
    %v1854 = vpack.c.bf16 %v1102, %v1094
    %v1855 = vpack.c.bf16 %v1103, %v1095
    %v1856 = vpack.c.bf16 %v1112, %v1104
    %v1857 = vpack.c.bf16 %v1113, %v1105
    %v1858 = vpack.c.bf16 %v1114, %v1106
    %v1859 = vpack.c.bf16 %v1115, %v1107
    %v1860 = vpack.c.bf16 %v1116, %v1108
    %v1861 = vpack.c.bf16 %v1117, %v1109
    %v1862 = vpack.c.bf16 %v1118, %v1110
    %v1863 = vpack.c.bf16 %v1119, %v1111
    %v1864 = vpack.c.bf16 %v1128, %v1120
    %v1865 = vpack.c.bf16 %v1129, %v1121
    %v1866 = vpack.c.bf16 %v1130, %v1122
    %v1867 = vpack.c.bf16 %v1131, %v1123
    %v1868 = vpack.c.bf16 %v1132, %v1124
    %v1869 = vpack.c.bf16 %v1133, %v1125
    %v1870 = vpack.c.bf16 %v1134, %v1126
    %v1871 = vpack.c.bf16 %v1135, %v1127
    %v1872 = vpack.c.bf16 %v1144, %v1136
    %v1873 = vpack.c.bf16 %v1145, %v1137
    %v1874 = vpack.c.bf16 %v1146, %v1138
    %v1875 = vpack.c.bf16 %v1147, %v1139
    %v1876 = vpack.c.bf16 %v1148, %v1140
    %v1877 = vpack.c.bf16 %v1149, %v1141
    %v1878 = vpack.c.bf16 %v1150, %v1142
    %v1879 = vpack.c.bf16 %v1151, %v1143
    %v1880 = vpack.c.bf16 %v1160, %v1152
    %v1881 = vpack.c.bf16 %v1161, %v1153
    %v1882 = vpack.c.bf16 %v1162, %v1154
    %v1883 = vpack.c.bf16 %v1163, %v1155
    %v1884 = vpack.c.bf16 %v1164, %v1156
    %v1885 = vpack.c.bf16 %v1165, %v1157
    %v1886 = vpack.c.bf16 %v1166, %v1158
    %v1887 = vpack.c.bf16 %v1167, %v1159
    %v1888 = vpack.c.bf16 %v1176, %v1168
    %v1889 = vpack.c.bf16 %v1177, %v1169
    %v1890 = vpack.c.bf16 %v1178, %v1170
    %v1891 = vpack.c.bf16 %v1179, %v1171
    %v1892 = vpack.c.bf16 %v1180, %v1172
    %v1893 = vpack.c.bf16 %v1181, %v1173
    %v1894 = vpack.c.bf16 %v1182, %v1174
    %v1895 = vpack.c.bf16 %v1183, %v1175
    %v1896 = vpack.c.bf16 %v1192, %v1184
    %v1897 = vpack.c.bf16 %v1193, %v1185
    %v1898 = vpack.c.bf16 %v1194, %v1186
    %v1899 = vpack.c.bf16 %v1195, %v1187
    %v1900 = vpack.c.bf16 %v1196, %v1188
    %v1901 = vpack.c.bf16 %v1197, %v1189
    %v1902 = vpack.c.bf16 %v1198, %v1190
    %v1903 = vpack.c.bf16 %v1199, %v1191
    %v1904 = vpack.c.bf16 %v1208, %v1200
    %v1905 = vpack.c.bf16 %v1209, %v1201
    %v1906 = vpack.c.bf16 %v1210, %v1202
    %v1907 = vpack.c.bf16 %v1211, %v1203
    %v1908 = vpack.c.bf16 %v1212, %v1204
    %v1909 = vpack.c.bf16 %v1213, %v1205
    %v1910 = vpack.c.bf16 %v1214, %v1206
    %v1911 = vpack.c.bf16 %v1215, %v1207
    %v1912 = vpack.c.bf16 %v1224, %v1216
    %v1913 = vpack.c.bf16 %v1225, %v1217
    %v1914 = vpack.c.bf16 %v1226, %v1218
    %v1915 = vpack.c.bf16 %v1227, %v1219
    %v1916 = vpack.c.bf16 %v1228, %v1220
    %v1917 = vpack.c.bf16 %v1229, %v1221
    %v1918 = vpack.c.bf16 %v1230, %v1222
    %v1919 = vpack.c.bf16 %v1231, %v1223
    %v1920 = vpack.c.bf16 %v1240, %v1232
    %v1921 = vpack.c.bf16 %v1241, %v1233
    %v1922 = vpack.c.bf16 %v1242, %v1234
    %v1923 = vpack.c.bf16 %v1243, %v1235
    %v1924 = vpack.c.bf16 %v1244, %v1236
    %v1925 = vpack.c.bf16 %v1245, %v1237
    %v1926 = vpack.c.bf16 %v1246, %v1238
    %v1927 = vpack.c.bf16 %v1247, %v1239
    %v1928 = vpack.c.bf16 %v1256, %v1248
    %v1929 = vpack.c.bf16 %v1257, %v1249
    %v1930 = vpack.c.bf16 %v1258, %v1250
    %v1931 = vpack.c.bf16 %v1259, %v1251
    %v1932 = vpack.c.bf16 %v1260, %v1252
    %v1933 = vpack.c.bf16 %v1261, %v1253
    %v1934 = vpack.c.bf16 %v1262, %v1254
    %v1935 = vpack.c.bf16 %v1263, %v1255
    %v1936 = vpack.c.bf16 %v1272, %v1264
    %v1937 = vpack.c.bf16 %v1273, %v1265
    %v1938 = vpack.c.bf16 %v1274, %v1266
    %v1939 = vpack.c.bf16 %v1275, %v1267
    %v1940 = vpack.c.bf16 %v1276, %v1268
    %v1941 = vpack.c.bf16 %v1277, %v1269
    %v1942 = vpack.c.bf16 %v1278, %v1270
    %v1943 = vpack.c.bf16 %v1279, %v1271
    %v1944 = vpack.c.bf16 %v1288, %v1280
    %v1945 = vpack.c.bf16 %v1289, %v1281
    %v1946 = vpack.c.bf16 %v1290, %v1282
    %v1947 = vpack.c.bf16 %v1291, %v1283
    %v1948 = vpack.c.bf16 %v1292, %v1284
    %v1949 = vpack.c.bf16 %v1293, %v1285
    %v1950 = vpack.c.bf16 %v1294, %v1286
    %v1951 = vpack.c.bf16 %v1295, %v1287
    %v1952 = vpack.c.bf16 %v1304, %v1296
    %v1953 = vpack.c.bf16 %v1305, %v1297
    %v1954 = vpack.c.bf16 %v1306, %v1298
    %v1955 = vpack.c.bf16 %v1307, %v1299
    %v1956 = vpack.c.bf16 %v1308, %v1300
    %v1957 = vpack.c.bf16 %v1309, %v1301
    %v1958 = vpack.c.bf16 %v1310, %v1302
    %v1959 = vpack.c.bf16 %v1311, %v1303
    %v1960 = vpack.c.bf16 %v1320, %v1312
    %v1961 = vpack.c.bf16 %v1321, %v1313
    %v1962 = vpack.c.bf16 %v1322, %v1314
    %v1963 = vpack.c.bf16 %v1323, %v1315
    %v1964 = vpack.c.bf16 %v1324, %v1316
    %v1965 = vpack.c.bf16 %v1325, %v1317
    %v1966 = vpack.c.bf16 %v1326, %v1318
    %v1967 = vpack.c.bf16 %v1327, %v1319
    %v1968 = vpack.c.bf16 %v1336, %v1328
    %v1969 = vpack.c.bf16 %v1337, %v1329
    %v1970 = vpack.c.bf16 %v1338, %v1330
    %v1971 = vpack.c.bf16 %v1339, %v1331
    %v1972 = vpack.c.bf16 %v1340, %v1332
    %v1973 = vpack.c.bf16 %v1341, %v1333
    %v1974 = vpack.c.bf16 %v1342, %v1334
    %v1975 = vpack.c.bf16 %v1343, %v1335
    %v1976 = vpack.c.bf16 %v1344, %v1344
    %v1977 = vpack.c.bf16 %v1345, %v1345
    %v1978 = vpack.c.bf16 %v1346, %v1346
    %v1979 = vpack.c.bf16 %v1347, %v1347
    %v1980 = vpack.c.bf16 %v1348, %v1348
    %v1981 = vpack.c.bf16 %v1349, %v1349
    %v1982 = vpack.c.bf16 %v1350, %v1350
    %v1983 = vpack.c.bf16 %v1351, %v1351
    %v1984 = vld [vmem:[%s2] sm:$0xff]
    %v1986 = vlaneseq
    %v1987 = vshrl.u32 %v1986, 7
    %v1988 = vsub.s32 0, %v1987
    %v1989 = vrot.slane %v1984, %v1988
    %v1990 = vlaneseq
    %v1991 = vshrl.u32 %v1990, 7
    %v1992 = vsub.s32 1, %v1991
    %v1993 = vrot.slane %v1984, %v1992
    %v1994 = vlaneseq
    %v1995 = vshrl.u32 %v1994, 7
    %v1996 = vsub.s32 2, %v1995
    %v1997 = vrot.slane %v1984, %v1996
    %v1998 = vlaneseq
    %v1999 = vshrl.u32 %v1998, 7
    %v2000 = vsub.s32 3, %v1999
    %v2001 = vrot.slane %v1984, %v2000
    %v2002 = vlaneseq
    %v2003 = vshrl.u32 %v2002, 7
    %v2004 = vsub.s32 4, %v2003
    %v2005 = vrot.slane %v1984, %v2004
    %v2006 = vlaneseq
    %v2007 = vshrl.u32 %v2006, 7
    %v2008 = vsub.s32 5, %v2007
    %v2009 = vrot.slane %v1984, %v2008
    %v2010 = vlaneseq
    %v2011 = vshrl.u32 %v2010, 7
    %v2012 = vsub.s32 6, %v2011
    %v2013 = vrot.slane %v1984, %v2012
    %v2014 = vlaneseq
    %v2015 = vshrl.u32 %v2014, 7
    %v2016 = vsub.s32 7, %v2015
    %v2017 = vrot.slane %v1984, %v2016
    %vm2026 = vcmask 801792
    %v2028 = vsel %vm2026, %v95, 0
    %vm2030 = vcmask 1040384
    %v2032 = vsel %vm2030, %v1976, 0
    %v2035 = vsel %vm2030, %v1977, 0
    %v2038 = vsel %vm2030, %v1978, 0
    %v2041 = vsel %vm2030, %v1979, 0
    %v2044 = vsel %vm2030, %v1980, 0
    %v2047 = vsel %vm2030, %v1981, 0
    %v2050 = vsel %vm2030, %v1982, 0
    %v2053 = vsel %vm2030, %v1983, 0
    %2055 = vmatprep.subr.bf16.mxu0 %v1409
    %2056 = vmatpush1.bf16.msra.mxu0 %v1408
    %2057 = vmatprep.subr.bf16.mxu0 %v1401
    %2058 = vmatpush1.bf16.msra.mxu0 %v1400
    %2059 = vmatprep.subr.bf16.mxu0 %v1393
    %2060 = vmatpush1.bf16.msra.mxu0 %v1392
    %2061 = vmatprep.subr.bf16.mxu0 %v1385
    %2062 = vmatpush1.bf16.msra.mxu0 %v1384
    %2063 = vmatprep.subr.bf16.mxu0 %v1377
    %2064 = vmatpush1.bf16.msra.mxu0 %v1376
    %2065 = vmatprep.subr.bf16.mxu0 %v1369
    %2066 = vmatpush1.bf16.msra.mxu0 %v1368
    %2067 = vmatprep.subr.bf16.mxu0 %v1361
    %2068 = vmatpush1.bf16.msra.mxu0 %v1360
    %2069 = vmatprep.subr.bf16.mxu0 %v1353
    %2070 = vmatpush1.bf16.msra.mxu0 %v1352
    %2071 = vmatprep.subr.bf16.mxu0 %v1473
    %2072 = vmatpush2.bf16.msra.mxu0 %v1472
    %2073 = vmatprep.subr.bf16.mxu0 %v1465
    %2074 = vmatpush2.bf16.msra.mxu0 %v1464
    %2075 = vmatprep.subr.bf16.mxu0 %v1457
    %2076 = vmatpush2.bf16.msra.mxu0 %v1456
    %2077 = vmatprep.subr.bf16.mxu0 %v1449
    %2078 = vmatpush2.bf16.msra.mxu0 %v1448
    %2079 = vmatprep.subr.bf16.mxu0 %v1441
    %2080 = vmatpush2.bf16.msra.mxu0 %v1440
    %2081 = vmatprep.subr.bf16.mxu0 %v1433
    %2082 = vmatpush2.bf16.msra.mxu0 %v1432
    %2083 = vmatprep.subr.bf16.mxu0 %v1425
    %2084 = vmatpush2.bf16.msra.mxu0 %v1424
    %2085 = vmatprep.subr.bf16.mxu0 %v1417
    %2086 = vmatpush2.bf16.msra.mxu0 %v1416
    %2087 = vmatprep.mubr.bf16.mxu0 %v87
    %2088 = vmatmul.mubr.bf16.gmra.mxu0 %v86
    %v2089 = vpop.f32.mrf.mxu0
    %v2090 = vadd.f32 %v1989, %v2089
    %v2091 = vpop.f32.mrf.mxu0
    %v2092 = vadd.f32 %v1993, %v2091
    %v2093 = vpop.f32.mrf.mxu0
    %v2094 = vpop.f32.mrf.mxu0
    %2095 = vdwg.mxu0
    %2096 = vmatprep.subr.bf16.mxu0 %v1537
    %2097 = vmatpush1.bf16.msra.mxu0 %v1536
    %2098 = vmatprep.subr.bf16.mxu0 %v1529
    %2099 = vmatpush1.bf16.msra.mxu0 %v1528
    %2100 = vmatprep.subr.bf16.mxu0 %v1521
    %2101 = vmatpush1.bf16.msra.mxu0 %v1520
    %2102 = vmatprep.subr.bf16.mxu0 %v1513
    %2103 = vmatpush1.bf16.msra.mxu0 %v1512
    %2104 = vmatprep.subr.bf16.mxu0 %v1505
    %2105 = vmatpush1.bf16.msra.mxu0 %v1504
    %2106 = vmatprep.subr.bf16.mxu0 %v1497
    %2107 = vmatpush1.bf16.msra.mxu0 %v1496
    %2108 = vmatprep.subr.bf16.mxu0 %v1489
    %2109 = vmatpush1.bf16.msra.mxu0 %v1488
    %2110 = vmatprep.subr.bf16.mxu0 %v1481
    %2111 = vmatpush1.bf16.msra.mxu0 %v1480
    %2112 = vmatprep.subr.bf16.mxu0 %v1601
    %2113 = vmatpush2.bf16.msra.mxu0 %v1600
    %2114 = vmatprep.subr.bf16.mxu0 %v1593
    %2115 = vmatpush2.bf16.msra.mxu0 %v1592
    %2116 = vmatprep.subr.bf16.mxu0 %v1585
    %2117 = vmatpush2.bf16.msra.mxu0 %v1584
    %2118 = vmatprep.subr.bf16.mxu0 %v1577
    %2119 = vmatpush2.bf16.msra.mxu0 %v1576
    %2120 = vmatprep.subr.bf16.mxu0 %v1569
    %2121 = vmatpush2.bf16.msra.mxu0 %v1568
    %2122 = vmatprep.subr.bf16.mxu0 %v1561
    %2123 = vmatpush2.bf16.msra.mxu0 %v1560
    %2124 = vmatprep.subr.bf16.mxu0 %v1553
    %2125 = vmatpush2.bf16.msra.mxu0 %v1552
    %2126 = vmatprep.subr.bf16.mxu0 %v1545
    %2127 = vmatpush2.bf16.msra.mxu0 %v1544
    %2128 = vmatprep.mubr.bf16.mxu0 %v89
    %2129 = vmatmul.mubr.bf16.gmra.mxu0 %v88
    %v2130 = vpop.f32.mrf.mxu0
    %v2131 = vadd.f32 %v2090, %v2130
    %v2132 = vpop.f32.mrf.mxu0
    %v2133 = vadd.f32 %v2092, %v2132
    %v2134 = vpop.f32.mrf.mxu0
    %v2135 = vpop.f32.mrf.mxu0
    %2136 = vdwg.mxu0
    %2137 = vmatprep.subr.bf16.mxu0 %v1665
    %2138 = vmatpush1.bf16.msra.mxu0 %v1664
    %2139 = vmatprep.subr.bf16.mxu0 %v1657
    %2140 = vmatpush1.bf16.msra.mxu0 %v1656
    %2141 = vmatprep.subr.bf16.mxu0 %v1649
    %2142 = vmatpush1.bf16.msra.mxu0 %v1648
    %2143 = vmatprep.subr.bf16.mxu0 %v1641
    %2144 = vmatpush1.bf16.msra.mxu0 %v1640
    %2145 = vmatprep.subr.bf16.mxu0 %v1633
    %2146 = vmatpush1.bf16.msra.mxu0 %v1632
    %2147 = vmatprep.subr.bf16.mxu0 %v1625
    %2148 = vmatpush1.bf16.msra.mxu0 %v1624
    %2149 = vmatprep.subr.bf16.mxu0 %v1617
    %2150 = vmatpush1.bf16.msra.mxu0 %v1616
    %2151 = vmatprep.subr.bf16.mxu0 %v1609
    %2152 = vmatpush1.bf16.msra.mxu0 %v1608
    %2153 = vmatprep.subr.bf16.mxu0 %v1729
    %2154 = vmatpush2.bf16.msra.mxu0 %v1728
    %2155 = vmatprep.subr.bf16.mxu0 %v1721
    %2156 = vmatpush2.bf16.msra.mxu0 %v1720
    %2157 = vmatprep.subr.bf16.mxu0 %v1713
    %2158 = vmatpush2.bf16.msra.mxu0 %v1712
    %2159 = vmatprep.subr.bf16.mxu0 %v1705
    %2160 = vmatpush2.bf16.msra.mxu0 %v1704
    %2161 = vmatprep.subr.bf16.mxu0 %v1697
    %2162 = vmatpush2.bf16.msra.mxu0 %v1696
    %2163 = vmatprep.subr.bf16.mxu0 %v1689
    %2164 = vmatpush2.bf16.msra.mxu0 %v1688
    %2165 = vmatprep.subr.bf16.mxu0 %v1681
    %2166 = vmatpush2.bf16.msra.mxu0 %v1680
    %2167 = vmatprep.subr.bf16.mxu0 %v1673
    %2168 = vmatpush2.bf16.msra.mxu0 %v1672
    %2169 = vmatprep.mubr.bf16.mxu0 %v91
    %2170 = vmatmul.mubr.bf16.gmra.mxu0 %v90
    %v2171 = vpop.f32.mrf.mxu0
    %v2172 = vadd.f32 %v2131, %v2171
    %v2173 = vpop.f32.mrf.mxu0
    %v2174 = vadd.f32 %v2133, %v2173
    %v2175 = vpop.f32.mrf.mxu0
    %v2176 = vpop.f32.mrf.mxu0
    %2177 = vdwg.mxu0
    %2178 = vmatprep.subr.bf16.mxu0 %v1793
    %2179 = vmatpush1.bf16.msra.mxu0 %v1792
    %2180 = vmatprep.subr.bf16.mxu0 %v1785
    %2181 = vmatpush1.bf16.msra.mxu0 %v1784
    %2182 = vmatprep.subr.bf16.mxu0 %v1777
    %2183 = vmatpush1.bf16.msra.mxu0 %v1776
    %2184 = vmatprep.subr.bf16.mxu0 %v1769
    %2185 = vmatpush1.bf16.msra.mxu0 %v1768
    %2186 = vmatprep.subr.bf16.mxu0 %v1761
    %2187 = vmatpush1.bf16.msra.mxu0 %v1760
    %2188 = vmatprep.subr.bf16.mxu0 %v1753
    %2189 = vmatpush1.bf16.msra.mxu0 %v1752
    %2190 = vmatprep.subr.bf16.mxu0 %v1745
    %2191 = vmatpush1.bf16.msra.mxu0 %v1744
    %2192 = vmatprep.subr.bf16.mxu0 %v1737
    %2193 = vmatpush1.bf16.msra.mxu0 %v1736
    %2194 = vmatprep.subr.bf16.mxu0 %v1857
    %2195 = vmatpush2.bf16.msra.mxu0 %v1856
    %2196 = vmatprep.subr.bf16.mxu0 %v1849
    %2197 = vmatpush2.bf16.msra.mxu0 %v1848
    %2198 = vmatprep.subr.bf16.mxu0 %v1841
    %2199 = vmatpush2.bf16.msra.mxu0 %v1840
    %2200 = vmatprep.subr.bf16.mxu0 %v1833
    %2201 = vmatpush2.bf16.msra.mxu0 %v1832
    %2202 = vmatprep.subr.bf16.mxu0 %v1825
    %2203 = vmatpush2.bf16.msra.mxu0 %v1824
    %2204 = vmatprep.subr.bf16.mxu0 %v1817
    %2205 = vmatpush2.bf16.msra.mxu0 %v1816
    %2206 = vmatprep.subr.bf16.mxu0 %v1809
    %2207 = vmatpush2.bf16.msra.mxu0 %v1808
    %2208 = vmatprep.subr.bf16.mxu0 %v1801
    %2209 = vmatpush2.bf16.msra.mxu0 %v1800
    %2210 = vmatprep.mubr.bf16.mxu0 %v93
    %2211 = vmatmul.mubr.bf16.gmra.mxu0 %v92
    %v2212 = vpop.f32.mrf.mxu0
    %v2213 = vadd.f32 %v2172, %v2212
    %v2214 = vpop.f32.mrf.mxu0
    %v2215 = vadd.f32 %v2174, %v2214
    %v2216 = vpop.f32.mrf.mxu0
    %v2217 = vpop.f32.mrf.mxu0
    %2218 = vdwg.mxu0
    %2219 = vmatprep.subr.bf16.mxu0 %v1921
    %2220 = vmatpush1.bf16.msra.mxu0 %v1920
    %2221 = vmatprep.subr.bf16.mxu0 %v1913
    %2222 = vmatpush1.bf16.msra.mxu0 %v1912
    %2223 = vmatprep.subr.bf16.mxu0 %v1905
    %2224 = vmatpush1.bf16.msra.mxu0 %v1904
    %2225 = vmatprep.subr.bf16.mxu0 %v1897
    %2226 = vmatpush1.bf16.msra.mxu0 %v1896
    %2227 = vmatprep.subr.bf16.mxu0 %v1889
    %2228 = vmatpush1.bf16.msra.mxu0 %v1888
    %2229 = vmatprep.subr.bf16.mxu0 %v1881
    %2230 = vmatpush1.bf16.msra.mxu0 %v1880
    %2231 = vmatprep.subr.bf16.mxu0 %v1873
    %2232 = vmatpush1.bf16.msra.mxu0 %v1872
    %2233 = vmatprep.subr.bf16.mxu0 %v1865
    %2234 = vmatpush1.bf16.msra.mxu0 %v1864
    %2235 = vmatprep.subr.bf16.mxu0 0
    %2236 = vmatpush2.bf16.msra.mxu0 0
    %2237 = vmatprep.subr.bf16.mxu0 %v2035
    %2238 = vmatpush2.bf16.msra.mxu0 %v2032
    %2239 = vmatprep.subr.bf16.mxu0 %v1969
    %2240 = vmatpush2.bf16.msra.mxu0 %v1968
    %2241 = vmatprep.subr.bf16.mxu0 %v1961
    %2242 = vmatpush2.bf16.msra.mxu0 %v1960
    %2243 = vmatprep.subr.bf16.mxu0 %v1953
    %2244 = vmatpush2.bf16.msra.mxu0 %v1952
    %2245 = vmatprep.subr.bf16.mxu0 %v1945
    %2246 = vmatpush2.bf16.msra.mxu0 %v1944
    %2247 = vmatprep.subr.bf16.mxu0 %v1937
    %2248 = vmatpush2.bf16.msra.mxu0 %v1936
    %2249 = vmatprep.subr.bf16.mxu0 %v1929
    %2250 = vmatpush2.bf16.msra.mxu0 %v1928
    %2251 = vmatprep.mubr.bf16.mxu0 %v2028
    %2252 = vmatmul.mubr.bf16.gmra.mxu0 %v94
    %v2253 = vpop.f32.mrf.mxu0
    %v2254 = vadd.f32 %v2213, %v2253
    %v2255 = vpop.f32.mrf.mxu0
    %v2256 = vadd.f32 %v2215, %v2255
    %v2257 = vpop.f32.mrf.mxu0
    %v2258 = vpop.f32.mrf.mxu0
    %2259 = vdwg.mxu0
    %2260 = vmatprep.subr.bf16.mxu0 %v1411
    %2261 = vmatpush1.bf16.msra.mxu0 %v1410
    %2262 = vmatprep.subr.bf16.mxu0 %v1403
    %2263 = vmatpush1.bf16.msra.mxu0 %v1402
    %2264 = vmatprep.subr.bf16.mxu0 %v1395
    %2265 = vmatpush1.bf16.msra.mxu0 %v1394
    %2266 = vmatprep.subr.bf16.mxu0 %v1387
    %2267 = vmatpush1.bf16.msra.mxu0 %v1386
    %2268 = vmatprep.subr.bf16.mxu0 %v1379
    %2269 = vmatpush1.bf16.msra.mxu0 %v1378
    %2270 = vmatprep.subr.bf16.mxu0 %v1371
    %2271 = vmatpush1.bf16.msra.mxu0 %v1370
    %2272 = vmatprep.subr.bf16.mxu0 %v1363
    %2273 = vmatpush1.bf16.msra.mxu0 %v1362
    %2274 = vmatprep.subr.bf16.mxu0 %v1355
    %2275 = vmatpush1.bf16.msra.mxu0 %v1354
    %2276 = vmatprep.subr.bf16.mxu0 %v1475
    %2277 = vmatpush2.bf16.msra.mxu0 %v1474
    %2278 = vmatprep.subr.bf16.mxu0 %v1467
    %2279 = vmatpush2.bf16.msra.mxu0 %v1466
    %2280 = vmatprep.subr.bf16.mxu0 %v1459
    %2281 = vmatpush2.bf16.msra.mxu0 %v1458
    %2282 = vmatprep.subr.bf16.mxu0 %v1451
    %2283 = vmatpush2.bf16.msra.mxu0 %v1450
    %2284 = vmatprep.subr.bf16.mxu0 %v1443
    %2285 = vmatpush2.bf16.msra.mxu0 %v1442
    %2286 = vmatprep.subr.bf16.mxu0 %v1435
    %2287 = vmatpush2.bf16.msra.mxu0 %v1434
    %2288 = vmatprep.subr.bf16.mxu0 %v1427
    %2289 = vmatpush2.bf16.msra.mxu0 %v1426
    %2290 = vmatprep.subr.bf16.mxu0 %v1419
    %2291 = vmatpush2.bf16.msra.mxu0 %v1418
    %2292 = vmatprep.mubr.bf16.mxu0 %v87
    %2293 = vmatmul.mubr.bf16.gmra.mxu0 %v86
    %v2294 = vpop.f32.mrf.mxu0
    %v2295 = vadd.f32 %v1997, %v2294
    %v2296 = vpop.f32.mrf.mxu0
    %v2297 = vadd.f32 %v2001, %v2296
    %v2298 = vpop.f32.mrf.mxu0
    %v2299 = vpop.f32.mrf.mxu0
    %2300 = vdwg.mxu0
    %2301 = vmatprep.subr.bf16.mxu0 %v1539
    %2302 = vmatpush1.bf16.msra.mxu0 %v1538
    %2303 = vmatprep.subr.bf16.mxu0 %v1531
    %2304 = vmatpush1.bf16.msra.mxu0 %v1530
    %2305 = vmatprep.subr.bf16.mxu0 %v1523
    %2306 = vmatpush1.bf16.msra.mxu0 %v1522
    %2307 = vmatprep.subr.bf16.mxu0 %v1515
    %2308 = vmatpush1.bf16.msra.mxu0 %v1514
    %2309 = vmatprep.subr.bf16.mxu0 %v1507
    %2310 = vmatpush1.bf16.msra.mxu0 %v1506
    %2311 = vmatprep.subr.bf16.mxu0 %v1499
    %2312 = vmatpush1.bf16.msra.mxu0 %v1498
    %2313 = vmatprep.subr.bf16.mxu0 %v1491
    %2314 = vmatpush1.bf16.msra.mxu0 %v1490
    %2315 = vmatprep.subr.bf16.mxu0 %v1483
    %2316 = vmatpush1.bf16.msra.mxu0 %v1482
    %2317 = vmatprep.subr.bf16.mxu0 %v1603
    %2318 = vmatpush2.bf16.msra.mxu0 %v1602
    %2319 = vmatprep.subr.bf16.mxu0 %v1595
    %2320 = vmatpush2.bf16.msra.mxu0 %v1594
    %2321 = vmatprep.subr.bf16.mxu0 %v1587
    %2322 = vmatpush2.bf16.msra.mxu0 %v1586
    %2323 = vmatprep.subr.bf16.mxu0 %v1579
    %2324 = vmatpush2.bf16.msra.mxu0 %v1578
    %2325 = vmatprep.subr.bf16.mxu0 %v1571
    %2326 = vmatpush2.bf16.msra.mxu0 %v1570
    %2327 = vmatprep.subr.bf16.mxu0 %v1563
    %2328 = vmatpush2.bf16.msra.mxu0 %v1562
    %2329 = vmatprep.subr.bf16.mxu0 %v1555
    %2330 = vmatpush2.bf16.msra.mxu0 %v1554
    %2331 = vmatprep.subr.bf16.mxu0 %v1547
    %2332 = vmatpush2.bf16.msra.mxu0 %v1546
    %2333 = vmatprep.mubr.bf16.mxu0 %v89
    %2334 = vmatmul.mubr.bf16.gmra.mxu0 %v88
    %v2335 = vpop.f32.mrf.mxu0
    %v2336 = vadd.f32 %v2295, %v2335
    %v2337 = vpop.f32.mrf.mxu0
    %v2338 = vadd.f32 %v2297, %v2337
    %v2339 = vpop.f32.mrf.mxu0
    %v2340 = vpop.f32.mrf.mxu0
    %2341 = vdwg.mxu0
    %2342 = vmatprep.subr.bf16.mxu0 %v1667
    %2343 = vmatpush1.bf16.msra.mxu0 %v1666
    %2344 = vmatprep.subr.bf16.mxu0 %v1659
    %2345 = vmatpush1.bf16.msra.mxu0 %v1658
    %2346 = vmatprep.subr.bf16.mxu0 %v1651
    %2347 = vmatpush1.bf16.msra.mxu0 %v1650
    %2348 = vmatprep.subr.bf16.mxu0 %v1643
    %2349 = vmatpush1.bf16.msra.mxu0 %v1642
    %2350 = vmatprep.subr.bf16.mxu0 %v1635
    %2351 = vmatpush1.bf16.msra.mxu0 %v1634
    %2352 = vmatprep.subr.bf16.mxu0 %v1627
    %2353 = vmatpush1.bf16.msra.mxu0 %v1626
    %2354 = vmatprep.subr.bf16.mxu0 %v1619
    %2355 = vmatpush1.bf16.msra.mxu0 %v1618
    %2356 = vmatprep.subr.bf16.mxu0 %v1611
    %2357 = vmatpush1.bf16.msra.mxu0 %v1610
    %2358 = vmatprep.subr.bf16.mxu0 %v1731
    %2359 = vmatpush2.bf16.msra.mxu0 %v1730
    %2360 = vmatprep.subr.bf16.mxu0 %v1723
    %2361 = vmatpush2.bf16.msra.mxu0 %v1722
    %2362 = vmatprep.subr.bf16.mxu0 %v1715
    %2363 = vmatpush2.bf16.msra.mxu0 %v1714
    %2364 = vmatprep.subr.bf16.mxu0 %v1707
    %2365 = vmatpush2.bf16.msra.mxu0 %v1706
    %2366 = vmatprep.subr.bf16.mxu0 %v1699
    %2367 = vmatpush2.bf16.msra.mxu0 %v1698
    %2368 = vmatprep.subr.bf16.mxu0 %v1691
    %2369 = vmatpush2.bf16.msra.mxu0 %v1690
    %2370 = vmatprep.subr.bf16.mxu0 %v1683
    %2371 = vmatpush2.bf16.msra.mxu0 %v1682
    %2372 = vmatprep.subr.bf16.mxu0 %v1675
    %2373 = vmatpush2.bf16.msra.mxu0 %v1674
    %2374 = vmatprep.mubr.bf16.mxu0 %v91
    %2375 = vmatmul.mubr.bf16.gmra.mxu0 %v90
    %v2376 = vpop.f32.mrf.mxu0
    %v2377 = vadd.f32 %v2336, %v2376
    %v2378 = vpop.f32.mrf.mxu0
    %v2379 = vadd.f32 %v2338, %v2378
    %v2380 = vpop.f32.mrf.mxu0
    %v2381 = vpop.f32.mrf.mxu0
    %2382 = vdwg.mxu0
    %2383 = vmatprep.subr.bf16.mxu0 %v1795
    %2384 = vmatpush1.bf16.msra.mxu0 %v1794
    %2385 = vmatprep.subr.bf16.mxu0 %v1787
    %2386 = vmatpush1.bf16.msra.mxu0 %v1786
    %2387 = vmatprep.subr.bf16.mxu0 %v1779
    %2388 = vmatpush1.bf16.msra.mxu0 %v1778
    %2389 = vmatprep.subr.bf16.mxu0 %v1771
    %2390 = vmatpush1.bf16.msra.mxu0 %v1770
    %2391 = vmatprep.subr.bf16.mxu0 %v1763
    %2392 = vmatpush1.bf16.msra.mxu0 %v1762
    %2393 = vmatprep.subr.bf16.mxu0 %v1755
    %2394 = vmatpush1.bf16.msra.mxu0 %v1754
    %2395 = vmatprep.subr.bf16.mxu0 %v1747
    %2396 = vmatpush1.bf16.msra.mxu0 %v1746
    %2397 = vmatprep.subr.bf16.mxu0 %v1739
    %2398 = vmatpush1.bf16.msra.mxu0 %v1738
    %2399 = vmatprep.subr.bf16.mxu0 %v1859
    %2400 = vmatpush2.bf16.msra.mxu0 %v1858
    %2401 = vmatprep.subr.bf16.mxu0 %v1851
    %2402 = vmatpush2.bf16.msra.mxu0 %v1850
    %2403 = vmatprep.subr.bf16.mxu0 %v1843
    %2404 = vmatpush2.bf16.msra.mxu0 %v1842
    %2405 = vmatprep.subr.bf16.mxu0 %v1835
    %2406 = vmatpush2.bf16.msra.mxu0 %v1834
    %2407 = vmatprep.subr.bf16.mxu0 %v1827
    %2408 = vmatpush2.bf16.msra.mxu0 %v1826
    %2409 = vmatprep.subr.bf16.mxu0 %v1819
    %2410 = vmatpush2.bf16.msra.mxu0 %v1818
    %2411 = vmatprep.subr.bf16.mxu0 %v1811
    %2412 = vmatpush2.bf16.msra.mxu0 %v1810
    %2413 = vmatprep.subr.bf16.mxu0 %v1803
    %2414 = vmatpush2.bf16.msra.mxu0 %v1802
    %2415 = vmatprep.mubr.bf16.mxu0 %v93
    %2416 = vmatmul.mubr.bf16.gmra.mxu0 %v92
    %v2417 = vpop.f32.mrf.mxu0
    %v2418 = vadd.f32 %v2377, %v2417
    %v2419 = vpop.f32.mrf.mxu0
    %v2420 = vadd.f32 %v2379, %v2419
    %v2421 = vpop.f32.mrf.mxu0
    %v2422 = vpop.f32.mrf.mxu0
    %2423 = vdwg.mxu0
    %2424 = vmatprep.subr.bf16.mxu0 %v1923
    %2425 = vmatpush1.bf16.msra.mxu0 %v1922
    %2426 = vmatprep.subr.bf16.mxu0 %v1915
    %2427 = vmatpush1.bf16.msra.mxu0 %v1914
    %2428 = vmatprep.subr.bf16.mxu0 %v1907
    %2429 = vmatpush1.bf16.msra.mxu0 %v1906
    %2430 = vmatprep.subr.bf16.mxu0 %v1899
    %2431 = vmatpush1.bf16.msra.mxu0 %v1898
    %2432 = vmatprep.subr.bf16.mxu0 %v1891
    %2433 = vmatpush1.bf16.msra.mxu0 %v1890
    %2434 = vmatprep.subr.bf16.mxu0 %v1883
    %2435 = vmatpush1.bf16.msra.mxu0 %v1882
    %2436 = vmatprep.subr.bf16.mxu0 %v1875
    %2437 = vmatpush1.bf16.msra.mxu0 %v1874
    %2438 = vmatprep.subr.bf16.mxu0 %v1867
    %2439 = vmatpush1.bf16.msra.mxu0 %v1866
    %2440 = vmatprep.subr.bf16.mxu0 0
    %2441 = vmatpush2.bf16.msra.mxu0 0
    %2442 = vmatprep.subr.bf16.mxu0 %v2041
    %2443 = vmatpush2.bf16.msra.mxu0 %v2038
    %2444 = vmatprep.subr.bf16.mxu0 %v1971
    %2445 = vmatpush2.bf16.msra.mxu0 %v1970
    %2446 = vmatprep.subr.bf16.mxu0 %v1963
    %2447 = vmatpush2.bf16.msra.mxu0 %v1962
    %2448 = vmatprep.subr.bf16.mxu0 %v1955
    %2449 = vmatpush2.bf16.msra.mxu0 %v1954
    %2450 = vmatprep.subr.bf16.mxu0 %v1947
    %2451 = vmatpush2.bf16.msra.mxu0 %v1946
    %2452 = vmatprep.subr.bf16.mxu0 %v1939
    %2453 = vmatpush2.bf16.msra.mxu0 %v1938
    %2454 = vmatprep.subr.bf16.mxu0 %v1931
    %2455 = vmatpush2.bf16.msra.mxu0 %v1930
    %2456 = vmatprep.mubr.bf16.mxu0 %v2028
    %2457 = vmatmul.mubr.bf16.gmra.mxu0 %v94
    %v2458 = vpop.f32.mrf.mxu0
    %v2459 = vadd.f32 %v2418, %v2458
    %v2460 = vpop.f32.mrf.mxu0
    %v2461 = vadd.f32 %v2420, %v2460
    %v2462 = vpop.f32.mrf.mxu0
    %v2463 = vpop.f32.mrf.mxu0
    %2464 = vdwg.mxu0
    %2465 = vmatprep.subr.bf16.mxu0 %v1413
    %2466 = vmatpush1.bf16.msra.mxu0 %v1412
    %2467 = vmatprep.subr.bf16.mxu0 %v1405
    %2468 = vmatpush1.bf16.msra.mxu0 %v1404
    %2469 = vmatprep.subr.bf16.mxu0 %v1397
    %2470 = vmatpush1.bf16.msra.mxu0 %v1396
    %2471 = vmatprep.subr.bf16.mxu0 %v1389
    %2472 = vmatpush1.bf16.msra.mxu0 %v1388
    %2473 = vmatprep.subr.bf16.mxu0 %v1381
    %2474 = vmatpush1.bf16.msra.mxu0 %v1380
    %2475 = vmatprep.subr.bf16.mxu0 %v1373
    %2476 = vmatpush1.bf16.msra.mxu0 %v1372
    %2477 = vmatprep.subr.bf16.mxu0 %v1365
    %2478 = vmatpush1.bf16.msra.mxu0 %v1364
    %2479 = vmatprep.subr.bf16.mxu0 %v1357
    %2480 = vmatpush1.bf16.msra.mxu0 %v1356
    %2481 = vmatprep.subr.bf16.mxu0 %v1477
    %2482 = vmatpush2.bf16.msra.mxu0 %v1476
    %2483 = vmatprep.subr.bf16.mxu0 %v1469
    %2484 = vmatpush2.bf16.msra.mxu0 %v1468
    %2485 = vmatprep.subr.bf16.mxu0 %v1461
    %2486 = vmatpush2.bf16.msra.mxu0 %v1460
    %2487 = vmatprep.subr.bf16.mxu0 %v1453
    %2488 = vmatpush2.bf16.msra.mxu0 %v1452
    %2489 = vmatprep.subr.bf16.mxu0 %v1445
    %2490 = vmatpush2.bf16.msra.mxu0 %v1444
    %2491 = vmatprep.subr.bf16.mxu0 %v1437
    %2492 = vmatpush2.bf16.msra.mxu0 %v1436
    %2493 = vmatprep.subr.bf16.mxu0 %v1429
    %2494 = vmatpush2.bf16.msra.mxu0 %v1428
    %2495 = vmatprep.subr.bf16.mxu0 %v1421
    %2496 = vmatpush2.bf16.msra.mxu0 %v1420
    %2497 = vmatprep.mubr.bf16.mxu0 %v87
    %2498 = vmatmul.mubr.bf16.gmra.mxu0 %v86
    %v2499 = vpop.f32.mrf.mxu0
    %v2500 = vadd.f32 %v2005, %v2499
    %v2501 = vpop.f32.mrf.mxu0
    %v2502 = vadd.f32 %v2009, %v2501
    %v2503 = vpop.f32.mrf.mxu0
    %v2504 = vpop.f32.mrf.mxu0
    %2505 = vdwg.mxu0
    %2506 = vmatprep.subr.bf16.mxu0 %v1541
    %2507 = vmatpush1.bf16.msra.mxu0 %v1540
    %2508 = vmatprep.subr.bf16.mxu0 %v1533
    %2509 = vmatpush1.bf16.msra.mxu0 %v1532
    %2510 = vmatprep.subr.bf16.mxu0 %v1525
    %2511 = vmatpush1.bf16.msra.mxu0 %v1524
    %2512 = vmatprep.subr.bf16.mxu0 %v1517
    %2513 = vmatpush1.bf16.msra.mxu0 %v1516
    %2514 = vmatprep.subr.bf16.mxu0 %v1509
    %2515 = vmatpush1.bf16.msra.mxu0 %v1508
    %2516 = vmatprep.subr.bf16.mxu0 %v1501
    %2517 = vmatpush1.bf16.msra.mxu0 %v1500
    %2518 = vmatprep.subr.bf16.mxu0 %v1493
    %2519 = vmatpush1.bf16.msra.mxu0 %v1492
    %2520 = vmatprep.subr.bf16.mxu0 %v1485
    %2521 = vmatpush1.bf16.msra.mxu0 %v1484
    %2522 = vmatprep.subr.bf16.mxu0 %v1605
    %2523 = vmatpush2.bf16.msra.mxu0 %v1604
    %2524 = vmatprep.subr.bf16.mxu0 %v1597
    %2525 = vmatpush2.bf16.msra.mxu0 %v1596
    %2526 = vmatprep.subr.bf16.mxu0 %v1589
    %2527 = vmatpush2.bf16.msra.mxu0 %v1588
    %2528 = vmatprep.subr.bf16.mxu0 %v1581
    %2529 = vmatpush2.bf16.msra.mxu0 %v1580
    %2530 = vmatprep.subr.bf16.mxu0 %v1573
    %2531 = vmatpush2.bf16.msra.mxu0 %v1572
    %2532 = vmatprep.subr.bf16.mxu0 %v1565
    %2533 = vmatpush2.bf16.msra.mxu0 %v1564
    %2534 = vmatprep.subr.bf16.mxu0 %v1557
    %2535 = vmatpush2.bf16.msra.mxu0 %v1556
    %2536 = vmatprep.subr.bf16.mxu0 %v1549
    %2537 = vmatpush2.bf16.msra.mxu0 %v1548
    %2538 = vmatprep.mubr.bf16.mxu0 %v89
    %2539 = vmatmul.mubr.bf16.gmra.mxu0 %v88
    %v2540 = vpop.f32.mrf.mxu0
    %v2541 = vadd.f32 %v2500, %v2540
    %v2542 = vpop.f32.mrf.mxu0
    %v2543 = vadd.f32 %v2502, %v2542
    %v2544 = vpop.f32.mrf.mxu0
    %v2545 = vpop.f32.mrf.mxu0
    %2546 = vdwg.mxu0
    %2547 = vmatprep.subr.bf16.mxu0 %v1669
    %2548 = vmatpush1.bf16.msra.mxu0 %v1668
    %2549 = vmatprep.subr.bf16.mxu0 %v1661
    %2550 = vmatpush1.bf16.msra.mxu0 %v1660
    %2551 = vmatprep.subr.bf16.mxu0 %v1653
    %2552 = vmatpush1.bf16.msra.mxu0 %v1652
    %2553 = vmatprep.subr.bf16.mxu0 %v1645
    %2554 = vmatpush1.bf16.msra.mxu0 %v1644
    %2555 = vmatprep.subr.bf16.mxu0 %v1637
    %2556 = vmatpush1.bf16.msra.mxu0 %v1636
    %2557 = vmatprep.subr.bf16.mxu0 %v1629
    %2558 = vmatpush1.bf16.msra.mxu0 %v1628
    %2559 = vmatprep.subr.bf16.mxu0 %v1621
    %2560 = vmatpush1.bf16.msra.mxu0 %v1620
    %2561 = vmatprep.subr.bf16.mxu0 %v1613
    %2562 = vmatpush1.bf16.msra.mxu0 %v1612
    %2563 = vmatprep.subr.bf16.mxu0 %v1733
    %2564 = vmatpush2.bf16.msra.mxu0 %v1732
    %2565 = vmatprep.subr.bf16.mxu0 %v1725
    %2566 = vmatpush2.bf16.msra.mxu0 %v1724
    %2567 = vmatprep.subr.bf16.mxu0 %v1717
    %2568 = vmatpush2.bf16.msra.mxu0 %v1716
    %2569 = vmatprep.subr.bf16.mxu0 %v1709
    %2570 = vmatpush2.bf16.msra.mxu0 %v1708
    %2571 = vmatprep.subr.bf16.mxu0 %v1701
    %2572 = vmatpush2.bf16.msra.mxu0 %v1700
    %2573 = vmatprep.subr.bf16.mxu0 %v1693
    %2574 = vmatpush2.bf16.msra.mxu0 %v1692
    %2575 = vmatprep.subr.bf16.mxu0 %v1685
    %2576 = vmatpush2.bf16.msra.mxu0 %v1684
    %2577 = vmatprep.subr.bf16.mxu0 %v1677
    %2578 = vmatpush2.bf16.msra.mxu0 %v1676
    %2579 = vmatprep.mubr.bf16.mxu0 %v91
    %2580 = vmatmul.mubr.bf16.gmra.mxu0 %v90
    %v2581 = vpop.f32.mrf.mxu0
    %v2582 = vadd.f32 %v2541, %v2581
    %v2583 = vpop.f32.mrf.mxu0
    %v2584 = vadd.f32 %v2543, %v2583
    %v2585 = vpop.f32.mrf.mxu0
    %v2586 = vpop.f32.mrf.mxu0
    %2587 = vdwg.mxu0
    %2588 = vmatprep.subr.bf16.mxu0 %v1797
    %2589 = vmatpush1.bf16.msra.mxu0 %v1796
    %2590 = vmatprep.subr.bf16.mxu0 %v1789
    %2591 = vmatpush1.bf16.msra.mxu0 %v1788
    %2592 = vmatprep.subr.bf16.mxu0 %v1781
    %2593 = vmatpush1.bf16.msra.mxu0 %v1780
    %2594 = vmatprep.subr.bf16.mxu0 %v1773
    %2595 = vmatpush1.bf16.msra.mxu0 %v1772
    %2596 = vmatprep.subr.bf16.mxu0 %v1765
    %2597 = vmatpush1.bf16.msra.mxu0 %v1764
    %2598 = vmatprep.subr.bf16.mxu0 %v1757
    %2599 = vmatpush1.bf16.msra.mxu0 %v1756
    %2600 = vmatprep.subr.bf16.mxu0 %v1749
    %2601 = vmatpush1.bf16.msra.mxu0 %v1748
    %2602 = vmatprep.subr.bf16.mxu0 %v1741
    %2603 = vmatpush1.bf16.msra.mxu0 %v1740
    %2604 = vmatprep.subr.bf16.mxu0 %v1861
    %2605 = vmatpush2.bf16.msra.mxu0 %v1860
    %2606 = vmatprep.subr.bf16.mxu0 %v1853
    %2607 = vmatpush2.bf16.msra.mxu0 %v1852
    %2608 = vmatprep.subr.bf16.mxu0 %v1845
    %2609 = vmatpush2.bf16.msra.mxu0 %v1844
    %2610 = vmatprep.subr.bf16.mxu0 %v1837
    %2611 = vmatpush2.bf16.msra.mxu0 %v1836
    %2612 = vmatprep.subr.bf16.mxu0 %v1829
    %2613 = vmatpush2.bf16.msra.mxu0 %v1828
    %2614 = vmatprep.subr.bf16.mxu0 %v1821
    %2615 = vmatpush2.bf16.msra.mxu0 %v1820
    %2616 = vmatprep.subr.bf16.mxu0 %v1813
    %2617 = vmatpush2.bf16.msra.mxu0 %v1812
    %2618 = vmatprep.subr.bf16.mxu0 %v1805
    %2619 = vmatpush2.bf16.msra.mxu0 %v1804
    %2620 = vmatprep.mubr.bf16.mxu0 %v93
    %2621 = vmatmul.mubr.bf16.gmra.mxu0 %v92
    %v2622 = vpop.f32.mrf.mxu0
    %v2623 = vadd.f32 %v2582, %v2622
    %v2624 = vpop.f32.mrf.mxu0
    %v2625 = vadd.f32 %v2584, %v2624
    %v2626 = vpop.f32.mrf.mxu0
    %v2627 = vpop.f32.mrf.mxu0
    %2628 = vdwg.mxu0
    %2629 = vmatprep.subr.bf16.mxu0 %v1925
    %2630 = vmatpush1.bf16.msra.mxu0 %v1924
    %2631 = vmatprep.subr.bf16.mxu0 %v1917
    %2632 = vmatpush1.bf16.msra.mxu0 %v1916
    %2633 = vmatprep.subr.bf16.mxu0 %v1909
    %2634 = vmatpush1.bf16.msra.mxu0 %v1908
    %2635 = vmatprep.subr.bf16.mxu0 %v1901
    %2636 = vmatpush1.bf16.msra.mxu0 %v1900
    %2637 = vmatprep.subr.bf16.mxu0 %v1893
    %2638 = vmatpush1.bf16.msra.mxu0 %v1892
    %2639 = vmatprep.subr.bf16.mxu0 %v1885
    %2640 = vmatpush1.bf16.msra.mxu0 %v1884
    %2641 = vmatprep.subr.bf16.mxu0 %v1877
    %2642 = vmatpush1.bf16.msra.mxu0 %v1876
    %2643 = vmatprep.subr.bf16.mxu0 %v1869
    %2644 = vmatpush1.bf16.msra.mxu0 %v1868
    %2645 = vmatprep.subr.bf16.mxu0 0
    %2646 = vmatpush2.bf16.msra.mxu0 0
    %2647 = vmatprep.subr.bf16.mxu0 %v2047
    %2648 = vmatpush2.bf16.msra.mxu0 %v2044
    %2649 = vmatprep.subr.bf16.mxu0 %v1973
    %2650 = vmatpush2.bf16.msra.mxu0 %v1972
    %2651 = vmatprep.subr.bf16.mxu0 %v1965
    %2652 = vmatpush2.bf16.msra.mxu0 %v1964
    %2653 = vmatprep.subr.bf16.mxu0 %v1957
    %2654 = vmatpush2.bf16.msra.mxu0 %v1956
    %2655 = vmatprep.subr.bf16.mxu0 %v1949
    %2656 = vmatpush2.bf16.msra.mxu0 %v1948
    %2657 = vmatprep.subr.bf16.mxu0 %v1941
    %2658 = vmatpush2.bf16.msra.mxu0 %v1940
    %2659 = vmatprep.subr.bf16.mxu0 %v1933
    %2660 = vmatpush2.bf16.msra.mxu0 %v1932
    %2661 = vmatprep.mubr.bf16.mxu0 %v2028
    %2662 = vmatmul.mubr.bf16.gmra.mxu0 %v94
    %v2663 = vpop.f32.mrf.mxu0
    %v2664 = vadd.f32 %v2623, %v2663
    %v2665 = vpop.f32.mrf.mxu0
    %v2666 = vadd.f32 %v2625, %v2665
    %v2667 = vpop.f32.mrf.mxu0
    %v2668 = vpop.f32.mrf.mxu0
    %2669 = vdwg.mxu0
    %2670 = vmatprep.subr.bf16.mxu0 %v1415
    %2671 = vmatpush1.bf16.msra.mxu0 %v1414
    %2672 = vmatprep.subr.bf16.mxu0 %v1407
    %2673 = vmatpush1.bf16.msra.mxu0 %v1406
    %2674 = vmatprep.subr.bf16.mxu0 %v1399
    %2675 = vmatpush1.bf16.msra.mxu0 %v1398
    %2676 = vmatprep.subr.bf16.mxu0 %v1391
    %2677 = vmatpush1.bf16.msra.mxu0 %v1390
    %2678 = vmatprep.subr.bf16.mxu0 %v1383
    %2679 = vmatpush1.bf16.msra.mxu0 %v1382
    %2680 = vmatprep.subr.bf16.mxu0 %v1375
    %2681 = vmatpush1.bf16.msra.mxu0 %v1374
    %2682 = vmatprep.subr.bf16.mxu0 %v1367
    %2683 = vmatpush1.bf16.msra.mxu0 %v1366
    %2684 = vmatprep.subr.bf16.mxu0 %v1359
    %2685 = vmatpush1.bf16.msra.mxu0 %v1358
    %2686 = vmatprep.subr.bf16.mxu0 %v1479
    %2687 = vmatpush2.bf16.msra.mxu0 %v1478
    %2688 = vmatprep.subr.bf16.mxu0 %v1471
    %2689 = vmatpush2.bf16.msra.mxu0 %v1470
    %2690 = vmatprep.subr.bf16.mxu0 %v1463
    %2691 = vmatpush2.bf16.msra.mxu0 %v1462
    %2692 = vmatprep.subr.bf16.mxu0 %v1455
    %2693 = vmatpush2.bf16.msra.mxu0 %v1454
    %2694 = vmatprep.subr.bf16.mxu0 %v1447
    %2695 = vmatpush2.bf16.msra.mxu0 %v1446
    %2696 = vmatprep.subr.bf16.mxu0 %v1439
    %2697 = vmatpush2.bf16.msra.mxu0 %v1438
    %2698 = vmatprep.subr.bf16.mxu0 %v1431
    %2699 = vmatpush2.bf16.msra.mxu0 %v1430
    %2700 = vmatprep.subr.bf16.mxu0 %v1423
    %2701 = vmatpush2.bf16.msra.mxu0 %v1422
    %2702 = vmatprep.mubr.bf16.mxu0 %v87
    %2703 = vmatmul.mubr.bf16.gmra.mxu0 %v86
    %v2704 = vpop.f32.mrf.mxu0
    %v2705 = vadd.f32 %v2013, %v2704
    %v2706 = vpop.f32.mrf.mxu0
    %v2707 = vadd.f32 %v2017, %v2706
    %v2708 = vpop.f32.mrf.mxu0
    %v2709 = vpop.f32.mrf.mxu0
    %2710 = vdwg.mxu0
    %2711 = vmatprep.subr.bf16.mxu0 %v1543
    %2712 = vmatpush1.bf16.msra.mxu0 %v1542
    %2713 = vmatprep.subr.bf16.mxu0 %v1535
    %2714 = vmatpush1.bf16.msra.mxu0 %v1534
    %2715 = vmatprep.subr.bf16.mxu0 %v1527
    %2716 = vmatpush1.bf16.msra.mxu0 %v1526
    %2717 = vmatprep.subr.bf16.mxu0 %v1519
    %2718 = vmatpush1.bf16.msra.mxu0 %v1518
    %2719 = vmatprep.subr.bf16.mxu0 %v1511
    %2720 = vmatpush1.bf16.msra.mxu0 %v1510
    %2721 = vmatprep.subr.bf16.mxu0 %v1503
    %2722 = vmatpush1.bf16.msra.mxu0 %v1502
    %2723 = vmatprep.subr.bf16.mxu0 %v1495
    %2724 = vmatpush1.bf16.msra.mxu0 %v1494
    %2725 = vmatprep.subr.bf16.mxu0 %v1487
    %2726 = vmatpush1.bf16.msra.mxu0 %v1486
    %2727 = vmatprep.subr.bf16.mxu0 %v1607
    %2728 = vmatpush2.bf16.msra.mxu0 %v1606
    %2729 = vmatprep.subr.bf16.mxu0 %v1599
    %2730 = vmatpush2.bf16.msra.mxu0 %v1598
    %2731 = vmatprep.subr.bf16.mxu0 %v1591
    %2732 = vmatpush2.bf16.msra.mxu0 %v1590
    %2733 = vmatprep.subr.bf16.mxu0 %v1583
    %2734 = vmatpush2.bf16.msra.mxu0 %v1582
    %2735 = vmatprep.subr.bf16.mxu0 %v1575
    %2736 = vmatpush2.bf16.msra.mxu0 %v1574
    %2737 = vmatprep.subr.bf16.mxu0 %v1567
    %2738 = vmatpush2.bf16.msra.mxu0 %v1566
    %2739 = vmatprep.subr.bf16.mxu0 %v1559
    %2740 = vmatpush2.bf16.msra.mxu0 %v1558
    %2741 = vmatprep.subr.bf16.mxu0 %v1551
    %2742 = vmatpush2.bf16.msra.mxu0 %v1550
    %2743 = vmatprep.mubr.bf16.mxu0 %v89
    %2744 = vmatmul.mubr.bf16.gmra.mxu0 %v88
    %v2745 = vpop.f32.mrf.mxu0
    %v2746 = vadd.f32 %v2705, %v2745
    %v2747 = vpop.f32.mrf.mxu0
    %v2748 = vadd.f32 %v2707, %v2747
    %v2749 = vpop.f32.mrf.mxu0
    %v2750 = vpop.f32.mrf.mxu0
    %2751 = vdwg.mxu0
    %2752 = vmatprep.subr.bf16.mxu0 %v1671
    %2753 = vmatpush1.bf16.msra.mxu0 %v1670
    %2754 = vmatprep.subr.bf16.mxu0 %v1663
    %2755 = vmatpush1.bf16.msra.mxu0 %v1662
    %2756 = vmatprep.subr.bf16.mxu0 %v1655
    %2757 = vmatpush1.bf16.msra.mxu0 %v1654
    %2758 = vmatprep.subr.bf16.mxu0 %v1647
    %2759 = vmatpush1.bf16.msra.mxu0 %v1646
    %2760 = vmatprep.subr.bf16.mxu0 %v1639
    %2761 = vmatpush1.bf16.msra.mxu0 %v1638
    %2762 = vmatprep.subr.bf16.mxu0 %v1631
    %2763 = vmatpush1.bf16.msra.mxu0 %v1630
    %2764 = vmatprep.subr.bf16.mxu0 %v1623
    %2765 = vmatpush1.bf16.msra.mxu0 %v1622
    %2766 = vmatprep.subr.bf16.mxu0 %v1615
    %2767 = vmatpush1.bf16.msra.mxu0 %v1614
    %2768 = vmatprep.subr.bf16.mxu0 %v1735
    %2769 = vmatpush2.bf16.msra.mxu0 %v1734
    %2770 = vmatprep.subr.bf16.mxu0 %v1727
    %2771 = vmatpush2.bf16.msra.mxu0 %v1726
    %2772 = vmatprep.subr.bf16.mxu0 %v1719
    %2773 = vmatpush2.bf16.msra.mxu0 %v1718
    %2774 = vmatprep.subr.bf16.mxu0 %v1711
    %2775 = vmatpush2.bf16.msra.mxu0 %v1710
    %2776 = vmatprep.subr.bf16.mxu0 %v1703
    %2777 = vmatpush2.bf16.msra.mxu0 %v1702
    %2778 = vmatprep.subr.bf16.mxu0 %v1695
    %2779 = vmatpush2.bf16.msra.mxu0 %v1694
    %2780 = vmatprep.subr.bf16.mxu0 %v1687
    %2781 = vmatpush2.bf16.msra.mxu0 %v1686
    %2782 = vmatprep.subr.bf16.mxu0 %v1679
    %2783 = vmatpush2.bf16.msra.mxu0 %v1678
    %2784 = vmatprep.mubr.bf16.mxu0 %v91
    %2785 = vmatmul.mubr.bf16.gmra.mxu0 %v90
    %v2786 = vpop.f32.mrf.mxu0
    %v2787 = vadd.f32 %v2746, %v2786
    %v2788 = vpop.f32.mrf.mxu0
    %v2789 = vadd.f32 %v2748, %v2788
    %v2790 = vpop.f32.mrf.mxu0
    %v2791 = vpop.f32.mrf.mxu0
    %2792 = vdwg.mxu0
    %2793 = vmatprep.subr.bf16.mxu0 %v1799
    %2794 = vmatpush1.bf16.msra.mxu0 %v1798
    %2795 = vmatprep.subr.bf16.mxu0 %v1791
    %2796 = vmatpush1.bf16.msra.mxu0 %v1790
    %2797 = vmatprep.subr.bf16.mxu0 %v1783
    %2798 = vmatpush1.bf16.msra.mxu0 %v1782
    %2799 = vmatprep.subr.bf16.mxu0 %v1775
    %2800 = vmatpush1.bf16.msra.mxu0 %v1774
    %2801 = vmatprep.subr.bf16.mxu0 %v1767
    %2802 = vmatpush1.bf16.msra.mxu0 %v1766
    %2803 = vmatprep.subr.bf16.mxu0 %v1759
    %2804 = vmatpush1.bf16.msra.mxu0 %v1758
    %2805 = vmatprep.subr.bf16.mxu0 %v1751
    %2806 = vmatpush1.bf16.msra.mxu0 %v1750
    %2807 = vmatprep.subr.bf16.mxu0 %v1743
    %2808 = vmatpush1.bf16.msra.mxu0 %v1742
    %2809 = vmatprep.subr.bf16.mxu0 %v1863
    %2810 = vmatpush2.bf16.msra.mxu0 %v1862
    %2811 = vmatprep.subr.bf16.mxu0 %v1855
    %2812 = vmatpush2.bf16.msra.mxu0 %v1854
    %2813 = vmatprep.subr.bf16.mxu0 %v1847
    %2814 = vmatpush2.bf16.msra.mxu0 %v1846
    %2815 = vmatprep.subr.bf16.mxu0 %v1839
    %2816 = vmatpush2.bf16.msra.mxu0 %v1838
    %2817 = vmatprep.subr.bf16.mxu0 %v1831
    %2818 = vmatpush2.bf16.msra.mxu0 %v1830
    %2819 = vmatprep.subr.bf16.mxu0 %v1823
    %2820 = vmatpush2.bf16.msra.mxu0 %v1822
    %2821 = vmatprep.subr.bf16.mxu0 %v1815
    %2822 = vmatpush2.bf16.msra.mxu0 %v1814
    %2823 = vmatprep.subr.bf16.mxu0 %v1807
    %2824 = vmatpush2.bf16.msra.mxu0 %v1806
    %2825 = vmatprep.mubr.bf16.mxu0 %v93
    %2826 = vmatmul.mubr.bf16.gmra.mxu0 %v92
    %v2827 = vpop.f32.mrf.mxu0
    %v2828 = vadd.f32 %v2787, %v2827
    %v2829 = vpop.f32.mrf.mxu0
    %v2830 = vadd.f32 %v2789, %v2829
    %v2831 = vpop.f32.mrf.mxu0
    %v2832 = vpop.f32.mrf.mxu0
    %2833 = vdwg.mxu0
    %2834 = vmatprep.subr.bf16.mxu0 %v1927
    %2835 = vmatpush1.bf16.msra.mxu0 %v1926
    %2836 = vmatprep.subr.bf16.mxu0 %v1919
    %2837 = vmatpush1.bf16.msra.mxu0 %v1918
    %2838 = vmatprep.subr.bf16.mxu0 %v1911
    %2839 = vmatpush1.bf16.msra.mxu0 %v1910
    %2840 = vmatprep.subr.bf16.mxu0 %v1903
    %2841 = vmatpush1.bf16.msra.mxu0 %v1902
    %2842 = vmatprep.subr.bf16.mxu0 %v1895
    %2843 = vmatpush1.bf16.msra.mxu0 %v1894
    %2844 = vmatprep.subr.bf16.mxu0 %v1887
    %2845 = vmatpush1.bf16.msra.mxu0 %v1886
    %2846 = vmatprep.subr.bf16.mxu0 %v1879
    %2847 = vmatpush1.bf16.msra.mxu0 %v1878
    %2848 = vmatprep.subr.bf16.mxu0 %v1871
    %2849 = vmatpush1.bf16.msra.mxu0 %v1870
    %2850 = vmatprep.subr.bf16.mxu0 0
    %2851 = vmatpush2.bf16.msra.mxu0 0
    %2852 = vmatprep.subr.bf16.mxu0 %v2053
    %2853 = vmatpush2.bf16.msra.mxu0 %v2050
    %2854 = vmatprep.subr.bf16.mxu0 %v1975
    %2855 = vmatpush2.bf16.msra.mxu0 %v1974
    %2856 = vmatprep.subr.bf16.mxu0 %v1967
    %2857 = vmatpush2.bf16.msra.mxu0 %v1966
    %2858 = vmatprep.subr.bf16.mxu0 %v1959
    %2859 = vmatpush2.bf16.msra.mxu0 %v1958
    %2860 = vmatprep.subr.bf16.mxu0 %v1951
    %2861 = vmatpush2.bf16.msra.mxu0 %v1950
    %2862 = vmatprep.subr.bf16.mxu0 %v1943
    %2863 = vmatpush2.bf16.msra.mxu0 %v1942
    %2864 = vmatprep.subr.bf16.mxu0 %v1935
    %2865 = vmatpush2.bf16.msra.mxu0 %v1934
    %2866 = vmatprep.mubr.bf16.mxu0 %v2028
    %2867 = vmatmul.mubr.bf16.gmra.mxu0 %v94
    %v2868 = vpop.f32.mrf.mxu0
    %v2869 = vadd.f32 %v2828, %v2868
    %v2870 = vpop.f32.mrf.mxu0
    %v2871 = vadd.f32 %v2830, %v2870
    %v2872 = vpop.f32.mrf.mxu0
    %v2873 = vpop.f32.mrf.mxu0
    %2874 = vdwg.mxu0
    %v2875 = vmax.f32 %v2254, 0.0
    %v2876 = vmax.f32 %v2256, 0.0
    %v2877 = vmax.f32 %v2459, 0.0
    %v2878 = vmax.f32 %v2461, 0.0
    %v2879 = vmax.f32 %v2664, 0.0
    %v2880 = vmax.f32 %v2666, 0.0
    %v2881 = vmax.f32 %v2869, 0.0
    %v2882 = vmax.f32 %v2871, 0.0
    %v2883 = vpack.c.bf16 %v2875, %v2875
    %v2884 = vpack.c.bf16 %v2876, %v2876
    %v2885 = vpack.c.bf16 %v2877, %v2877
    %v2886 = vpack.c.bf16 %v2878, %v2878
    %v2887 = vpack.c.bf16 %v2879, %v2879
    %v2888 = vpack.c.bf16 %v2880, %v2880
    %v2889 = vpack.c.bf16 %v2881, %v2881
    %v2890 = vpack.c.bf16 %v2882, %v2882
    %v2891 = vld [vmem:[%s3] sm:$0xff]
    %v2892 = vld [vmem:[%s3 + $0x8] sm:$0xff]
    %v2893 = vld [vmem:[%s3 + $0x10] sm:$0xff]
    %v2894 = vld [vmem:[%s3 + $0x18] sm:$0xff]
    %v2895 = vld [vmem:[%s3 + $0x20] sm:$0xff]
    %v2896 = vld [vmem:[%s3 + $0x28] sm:$0xff]
    %v2897 = vld [vmem:[%s3 + $0x30] sm:$0xff]
    %v2898 = vld [vmem:[%s3 + $0x38] sm:$0xff]
    %v2899 = vld [vmem:[%s3 + $0x40] sm:$0xff]
    %v2900 = vld [vmem:[%s3 + $0x48] sm:$0xff]
    %v2901 = vld [vmem:[%s3 + $0x50] sm:$0xff]
    %v2902 = vld [vmem:[%s3 + $0x58] sm:$0xff]
    %v2903 = vld [vmem:[%s3 + $0x60] sm:$0xff]
    %v2904 = vld [vmem:[%s3 + $0x68] sm:$0xff]
    %v2905 = vld [vmem:[%s3 + $0x70] sm:$0xff]
    %v2906 = vld [vmem:[%s3 + $0x78] sm:$0xff]
    %v2907 = vld [vmem:[%s3 + $0x80] sm:$0xff]
    %v2908 = vld [vmem:[%s3 + $0x88] sm:$0xff]
    %v2909 = vld [vmem:[%s3 + $0x90] sm:$0xff]
    %v2910 = vld [vmem:[%s3 + $0x98] sm:$0xff]
    %v2911 = vld [vmem:[%s3 + $0xa0] sm:$0xff]
    %v2912 = vld [vmem:[%s3 + $0xa8] sm:$0xff]
    %v2913 = vld [vmem:[%s3 + $0xb0] sm:$0xff]
    %v2914 = vld [vmem:[%s3 + $0xb8] sm:$0xff]
    %v2915 = vld [vmem:[%s3 + $0xc0] sm:$0xff]
    %v2916 = vld [vmem:[%s3 + $0xc8] sm:$0xff]
    %v2917 = vld [vmem:[%s3 + $0xd0] sm:$0xff]
    %v2918 = vld [vmem:[%s3 + $0xd8] sm:$0xff]
    %v2919 = vld [vmem:[%s3 + $0xe0] sm:$0xff]
    %v2920 = vld [vmem:[%s3 + $0xe8] sm:$0xff]
    %v2921 = vld [vmem:[%s3 + $0xf0] sm:$0xff]
    %v2922 = vld [vmem:[%s3 + $0xf8] sm:$0xff]
    %v2923 = vld [vmem:[%s3 + $0x100] sm:$0xff]
    %v2924 = vld [vmem:[%s3 + $0x108] sm:$0xff]
    %v2925 = vld [vmem:[%s3 + $0x110] sm:$0xff]
    %v2926 = vld [vmem:[%s3 + $0x118] sm:$0xff]
    %v2927 = vld [vmem:[%s3 + $0x120] sm:$0xff]
    %v2928 = vld [vmem:[%s3 + $0x128] sm:$0xff]
    %v2929 = vld [vmem:[%s3 + $0x130] sm:$0xff]
    %v2930 = vld [vmem:[%s3 + $0x138] sm:$0xff]
    %v2931 = vld [vmem:[%s3 + $0x140] sm:$0xff]
    %v2932 = vld [vmem:[%s3 + $0x148] sm:$0xff]
    %v2933 = vld [vmem:[%s3 + $0x150] sm:$0xff]
    %v2934 = vld [vmem:[%s3 + $0x158] sm:$0xff]
    %v2935 = vld [vmem:[%s3 + $0x160] sm:$0xff]
    %v2936 = vld [vmem:[%s3 + $0x168] sm:$0xff]
    %v2937 = vld [vmem:[%s3 + $0x170] sm:$0xff]
    %v2938 = vld [vmem:[%s3 + $0x178] sm:$0xff]
    %v2939 = vld [vmem:[%s3 + $0x180] sm:$0xff]
    %v2940 = vld [vmem:[%s3 + $0x188] sm:$0xff]
    %v2941 = vld [vmem:[%s3 + $0x190] sm:$0xff]
    %v2942 = vld [vmem:[%s3 + $0x198] sm:$0xff]
    %v2943 = vld [vmem:[%s3 + $0x1a0] sm:$0xff]
    %v2944 = vld [vmem:[%s3 + $0x1a8] sm:$0xff]
    %v2945 = vld [vmem:[%s3 + $0x1b0] sm:$0xff]
    %v2946 = vld [vmem:[%s3 + $0x1b8] sm:$0xff]
    %v2947 = vld [vmem:[%s3 + $0x1c0] sm:$0xff]
    %v2948 = vld [vmem:[%s3 + $0x1c8] sm:$0xff]
    %v2949 = vld [vmem:[%s3 + $0x1d0] sm:$0xff]
    %v2950 = vld [vmem:[%s3 + $0x1d8] sm:$0xff]
    %v2951 = vld [vmem:[%s3 + $0x1e0] sm:$0xff]
    %v2952 = vld [vmem:[%s3 + $0x1e8] sm:$0xff]
    %v2953 = vld [vmem:[%s3 + $0x1f0] sm:$0xff]
    %v2954 = vld [vmem:[%s3 + $0x1f8] sm:$0xff]
    %v2955 = vld [vmem:[%s3 + $0x200] sm:$0xff]
    %v2956 = vld [vmem:[%s3 + $0x208] sm:$0xff]
    %v2957 = vld [vmem:[%s3 + $0x210] sm:$0xff]
    %v2958 = vld [vmem:[%s3 + $0x218] sm:$0xff]
    %v2959 = vld [vmem:[%s3 + $0x220] sm:$0xff]
    %v2960 = vld [vmem:[%s3 + $0x228] sm:$0xff]
    %v2961 = vld [vmem:[%s3 + $0x230] sm:$0xff]
    %v2962 = vld [vmem:[%s3 + $0x238] sm:$0xff]
    %v2963 = vld [vmem:[%s3 + $0x240] sm:$0xff]
    %v2964 = vld [vmem:[%s3 + $0x248] sm:$0xff]
    %v2965 = vld [vmem:[%s3 + $0x250] sm:$0xff]
    %v2966 = vld [vmem:[%s3 + $0x258] sm:$0xff]
    %v2967 = vld [vmem:[%s3 + $0x260] sm:$0xff]
    %v2968 = vld [vmem:[%s3 + $0x268] sm:$0xff]
    %v2969 = vld [vmem:[%s3 + $0x270] sm:$0xff]
    %v2970 = vld [vmem:[%s3 + $0x278] sm:$0xff]
    %v2971 = vld [vmem:[%s3 + $0x280] sm:$0xff]
    %v2972 = vld [vmem:[%s3 + $0x288] sm:$0xff]
    %v2973 = vld [vmem:[%s3 + $0x290] sm:$0xff]
    %v2974 = vld [vmem:[%s3 + $0x298] sm:$0xff]
    %v2975 = vld [vmem:[%s3 + $0x2a0] sm:$0xff]
    %v2976 = vld [vmem:[%s3 + $0x2a8] sm:$0xff]
    %v2977 = vld [vmem:[%s3 + $0x2b0] sm:$0xff]
    %v2978 = vld [vmem:[%s3 + $0x2b8] sm:$0xff]
    %v2979 = vld [vmem:[%s3 + $0x2c0] sm:$0xff]
    %v2980 = vld [vmem:[%s3 + $0x2c8] sm:$0xff]
    %v2981 = vld [vmem:[%s3 + $0x2d0] sm:$0xff]
    %v2982 = vld [vmem:[%s3 + $0x2d8] sm:$0xff]
    %v2983 = vld [vmem:[%s3 + $0x2e0] sm:$0xff]
    %v2984 = vld [vmem:[%s3 + $0x2e8] sm:$0xff]
    %v2985 = vld [vmem:[%s3 + $0x2f0] sm:$0xff]
    %v2986 = vld [vmem:[%s3 + $0x2f8] sm:$0xff]
    %v2987 = vld [vmem:[%s3 + $0x300] sm:$0xff]
    %v2988 = vld [vmem:[%s3 + $0x308] sm:$0xff]
    %v2989 = vld [vmem:[%s3 + $0x310] sm:$0xff]
    %v2990 = vld [vmem:[%s3 + $0x318] sm:$0xff]
    %v2991 = vld [vmem:[%s3 + $0x320] sm:$0xff]
    %v2992 = vld [vmem:[%s3 + $0x328] sm:$0xff]
    %v2993 = vld [vmem:[%s3 + $0x330] sm:$0xff]
    %v2994 = vld [vmem:[%s3 + $0x338] sm:$0xff]
    %v2995 = vld [vmem:[%s3 + $0x340] sm:$0xff]
    %v2996 = vld [vmem:[%s3 + $0x348] sm:$0xff]
    %v2997 = vld [vmem:[%s3 + $0x350] sm:$0xff]
    %v2998 = vld [vmem:[%s3 + $0x358] sm:$0xff]
    %v2999 = vld [vmem:[%s3 + $0x360] sm:$0xff]
    %v3000 = vld [vmem:[%s3 + $0x368] sm:$0xff]
    %v3001 = vld [vmem:[%s3 + $0x370] sm:$0xff]
    %v3002 = vld [vmem:[%s3 + $0x378] sm:$0xff]
    %v3003 = vld [vmem:[%s3 + $0x380] sm:$0xff]
    %v3004 = vld [vmem:[%s3 + $0x388] sm:$0xff]
    %v3005 = vld [vmem:[%s3 + $0x390] sm:$0xff]
    %v3006 = vld [vmem:[%s3 + $0x398] sm:$0xff]
    %v3007 = vld [vmem:[%s3 + $0x3a0] sm:$0xff]
    %v3008 = vld [vmem:[%s3 + $0x3a8] sm:$0xff]
    %v3009 = vld [vmem:[%s3 + $0x3b0] sm:$0xff]
    %v3010 = vld [vmem:[%s3 + $0x3b8] sm:$0xff]
    %v3011 = vld [vmem:[%s3 + $0x3c0] sm:$0xff]
    %v3012 = vld [vmem:[%s3 + $0x3c8] sm:$0xff]
    %v3013 = vld [vmem:[%s3 + $0x3d0] sm:$0xff]
    %v3014 = vld [vmem:[%s3 + $0x3d8] sm:$0xff]
    %v3015 = vld [vmem:[%s3 + $0x3e0] sm:$0xff]
    %v3016 = vld [vmem:[%s3 + $0x3e8] sm:$0xff]
    %v3017 = vld [vmem:[%s3 + $0x3f0] sm:$0xff]
    %v3018 = vld [vmem:[%s3 + $0x3f8] sm:$0xff]
    %v3019 = vpack.c.bf16 %v2892, %v2891
    %v3020 = vpack.c.bf16 %v2894, %v2893
    %v3021 = vpack.c.bf16 %v2896, %v2895
    %v3022 = vpack.c.bf16 %v2898, %v2897
    %v3023 = vpack.c.bf16 %v2900, %v2899
    %v3024 = vpack.c.bf16 %v2902, %v2901
    %v3025 = vpack.c.bf16 %v2904, %v2903
    %v3026 = vpack.c.bf16 %v2906, %v2905
    %v3027 = vpack.c.bf16 %v2908, %v2907
    %v3028 = vpack.c.bf16 %v2910, %v2909
    %v3029 = vpack.c.bf16 %v2912, %v2911
    %v3030 = vpack.c.bf16 %v2914, %v2913
    %v3031 = vpack.c.bf16 %v2916, %v2915
    %v3032 = vpack.c.bf16 %v2918, %v2917
    %v3033 = vpack.c.bf16 %v2920, %v2919
    %v3034 = vpack.c.bf16 %v2922, %v2921
    %v3035 = vpack.c.bf16 %v2924, %v2923
    %v3036 = vpack.c.bf16 %v2926, %v2925
    %v3037 = vpack.c.bf16 %v2928, %v2927
    %v3038 = vpack.c.bf16 %v2930, %v2929
    %v3039 = vpack.c.bf16 %v2932, %v2931
    %v3040 = vpack.c.bf16 %v2934, %v2933
    %v3041 = vpack.c.bf16 %v2936, %v2935
    %v3042 = vpack.c.bf16 %v2938, %v2937
    %v3043 = vpack.c.bf16 %v2940, %v2939
    %v3044 = vpack.c.bf16 %v2942, %v2941
    %v3045 = vpack.c.bf16 %v2944, %v2943
    %v3046 = vpack.c.bf16 %v2946, %v2945
    %v3047 = vpack.c.bf16 %v2948, %v2947
    %v3048 = vpack.c.bf16 %v2950, %v2949
    %v3049 = vpack.c.bf16 %v2952, %v2951
    %v3050 = vpack.c.bf16 %v2954, %v2953
    %v3051 = vpack.c.bf16 %v2956, %v2955
    %v3052 = vpack.c.bf16 %v2958, %v2957
    %v3053 = vpack.c.bf16 %v2960, %v2959
    %v3054 = vpack.c.bf16 %v2962, %v2961
    %v3055 = vpack.c.bf16 %v2964, %v2963
    %v3056 = vpack.c.bf16 %v2966, %v2965
    %v3057 = vpack.c.bf16 %v2968, %v2967
    %v3058 = vpack.c.bf16 %v2970, %v2969
    %v3059 = vpack.c.bf16 %v2972, %v2971
    %v3060 = vpack.c.bf16 %v2974, %v2973
    %v3061 = vpack.c.bf16 %v2976, %v2975
    %v3062 = vpack.c.bf16 %v2978, %v2977
    %v3063 = vpack.c.bf16 %v2980, %v2979
    %v3064 = vpack.c.bf16 %v2982, %v2981
    %v3065 = vpack.c.bf16 %v2984, %v2983
    %v3066 = vpack.c.bf16 %v2986, %v2985
    %v3067 = vpack.c.bf16 %v2988, %v2987
    %v3068 = vpack.c.bf16 %v2990, %v2989
    %v3069 = vpack.c.bf16 %v2992, %v2991
    %v3070 = vpack.c.bf16 %v2994, %v2993
    %v3071 = vpack.c.bf16 %v2996, %v2995
    %v3072 = vpack.c.bf16 %v2998, %v2997
    %v3073 = vpack.c.bf16 %v3000, %v2999
    %v3074 = vpack.c.bf16 %v3002, %v3001
    %v3075 = vpack.c.bf16 %v3004, %v3003
    %v3076 = vpack.c.bf16 %v3006, %v3005
    %v3077 = vpack.c.bf16 %v3008, %v3007
    %v3078 = vpack.c.bf16 %v3010, %v3009
    %v3079 = vpack.c.bf16 %v3012, %v3011
    %v3080 = vpack.c.bf16 %v3014, %v3013
    %v3081 = vpack.c.bf16 %v3016, %v3015
    %v3082 = vpack.c.bf16 %v3018, %v3017
    %v3083 = vld [vmem:[%s4] sm:$0x1]
    %v3085 = vlaneseq
    %v3086 = vshrl.u32 %v3085, 7
    %v3087 = vsub.s32 0, %v3086
    %v3088 = vrot.slane %v3083, %v3087
    %3090 = vmatprep.subr.bf16.mxu0 0
    %3091 = vmatpush1.bf16.msra.mxu0 %v3026
    %3092 = vmatprep.subr.bf16.mxu0 0
    %3093 = vmatpush1.bf16.msra.mxu0 %v3025
    %3094 = vmatprep.subr.bf16.mxu0 0
    %3095 = vmatpush1.bf16.msra.mxu0 %v3024
    %3096 = vmatprep.subr.bf16.mxu0 0
    %3097 = vmatpush1.bf16.msra.mxu0 %v3023
    %3098 = vmatprep.subr.bf16.mxu0 0
    %3099 = vmatpush1.bf16.msra.mxu0 %v3022
    %3100 = vmatprep.subr.bf16.mxu0 0
    %3101 = vmatpush1.bf16.msra.mxu0 %v3021
    %3102 = vmatprep.subr.bf16.mxu0 0
    %3103 = vmatpush1.bf16.msra.mxu0 %v3020
    %3104 = vmatprep.subr.bf16.mxu0 0
    %3105 = vmatpush1.bf16.msra.mxu0 %v3019
    %3106 = vmatprep.subr.bf16.mxu0 0
    %3107 = vmatpush2.bf16.msra.mxu0 %v3034
    %3108 = vmatprep.subr.bf16.mxu0 0
    %3109 = vmatpush2.bf16.msra.mxu0 %v3033
    %3110 = vmatprep.subr.bf16.mxu0 0
    %3111 = vmatpush2.bf16.msra.mxu0 %v3032
    %3112 = vmatprep.subr.bf16.mxu0 0
    %3113 = vmatpush2.bf16.msra.mxu0 %v3031
    %3114 = vmatprep.subr.bf16.mxu0 0
    %3115 = vmatpush2.bf16.msra.mxu0 %v3030
    %3116 = vmatprep.subr.bf16.mxu0 0
    %3117 = vmatpush2.bf16.msra.mxu0 %v3029
    %3118 = vmatprep.subr.bf16.mxu0 0
    %3119 = vmatpush2.bf16.msra.mxu0 %v3028
    %3120 = vmatprep.subr.bf16.mxu0 0
    %3121 = vmatpush2.bf16.msra.mxu0 %v3027
    %3122 = vmatprep.mubr.bf16.mxu0 %v2884
    %3123 = vmatmul.mubr.bf16.gmra.mxu0 %v2883
    %v3124 = vpop.f32.mrf.mxu0
    %v3125 = vadd.f32 %v3088, %v3124
    %v3126 = vpop.f32.mrf.mxu0
    %v3127 = vpop.f32.mrf.mxu0
    %v3128 = vpop.f32.mrf.mxu0
    %3129 = vdwg.mxu0
    %3130 = vmatprep.subr.bf16.mxu0 0
    %3131 = vmatpush1.bf16.msra.mxu0 %v3042
    %3132 = vmatprep.subr.bf16.mxu0 0
    %3133 = vmatpush1.bf16.msra.mxu0 %v3041
    %3134 = vmatprep.subr.bf16.mxu0 0
    %3135 = vmatpush1.bf16.msra.mxu0 %v3040
    %3136 = vmatprep.subr.bf16.mxu0 0
    %3137 = vmatpush1.bf16.msra.mxu0 %v3039
    %3138 = vmatprep.subr.bf16.mxu0 0
    %3139 = vmatpush1.bf16.msra.mxu0 %v3038
    %3140 = vmatprep.subr.bf16.mxu0 0
    %3141 = vmatpush1.bf16.msra.mxu0 %v3037
    %3142 = vmatprep.subr.bf16.mxu0 0
    %3143 = vmatpush1.bf16.msra.mxu0 %v3036
    %3144 = vmatprep.subr.bf16.mxu0 0
    %3145 = vmatpush1.bf16.msra.mxu0 %v3035
    %3146 = vmatprep.subr.bf16.mxu0 0
    %3147 = vmatpush2.bf16.msra.mxu0 %v3050
    %3148 = vmatprep.subr.bf16.mxu0 0
    %3149 = vmatpush2.bf16.msra.mxu0 %v3049
    %3150 = vmatprep.subr.bf16.mxu0 0
    %3151 = vmatpush2.bf16.msra.mxu0 %v3048
    %3152 = vmatprep.subr.bf16.mxu0 0
    %3153 = vmatpush2.bf16.msra.mxu0 %v3047
    %3154 = vmatprep.subr.bf16.mxu0 0
    %3155 = vmatpush2.bf16.msra.mxu0 %v3046
    %3156 = vmatprep.subr.bf16.mxu0 0
    %3157 = vmatpush2.bf16.msra.mxu0 %v3045
    %3158 = vmatprep.subr.bf16.mxu0 0
    %3159 = vmatpush2.bf16.msra.mxu0 %v3044
    %3160 = vmatprep.subr.bf16.mxu0 0
    %3161 = vmatpush2.bf16.msra.mxu0 %v3043
    %3162 = vmatprep.mubr.bf16.mxu0 %v2886
    %3163 = vmatmul.mubr.bf16.gmra.mxu0 %v2885
    %v3164 = vpop.f32.mrf.mxu0
    %v3165 = vadd.f32 %v3125, %v3164
    %v3166 = vpop.f32.mrf.mxu0
    %v3167 = vpop.f32.mrf.mxu0
    %v3168 = vpop.f32.mrf.mxu0
    %3169 = vdwg.mxu0
    %3170 = vmatprep.subr.bf16.mxu0 0
    %3171 = vmatpush1.bf16.msra.mxu0 %v3058
    %3172 = vmatprep.subr.bf16.mxu0 0
    %3173 = vmatpush1.bf16.msra.mxu0 %v3057
    %3174 = vmatprep.subr.bf16.mxu0 0
    %3175 = vmatpush1.bf16.msra.mxu0 %v3056
    %3176 = vmatprep.subr.bf16.mxu0 0
    %3177 = vmatpush1.bf16.msra.mxu0 %v3055
    %3178 = vmatprep.subr.bf16.mxu0 0
    %3179 = vmatpush1.bf16.msra.mxu0 %v3054
    %3180 = vmatprep.subr.bf16.mxu0 0
    %3181 = vmatpush1.bf16.msra.mxu0 %v3053
    %3182 = vmatprep.subr.bf16.mxu0 0
    %3183 = vmatpush1.bf16.msra.mxu0 %v3052
    %3184 = vmatprep.subr.bf16.mxu0 0
    %3185 = vmatpush1.bf16.msra.mxu0 %v3051
    %3186 = vmatprep.subr.bf16.mxu0 0
    %3187 = vmatpush2.bf16.msra.mxu0 %v3066
    %3188 = vmatprep.subr.bf16.mxu0 0
    %3189 = vmatpush2.bf16.msra.mxu0 %v3065
    %3190 = vmatprep.subr.bf16.mxu0 0
    %3191 = vmatpush2.bf16.msra.mxu0 %v3064
    %3192 = vmatprep.subr.bf16.mxu0 0
    %3193 = vmatpush2.bf16.msra.mxu0 %v3063
    %3194 = vmatprep.subr.bf16.mxu0 0
    %3195 = vmatpush2.bf16.msra.mxu0 %v3062
    %3196 = vmatprep.subr.bf16.mxu0 0
    %3197 = vmatpush2.bf16.msra.mxu0 %v3061
    %3198 = vmatprep.subr.bf16.mxu0 0
    %3199 = vmatpush2.bf16.msra.mxu0 %v3060
    %3200 = vmatprep.subr.bf16.mxu0 0
    %3201 = vmatpush2.bf16.msra.mxu0 %v3059
    %3202 = vmatprep.mubr.bf16.mxu0 %v2888
    %3203 = vmatmul.mubr.bf16.gmra.mxu0 %v2887
    %v3204 = vpop.f32.mrf.mxu0
    %v3205 = vadd.f32 %v3165, %v3204
    %v3206 = vpop.f32.mrf.mxu0
    %v3207 = vpop.f32.mrf.mxu0
    %v3208 = vpop.f32.mrf.mxu0
    %3209 = vdwg.mxu0
    %3210 = vmatprep.subr.bf16.mxu0 0
    %3211 = vmatpush1.bf16.msra.mxu0 %v3074
    %3212 = vmatprep.subr.bf16.mxu0 0
    %3213 = vmatpush1.bf16.msra.mxu0 %v3073
    %3214 = vmatprep.subr.bf16.mxu0 0
    %3215 = vmatpush1.bf16.msra.mxu0 %v3072
    %3216 = vmatprep.subr.bf16.mxu0 0
    %3217 = vmatpush1.bf16.msra.mxu0 %v3071
    %3218 = vmatprep.subr.bf16.mxu0 0
    %3219 = vmatpush1.bf16.msra.mxu0 %v3070
    %3220 = vmatprep.subr.bf16.mxu0 0
    %3221 = vmatpush1.bf16.msra.mxu0 %v3069
    %3222 = vmatprep.subr.bf16.mxu0 0
    %3223 = vmatpush1.bf16.msra.mxu0 %v3068
    %3224 = vmatprep.subr.bf16.mxu0 0
    %3225 = vmatpush1.bf16.msra.mxu0 %v3067
    %3226 = vmatprep.subr.bf16.mxu0 0
    %3227 = vmatpush2.bf16.msra.mxu0 %v3082
    %3228 = vmatprep.subr.bf16.mxu0 0
    %3229 = vmatpush2.bf16.msra.mxu0 %v3081
    %3230 = vmatprep.subr.bf16.mxu0 0
    %3231 = vmatpush2.bf16.msra.mxu0 %v3080
    %3232 = vmatprep.subr.bf16.mxu0 0
    %3233 = vmatpush2.bf16.msra.mxu0 %v3079
    %3234 = vmatprep.subr.bf16.mxu0 0
    %3235 = vmatpush2.bf16.msra.mxu0 %v3078
    %3236 = vmatprep.subr.bf16.mxu0 0
    %3237 = vmatpush2.bf16.msra.mxu0 %v3077
    %3238 = vmatprep.subr.bf16.mxu0 0
    %3239 = vmatpush2.bf16.msra.mxu0 %v3076
    %3240 = vmatprep.subr.bf16.mxu0 0
    %3241 = vmatpush2.bf16.msra.mxu0 %v3075
    %3242 = vmatprep.mubr.bf16.mxu0 %v2890
    %3243 = vmatmul.mubr.bf16.gmra.mxu0 %v2889
    %v3244 = vpop.f32.mrf.mxu0
    %v3245 = vadd.f32 %v3205, %v3244
    %v3246 = vpop.f32.mrf.mxu0
    %v3247 = vpop.f32.mrf.mxu0
    %v3248 = vpop.f32.mrf.mxu0
    %3249 = vdwg.mxu0
    %v3250 = vmax.f32 %v3245, 0.0
    %v3251 = vpack.c.bf16 %v3250, %v3250
    %v3252 = vld [vmem:[%s5] sm:$0xff]
    %v3253 = vld [vmem:[%s5 + $0x8] sm:$0xff]
    %v3254 = vld [vmem:[%s5 + $0x10] sm:$0xff]
    %v3255 = vld [vmem:[%s5 + $0x18] sm:$0xff]
    %v3256 = vld [vmem:[%s5 + $0x20] sm:$0xff]
    %v3257 = vld [vmem:[%s5 + $0x28] sm:$0xff]
    %v3258 = vld [vmem:[%s5 + $0x30] sm:$0xff]
    %v3259 = vld [vmem:[%s5 + $0x38] sm:$0xff]
    %v3260 = vld [vmem:[%s5 + $0x40] sm:$0xff]
    %v3261 = vld [vmem:[%s5 + $0x48] sm:$0xff]
    %v3262 = vld [vmem:[%s5 + $0x50] sm:$0xff]
    %v3263 = vld [vmem:[%s5 + $0x58] sm:$0xff]
    %v3264 = vld [vmem:[%s5 + $0x60] sm:$0xff]
    %v3265 = vld [vmem:[%s5 + $0x68] sm:$0xff]
    %v3266 = vld [vmem:[%s5 + $0x70] sm:$0xff]
    %v3267 = vld [vmem:[%s5 + $0x78] sm:$0xff]
    %v3268 = vpack.c.bf16 %v3253, %v3252
    %v3269 = vpack.c.bf16 %v3255, %v3254
    %v3270 = vpack.c.bf16 %v3257, %v3256
    %v3271 = vpack.c.bf16 %v3259, %v3258
    %v3272 = vpack.c.bf16 %v3261, %v3260
    %v3273 = vpack.c.bf16 %v3263, %v3262
    %v3274 = vpack.c.bf16 %v3265, %v3264
    %v3275 = vpack.c.bf16 %v3267, %v3266
    %v3276 = vld [vmem:[%s6] sm:$0x1]
    %v3278 = vlaneseq
    %v3279 = vshrl.u32 %v3278, 7
    %v3280 = vsub.s32 0, %v3279
    %v3281 = vrot.slane %v3276, %v3280
    %3283 = vmatprep.subr.bf16.mxu0 0
    %3284 = vmatpush1.bf16.msra.mxu0 %v3275
    %3285 = vmatprep.subr.bf16.mxu0 0
    %3286 = vmatpush1.bf16.msra.mxu0 %v3274
    %3287 = vmatprep.subr.bf16.mxu0 0
    %3288 = vmatpush1.bf16.msra.mxu0 %v3273
    %3289 = vmatprep.subr.bf16.mxu0 0
    %3290 = vmatpush1.bf16.msra.mxu0 %v3272
    %3291 = vmatprep.subr.bf16.mxu0 0
    %3292 = vmatpush1.bf16.msra.mxu0 %v3271
    %3293 = vmatprep.subr.bf16.mxu0 0
    %3294 = vmatpush1.bf16.msra.mxu0 %v3270
    %3295 = vmatprep.subr.bf16.mxu0 0
    %3296 = vmatpush1.bf16.msra.mxu0 %v3269
    %3297 = vmatprep.subr.bf16.mxu0 0
    %3298 = vmatpush1.bf16.msra.mxu0 %v3268
    %3299 = vmatprep.subr.bf16.mxu0 0
    %3300 = vmatpush2.bf16.msra.mxu0 0
    %3301 = vmatprep.subr.bf16.mxu0 0
    %3302 = vmatpush2.bf16.msra.mxu0 0
    %3303 = vmatprep.subr.bf16.mxu0 0
    %3304 = vmatpush2.bf16.msra.mxu0 0
    %3305 = vmatprep.subr.bf16.mxu0 0
    %3306 = vmatpush2.bf16.msra.mxu0 0
    %3307 = vmatprep.subr.bf16.mxu0 0
    %3308 = vmatpush2.bf16.msra.mxu0 0
    %3309 = vmatprep.subr.bf16.mxu0 0
    %3310 = vmatpush2.bf16.msra.mxu0 0
    %3311 = vmatprep.subr.bf16.mxu0 0
    %3312 = vmatpush2.bf16.msra.mxu0 0
    %3313 = vmatprep.subr.bf16.mxu0 0
    %3314 = vmatpush2.bf16.msra.mxu0 0
    %3315 = vmatprep.mubr.bf16.mxu0 0
    %3316 = vmatmul.mubr.bf16.gmra.mxu0 %v3251
    %v3317 = vpop.f32.mrf.mxu0
    %v3318 = vadd.f32 %v3281, %v3317
    %v3319 = vpop.f32.mrf.mxu0
    %v3320 = vpop.f32.mrf.mxu0
    %v3321 = vpop.f32.mrf.mxu0
    %3322 = vdwg.mxu0
    %vm3323 = vcmask 74752
    %3324 = vst.msk [vmem:[#allocation2] sm:$0x3] %vm3323, %v3318
    // Predicated region
    $region30: #{cnn_forward.5} parent=1 // pred_check
      _
    $region31: #{cnn_forward.5} parent=1 // pred_check_branch
      %3326 = sbr.rel (0) target = $region33
    $region32: #{cnn_forward.5} parent=1 // pred_region
      %s3328 = ssub.s32 32, 32
      %3329 = vsyncadd [#allocation3], %s3328
      %s3331 = sshll.u32 [#allocation2], 4
      %s3332 = int_to_ptr.vmem [resolvable:$true] %s3331
      %3334 = dma.vmem_to_hbm [thread:$0]  %s3332, 32, %s7, [#allocation3]
    $region33: #{cnn_forward.5} parent=1 // pred_fallthru
      _
    // Predicated region
    $region34: #{cnn_forward.5} parent=1 // pred_check
      _
    $region35: #{cnn_forward.5} parent=1 // pred_check_branch
      %3336 = sbr.rel (0) target = $region37
    $region36: #{cnn_forward.5} parent=1 // pred_region
      %3337 = dma.done [#allocation3], 32
    $region37: #{cnn_forward.5} parent=1 // pred_fallthru
      _
    %3338 = vsyncpa [#allocation3], 1

</llo_original>
